<compile_context>
chip_gen: v7x
topology: tpu7x:2x2x1
jax: 0.10.0
libtpu: 0.0.40
codegen_flags: <defaults>
</compile_context>

<pallas_src>
import functools
import math

import jax
import jax.numpy as jnp
import numpy as np
from jax import lax
from jax.experimental import pallas as pl
from jax.experimental.pallas import tpu as pltpu

FEATURE_DIM = 32
NUM_HEADS = 4
HEAD_DIM = FEATURE_DIM // NUM_HEADS
EPS = 1e-5           # torch.nn.InstanceNorm1d default eps
MASK_BIAS = -1e30    # finite additive mask bias (no NaN for fully-masked rows)
USE_BF16 = True      # bf16 MXU operands + f32 accumulation (VPU/EUP math stays f32)


# ---------------------------------------------------------------------------
# Fused kernel: all layers x both descriptor sets, one batch item per grid step
# ---------------------------------------------------------------------------
def _make_gnn_kernel(names, n0, n1, D, H, use_bf16):
    """Build the fused kernel body; `names` (layer schedule) and n0/n1 are static."""
    dh = D // H
    cdt = jnp.bfloat16 if use_bf16 else jnp.float32

    def cast(a):
        return a.astype(cdt)

    def attn_message(q, k, v, bias, wm, bm):
        # q: (Nq, D), k/v: (Nk, D) f32, head-packed (head h = columns h*dh:(h+1)*dh).
        # bias: (Nq, Nk) additive mask bias.  wm: (D, D) merge weight, rows in
        # packed head-major order.  bm: (1, D).  Scale is pre-folded into Wq.
        msg = bm                                              # (1, D) f32
        for h in range(H):                                    # static unroll, H=4
            sl = slice(h * dh, (h + 1) * dh)
            s = jnp.einsum("ne,me->nm", cast(q[:, sl]), cast(k[:, sl]),
                           preferred_element_type=jnp.float32)      # (Nq, Nk)
            s = s + bias
            s = s - jnp.max(s, axis=-1, keepdims=True)
            e = jnp.exp(s)
            p = e * pl.reciprocal(jnp.sum(e, axis=-1, keepdims=True), approx=True)
            pv = jnp.dot(cast(p), cast(v[:, sl]),
                         preferred_element_type=jnp.float32)         # (Nq, dh)
            msg = msg + jnp.dot(cast(pv), wm[sl, :],
                                preferred_element_type=jnp.float32)  # (Nq, D)
        return msg

    def mlp_delta(x, message, w1x, w1m, b1, w2, b2):
        # MLP([2D -> 2D, InstanceNorm1d, ReLU, 2D -> D]) on concat([x, message])
        # without materializing the concat.  Norm statistics are per-channel over
        # this descriptor set's points, so the MLP must run per set.
        h1 = (jnp.dot(cast(x), w1x, preferred_element_type=jnp.float32)
              + jnp.dot(cast(message), w1m, preferred_element_type=jnp.float32)
              + b1)                                           # (N, 2D) f32
        mu = jnp.mean(h1, axis=0, keepdims=True)
        var = jnp.mean((h1 - mu) ** 2, axis=0, keepdims=True)  # biased variance
        hr = jnp.maximum((h1 - mu) * lax.rsqrt(var + EPS), 0.0)
        return jnp.dot(cast(hr), w2, preferred_element_type=jnp.float32) + b2

    def kernel(d0_ref, d1_ref, m00_ref, m11_ref, m01_ref, m10_ref,
               wq_ref, bq_ref, wk_ref, bk_ref, wv_ref, bv_ref, wm_ref, bm_ref,
               w1x_ref, w1m_ref, b1_ref, w2_ref, b2_ref,
               out0_ref, out1_ref):
        x0 = d0_ref[0]            # (N0, D) f32 residual stream (VMEM/vreg resident)
        x1 = d1_ref[0]            # (N1, D)

        # masked_fill(mask == 0, -inf) -> additive bias, built in-kernel once per
        # batch item (no separate XLA pass, no extra O(N^2) HBM inputs).
        def bias(m):
            return jnp.where(m == 0.0, jnp.float32(MASK_BIAS), jnp.float32(0.0))

        b00, b11 = bias(m00_ref[0]), bias(m11_ref[0])
        b01, b10 = bias(m01_ref[0]), bias(m10_ref[0])

        for l, name in enumerate(names):       # static unroll over the layer stack
            wq, bq = wq_ref[l], bq_ref[l]
            wk, bk = wk_ref[l], bk_ref[l]
            wv, bv = wv_ref[l], bv_ref[l]
            wm, bm = wm_ref[l], bm_ref[l]
            w1x, w1m, b1 = w1x_ref[l], w1m_ref[l], b1_ref[l]
            w2, b2 = w2_ref[l], b2_ref[l]

            # Shared projections on the concatenated token stream: one lane-dense
            # (N0+N1, D) @ (D, D) matmul per Q/K/V for BOTH descriptor sets.
            x_all = cast(jnp.concatenate([x0, x1], axis=0))          # (N0+N1, D)
            q_all = jnp.dot(x_all, wq, preferred_element_type=jnp.float32) + bq
            k_all = jnp.dot(x_all, wk, preferred_element_type=jnp.float32) + bk
            v_all = jnp.dot(x_all, wv, preferred_element_type=jnp.float32) + bv
            q0, q1 = q_all[:n0], q_all[n0:]
            k0, k1 = k_all[:n0], k_all[n0:]
            v0, v1 = v_all[:n0], v_all[n0:]

            if name == "cross":
                m0 = attn_message(q0, k1, v1, b01, wm, bm)
                m1 = attn_message(q1, k0, v0, b10, wm, bm)
            else:
                m0 = attn_message(q0, k0, v0, b00, wm, bm)
                m1 = attn_message(q1, k1, v1, b11, wm, bm)

            x0 = x0 + mlp_delta(x0, m0, w1x, w1m, b1, w2, b2)
            x1 = x1 + mlp_delta(x1, m1, w1x, w1m, b1, w2, b2)

        out0_ref[0] = x0
        out1_ref[0] = x1

    return kernel


def _per_batch_spec(shape):
    n = len(shape)
    return pl.BlockSpec((1,) + tuple(shape[1:]), lambda b: (b,) + (0,) * (n - 1))


def _full_spec(shape):
    n = len(shape)
    return pl.BlockSpec(tuple(shape), lambda b: (0,) * n)


# ---------------------------------------------------------------------------
# Parameters: deterministic synthetic init + one-time kernel-layout packing
# ---------------------------------------------------------------------------
def init_params(key, num_layers, D):
    params = []
    scale = 0.1
    for l in range(num_layers):
        ks = jax.random.split(jax.random.fold_in(key, l), 11)
        p = {
            "wq": scale * jax.random.normal(ks[0], (D, D), jnp.float32),
            "bq": scale * jax.random.normal(ks[1], (D,), jnp.float32),
            "wk": scale * jax.random.normal(ks[2], (D, D), jnp.float32),
            "bk": scale * jax.random.normal(ks[3], (D,), jnp.float32),
            "wv": scale * jax.random.normal(ks[4], (D, D), jnp.float32),
            "bv": scale * jax.random.normal(ks[5], (D,), jnp.float32),
            "wmerge": scale * jax.random.normal(ks[6], (D, D), jnp.float32),
            "bmerge": scale * jax.random.normal(ks[7], (D,), jnp.float32),
            "w1": scale * jax.random.normal(ks[8], (2 * D, 2 * D), jnp.float32),
            "b1": scale * jax.random.normal(ks[9], (2 * D,), jnp.float32),
            "w2": scale * jax.random.normal(ks[10], (D, 2 * D), jnp.float32),
            "b2": jnp.zeros((D,), jnp.float32),  # nn.init.constant_(mlp[-1].bias, 0)
        }
        params.append(p)
    return params


def prepare_kernel_params(params, D=FEATURE_DIM, H=NUM_HEADS, use_bf16=USE_BF16):
    """One-time packing, hoisted out of the forward path:
    - transpose Conv1d weights to (in, out),
    - pack heads lane-dense: packed output column h*dh+d <-> original channel d*H+h
      (PyTorch's view(B, dim, heads, N) means head = channel % H),
    - fold the 1/sqrt(head_dim) softmax scale into Wq and bq,
    - permute the merge-weight INPUT rows into the same packed head-major order,
    - split W1 into its x-rows and message-rows (concat never materialized),
    - stack everything over the layer axis L; matmul operands -> bf16."""
    dh = D // H
    scale = 1.0 / math.sqrt(dh)
    cdt = jnp.bfloat16 if use_bf16 else jnp.float32
    # packed index h*dh + d  <->  original output channel d*H + h
    perm = np.array([d * H + h for h in range(H) for d in range(dh)], dtype=np.int32)

    keys = ("wq", "bq", "wk", "bk", "wv", "bv", "wm", "bm",
            "w1x", "w1m", "b1", "w2", "b2")
    acc = {k: [] for k in keys}
    for p in params:
        acc["wq"].append(p["wq"].T[:, perm] * scale)          # (D, D), scale folded
        acc["bq"].append((p["bq"][perm] * scale)[None, :])    # (1, D)
        acc["wk"].append(p["wk"].T[:, perm])
        acc["bk"].append(p["bk"][perm][None, :])
        acc["wv"].append(p["wv"].T[:, perm])
        acc["bv"].append(p["bv"][perm][None, :])
        acc["wm"].append(p["wmerge"].T[perm, :])               # rows in packed order
        acc["bm"].append(p["bmerge"][None, :])
        w1T = p["w1"].T                                        # (2D_in, 2D_out)
        acc["w1x"].append(w1T[:D, :])
        acc["w1m"].append(w1T[D:, :])
        acc["b1"].append(p["b1"][None, :])
        acc["w2"].append(p["w2"].T)                            # (2D, D)
        acc["b2"].append(p["b2"][None, :])

    out = {k: jnp.stack(v) for k, v in acc.items()}
    for k in ("wq", "wk", "wv", "wm", "w1x", "w1m", "w2"):     # matmul operands
        out[k] = out[k].astype(cdt)
    return out


# ---------------------------------------------------------------------------
# Jitted forward wrapper: single pallas_call for the whole GNN
# ---------------------------------------------------------------------------
@functools.partial(jax.jit, static_argnames=("names",))
def attentional_gnn_pallas(desc0, desc1, kp, names, mask00, mask11, mask01, mask10):
    """desc0: (B, D, N0), desc1: (B, D, N1) in PyTorch NCW layout. Masks: (B, Nq, Nk)."""
    B, D, N0 = desc0.shape
    N1 = desc1.shape[2]
    # Boundary NCW<->NWD transposes stay in the jitted wrapper (tiny, fused by XLA);
    # the O(N^2) mask->bias conversion now happens inside the kernel.
    d0 = jnp.transpose(desc0, (0, 2, 1)).astype(jnp.float32)   # (B, N0, D)
    d1 = jnp.transpose(desc1, (0, 2, 1)).astype(jnp.float32)   # (B, N1, D)
    m00 = mask00.astype(jnp.float32)
    m11 = mask11.astype(jnp.float32)
    m01 = mask01.astype(jnp.float32)
    m10 = mask10.astype(jnp.float32)

    weight_order = ("wq", "bq", "wk", "bk", "wv", "bv", "wm", "bm",
                    "w1x", "w1m", "b1", "w2", "b2")
    weights = [kp[k] for k in weight_order]

    kernel = _make_gnn_kernel(names, N0, N1, D, NUM_HEADS, USE_BF16)
    in_specs = ([_per_batch_spec(d0.shape), _per_batch_spec(d1.shape),
                 _per_batch_spec(m00.shape), _per_batch_spec(m11.shape),
                 _per_batch_spec(m01.shape), _per_batch_spec(m10.shape)]
                + [_full_spec(w.shape) for w in weights])

    out0, out1 = pl.pallas_call(
        kernel,
        out_shape=(jax.ShapeDtypeStruct((B, N0, D), jnp.float32),
                   jax.ShapeDtypeStruct((B, N1, D), jnp.float32)),
        grid=(B,),
        in_specs=in_specs,
        out_specs=(_per_batch_spec((B, N0, D)), _per_batch_spec((B, N1, D))),
        compiler_params=pltpu.CompilerParams(
            dimension_semantics=("parallel",)),   # batch items -> megacore on v7x
    )(d0, d1, m00, m11, m01, m10, *weights)

    return jnp.transpose(out0, (0, 2, 1)), jnp.transpose(out1, (0, 2, 1))


# ---------------------------------------------------------------------------
# Pure-JAX reference mirroring the PyTorch module (verification only).
# ---------------------------------------------------------------------------
def _ref_layer(x, src, mask, p):
    B, D, N = x.shape
    H, dim = NUM_HEADS, HEAD_DIM

    def conv(w, b, t):
        return jnp.einsum("oi,bin->bon", w, t) + b[None, :, None]

    q = conv(p["wq"], p["bq"], x).reshape(B, dim, H, N)
    k = conv(p["wk"], p["bk"], src).reshape(B, dim, H, -1)
    v = conv(p["wv"], p["bv"], src).reshape(B, dim, H, -1)
    scores = jnp.einsum("bdhn,bdhm->bhnm", q, k) / math.sqrt(dim)
    scores = jnp.where(mask[:, None] == 0, -jnp.inf, scores)
    prob = jax.nn.softmax(scores, axis=-1)
    msg = jnp.einsum("bhnm,bdhm->bdhn", prob, v).reshape(B, D, N)
    message = conv(p["wmerge"], p["bmerge"], msg)
    y = jnp.concatenate([x, message], axis=1)
    h1 = conv(p["w1"], p["b1"], y)
    mu = h1.mean(axis=2, keepdims=True)
    var = ((h1 - mu) ** 2).mean(axis=2, keepdims=True)
    hr = jax.nn.relu((h1 - mu) / jnp.sqrt(var + EPS))
    return conv(p["w2"], p["b2"], hr)


def attentional_gnn_ref(desc0, desc1, params, names,
                        mask00, mask11, mask01, mask10):
    for p, name in zip(params, names):
        if name == "cross":
            src0, src1, m0, m1 = desc1, desc0, mask01, mask10
        else:
            src0, src1, m0, m1 = desc0, desc1, mask00, mask11
        delta0 = _ref_layer(desc0, src0, m0, p)
        delta1 = _ref_layer(desc1, src1, m1, p)
        desc0, desc1 = desc0 + delta0, desc1 + delta1
    return desc0, desc1


# ---------------------------------------------------------------------------
if __name__ == "__main__":
    key = jax.random.PRNGKey(0)
    B, D, N0, N1 = 2, FEATURE_DIM, 16, 12
    names = ("self", "cross")
    params = init_params(key, len(names), D)
    kparams = prepare_kernel_params(params)   # one-time packing, hoisted out of forward

    k1, k2, k3, k4, k5, k6 = jax.random.split(jax.random.fold_in(key, 999), 6)
    desc0 = jax.random.normal(k1, (B, D, N0), jnp.float32)
    desc1 = jax.random.normal(k2, (B, D, N1), jnp.float32)

    def make_mask(k, n, m):
        msk = (jax.random.uniform(k, (B, n, m)) > 0.25).astype(jnp.float32)
        return msk.at[..., 0].set(1.0)  # keep >=1 valid key per row (ref uses -inf)

    mask00 = make_mask(k3, N0, N0)
    mask11 = make_mask(k4, N1, N1)
    mask01 = make_mask(k5, N0, N1)
    mask10 = make_mask(k6, N1, N0)

    out0, out1 = attentional_gnn_pallas(desc0, desc1, kparams, names,
                                        mask00, mask11, mask01, mask10)
    jax.block_until_ready((out0, out1))

    ref0, ref1 = attentional_gnn_ref(desc0, desc1, params, names,
                                     mask00, mask11, mask01, mask10)
    # bf16 matmul operands (f32 accumulation) over 2 layers -> a few 1e-3..1e-2 abs.
    tol = 3e-2 if USE_BF16 else 5e-3
    np.testing.assert_allclose(np.asarray(out0), np.asarray(ref0), rtol=tol, atol=tol)
    np.testing.assert_allclose(np.asarray(out1), np.asarray(ref1), rtol=tol, atol=tol)
    print("KERNEL_OK")
</pallas_src>

<mosaic_0001>
module attributes {stable_mosaic.version = 11 : i64} {
  func.func @kernel(%arg0: i32, %arg1: memref<1x16x32xf32, #tpu.memory_space<vmem>>, %arg2: memref<1x12x32xf32, #tpu.memory_space<vmem>>, %arg3: memref<1x16x16xf32, #tpu.memory_space<vmem>>, %arg4: memref<1x12x12xf32, #tpu.memory_space<vmem>>, %arg5: memref<1x16x12xf32, #tpu.memory_space<vmem>>, %arg6: memref<1x12x16xf32, #tpu.memory_space<vmem>>, %arg7: memref<2x32x32xbf16, #tpu.memory_space<vmem>>, %arg8: memref<2x1x32xf32, #tpu.memory_space<vmem>>, %arg9: memref<2x32x32xbf16, #tpu.memory_space<vmem>>, %arg10: memref<2x1x32xf32, #tpu.memory_space<vmem>>, %arg11: memref<2x32x32xbf16, #tpu.memory_space<vmem>>, %arg12: memref<2x1x32xf32, #tpu.memory_space<vmem>>, %arg13: memref<2x32x32xbf16, #tpu.memory_space<vmem>>, %arg14: memref<2x1x32xf32, #tpu.memory_space<vmem>>, %arg15: memref<2x32x64xbf16, #tpu.memory_space<vmem>>, %arg16: memref<2x32x64xbf16, #tpu.memory_space<vmem>>, %arg17: memref<2x1x64xf32, #tpu.memory_space<vmem>>, %arg18: memref<2x64x32xbf16, #tpu.memory_space<vmem>>, %arg19: memref<2x1x32xf32, #tpu.memory_space<vmem>>, %arg20: memref<1x16x32xf32, #tpu.memory_space<vmem>>, %arg21: memref<1x12x32xf32, #tpu.memory_space<vmem>>) attributes {dimension_semantics = [#tpu.dimension_semantics<parallel>], iteration_bounds = array<i64: 2>, scalar_prefetch = 0 : i64, scratch_operands = 0 : i64, tpu.core_type = #tpu.core_type<tc>, window_params = [{transform_indices = @transform_0, window_bounds = array<i64: 1, 16, 32>}, {transform_indices = @transform_1, window_bounds = array<i64: 1, 12, 32>}, {transform_indices = @transform_2, window_bounds = array<i64: 1, 16, 16>}, {transform_indices = @transform_3, window_bounds = array<i64: 1, 12, 12>}, {transform_indices = @transform_4, window_bounds = array<i64: 1, 16, 12>}, {transform_indices = @transform_5, window_bounds = array<i64: 1, 12, 16>}, {pipeline_mode = #tpu.pipeline_mode<synchronous>, transform_indices = @transform_6, window_bounds = array<i64: 2, 32, 32>}, {pipeline_mode = #tpu.pipeline_mode<synchronous>, transform_indices = @transform_7, window_bounds = array<i64: 2, 1, 32>}, {pipeline_mode = #tpu.pipeline_mode<synchronous>, transform_indices = @transform_8, window_bounds = array<i64: 2, 32, 32>}, {pipeline_mode = #tpu.pipeline_mode<synchronous>, transform_indices = @transform_9, window_bounds = array<i64: 2, 1, 32>}, {pipeline_mode = #tpu.pipeline_mode<synchronous>, transform_indices = @transform_10, window_bounds = array<i64: 2, 32, 32>}, {pipeline_mode = #tpu.pipeline_mode<synchronous>, transform_indices = @transform_11, window_bounds = array<i64: 2, 1, 32>}, {pipeline_mode = #tpu.pipeline_mode<synchronous>, transform_indices = @transform_12, window_bounds = array<i64: 2, 32, 32>}, {pipeline_mode = #tpu.pipeline_mode<synchronous>, transform_indices = @transform_13, window_bounds = array<i64: 2, 1, 32>}, {pipeline_mode = #tpu.pipeline_mode<synchronous>, transform_indices = @transform_14, window_bounds = array<i64: 2, 32, 64>}, {pipeline_mode = #tpu.pipeline_mode<synchronous>, transform_indices = @transform_15, window_bounds = array<i64: 2, 32, 64>}, {pipeline_mode = #tpu.pipeline_mode<synchronous>, transform_indices = @transform_16, window_bounds = array<i64: 2, 1, 64>}, {pipeline_mode = #tpu.pipeline_mode<synchronous>, transform_indices = @transform_17, window_bounds = array<i64: 2, 64, 32>}, {pipeline_mode = #tpu.pipeline_mode<synchronous>, transform_indices = @transform_18, window_bounds = array<i64: 2, 1, 32>}, {transform_indices = @transform_19, window_bounds = array<i64: 1, 16, 32>}, {transform_indices = @transform_20, window_bounds = array<i64: 1, 12, 32>}]} {
    %c0 = arith.constant 0 : index
    %c0_0 = arith.constant 0 : index
    %c0_1 = arith.constant 0 : index
    %0 = vector.load %arg1[%c0, %c0_0, %c0_1] : memref<1x16x32xf32, #tpu.memory_space<vmem>>, vector<1x16x32xf32>
    %1 = vector.shape_cast %0 : vector<1x16x32xf32> to vector<16x32xf32>
    %c0_2 = arith.constant 0 : index
    %c0_3 = arith.constant 0 : index
    %c0_4 = arith.constant 0 : index
    %2 = vector.load %arg2[%c0_2, %c0_3, %c0_4] : memref<1x12x32xf32, #tpu.memory_space<vmem>>, vector<1x12x32xf32>
    %3 = vector.shape_cast %2 : vector<1x12x32xf32> to vector<12x32xf32>
    %c0_5 = arith.constant 0 : index
    %c0_6 = arith.constant 0 : index
    %c0_7 = arith.constant 0 : index
    %4 = vector.load %arg3[%c0_5, %c0_6, %c0_7] : memref<1x16x16xf32, #tpu.memory_space<vmem>>, vector<1x16x16xf32>
    %5 = vector.shape_cast %4 : vector<1x16x16xf32> to vector<16x16xf32>
    %cst = arith.constant 0.000000e+00 : f32
    %6 = vector.broadcast %cst : f32 to vector<16x16xf32>
    %7 = arith.cmpf oeq, %5, %6 : vector<16x16xf32>
    %cst_8 = arith.constant -1.000000e+30 : f32
    %cst_9 = arith.constant 0.000000e+00 : f32
    %8 = vector.broadcast %cst_8 : f32 to vector<16x16xf32>
    %9 = vector.broadcast %cst_9 : f32 to vector<16x16xf32>
    %10 = arith.select %7, %8, %9 : vector<16x16xi1>, vector<16x16xf32>
    %c0_10 = arith.constant 0 : index
    %c0_11 = arith.constant 0 : index
    %c0_12 = arith.constant 0 : index
    %11 = vector.load %arg4[%c0_10, %c0_11, %c0_12] : memref<1x12x12xf32, #tpu.memory_space<vmem>>, vector<1x12x12xf32>
    %12 = vector.shape_cast %11 : vector<1x12x12xf32> to vector<12x12xf32>
    %cst_13 = arith.constant 0.000000e+00 : f32
    %13 = vector.broadcast %cst_13 : f32 to vector<12x12xf32>
    %14 = arith.cmpf oeq, %12, %13 : vector<12x12xf32>
    %cst_14 = arith.constant -1.000000e+30 : f32
    %cst_15 = arith.constant 0.000000e+00 : f32
    %15 = vector.broadcast %cst_14 : f32 to vector<12x12xf32>
    %16 = vector.broadcast %cst_15 : f32 to vector<12x12xf32>
    %17 = arith.select %14, %15, %16 : vector<12x12xi1>, vector<12x12xf32>
    %c0_16 = arith.constant 0 : index
    %c0_17 = arith.constant 0 : index
    %c0_18 = arith.constant 0 : index
    %18 = vector.load %arg5[%c0_16, %c0_17, %c0_18] : memref<1x16x12xf32, #tpu.memory_space<vmem>>, vector<1x16x12xf32>
    %19 = vector.shape_cast %18 : vector<1x16x12xf32> to vector<16x12xf32>
    %cst_19 = arith.constant 0.000000e+00 : f32
    %20 = vector.broadcast %cst_19 : f32 to vector<16x12xf32>
    %21 = arith.cmpf oeq, %19, %20 : vector<16x12xf32>
    %cst_20 = arith.constant -1.000000e+30 : f32
    %cst_21 = arith.constant 0.000000e+00 : f32
    %22 = vector.broadcast %cst_20 : f32 to vector<16x12xf32>
    %23 = vector.broadcast %cst_21 : f32 to vector<16x12xf32>
    %24 = arith.select %21, %22, %23 : vector<16x12xi1>, vector<16x12xf32>
    %c0_22 = arith.constant 0 : index
    %c0_23 = arith.constant 0 : index
    %c0_24 = arith.constant 0 : index
    %25 = vector.load %arg6[%c0_22, %c0_23, %c0_24] : memref<1x12x16xf32, #tpu.memory_space<vmem>>, vector<1x12x16xf32>
    %26 = vector.shape_cast %25 : vector<1x12x16xf32> to vector<12x16xf32>
    %cst_25 = arith.constant 0.000000e+00 : f32
    %27 = vector.broadcast %cst_25 : f32 to vector<12x16xf32>
    %28 = arith.cmpf oeq, %26, %27 : vector<12x16xf32>
    %cst_26 = arith.constant -1.000000e+30 : f32
    %cst_27 = arith.constant 0.000000e+00 : f32
    %29 = vector.broadcast %cst_26 : f32 to vector<12x16xf32>
    %30 = vector.broadcast %cst_27 : f32 to vector<12x16xf32>
    %31 = arith.select %28, %29, %30 : vector<12x16xi1>, vector<12x16xf32>
    %c0_28 = arith.constant 0 : index
    %c0_29 = arith.constant 0 : index
    %c0_30 = arith.constant 0 : index
    %32 = vector.load %arg7[%c0_28, %c0_29, %c0_30] : memref<2x32x32xbf16, #tpu.memory_space<vmem>>, vector<1x32x32xbf16>
    %33 = vector.shape_cast %32 : vector<1x32x32xbf16> to vector<32x32xbf16>
    %c0_31 = arith.constant 0 : index
    %c0_32 = arith.constant 0 : index
    %c0_33 = arith.constant 0 : index
    %34 = vector.load %arg8[%c0_31, %c0_32, %c0_33] : memref<2x1x32xf32, #tpu.memory_space<vmem>>, vector<1x1x32xf32>
    %35 = vector.shape_cast %34 : vector<1x1x32xf32> to vector<1x32xf32>
    %c0_34 = arith.constant 0 : index
    %c0_35 = arith.constant 0 : index
    %c0_36 = arith.constant 0 : index
    %36 = vector.load %arg9[%c0_34, %c0_35, %c0_36] : memref<2x32x32xbf16, #tpu.memory_space<vmem>>, vector<1x32x32xbf16>
    %37 = vector.shape_cast %36 : vector<1x32x32xbf16> to vector<32x32xbf16>
    %c0_37 = arith.constant 0 : index
    %c0_38 = arith.constant 0 : index
    %c0_39 = arith.constant 0 : index
    %38 = vector.load %arg10[%c0_37, %c0_38, %c0_39] : memref<2x1x32xf32, #tpu.memory_space<vmem>>, vector<1x1x32xf32>
    %39 = vector.shape_cast %38 : vector<1x1x32xf32> to vector<1x32xf32>
    %c0_40 = arith.constant 0 : index
    %c0_41 = arith.constant 0 : index
    %c0_42 = arith.constant 0 : index
    %40 = vector.load %arg11[%c0_40, %c0_41, %c0_42] : memref<2x32x32xbf16, #tpu.memory_space<vmem>>, vector<1x32x32xbf16>
    %41 = vector.shape_cast %40 : vector<1x32x32xbf16> to vector<32x32xbf16>
    %c0_43 = arith.constant 0 : index
    %c0_44 = arith.constant 0 : index
    %c0_45 = arith.constant 0 : index
    %42 = vector.load %arg12[%c0_43, %c0_44, %c0_45] : memref<2x1x32xf32, #tpu.memory_space<vmem>>, vector<1x1x32xf32>
    %43 = vector.shape_cast %42 : vector<1x1x32xf32> to vector<1x32xf32>
    %c0_46 = arith.constant 0 : index
    %c0_47 = arith.constant 0 : index
    %c0_48 = arith.constant 0 : index
    %44 = vector.load %arg13[%c0_46, %c0_47, %c0_48] : memref<2x32x32xbf16, #tpu.memory_space<vmem>>, vector<1x32x32xbf16>
    %45 = vector.shape_cast %44 : vector<1x32x32xbf16> to vector<32x32xbf16>
    %c0_49 = arith.constant 0 : index
    %c0_50 = arith.constant 0 : index
    %c0_51 = arith.constant 0 : index
    %46 = vector.load %arg14[%c0_49, %c0_50, %c0_51] : memref<2x1x32xf32, #tpu.memory_space<vmem>>, vector<1x1x32xf32>
    %47 = vector.shape_cast %46 : vector<1x1x32xf32> to vector<1x32xf32>
    %c0_52 = arith.constant 0 : index
    %c0_53 = arith.constant 0 : index
    %c0_54 = arith.constant 0 : index
    %48 = vector.load %arg15[%c0_52, %c0_53, %c0_54] : memref<2x32x64xbf16, #tpu.memory_space<vmem>>, vector<1x32x64xbf16>
    %49 = vector.shape_cast %48 : vector<1x32x64xbf16> to vector<32x64xbf16>
    %c0_55 = arith.constant 0 : index
    %c0_56 = arith.constant 0 : index
    %c0_57 = arith.constant 0 : index
    %50 = vector.load %arg16[%c0_55, %c0_56, %c0_57] : memref<2x32x64xbf16, #tpu.memory_space<vmem>>, vector<1x32x64xbf16>
    %51 = vector.shape_cast %50 : vector<1x32x64xbf16> to vector<32x64xbf16>
    %c0_58 = arith.constant 0 : index
    %c0_59 = arith.constant 0 : index
    %c0_60 = arith.constant 0 : index
    %52 = vector.load %arg17[%c0_58, %c0_59, %c0_60] : memref<2x1x64xf32, #tpu.memory_space<vmem>>, vector<1x1x64xf32>
    %53 = vector.shape_cast %52 : vector<1x1x64xf32> to vector<1x64xf32>
    %c0_61 = arith.constant 0 : index
    %c0_62 = arith.constant 0 : index
    %c0_63 = arith.constant 0 : index
    %54 = vector.load %arg18[%c0_61, %c0_62, %c0_63] : memref<2x64x32xbf16, #tpu.memory_space<vmem>>, vector<1x64x32xbf16>
    %55 = vector.shape_cast %54 : vector<1x64x32xbf16> to vector<64x32xbf16>
    %c0_64 = arith.constant 0 : index
    %c0_65 = arith.constant 0 : index
    %c0_66 = arith.constant 0 : index
    %56 = vector.load %arg19[%c0_64, %c0_65, %c0_66] : memref<2x1x32xf32, #tpu.memory_space<vmem>>, vector<1x1x32xf32>
    %57 = vector.shape_cast %56 : vector<1x1x32xf32> to vector<1x32xf32>
    %58 = tpu.concatenate %1, %3 in 0 : vector<16x32xf32>, vector<12x32xf32> -> vector<28x32xf32>
    %59 = arith.truncf %58 : vector<28x32xf32> to vector<28x32xbf16>
    %cst_67 = arith.constant dense<0.000000e+00> : vector<28x32xf32>
    %60 = tpu.matmul %59, %33, %cst_67 {dimension_numbers = #tpu.dot_dimension_numbers<[1], [0], [0], [1], [0, 0, 1, 1], [], []>} : vector<28x32xbf16>, vector<32x32xbf16>, vector<28x32xf32> -> vector<28x32xf32>
    %61 = vector.broadcast %35 : vector<1x32xf32> to vector<28x32xf32>
    %62 = arith.addf %60, %61 : vector<28x32xf32>
    %cst_68 = arith.constant dense<0.000000e+00> : vector<28x32xf32>
    %63 = tpu.matmul %59, %37, %cst_68 {dimension_numbers = #tpu.dot_dimension_numbers<[1], [0], [0], [1], [0, 0, 1, 1], [], []>} : vector<28x32xbf16>, vector<32x32xbf16>, vector<28x32xf32> -> vector<28x32xf32>
    %64 = vector.broadcast %39 : vector<1x32xf32> to vector<28x32xf32>
    %65 = arith.addf %63, %64 : vector<28x32xf32>
    %cst_69 = arith.constant dense<0.000000e+00> : vector<28x32xf32>
    %66 = tpu.matmul %59, %41, %cst_69 {dimension_numbers = #tpu.dot_dimension_numbers<[1], [0], [0], [1], [0, 0, 1, 1], [], []>} : vector<28x32xbf16>, vector<32x32xbf16>, vector<28x32xf32> -> vector<28x32xf32>
    %67 = vector.broadcast %43 : vector<1x32xf32> to vector<28x32xf32>
    %68 = arith.addf %66, %67 : vector<28x32xf32>
    %69 = vector.extract_strided_slice %62 {offsets = [0, 0], sizes = [16, 32], strides = [1, 1]} : vector<28x32xf32> to vector<16x32xf32>
    %70 = vector.extract_strided_slice %62 {offsets = [16, 0], sizes = [12, 32], strides = [1, 1]} : vector<28x32xf32> to vector<12x32xf32>
    %71 = vector.extract_strided_slice %65 {offsets = [0, 0], sizes = [16, 32], strides = [1, 1]} : vector<28x32xf32> to vector<16x32xf32>
    %72 = vector.extract_strided_slice %65 {offsets = [16, 0], sizes = [12, 32], strides = [1, 1]} : vector<28x32xf32> to vector<12x32xf32>
    %73 = vector.extract_strided_slice %68 {offsets = [0, 0], sizes = [16, 32], strides = [1, 1]} : vector<28x32xf32> to vector<16x32xf32>
    %74 = vector.extract_strided_slice %68 {offsets = [16, 0], sizes = [12, 32], strides = [1, 1]} : vector<28x32xf32> to vector<12x32xf32>
    %75 = vector.extract_strided_slice %69 {offsets = [0, 0], sizes = [16, 8], strides = [1, 1]} : vector<16x32xf32> to vector<16x8xf32>
    %76 = arith.truncf %75 : vector<16x8xf32> to vector<16x8xbf16>
    %77 = vector.extract_strided_slice %71 {offsets = [0, 0], sizes = [16, 8], strides = [1, 1]} : vector<16x32xf32> to vector<16x8xf32>
    %78 = arith.truncf %77 : vector<16x8xf32> to vector<16x8xbf16>
    "tpu.trace_start"() <{level = 10 : i32, message = "ne,me->nm"}> : () -> ()
    %cst_70 = arith.constant dense<0.000000e+00> : vector<16x16xf32>
    %79 = tpu.matmul %76, %78, %cst_70 {dimension_numbers = #tpu.dot_dimension_numbers<[1], [1], [0], [0], [0, 0, 1, 0], [], []>} : vector<16x8xbf16>, vector<16x8xbf16>, vector<16x16xf32> -> vector<16x16xf32>
    "tpu.trace_stop"() : () -> ()
    %80 = arith.addf %79, %10 : vector<16x16xf32>
    %cst_71 = arith.constant dense<0xFF800000> : vector<16xf32>
    %81 = vector.multi_reduction <maximumf>, %80, %cst_71 [1] : vector<16x16xf32> to vector<16xf32>
    %82 = vector.shape_cast %81 : vector<16xf32> to vector<16x1xf32>
    %83 = vector.broadcast %82 : vector<16x1xf32> to vector<16x16xf32>
    %84 = arith.subf %80, %83 : vector<16x16xf32>
    %85 = math.exp %84 : vector<16x16xf32>
    %cst_72 = arith.constant dense<0.000000e+00> : vector<16xf32>
    %86 = vector.multi_reduction <add>, %85, %cst_72 [1] : vector<16x16xf32> to vector<16xf32>
    %87 = vector.shape_cast %86 : vector<16xf32> to vector<16x1xf32>
    %88 = tpu.reciprocal %87 {approx = true} : vector<16x1xf32> -> vector<16x1xf32>
    %89 = vector.broadcast %88 : vector<16x1xf32> to vector<16x16xf32>
    %90 = arith.mulf %85, %89 : vector<16x16xf32>
    %91 = arith.truncf %90 : vector<16x16xf32> to vector<16x16xbf16>
    %92 = vector.extract_strided_slice %73 {offsets = [0, 0], sizes = [16, 8], strides = [1, 1]} : vector<16x32xf32> to vector<16x8xf32>
    %93 = arith.truncf %92 : vector<16x8xf32> to vector<16x8xbf16>
    %cst_73 = arith.constant dense<0.000000e+00> : vector<16x8xf32>
    %94 = tpu.matmul %91, %93, %cst_73 {dimension_numbers = #tpu.dot_dimension_numbers<[1], [0], [0], [1], [0, 0, 1, 1], [], []>} : vector<16x16xbf16>, vector<16x8xbf16>, vector<16x8xf32> -> vector<16x8xf32>
    %95 = arith.truncf %94 : vector<16x8xf32> to vector<16x8xbf16>
    %96 = vector.extract_strided_slice %45 {offsets = [0, 0], sizes = [8, 32], strides = [1, 1]} : vector<32x32xbf16> to vector<8x32xbf16>
    %cst_74 = arith.constant dense<0.000000e+00> : vector<16x32xf32>
    %97 = tpu.matmul %95, %96, %cst_74 {dimension_numbers = #tpu.dot_dimension_numbers<[1], [0], [0], [1], [0, 0, 1, 1], [], []>} : vector<16x8xbf16>, vector<8x32xbf16>, vector<16x32xf32> -> vector<16x32xf32>
    %98 = vector.broadcast %47 : vector<1x32xf32> to vector<16x32xf32>
    %99 = arith.addf %98, %97 : vector<16x32xf32>
    %100 = vector.extract_strided_slice %69 {offsets = [0, 8], sizes = [16, 8], strides = [1, 1]} : vector<16x32xf32> to vector<16x8xf32>
    %101 = arith.truncf %100 : vector<16x8xf32> to vector<16x8xbf16>
    %102 = vector.extract_strided_slice %71 {offsets = [0, 8], sizes = [16, 8], strides = [1, 1]} : vector<16x32xf32> to vector<16x8xf32>
    %103 = arith.truncf %102 : vector<16x8xf32> to vector<16x8xbf16>
    "tpu.trace_start"() <{level = 10 : i32, message = "ne,me->nm"}> : () -> ()
    %cst_75 = arith.constant dense<0.000000e+00> : vector<16x16xf32>
    %104 = tpu.matmul %101, %103, %cst_75 {dimension_numbers = #tpu.dot_dimension_numbers<[1], [1], [0], [0], [0, 0, 1, 0], [], []>} : vector<16x8xbf16>, vector<16x8xbf16>, vector<16x16xf32> -> vector<16x16xf32>
    "tpu.trace_stop"() : () -> ()
    %105 = arith.addf %104, %10 : vector<16x16xf32>
    %cst_76 = arith.constant dense<0xFF800000> : vector<16xf32>
    %106 = vector.multi_reduction <maximumf>, %105, %cst_76 [1] : vector<16x16xf32> to vector<16xf32>
    %107 = vector.shape_cast %106 : vector<16xf32> to vector<16x1xf32>
    %108 = vector.broadcast %107 : vector<16x1xf32> to vector<16x16xf32>
    %109 = arith.subf %105, %108 : vector<16x16xf32>
    %110 = math.exp %109 : vector<16x16xf32>
    %cst_77 = arith.constant dense<0.000000e+00> : vector<16xf32>
    %111 = vector.multi_reduction <add>, %110, %cst_77 [1] : vector<16x16xf32> to vector<16xf32>
    %112 = vector.shape_cast %111 : vector<16xf32> to vector<16x1xf32>
    %113 = tpu.reciprocal %112 {approx = true} : vector<16x1xf32> -> vector<16x1xf32>
    %114 = vector.broadcast %113 : vector<16x1xf32> to vector<16x16xf32>
    %115 = arith.mulf %110, %114 : vector<16x16xf32>
    %116 = arith.truncf %115 : vector<16x16xf32> to vector<16x16xbf16>
    %117 = vector.extract_strided_slice %73 {offsets = [0, 8], sizes = [16, 8], strides = [1, 1]} : vector<16x32xf32> to vector<16x8xf32>
    %118 = arith.truncf %117 : vector<16x8xf32> to vector<16x8xbf16>
    %cst_78 = arith.constant dense<0.000000e+00> : vector<16x8xf32>
    %119 = tpu.matmul %116, %118, %cst_78 {dimension_numbers = #tpu.dot_dimension_numbers<[1], [0], [0], [1], [0, 0, 1, 1], [], []>} : vector<16x16xbf16>, vector<16x8xbf16>, vector<16x8xf32> -> vector<16x8xf32>
    %120 = arith.truncf %119 : vector<16x8xf32> to vector<16x8xbf16>
    %121 = vector.extract_strided_slice %45 {offsets = [8, 0], sizes = [8, 32], strides = [1, 1]} : vector<32x32xbf16> to vector<8x32xbf16>
    %cst_79 = arith.constant dense<0.000000e+00> : vector<16x32xf32>
    %122 = tpu.matmul %120, %121, %cst_79 {dimension_numbers = #tpu.dot_dimension_numbers<[1], [0], [0], [1], [0, 0, 1, 1], [], []>} : vector<16x8xbf16>, vector<8x32xbf16>, vector<16x32xf32> -> vector<16x32xf32>
    %123 = arith.addf %99, %122 : vector<16x32xf32>
    %124 = vector.extract_strided_slice %69 {offsets = [0, 16], sizes = [16, 8], strides = [1, 1]} : vector<16x32xf32> to vector<16x8xf32>
    %125 = arith.truncf %124 : vector<16x8xf32> to vector<16x8xbf16>
    %126 = vector.extract_strided_slice %71 {offsets = [0, 16], sizes = [16, 8], strides = [1, 1]} : vector<16x32xf32> to vector<16x8xf32>
    %127 = arith.truncf %126 : vector<16x8xf32> to vector<16x8xbf16>
    "tpu.trace_start"() <{level = 10 : i32, message = "ne,me->nm"}> : () -> ()
    %cst_80 = arith.constant dense<0.000000e+00> : vector<16x16xf32>
    %128 = tpu.matmul %125, %127, %cst_80 {dimension_numbers = #tpu.dot_dimension_numbers<[1], [1], [0], [0], [0, 0, 1, 0], [], []>} : vector<16x8xbf16>, vector<16x8xbf16>, vector<16x16xf32> -> vector<16x16xf32>
    "tpu.trace_stop"() : () -> ()
    %129 = arith.addf %128, %10 : vector<16x16xf32>
    %cst_81 = arith.constant dense<0xFF800000> : vector<16xf32>
    %130 = vector.multi_reduction <maximumf>, %129, %cst_81 [1] : vector<16x16xf32> to vector<16xf32>
    %131 = vector.shape_cast %130 : vector<16xf32> to vector<16x1xf32>
    %132 = vector.broadcast %131 : vector<16x1xf32> to vector<16x16xf32>
    %133 = arith.subf %129, %132 : vector<16x16xf32>
    %134 = math.exp %133 : vector<16x16xf32>
    %cst_82 = arith.constant dense<0.000000e+00> : vector<16xf32>
    %135 = vector.multi_reduction <add>, %134, %cst_82 [1] : vector<16x16xf32> to vector<16xf32>
    %136 = vector.shape_cast %135 : vector<16xf32> to vector<16x1xf32>
    %137 = tpu.reciprocal %136 {approx = true} : vector<16x1xf32> -> vector<16x1xf32>
    %138 = vector.broadcast %137 : vector<16x1xf32> to vector<16x16xf32>
    %139 = arith.mulf %134, %138 : vector<16x16xf32>
    %140 = arith.truncf %139 : vector<16x16xf32> to vector<16x16xbf16>
    %141 = vector.extract_strided_slice %73 {offsets = [0, 16], sizes = [16, 8], strides = [1, 1]} : vector<16x32xf32> to vector<16x8xf32>
    %142 = arith.truncf %141 : vector<16x8xf32> to vector<16x8xbf16>
    %cst_83 = arith.constant dense<0.000000e+00> : vector<16x8xf32>
    %143 = tpu.matmul %140, %142, %cst_83 {dimension_numbers = #tpu.dot_dimension_numbers<[1], [0], [0], [1], [0, 0, 1, 1], [], []>} : vector<16x16xbf16>, vector<16x8xbf16>, vector<16x8xf32> -> vector<16x8xf32>
    %144 = arith.truncf %143 : vector<16x8xf32> to vector<16x8xbf16>
    %145 = vector.extract_strided_slice %45 {offsets = [16, 0], sizes = [8, 32], strides = [1, 1]} : vector<32x32xbf16> to vector<8x32xbf16>
    %cst_84 = arith.constant dense<0.000000e+00> : vector<16x32xf32>
    %146 = tpu.matmul %144, %145, %cst_84 {dimension_numbers = #tpu.dot_dimension_numbers<[1], [0], [0], [1], [0, 0, 1, 1], [], []>} : vector<16x8xbf16>, vector<8x32xbf16>, vector<16x32xf32> -> vector<16x32xf32>
    %147 = arith.addf %123, %146 : vector<16x32xf32>
    %148 = vector.extract_strided_slice %69 {offsets = [0, 24], sizes = [16, 8], strides = [1, 1]} : vector<16x32xf32> to vector<16x8xf32>
    %149 = arith.truncf %148 : vector<16x8xf32> to vector<16x8xbf16>
    %150 = vector.extract_strided_slice %71 {offsets = [0, 24], sizes = [16, 8], strides = [1, 1]} : vector<16x32xf32> to vector<16x8xf32>
    %151 = arith.truncf %150 : vector<16x8xf32> to vector<16x8xbf16>
    "tpu.trace_start"() <{level = 10 : i32, message = "ne,me->nm"}> : () -> ()
    %cst_85 = arith.constant dense<0.000000e+00> : vector<16x16xf32>
    %152 = tpu.matmul %149, %151, %cst_85 {dimension_numbers = #tpu.dot_dimension_numbers<[1], [1], [0], [0], [0, 0, 1, 0], [], []>} : vector<16x8xbf16>, vector<16x8xbf16>, vector<16x16xf32> -> vector<16x16xf32>
    "tpu.trace_stop"() : () -> ()
    %153 = arith.addf %152, %10 : vector<16x16xf32>
    %cst_86 = arith.constant dense<0xFF800000> : vector<16xf32>
    %154 = vector.multi_reduction <maximumf>, %153, %cst_86 [1] : vector<16x16xf32> to vector<16xf32>
    %155 = vector.shape_cast %154 : vector<16xf32> to vector<16x1xf32>
    %156 = vector.broadcast %155 : vector<16x1xf32> to vector<16x16xf32>
    %157 = arith.subf %153, %156 : vector<16x16xf32>
    %158 = math.exp %157 : vector<16x16xf32>
    %cst_87 = arith.constant dense<0.000000e+00> : vector<16xf32>
    %159 = vector.multi_reduction <add>, %158, %cst_87 [1] : vector<16x16xf32> to vector<16xf32>
    %160 = vector.shape_cast %159 : vector<16xf32> to vector<16x1xf32>
    %161 = tpu.reciprocal %160 {approx = true} : vector<16x1xf32> -> vector<16x1xf32>
    %162 = vector.broadcast %161 : vector<16x1xf32> to vector<16x16xf32>
    %163 = arith.mulf %158, %162 : vector<16x16xf32>
    %164 = arith.truncf %163 : vector<16x16xf32> to vector<16x16xbf16>
    %165 = vector.extract_strided_slice %73 {offsets = [0, 24], sizes = [16, 8], strides = [1, 1]} : vector<16x32xf32> to vector<16x8xf32>
    %166 = arith.truncf %165 : vector<16x8xf32> to vector<16x8xbf16>
    %cst_88 = arith.constant dense<0.000000e+00> : vector<16x8xf32>
    %167 = tpu.matmul %164, %166, %cst_88 {dimension_numbers = #tpu.dot_dimension_numbers<[1], [0], [0], [1], [0, 0, 1, 1], [], []>} : vector<16x16xbf16>, vector<16x8xbf16>, vector<16x8xf32> -> vector<16x8xf32>
    %168 = arith.truncf %167 : vector<16x8xf32> to vector<16x8xbf16>
    %169 = vector.extract_strided_slice %45 {offsets = [24, 0], sizes = [8, 32], strides = [1, 1]} : vector<32x32xbf16> to vector<8x32xbf16>
    %cst_89 = arith.constant dense<0.000000e+00> : vector<16x32xf32>
    %170 = tpu.matmul %168, %169, %cst_89 {dimension_numbers = #tpu.dot_dimension_numbers<[1], [0], [0], [1], [0, 0, 1, 1], [], []>} : vector<16x8xbf16>, vector<8x32xbf16>, vector<16x32xf32> -> vector<16x32xf32>
    %171 = arith.addf %147, %170 : vector<16x32xf32>
    %172 = vector.extract_strided_slice %70 {offsets = [0, 0], sizes = [12, 8], strides = [1, 1]} : vector<12x32xf32> to vector<12x8xf32>
    %173 = arith.truncf %172 : vector<12x8xf32> to vector<12x8xbf16>
    %174 = vector.extract_strided_slice %72 {offsets = [0, 0], sizes = [12, 8], strides = [1, 1]} : vector<12x32xf32> to vector<12x8xf32>
    %175 = arith.truncf %174 : vector<12x8xf32> to vector<12x8xbf16>
    "tpu.trace_start"() <{level = 10 : i32, message = "ne,me->nm"}> : () -> ()
    %cst_90 = arith.constant dense<0.000000e+00> : vector<12x12xf32>
    %176 = tpu.matmul %173, %175, %cst_90 {dimension_numbers = #tpu.dot_dimension_numbers<[1], [1], [0], [0], [0, 0, 1, 0], [], []>} : vector<12x8xbf16>, vector<12x8xbf16>, vector<12x12xf32> -> vector<12x12xf32>
    "tpu.trace_stop"() : () -> ()
    %177 = arith.addf %176, %17 : vector<12x12xf32>
    %cst_91 = arith.constant dense<0xFF800000> : vector<12xf32>
    %178 = vector.multi_reduction <maximumf>, %177, %cst_91 [1] : vector<12x12xf32> to vector<12xf32>
    %179 = vector.shape_cast %178 : vector<12xf32> to vector<12x1xf32>
    %180 = vector.broadcast %179 : vector<12x1xf32> to vector<12x12xf32>
    %181 = arith.subf %177, %180 : vector<12x12xf32>
    %182 = math.exp %181 : vector<12x12xf32>
    %cst_92 = arith.constant dense<0.000000e+00> : vector<12xf32>
    %183 = vector.multi_reduction <add>, %182, %cst_92 [1] : vector<12x12xf32> to vector<12xf32>
    %184 = vector.shape_cast %183 : vector<12xf32> to vector<12x1xf32>
    %185 = tpu.reciprocal %184 {approx = true} : vector<12x1xf32> -> vector<12x1xf32>
    %186 = vector.broadcast %185 : vector<12x1xf32> to vector<12x12xf32>
    %187 = arith.mulf %182, %186 : vector<12x12xf32>
    %188 = arith.truncf %187 : vector<12x12xf32> to vector<12x12xbf16>
    %189 = vector.extract_strided_slice %74 {offsets = [0, 0], sizes = [12, 8], strides = [1, 1]} : vector<12x32xf32> to vector<12x8xf32>
    %190 = arith.truncf %189 : vector<12x8xf32> to vector<12x8xbf16>
    %cst_93 = arith.constant dense<0.000000e+00> : vector<12x8xf32>
    %191 = tpu.matmul %188, %190, %cst_93 {dimension_numbers = #tpu.dot_dimension_numbers<[1], [0], [0], [1], [0, 0, 1, 1], [], []>} : vector<12x12xbf16>, vector<12x8xbf16>, vector<12x8xf32> -> vector<12x8xf32>
    %192 = arith.truncf %191 : vector<12x8xf32> to vector<12x8xbf16>
    %193 = vector.extract_strided_slice %45 {offsets = [0, 0], sizes = [8, 32], strides = [1, 1]} : vector<32x32xbf16> to vector<8x32xbf16>
    %cst_94 = arith.constant dense<0.000000e+00> : vector<12x32xf32>
    %194 = tpu.matmul %192, %193, %cst_94 {dimension_numbers = #tpu.dot_dimension_numbers<[1], [0], [0], [1], [0, 0, 1, 1], [], []>} : vector<12x8xbf16>, vector<8x32xbf16>, vector<12x32xf32> -> vector<12x32xf32>
    %195 = vector.broadcast %47 : vector<1x32xf32> to vector<12x32xf32>
    %196 = arith.addf %195, %194 : vector<12x32xf32>
    %197 = vector.extract_strided_slice %70 {offsets = [0, 8], sizes = [12, 8], strides = [1, 1]} : vector<12x32xf32> to vector<12x8xf32>
    %198 = arith.truncf %197 : vector<12x8xf32> to vector<12x8xbf16>
    %199 = vector.extract_strided_slice %72 {offsets = [0, 8], sizes = [12, 8], strides = [1, 1]} : vector<12x32xf32> to vector<12x8xf32>
    %200 = arith.truncf %199 : vector<12x8xf32> to vector<12x8xbf16>
    "tpu.trace_start"() <{level = 10 : i32, message = "ne,me->nm"}> : () -> ()
    %cst_95 = arith.constant dense<0.000000e+00> : vector<12x12xf32>
    %201 = tpu.matmul %198, %200, %cst_95 {dimension_numbers = #tpu.dot_dimension_numbers<[1], [1], [0], [0], [0, 0, 1, 0], [], []>} : vector<12x8xbf16>, vector<12x8xbf16>, vector<12x12xf32> -> vector<12x12xf32>
    "tpu.trace_stop"() : () -> ()
    %202 = arith.addf %201, %17 : vector<12x12xf32>
    %cst_96 = arith.constant dense<0xFF800000> : vector<12xf32>
    %203 = vector.multi_reduction <maximumf>, %202, %cst_96 [1] : vector<12x12xf32> to vector<12xf32>
    %204 = vector.shape_cast %203 : vector<12xf32> to vector<12x1xf32>
    %205 = vector.broadcast %204 : vector<12x1xf32> to vector<12x12xf32>
    %206 = arith.subf %202, %205 : vector<12x12xf32>
    %207 = math.exp %206 : vector<12x12xf32>
    %cst_97 = arith.constant dense<0.000000e+00> : vector<12xf32>
    %208 = vector.multi_reduction <add>, %207, %cst_97 [1] : vector<12x12xf32> to vector<12xf32>
    %209 = vector.shape_cast %208 : vector<12xf32> to vector<12x1xf32>
    %210 = tpu.reciprocal %209 {approx = true} : vector<12x1xf32> -> vector<12x1xf32>
    %211 = vector.broadcast %210 : vector<12x1xf32> to vector<12x12xf32>
    %212 = arith.mulf %207, %211 : vector<12x12xf32>
    %213 = arith.truncf %212 : vector<12x12xf32> to vector<12x12xbf16>
    %214 = vector.extract_strided_slice %74 {offsets = [0, 8], sizes = [12, 8], strides = [1, 1]} : vector<12x32xf32> to vector<12x8xf32>
    %215 = arith.truncf %214 : vector<12x8xf32> to vector<12x8xbf16>
    %cst_98 = arith.constant dense<0.000000e+00> : vector<12x8xf32>
    %216 = tpu.matmul %213, %215, %cst_98 {dimension_numbers = #tpu.dot_dimension_numbers<[1], [0], [0], [1], [0, 0, 1, 1], [], []>} : vector<12x12xbf16>, vector<12x8xbf16>, vector<12x8xf32> -> vector<12x8xf32>
    %217 = arith.truncf %216 : vector<12x8xf32> to vector<12x8xbf16>
    %218 = vector.extract_strided_slice %45 {offsets = [8, 0], sizes = [8, 32], strides = [1, 1]} : vector<32x32xbf16> to vector<8x32xbf16>
    %cst_99 = arith.constant dense<0.000000e+00> : vector<12x32xf32>
    %219 = tpu.matmul %217, %218, %cst_99 {dimension_numbers = #tpu.dot_dimension_numbers<[1], [0], [0], [1], [0, 0, 1, 1], [], []>} : vector<12x8xbf16>, vector<8x32xbf16>, vector<12x32xf32> -> vector<12x32xf32>
    %220 = arith.addf %196, %219 : vector<12x32xf32>
    %221 = vector.extract_strided_slice %70 {offsets = [0, 16], sizes = [12, 8], strides = [1, 1]} : vector<12x32xf32> to vector<12x8xf32>
    %222 = arith.truncf %221 : vector<12x8xf32> to vector<12x8xbf16>
    %223 = vector.extract_strided_slice %72 {offsets = [0, 16], sizes = [12, 8], strides = [1, 1]} : vector<12x32xf32> to vector<12x8xf32>
    %224 = arith.truncf %223 : vector<12x8xf32> to vector<12x8xbf16>
    "tpu.trace_start"() <{level = 10 : i32, message = "ne,me->nm"}> : () -> ()
    %cst_100 = arith.constant dense<0.000000e+00> : vector<12x12xf32>
    %225 = tpu.matmul %222, %224, %cst_100 {dimension_numbers = #tpu.dot_dimension_numbers<[1], [1], [0], [0], [0, 0, 1, 0], [], []>} : vector<12x8xbf16>, vector<12x8xbf16>, vector<12x12xf32> -> vector<12x12xf32>
    "tpu.trace_stop"() : () -> ()
    %226 = arith.addf %225, %17 : vector<12x12xf32>
    %cst_101 = arith.constant dense<0xFF800000> : vector<12xf32>
    %227 = vector.multi_reduction <maximumf>, %226, %cst_101 [1] : vector<12x12xf32> to vector<12xf32>
    %228 = vector.shape_cast %227 : vector<12xf32> to vector<12x1xf32>
    %229 = vector.broadcast %228 : vector<12x1xf32> to vector<12x12xf32>
    %230 = arith.subf %226, %229 : vector<12x12xf32>
    %231 = math.exp %230 : vector<12x12xf32>
    %cst_102 = arith.constant dense<0.000000e+00> : vector<12xf32>
    %232 = vector.multi_reduction <add>, %231, %cst_102 [1] : vector<12x12xf32> to vector<12xf32>
    %233 = vector.shape_cast %232 : vector<12xf32> to vector<12x1xf32>
    %234 = tpu.reciprocal %233 {approx = true} : vector<12x1xf32> -> vector<12x1xf32>
    %235 = vector.broadcast %234 : vector<12x1xf32> to vector<12x12xf32>
    %236 = arith.mulf %231, %235 : vector<12x12xf32>
    %237 = arith.truncf %236 : vector<12x12xf32> to vector<12x12xbf16>
    %238 = vector.extract_strided_slice %74 {offsets = [0, 16], sizes = [12, 8], strides = [1, 1]} : vector<12x32xf32> to vector<12x8xf32>
    %239 = arith.truncf %238 : vector<12x8xf32> to vector<12x8xbf16>
    %cst_103 = arith.constant dense<0.000000e+00> : vector<12x8xf32>
    %240 = tpu.matmul %237, %239, %cst_103 {dimension_numbers = #tpu.dot_dimension_numbers<[1], [0], [0], [1], [0, 0, 1, 1], [], []>} : vector<12x12xbf16>, vector<12x8xbf16>, vector<12x8xf32> -> vector<12x8xf32>
    %241 = arith.truncf %240 : vector<12x8xf32> to vector<12x8xbf16>
    %242 = vector.extract_strided_slice %45 {offsets = [16, 0], sizes = [8, 32], strides = [1, 1]} : vector<32x32xbf16> to vector<8x32xbf16>
    %cst_104 = arith.constant dense<0.000000e+00> : vector<12x32xf32>
    %243 = tpu.matmul %241, %242, %cst_104 {dimension_numbers = #tpu.dot_dimension_numbers<[1], [0], [0], [1], [0, 0, 1, 1], [], []>} : vector<12x8xbf16>, vector<8x32xbf16>, vector<12x32xf32> -> vector<12x32xf32>
    %244 = arith.addf %220, %243 : vector<12x32xf32>
    %245 = vector.extract_strided_slice %70 {offsets = [0, 24], sizes = [12, 8], strides = [1, 1]} : vector<12x32xf32> to vector<12x8xf32>
    %246 = arith.truncf %245 : vector<12x8xf32> to vector<12x8xbf16>
    %247 = vector.extract_strided_slice %72 {offsets = [0, 24], sizes = [12, 8], strides = [1, 1]} : vector<12x32xf32> to vector<12x8xf32>
    %248 = arith.truncf %247 : vector<12x8xf32> to vector<12x8xbf16>
    "tpu.trace_start"() <{level = 10 : i32, message = "ne,me->nm"}> : () -> ()
    %cst_105 = arith.constant dense<0.000000e+00> : vector<12x12xf32>
    %249 = tpu.matmul %246, %248, %cst_105 {dimension_numbers = #tpu.dot_dimension_numbers<[1], [1], [0], [0], [0, 0, 1, 0], [], []>} : vector<12x8xbf16>, vector<12x8xbf16>, vector<12x12xf32> -> vector<12x12xf32>
    "tpu.trace_stop"() : () -> ()
    %250 = arith.addf %249, %17 : vector<12x12xf32>
    %cst_106 = arith.constant dense<0xFF800000> : vector<12xf32>
    %251 = vector.multi_reduction <maximumf>, %250, %cst_106 [1] : vector<12x12xf32> to vector<12xf32>
    %252 = vector.shape_cast %251 : vector<12xf32> to vector<12x1xf32>
    %253 = vector.broadcast %252 : vector<12x1xf32> to vector<12x12xf32>
    %254 = arith.subf %250, %253 : vector<12x12xf32>
    %255 = math.exp %254 : vector<12x12xf32>
    %cst_107 = arith.constant dense<0.000000e+00> : vector<12xf32>
    %256 = vector.multi_reduction <add>, %255, %cst_107 [1] : vector<12x12xf32> to vector<12xf32>
    %257 = vector.shape_cast %256 : vector<12xf32> to vector<12x1xf32>
    %258 = tpu.reciprocal %257 {approx = true} : vector<12x1xf32> -> vector<12x1xf32>
    %259 = vector.broadcast %258 : vector<12x1xf32> to vector<12x12xf32>
    %260 = arith.mulf %255, %259 : vector<12x12xf32>
    %261 = arith.truncf %260 : vector<12x12xf32> to vector<12x12xbf16>
    %262 = vector.extract_strided_slice %74 {offsets = [0, 24], sizes = [12, 8], strides = [1, 1]} : vector<12x32xf32> to vector<12x8xf32>
    %263 = arith.truncf %262 : vector<12x8xf32> to vector<12x8xbf16>
    %cst_108 = arith.constant dense<0.000000e+00> : vector<12x8xf32>
    %264 = tpu.matmul %261, %263, %cst_108 {dimension_numbers = #tpu.dot_dimension_numbers<[1], [0], [0], [1], [0, 0, 1, 1], [], []>} : vector<12x12xbf16>, vector<12x8xbf16>, vector<12x8xf32> -> vector<12x8xf32>
    %265 = arith.truncf %264 : vector<12x8xf32> to vector<12x8xbf16>
    %266 = vector.extract_strided_slice %45 {offsets = [24, 0], sizes = [8, 32], strides = [1, 1]} : vector<32x32xbf16> to vector<8x32xbf16>
    %cst_109 = arith.constant dense<0.000000e+00> : vector<12x32xf32>
    %267 = tpu.matmul %265, %266, %cst_109 {dimension_numbers = #tpu.dot_dimension_numbers<[1], [0], [0], [1], [0, 0, 1, 1], [], []>} : vector<12x8xbf16>, vector<8x32xbf16>, vector<12x32xf32> -> vector<12x32xf32>
    %268 = arith.addf %244, %267 : vector<12x32xf32>
    %269 = arith.truncf %1 : vector<16x32xf32> to vector<16x32xbf16>
    %cst_110 = arith.constant dense<0.000000e+00> : vector<16x64xf32>
    %270 = tpu.matmul %269, %49, %cst_110 {dimension_numbers = #tpu.dot_dimension_numbers<[1], [0], [0], [1], [0, 0, 1, 1], [], []>} : vector<16x32xbf16>, vector<32x64xbf16>, vector<16x64xf32> -> vector<16x64xf32>
    %271 = arith.truncf %171 : vector<16x32xf32> to vector<16x32xbf16>
    %cst_111 = arith.constant dense<0.000000e+00> : vector<16x64xf32>
    %272 = tpu.matmul %271, %51, %cst_111 {dimension_numbers = #tpu.dot_dimension_numbers<[1], [0], [0], [1], [0, 0, 1, 1], [], []>} : vector<16x32xbf16>, vector<32x64xbf16>, vector<16x64xf32> -> vector<16x64xf32>
    %273 = arith.addf %270, %272 : vector<16x64xf32>
    %274 = vector.broadcast %53 : vector<1x64xf32> to vector<16x64xf32>
    %275 = arith.addf %273, %274 : vector<16x64xf32>
    %cst_112 = arith.constant dense<0.000000e+00> : vector<64xf32>
    %276 = vector.multi_reduction <add>, %275, %cst_112 [0] : vector<16x64xf32> to vector<64xf32>
    %277 = vector.shape_cast %276 : vector<64xf32> to vector<1x64xf32>
    %cst_113 = arith.constant 1.600000e+01 : f32
    %278 = vector.broadcast %cst_113 : f32 to vector<1x64xf32>
    %279 = arith.divf %277, %278 : vector<1x64xf32>
    %280 = vector.broadcast %279 : vector<1x64xf32> to vector<16x64xf32>
    %281 = arith.subf %275, %280 : vector<16x64xf32>
    %282 = arith.mulf %281, %281 : vector<16x64xf32>
    %cst_114 = arith.constant dense<0.000000e+00> : vector<64xf32>
    %283 = vector.multi_reduction <add>, %282, %cst_114 [0] : vector<16x64xf32> to vector<64xf32>
    %284 = vector.shape_cast %283 : vector<64xf32> to vector<1x64xf32>
    %cst_115 = arith.constant 1.600000e+01 : f32
    %285 = vector.broadcast %cst_115 : f32 to vector<1x64xf32>
    %286 = arith.divf %284, %285 : vector<1x64xf32>
    %287 = vector.broadcast %279 : vector<1x64xf32> to vector<16x64xf32>
    %288 = arith.subf %275, %287 : vector<16x64xf32>
    %cst_116 = arith.constant 9.99999974E-6 : f32
    %289 = vector.broadcast %cst_116 : f32 to vector<1x64xf32>
    %290 = arith.addf %286, %289 : vector<1x64xf32>
    %291 = math.rsqrt %290 : vector<1x64xf32>
    %292 = vector.broadcast %291 : vector<1x64xf32> to vector<16x64xf32>
    %293 = arith.mulf %288, %292 : vector<16x64xf32>
    %cst_117 = arith.constant 0.000000e+00 : f32
    %294 = vector.broadcast %cst_117 : f32 to vector<16x64xf32>
    %295 = arith.maximumf %293, %294 : vector<16x64xf32>
    %296 = arith.truncf %295 : vector<16x64xf32> to vector<16x64xbf16>
    %cst_118 = arith.constant dense<0.000000e+00> : vector<16x32xf32>
    %297 = tpu.matmul %296, %55, %cst_118 {dimension_numbers = #tpu.dot_dimension_numbers<[1], [0], [0], [1], [0, 0, 1, 1], [], []>} : vector<16x64xbf16>, vector<64x32xbf16>, vector<16x32xf32> -> vector<16x32xf32>
    %298 = vector.broadcast %57 : vector<1x32xf32> to vector<16x32xf32>
    %299 = arith.addf %297, %298 : vector<16x32xf32>
    %300 = arith.addf %1, %299 : vector<16x32xf32>
    %301 = arith.truncf %3 : vector<12x32xf32> to vector<12x32xbf16>
    %cst_119 = arith.constant dense<0.000000e+00> : vector<12x64xf32>
    %302 = tpu.matmul %301, %49, %cst_119 {dimension_numbers = #tpu.dot_dimension_numbers<[1], [0], [0], [1], [0, 0, 1, 1], [], []>} : vector<12x32xbf16>, vector<32x64xbf16>, vector<12x64xf32> -> vector<12x64xf32>
    %303 = arith.truncf %268 : vector<12x32xf32> to vector<12x32xbf16>
    %cst_120 = arith.constant dense<0.000000e+00> : vector<12x64xf32>
    %304 = tpu.matmul %303, %51, %cst_120 {dimension_numbers = #tpu.dot_dimension_numbers<[1], [0], [0], [1], [0, 0, 1, 1], [], []>} : vector<12x32xbf16>, vector<32x64xbf16>, vector<12x64xf32> -> vector<12x64xf32>
    %305 = arith.addf %302, %304 : vector<12x64xf32>
    %306 = vector.broadcast %53 : vector<1x64xf32> to vector<12x64xf32>
    %307 = arith.addf %305, %306 : vector<12x64xf32>
    %cst_121 = arith.constant dense<0.000000e+00> : vector<64xf32>
    %308 = vector.multi_reduction <add>, %307, %cst_121 [0] : vector<12x64xf32> to vector<64xf32>
    %309 = vector.shape_cast %308 : vector<64xf32> to vector<1x64xf32>
    %cst_122 = arith.constant 1.200000e+01 : f32
    %310 = vector.broadcast %cst_122 : f32 to vector<1x64xf32>
    %311 = arith.divf %309, %310 : vector<1x64xf32>
    %312 = vector.broadcast %311 : vector<1x64xf32> to vector<12x64xf32>
    %313 = arith.subf %307, %312 : vector<12x64xf32>
    %314 = arith.mulf %313, %313 : vector<12x64xf32>
    %cst_123 = arith.constant dense<0.000000e+00> : vector<64xf32>
    %315 = vector.multi_reduction <add>, %314, %cst_123 [0] : vector<12x64xf32> to vector<64xf32>
    %316 = vector.shape_cast %315 : vector<64xf32> to vector<1x64xf32>
    %cst_124 = arith.constant 1.200000e+01 : f32
    %317 = vector.broadcast %cst_124 : f32 to vector<1x64xf32>
    %318 = arith.divf %316, %317 : vector<1x64xf32>
    %319 = vector.broadcast %311 : vector<1x64xf32> to vector<12x64xf32>
    %320 = arith.subf %307, %319 : vector<12x64xf32>
    %cst_125 = arith.constant 9.99999974E-6 : f32
    %321 = vector.broadcast %cst_125 : f32 to vector<1x64xf32>
    %322 = arith.addf %318, %321 : vector<1x64xf32>
    %323 = math.rsqrt %322 : vector<1x64xf32>
    %324 = vector.broadcast %323 : vector<1x64xf32> to vector<12x64xf32>
    %325 = arith.mulf %320, %324 : vector<12x64xf32>
    %cst_126 = arith.constant 0.000000e+00 : f32
    %326 = vector.broadcast %cst_126 : f32 to vector<12x64xf32>
    %327 = arith.maximumf %325, %326 : vector<12x64xf32>
    %328 = arith.truncf %327 : vector<12x64xf32> to vector<12x64xbf16>
    %cst_127 = arith.constant dense<0.000000e+00> : vector<12x32xf32>
    %329 = tpu.matmul %328, %55, %cst_127 {dimension_numbers = #tpu.dot_dimension_numbers<[1], [0], [0], [1], [0, 0, 1, 1], [], []>} : vector<12x64xbf16>, vector<64x32xbf16>, vector<12x32xf32> -> vector<12x32xf32>
    %330 = vector.broadcast %57 : vector<1x32xf32> to vector<12x32xf32>
    %331 = arith.addf %329, %330 : vector<12x32xf32>
    %332 = arith.addf %3, %331 : vector<12x32xf32>
    %c1 = arith.constant 1 : index
    %c0_128 = arith.constant 0 : index
    %c0_129 = arith.constant 0 : index
    %333 = vector.load %arg7[%c1, %c0_128, %c0_129] : memref<2x32x32xbf16, #tpu.memory_space<vmem>>, vector<1x32x32xbf16>
    %334 = vector.shape_cast %333 : vector<1x32x32xbf16> to vector<32x32xbf16>
    %c1_130 = arith.constant 1 : index
    %c0_131 = arith.constant 0 : index
    %c0_132 = arith.constant 0 : index
    %335 = vector.load %arg8[%c1_130, %c0_131, %c0_132] : memref<2x1x32xf32, #tpu.memory_space<vmem>>, vector<1x1x32xf32>
    %336 = vector.shape_cast %335 : vector<1x1x32xf32> to vector<1x32xf32>
    %c1_133 = arith.constant 1 : index
    %c0_134 = arith.constant 0 : index
    %c0_135 = arith.constant 0 : index
    %337 = vector.load %arg9[%c1_133, %c0_134, %c0_135] : memref<2x32x32xbf16, #tpu.memory_space<vmem>>, vector<1x32x32xbf16>
    %338 = vector.shape_cast %337 : vector<1x32x32xbf16> to vector<32x32xbf16>
    %c1_136 = arith.constant 1 : index
    %c0_137 = arith.constant 0 : index
    %c0_138 = arith.constant 0 : index
    %339 = vector.load %arg10[%c1_136, %c0_137, %c0_138] : memref<2x1x32xf32, #tpu.memory_space<vmem>>, vector<1x1x32xf32>
    %340 = vector.shape_cast %339 : vector<1x1x32xf32> to vector<1x32xf32>
    %c1_139 = arith.constant 1 : index
    %c0_140 = arith.constant 0 : index
    %c0_141 = arith.constant 0 : index
    %341 = vector.load %arg11[%c1_139, %c0_140, %c0_141] : memref<2x32x32xbf16, #tpu.memory_space<vmem>>, vector<1x32x32xbf16>
    %342 = vector.shape_cast %341 : vector<1x32x32xbf16> to vector<32x32xbf16>
    %c1_142 = arith.constant 1 : index
    %c0_143 = arith.constant 0 : index
    %c0_144 = arith.constant 0 : index
    %343 = vector.load %arg12[%c1_142, %c0_143, %c0_144] : memref<2x1x32xf32, #tpu.memory_space<vmem>>, vector<1x1x32xf32>
    %344 = vector.shape_cast %343 : vector<1x1x32xf32> to vector<1x32xf32>
    %c1_145 = arith.constant 1 : index
    %c0_146 = arith.constant 0 : index
    %c0_147 = arith.constant 0 : index
    %345 = vector.load %arg13[%c1_145, %c0_146, %c0_147] : memref<2x32x32xbf16, #tpu.memory_space<vmem>>, vector<1x32x32xbf16>
    %346 = vector.shape_cast %345 : vector<1x32x32xbf16> to vector<32x32xbf16>
    %c1_148 = arith.constant 1 : index
    %c0_149 = arith.constant 0 : index
    %c0_150 = arith.constant 0 : index
    %347 = vector.load %arg14[%c1_148, %c0_149, %c0_150] : memref<2x1x32xf32, #tpu.memory_space<vmem>>, vector<1x1x32xf32>
    %348 = vector.shape_cast %347 : vector<1x1x32xf32> to vector<1x32xf32>
    %c1_151 = arith.constant 1 : index
    %c0_152 = arith.constant 0 : index
    %c0_153 = arith.constant 0 : index
    %349 = vector.load %arg15[%c1_151, %c0_152, %c0_153] : memref<2x32x64xbf16, #tpu.memory_space<vmem>>, vector<1x32x64xbf16>
    %350 = vector.shape_cast %349 : vector<1x32x64xbf16> to vector<32x64xbf16>
    %c1_154 = arith.constant 1 : index
    %c0_155 = arith.constant 0 : index
    %c0_156 = arith.constant 0 : index
    %351 = vector.load %arg16[%c1_154, %c0_155, %c0_156] : memref<2x32x64xbf16, #tpu.memory_space<vmem>>, vector<1x32x64xbf16>
    %352 = vector.shape_cast %351 : vector<1x32x64xbf16> to vector<32x64xbf16>
    %c1_157 = arith.constant 1 : index
    %c0_158 = arith.constant 0 : index
    %c0_159 = arith.constant 0 : index
    %353 = vector.load %arg17[%c1_157, %c0_158, %c0_159] : memref<2x1x64xf32, #tpu.memory_space<vmem>>, vector<1x1x64xf32>
    %354 = vector.shape_cast %353 : vector<1x1x64xf32> to vector<1x64xf32>
    %c1_160 = arith.constant 1 : index
    %c0_161 = arith.constant 0 : index
    %c0_162 = arith.constant 0 : index
    %355 = vector.load %arg18[%c1_160, %c0_161, %c0_162] : memref<2x64x32xbf16, #tpu.memory_space<vmem>>, vector<1x64x32xbf16>
    %356 = vector.shape_cast %355 : vector<1x64x32xbf16> to vector<64x32xbf16>
    %c1_163 = arith.constant 1 : index
    %c0_164 = arith.constant 0 : index
    %c0_165 = arith.constant 0 : index
    %357 = vector.load %arg19[%c1_163, %c0_164, %c0_165] : memref<2x1x32xf32, #tpu.memory_space<vmem>>, vector<1x1x32xf32>
    %358 = vector.shape_cast %357 : vector<1x1x32xf32> to vector<1x32xf32>
    %359 = tpu.concatenate %300, %332 in 0 : vector<16x32xf32>, vector<12x32xf32> -> vector<28x32xf32>
    %360 = arith.truncf %359 : vector<28x32xf32> to vector<28x32xbf16>
    %cst_166 = arith.constant dense<0.000000e+00> : vector<28x32xf32>
    %361 = tpu.matmul %360, %334, %cst_166 {dimension_numbers = #tpu.dot_dimension_numbers<[1], [0], [0], [1], [0, 0, 1, 1], [], []>} : vector<28x32xbf16>, vector<32x32xbf16>, vector<28x32xf32> -> vector<28x32xf32>
    %362 = vector.broadcast %336 : vector<1x32xf32> to vector<28x32xf32>
    %363 = arith.addf %361, %362 : vector<28x32xf32>
    %cst_167 = arith.constant dense<0.000000e+00> : vector<28x32xf32>
    %364 = tpu.matmul %360, %338, %cst_167 {dimension_numbers = #tpu.dot_dimension_numbers<[1], [0], [0], [1], [0, 0, 1, 1], [], []>} : vector<28x32xbf16>, vector<32x32xbf16>, vector<28x32xf32> -> vector<28x32xf32>
    %365 = vector.broadcast %340 : vector<1x32xf32> to vector<28x32xf32>
    %366 = arith.addf %364, %365 : vector<28x32xf32>
    %cst_168 = arith.constant dense<0.000000e+00> : vector<28x32xf32>
    %367 = tpu.matmul %360, %342, %cst_168 {dimension_numbers = #tpu.dot_dimension_numbers<[1], [0], [0], [1], [0, 0, 1, 1], [], []>} : vector<28x32xbf16>, vector<32x32xbf16>, vector<28x32xf32> -> vector<28x32xf32>
    %368 = vector.broadcast %344 : vector<1x32xf32> to vector<28x32xf32>
    %369 = arith.addf %367, %368 : vector<28x32xf32>
    %370 = vector.extract_strided_slice %363 {offsets = [0, 0], sizes = [16, 32], strides = [1, 1]} : vector<28x32xf32> to vector<16x32xf32>
    %371 = vector.extract_strided_slice %363 {offsets = [16, 0], sizes = [12, 32], strides = [1, 1]} : vector<28x32xf32> to vector<12x32xf32>
    %372 = vector.extract_strided_slice %366 {offsets = [0, 0], sizes = [16, 32], strides = [1, 1]} : vector<28x32xf32> to vector<16x32xf32>
    %373 = vector.extract_strided_slice %366 {offsets = [16, 0], sizes = [12, 32], strides = [1, 1]} : vector<28x32xf32> to vector<12x32xf32>
    %374 = vector.extract_strided_slice %369 {offsets = [0, 0], sizes = [16, 32], strides = [1, 1]} : vector<28x32xf32> to vector<16x32xf32>
    %375 = vector.extract_strided_slice %369 {offsets = [16, 0], sizes = [12, 32], strides = [1, 1]} : vector<28x32xf32> to vector<12x32xf32>
    %376 = vector.extract_strided_slice %370 {offsets = [0, 0], sizes = [16, 8], strides = [1, 1]} : vector<16x32xf32> to vector<16x8xf32>
    %377 = arith.truncf %376 : vector<16x8xf32> to vector<16x8xbf16>
    %378 = vector.extract_strided_slice %373 {offsets = [0, 0], sizes = [12, 8], strides = [1, 1]} : vector<12x32xf32> to vector<12x8xf32>
    %379 = arith.truncf %378 : vector<12x8xf32> to vector<12x8xbf16>
    "tpu.trace_start"() <{level = 10 : i32, message = "ne,me->nm"}> : () -> ()
    %cst_169 = arith.constant dense<0.000000e+00> : vector<16x12xf32>
    %380 = tpu.matmul %377, %379, %cst_169 {dimension_numbers = #tpu.dot_dimension_numbers<[1], [1], [0], [0], [0, 0, 1, 0], [], []>} : vector<16x8xbf16>, vector<12x8xbf16>, vector<16x12xf32> -> vector<16x12xf32>
    "tpu.trace_stop"() : () -> ()
    %381 = arith.addf %380, %24 : vector<16x12xf32>
    %cst_170 = arith.constant dense<0xFF800000> : vector<16xf32>
    %382 = vector.multi_reduction <maximumf>, %381, %cst_170 [1] : vector<16x12xf32> to vector<16xf32>
    %383 = vector.shape_cast %382 : vector<16xf32> to vector<16x1xf32>
    %384 = vector.broadcast %383 : vector<16x1xf32> to vector<16x12xf32>
    %385 = arith.subf %381, %384 : vector<16x12xf32>
    %386 = math.exp %385 : vector<16x12xf32>
    %cst_171 = arith.constant dense<0.000000e+00> : vector<16xf32>
    %387 = vector.multi_reduction <add>, %386, %cst_171 [1] : vector<16x12xf32> to vector<16xf32>
    %388 = vector.shape_cast %387 : vector<16xf32> to vector<16x1xf32>
    %389 = tpu.reciprocal %388 {approx = true} : vector<16x1xf32> -> vector<16x1xf32>
    %390 = vector.broadcast %389 : vector<16x1xf32> to vector<16x12xf32>
    %391 = arith.mulf %386, %390 : vector<16x12xf32>
    %392 = arith.truncf %391 : vector<16x12xf32> to vector<16x12xbf16>
    %393 = vector.extract_strided_slice %375 {offsets = [0, 0], sizes = [12, 8], strides = [1, 1]} : vector<12x32xf32> to vector<12x8xf32>
    %394 = arith.truncf %393 : vector<12x8xf32> to vector<12x8xbf16>
    %cst_172 = arith.constant dense<0.000000e+00> : vector<16x8xf32>
    %395 = tpu.matmul %392, %394, %cst_172 {dimension_numbers = #tpu.dot_dimension_numbers<[1], [0], [0], [1], [0, 0, 1, 1], [], []>} : vector<16x12xbf16>, vector<12x8xbf16>, vector<16x8xf32> -> vector<16x8xf32>
    %396 = arith.truncf %395 : vector<16x8xf32> to vector<16x8xbf16>
    %397 = vector.extract_strided_slice %346 {offsets = [0, 0], sizes = [8, 32], strides = [1, 1]} : vector<32x32xbf16> to vector<8x32xbf16>
    %cst_173 = arith.constant dense<0.000000e+00> : vector<16x32xf32>
    %398 = tpu.matmul %396, %397, %cst_173 {dimension_numbers = #tpu.dot_dimension_numbers<[1], [0], [0], [1], [0, 0, 1, 1], [], []>} : vector<16x8xbf16>, vector<8x32xbf16>, vector<16x32xf32> -> vector<16x32xf32>
    %399 = vector.broadcast %348 : vector<1x32xf32> to vector<16x32xf32>
    %400 = arith.addf %399, %398 : vector<16x32xf32>
    %401 = vector.extract_strided_slice %370 {offsets = [0, 8], sizes = [16, 8], strides = [1, 1]} : vector<16x32xf32> to vector<16x8xf32>
    %402 = arith.truncf %401 : vector<16x8xf32> to vector<16x8xbf16>
    %403 = vector.extract_strided_slice %373 {offsets = [0, 8], sizes = [12, 8], strides = [1, 1]} : vector<12x32xf32> to vector<12x8xf32>
    %404 = arith.truncf %403 : vector<12x8xf32> to vector<12x8xbf16>
    "tpu.trace_start"() <{level = 10 : i32, message = "ne,me->nm"}> : () -> ()
    %cst_174 = arith.constant dense<0.000000e+00> : vector<16x12xf32>
    %405 = tpu.matmul %402, %404, %cst_174 {dimension_numbers = #tpu.dot_dimension_numbers<[1], [1], [0], [0], [0, 0, 1, 0], [], []>} : vector<16x8xbf16>, vector<12x8xbf16>, vector<16x12xf32> -> vector<16x12xf32>
    "tpu.trace_stop"() : () -> ()
    %406 = arith.addf %405, %24 : vector<16x12xf32>
    %cst_175 = arith.constant dense<0xFF800000> : vector<16xf32>
    %407 = vector.multi_reduction <maximumf>, %406, %cst_175 [1] : vector<16x12xf32> to vector<16xf32>
    %408 = vector.shape_cast %407 : vector<16xf32> to vector<16x1xf32>
    %409 = vector.broadcast %408 : vector<16x1xf32> to vector<16x12xf32>
    %410 = arith.subf %406, %409 : vector<16x12xf32>
    %411 = math.exp %410 : vector<16x12xf32>
    %cst_176 = arith.constant dense<0.000000e+00> : vector<16xf32>
    %412 = vector.multi_reduction <add>, %411, %cst_176 [1] : vector<16x12xf32> to vector<16xf32>
    %413 = vector.shape_cast %412 : vector<16xf32> to vector<16x1xf32>
    %414 = tpu.reciprocal %413 {approx = true} : vector<16x1xf32> -> vector<16x1xf32>
    %415 = vector.broadcast %414 : vector<16x1xf32> to vector<16x12xf32>
    %416 = arith.mulf %411, %415 : vector<16x12xf32>
    %417 = arith.truncf %416 : vector<16x12xf32> to vector<16x12xbf16>
    %418 = vector.extract_strided_slice %375 {offsets = [0, 8], sizes = [12, 8], strides = [1, 1]} : vector<12x32xf32> to vector<12x8xf32>
    %419 = arith.truncf %418 : vector<12x8xf32> to vector<12x8xbf16>
    %cst_177 = arith.constant dense<0.000000e+00> : vector<16x8xf32>
    %420 = tpu.matmul %417, %419, %cst_177 {dimension_numbers = #tpu.dot_dimension_numbers<[1], [0], [0], [1], [0, 0, 1, 1], [], []>} : vector<16x12xbf16>, vector<12x8xbf16>, vector<16x8xf32> -> vector<16x8xf32>
    %421 = arith.truncf %420 : vector<16x8xf32> to vector<16x8xbf16>
    %422 = vector.extract_strided_slice %346 {offsets = [8, 0], sizes = [8, 32], strides = [1, 1]} : vector<32x32xbf16> to vector<8x32xbf16>
    %cst_178 = arith.constant dense<0.000000e+00> : vector<16x32xf32>
    %423 = tpu.matmul %421, %422, %cst_178 {dimension_numbers = #tpu.dot_dimension_numbers<[1], [0], [0], [1], [0, 0, 1, 1], [], []>} : vector<16x8xbf16>, vector<8x32xbf16>, vector<16x32xf32> -> vector<16x32xf32>
    %424 = arith.addf %400, %423 : vector<16x32xf32>
    %425 = vector.extract_strided_slice %370 {offsets = [0, 16], sizes = [16, 8], strides = [1, 1]} : vector<16x32xf32> to vector<16x8xf32>
    %426 = arith.truncf %425 : vector<16x8xf32> to vector<16x8xbf16>
    %427 = vector.extract_strided_slice %373 {offsets = [0, 16], sizes = [12, 8], strides = [1, 1]} : vector<12x32xf32> to vector<12x8xf32>
    %428 = arith.truncf %427 : vector<12x8xf32> to vector<12x8xbf16>
    "tpu.trace_start"() <{level = 10 : i32, message = "ne,me->nm"}> : () -> ()
    %cst_179 = arith.constant dense<0.000000e+00> : vector<16x12xf32>
    %429 = tpu.matmul %426, %428, %cst_179 {dimension_numbers = #tpu.dot_dimension_numbers<[1], [1], [0], [0], [0, 0, 1, 0], [], []>} : vector<16x8xbf16>, vector<12x8xbf16>, vector<16x12xf32> -> vector<16x12xf32>
    "tpu.trace_stop"() : () -> ()
    %430 = arith.addf %429, %24 : vector<16x12xf32>
    %cst_180 = arith.constant dense<0xFF800000> : vector<16xf32>
    %431 = vector.multi_reduction <maximumf>, %430, %cst_180 [1] : vector<16x12xf32> to vector<16xf32>
    %432 = vector.shape_cast %431 : vector<16xf32> to vector<16x1xf32>
    %433 = vector.broadcast %432 : vector<16x1xf32> to vector<16x12xf32>
    %434 = arith.subf %430, %433 : vector<16x12xf32>
    %435 = math.exp %434 : vector<16x12xf32>
    %cst_181 = arith.constant dense<0.000000e+00> : vector<16xf32>
    %436 = vector.multi_reduction <add>, %435, %cst_181 [1] : vector<16x12xf32> to vector<16xf32>
    %437 = vector.shape_cast %436 : vector<16xf32> to vector<16x1xf32>
    %438 = tpu.reciprocal %437 {approx = true} : vector<16x1xf32> -> vector<16x1xf32>
    %439 = vector.broadcast %438 : vector<16x1xf32> to vector<16x12xf32>
    %440 = arith.mulf %435, %439 : vector<16x12xf32>
    %441 = arith.truncf %440 : vector<16x12xf32> to vector<16x12xbf16>
    %442 = vector.extract_strided_slice %375 {offsets = [0, 16], sizes = [12, 8], strides = [1, 1]} : vector<12x32xf32> to vector<12x8xf32>
    %443 = arith.truncf %442 : vector<12x8xf32> to vector<12x8xbf16>
    %cst_182 = arith.constant dense<0.000000e+00> : vector<16x8xf32>
    %444 = tpu.matmul %441, %443, %cst_182 {dimension_numbers = #tpu.dot_dimension_numbers<[1], [0], [0], [1], [0, 0, 1, 1], [], []>} : vector<16x12xbf16>, vector<12x8xbf16>, vector<16x8xf32> -> vector<16x8xf32>
    %445 = arith.truncf %444 : vector<16x8xf32> to vector<16x8xbf16>
    %446 = vector.extract_strided_slice %346 {offsets = [16, 0], sizes = [8, 32], strides = [1, 1]} : vector<32x32xbf16> to vector<8x32xbf16>
    %cst_183 = arith.constant dense<0.000000e+00> : vector<16x32xf32>
    %447 = tpu.matmul %445, %446, %cst_183 {dimension_numbers = #tpu.dot_dimension_numbers<[1], [0], [0], [1], [0, 0, 1, 1], [], []>} : vector<16x8xbf16>, vector<8x32xbf16>, vector<16x32xf32> -> vector<16x32xf32>
    %448 = arith.addf %424, %447 : vector<16x32xf32>
    %449 = vector.extract_strided_slice %370 {offsets = [0, 24], sizes = [16, 8], strides = [1, 1]} : vector<16x32xf32> to vector<16x8xf32>
    %450 = arith.truncf %449 : vector<16x8xf32> to vector<16x8xbf16>
    %451 = vector.extract_strided_slice %373 {offsets = [0, 24], sizes = [12, 8], strides = [1, 1]} : vector<12x32xf32> to vector<12x8xf32>
    %452 = arith.truncf %451 : vector<12x8xf32> to vector<12x8xbf16>
    "tpu.trace_start"() <{level = 10 : i32, message = "ne,me->nm"}> : () -> ()
    %cst_184 = arith.constant dense<0.000000e+00> : vector<16x12xf32>
    %453 = tpu.matmul %450, %452, %cst_184 {dimension_numbers = #tpu.dot_dimension_numbers<[1], [1], [0], [0], [0, 0, 1, 0], [], []>} : vector<16x8xbf16>, vector<12x8xbf16>, vector<16x12xf32> -> vector<16x12xf32>
    "tpu.trace_stop"() : () -> ()
    %454 = arith.addf %453, %24 : vector<16x12xf32>
    %cst_185 = arith.constant dense<0xFF800000> : vector<16xf32>
    %455 = vector.multi_reduction <maximumf>, %454, %cst_185 [1] : vector<16x12xf32> to vector<16xf32>
    %456 = vector.shape_cast %455 : vector<16xf32> to vector<16x1xf32>
    %457 = vector.broadcast %456 : vector<16x1xf32> to vector<16x12xf32>
    %458 = arith.subf %454, %457 : vector<16x12xf32>
    %459 = math.exp %458 : vector<16x12xf32>
    %cst_186 = arith.constant dense<0.000000e+00> : vector<16xf32>
    %460 = vector.multi_reduction <add>, %459, %cst_186 [1] : vector<16x12xf32> to vector<16xf32>
    %461 = vector.shape_cast %460 : vector<16xf32> to vector<16x1xf32>
    %462 = tpu.reciprocal %461 {approx = true} : vector<16x1xf32> -> vector<16x1xf32>
    %463 = vector.broadcast %462 : vector<16x1xf32> to vector<16x12xf32>
    %464 = arith.mulf %459, %463 : vector<16x12xf32>
    %465 = arith.truncf %464 : vector<16x12xf32> to vector<16x12xbf16>
    %466 = vector.extract_strided_slice %375 {offsets = [0, 24], sizes = [12, 8], strides = [1, 1]} : vector<12x32xf32> to vector<12x8xf32>
    %467 = arith.truncf %466 : vector<12x8xf32> to vector<12x8xbf16>
    %cst_187 = arith.constant dense<0.000000e+00> : vector<16x8xf32>
    %468 = tpu.matmul %465, %467, %cst_187 {dimension_numbers = #tpu.dot_dimension_numbers<[1], [0], [0], [1], [0, 0, 1, 1], [], []>} : vector<16x12xbf16>, vector<12x8xbf16>, vector<16x8xf32> -> vector<16x8xf32>
    %469 = arith.truncf %468 : vector<16x8xf32> to vector<16x8xbf16>
    %470 = vector.extract_strided_slice %346 {offsets = [24, 0], sizes = [8, 32], strides = [1, 1]} : vector<32x32xbf16> to vector<8x32xbf16>
    %cst_188 = arith.constant dense<0.000000e+00> : vector<16x32xf32>
    %471 = tpu.matmul %469, %470, %cst_188 {dimension_numbers = #tpu.dot_dimension_numbers<[1], [0], [0], [1], [0, 0, 1, 1], [], []>} : vector<16x8xbf16>, vector<8x32xbf16>, vector<16x32xf32> -> vector<16x32xf32>
    %472 = arith.addf %448, %471 : vector<16x32xf32>
    %473 = vector.extract_strided_slice %371 {offsets = [0, 0], sizes = [12, 8], strides = [1, 1]} : vector<12x32xf32> to vector<12x8xf32>
    %474 = arith.truncf %473 : vector<12x8xf32> to vector<12x8xbf16>
    %475 = vector.extract_strided_slice %372 {offsets = [0, 0], sizes = [16, 8], strides = [1, 1]} : vector<16x32xf32> to vector<16x8xf32>
    %476 = arith.truncf %475 : vector<16x8xf32> to vector<16x8xbf16>
    "tpu.trace_start"() <{level = 10 : i32, message = "ne,me->nm"}> : () -> ()
    %cst_189 = arith.constant dense<0.000000e+00> : vector<12x16xf32>
    %477 = tpu.matmul %474, %476, %cst_189 {dimension_numbers = #tpu.dot_dimension_numbers<[1], [1], [0], [0], [0, 0, 1, 0], [], []>} : vector<12x8xbf16>, vector<16x8xbf16>, vector<12x16xf32> -> vector<12x16xf32>
    "tpu.trace_stop"() : () -> ()
    %478 = arith.addf %477, %31 : vector<12x16xf32>
    %cst_190 = arith.constant dense<0xFF800000> : vector<12xf32>
    %479 = vector.multi_reduction <maximumf>, %478, %cst_190 [1] : vector<12x16xf32> to vector<12xf32>
    %480 = vector.shape_cast %479 : vector<12xf32> to vector<12x1xf32>
    %481 = vector.broadcast %480 : vector<12x1xf32> to vector<12x16xf32>
    %482 = arith.subf %478, %481 : vector<12x16xf32>
    %483 = math.exp %482 : vector<12x16xf32>
    %cst_191 = arith.constant dense<0.000000e+00> : vector<12xf32>
    %484 = vector.multi_reduction <add>, %483, %cst_191 [1] : vector<12x16xf32> to vector<12xf32>
    %485 = vector.shape_cast %484 : vector<12xf32> to vector<12x1xf32>
    %486 = tpu.reciprocal %485 {approx = true} : vector<12x1xf32> -> vector<12x1xf32>
    %487 = vector.broadcast %486 : vector<12x1xf32> to vector<12x16xf32>
    %488 = arith.mulf %483, %487 : vector<12x16xf32>
    %489 = arith.truncf %488 : vector<12x16xf32> to vector<12x16xbf16>
    %490 = vector.extract_strided_slice %374 {offsets = [0, 0], sizes = [16, 8], strides = [1, 1]} : vector<16x32xf32> to vector<16x8xf32>
    %491 = arith.truncf %490 : vector<16x8xf32> to vector<16x8xbf16>
    %cst_192 = arith.constant dense<0.000000e+00> : vector<12x8xf32>
    %492 = tpu.matmul %489, %491, %cst_192 {dimension_numbers = #tpu.dot_dimension_numbers<[1], [0], [0], [1], [0, 0, 1, 1], [], []>} : vector<12x16xbf16>, vector<16x8xbf16>, vector<12x8xf32> -> vector<12x8xf32>
    %493 = arith.truncf %492 : vector<12x8xf32> to vector<12x8xbf16>
    %494 = vector.extract_strided_slice %346 {offsets = [0, 0], sizes = [8, 32], strides = [1, 1]} : vector<32x32xbf16> to vector<8x32xbf16>
    %cst_193 = arith.constant dense<0.000000e+00> : vector<12x32xf32>
    %495 = tpu.matmul %493, %494, %cst_193 {dimension_numbers = #tpu.dot_dimension_numbers<[1], [0], [0], [1], [0, 0, 1, 1], [], []>} : vector<12x8xbf16>, vector<8x32xbf16>, vector<12x32xf32> -> vector<12x32xf32>
    %496 = vector.broadcast %348 : vector<1x32xf32> to vector<12x32xf32>
    %497 = arith.addf %496, %495 : vector<12x32xf32>
    %498 = vector.extract_strided_slice %371 {offsets = [0, 8], sizes = [12, 8], strides = [1, 1]} : vector<12x32xf32> to vector<12x8xf32>
    %499 = arith.truncf %498 : vector<12x8xf32> to vector<12x8xbf16>
    %500 = vector.extract_strided_slice %372 {offsets = [0, 8], sizes = [16, 8], strides = [1, 1]} : vector<16x32xf32> to vector<16x8xf32>
    %501 = arith.truncf %500 : vector<16x8xf32> to vector<16x8xbf16>
    "tpu.trace_start"() <{level = 10 : i32, message = "ne,me->nm"}> : () -> ()
    %cst_194 = arith.constant dense<0.000000e+00> : vector<12x16xf32>
    %502 = tpu.matmul %499, %501, %cst_194 {dimension_numbers = #tpu.dot_dimension_numbers<[1], [1], [0], [0], [0, 0, 1, 0], [], []>} : vector<12x8xbf16>, vector<16x8xbf16>, vector<12x16xf32> -> vector<12x16xf32>
    "tpu.trace_stop"() : () -> ()
    %503 = arith.addf %502, %31 : vector<12x16xf32>
    %cst_195 = arith.constant dense<0xFF800000> : vector<12xf32>
    %504 = vector.multi_reduction <maximumf>, %503, %cst_195 [1] : vector<12x16xf32> to vector<12xf32>
    %505 = vector.shape_cast %504 : vector<12xf32> to vector<12x1xf32>
    %506 = vector.broadcast %505 : vector<12x1xf32> to vector<12x16xf32>
    %507 = arith.subf %503, %506 : vector<12x16xf32>
    %508 = math.exp %507 : vector<12x16xf32>
    %cst_196 = arith.constant dense<0.000000e+00> : vector<12xf32>
    %509 = vector.multi_reduction <add>, %508, %cst_196 [1] : vector<12x16xf32> to vector<12xf32>
    %510 = vector.shape_cast %509 : vector<12xf32> to vector<12x1xf32>
    %511 = tpu.reciprocal %510 {approx = true} : vector<12x1xf32> -> vector<12x1xf32>
    %512 = vector.broadcast %511 : vector<12x1xf32> to vector<12x16xf32>
    %513 = arith.mulf %508, %512 : vector<12x16xf32>
    %514 = arith.truncf %513 : vector<12x16xf32> to vector<12x16xbf16>
    %515 = vector.extract_strided_slice %374 {offsets = [0, 8], sizes = [16, 8], strides = [1, 1]} : vector<16x32xf32> to vector<16x8xf32>
    %516 = arith.truncf %515 : vector<16x8xf32> to vector<16x8xbf16>
    %cst_197 = arith.constant dense<0.000000e+00> : vector<12x8xf32>
    %517 = tpu.matmul %514, %516, %cst_197 {dimension_numbers = #tpu.dot_dimension_numbers<[1], [0], [0], [1], [0, 0, 1, 1], [], []>} : vector<12x16xbf16>, vector<16x8xbf16>, vector<12x8xf32> -> vector<12x8xf32>
    %518 = arith.truncf %517 : vector<12x8xf32> to vector<12x8xbf16>
    %519 = vector.extract_strided_slice %346 {offsets = [8, 0], sizes = [8, 32], strides = [1, 1]} : vector<32x32xbf16> to vector<8x32xbf16>
    %cst_198 = arith.constant dense<0.000000e+00> : vector<12x32xf32>
    %520 = tpu.matmul %518, %519, %cst_198 {dimension_numbers = #tpu.dot_dimension_numbers<[1], [0], [0], [1], [0, 0, 1, 1], [], []>} : vector<12x8xbf16>, vector<8x32xbf16>, vector<12x32xf32> -> vector<12x32xf32>
    %521 = arith.addf %497, %520 : vector<12x32xf32>
    %522 = vector.extract_strided_slice %371 {offsets = [0, 16], sizes = [12, 8], strides = [1, 1]} : vector<12x32xf32> to vector<12x8xf32>
    %523 = arith.truncf %522 : vector<12x8xf32> to vector<12x8xbf16>
    %524 = vector.extract_strided_slice %372 {offsets = [0, 16], sizes = [16, 8], strides = [1, 1]} : vector<16x32xf32> to vector<16x8xf32>
    %525 = arith.truncf %524 : vector<16x8xf32> to vector<16x8xbf16>
    "tpu.trace_start"() <{level = 10 : i32, message = "ne,me->nm"}> : () -> ()
    %cst_199 = arith.constant dense<0.000000e+00> : vector<12x16xf32>
    %526 = tpu.matmul %523, %525, %cst_199 {dimension_numbers = #tpu.dot_dimension_numbers<[1], [1], [0], [0], [0, 0, 1, 0], [], []>} : vector<12x8xbf16>, vector<16x8xbf16>, vector<12x16xf32> -> vector<12x16xf32>
    "tpu.trace_stop"() : () -> ()
    %527 = arith.addf %526, %31 : vector<12x16xf32>
    %cst_200 = arith.constant dense<0xFF800000> : vector<12xf32>
    %528 = vector.multi_reduction <maximumf>, %527, %cst_200 [1] : vector<12x16xf32> to vector<12xf32>
    %529 = vector.shape_cast %528 : vector<12xf32> to vector<12x1xf32>
    %530 = vector.broadcast %529 : vector<12x1xf32> to vector<12x16xf32>
    %531 = arith.subf %527, %530 : vector<12x16xf32>
    %532 = math.exp %531 : vector<12x16xf32>
    %cst_201 = arith.constant dense<0.000000e+00> : vector<12xf32>
    %533 = vector.multi_reduction <add>, %532, %cst_201 [1] : vector<12x16xf32> to vector<12xf32>
    %534 = vector.shape_cast %533 : vector<12xf32> to vector<12x1xf32>
    %535 = tpu.reciprocal %534 {approx = true} : vector<12x1xf32> -> vector<12x1xf32>
    %536 = vector.broadcast %535 : vector<12x1xf32> to vector<12x16xf32>
    %537 = arith.mulf %532, %536 : vector<12x16xf32>
    %538 = arith.truncf %537 : vector<12x16xf32> to vector<12x16xbf16>
    %539 = vector.extract_strided_slice %374 {offsets = [0, 16], sizes = [16, 8], strides = [1, 1]} : vector<16x32xf32> to vector<16x8xf32>
    %540 = arith.truncf %539 : vector<16x8xf32> to vector<16x8xbf16>
    %cst_202 = arith.constant dense<0.000000e+00> : vector<12x8xf32>
    %541 = tpu.matmul %538, %540, %cst_202 {dimension_numbers = #tpu.dot_dimension_numbers<[1], [0], [0], [1], [0, 0, 1, 1], [], []>} : vector<12x16xbf16>, vector<16x8xbf16>, vector<12x8xf32> -> vector<12x8xf32>
    %542 = arith.truncf %541 : vector<12x8xf32> to vector<12x8xbf16>
    %543 = vector.extract_strided_slice %346 {offsets = [16, 0], sizes = [8, 32], strides = [1, 1]} : vector<32x32xbf16> to vector<8x32xbf16>
    %cst_203 = arith.constant dense<0.000000e+00> : vector<12x32xf32>
    %544 = tpu.matmul %542, %543, %cst_203 {dimension_numbers = #tpu.dot_dimension_numbers<[1], [0], [0], [1], [0, 0, 1, 1], [], []>} : vector<12x8xbf16>, vector<8x32xbf16>, vector<12x32xf32> -> vector<12x32xf32>
    %545 = arith.addf %521, %544 : vector<12x32xf32>
    %546 = vector.extract_strided_slice %371 {offsets = [0, 24], sizes = [12, 8], strides = [1, 1]} : vector<12x32xf32> to vector<12x8xf32>
    %547 = arith.truncf %546 : vector<12x8xf32> to vector<12x8xbf16>
    %548 = vector.extract_strided_slice %372 {offsets = [0, 24], sizes = [16, 8], strides = [1, 1]} : vector<16x32xf32> to vector<16x8xf32>
    %549 = arith.truncf %548 : vector<16x8xf32> to vector<16x8xbf16>
    "tpu.trace_start"() <{level = 10 : i32, message = "ne,me->nm"}> : () -> ()
    %cst_204 = arith.constant dense<0.000000e+00> : vector<12x16xf32>
    %550 = tpu.matmul %547, %549, %cst_204 {dimension_numbers = #tpu.dot_dimension_numbers<[1], [1], [0], [0], [0, 0, 1, 0], [], []>} : vector<12x8xbf16>, vector<16x8xbf16>, vector<12x16xf32> -> vector<12x16xf32>
    "tpu.trace_stop"() : () -> ()
    %551 = arith.addf %550, %31 : vector<12x16xf32>
    %cst_205 = arith.constant dense<0xFF800000> : vector<12xf32>
    %552 = vector.multi_reduction <maximumf>, %551, %cst_205 [1] : vector<12x16xf32> to vector<12xf32>
    %553 = vector.shape_cast %552 : vector<12xf32> to vector<12x1xf32>
    %554 = vector.broadcast %553 : vector<12x1xf32> to vector<12x16xf32>
    %555 = arith.subf %551, %554 : vector<12x16xf32>
    %556 = math.exp %555 : vector<12x16xf32>
    %cst_206 = arith.constant dense<0.000000e+00> : vector<12xf32>
    %557 = vector.multi_reduction <add>, %556, %cst_206 [1] : vector<12x16xf32> to vector<12xf32>
    %558 = vector.shape_cast %557 : vector<12xf32> to vector<12x1xf32>
    %559 = tpu.reciprocal %558 {approx = true} : vector<12x1xf32> -> vector<12x1xf32>
    %560 = vector.broadcast %559 : vector<12x1xf32> to vector<12x16xf32>
    %561 = arith.mulf %556, %560 : vector<12x16xf32>
    %562 = arith.truncf %561 : vector<12x16xf32> to vector<12x16xbf16>
    %563 = vector.extract_strided_slice %374 {offsets = [0, 24], sizes = [16, 8], strides = [1, 1]} : vector<16x32xf32> to vector<16x8xf32>
    %564 = arith.truncf %563 : vector<16x8xf32> to vector<16x8xbf16>
    %cst_207 = arith.constant dense<0.000000e+00> : vector<12x8xf32>
    %565 = tpu.matmul %562, %564, %cst_207 {dimension_numbers = #tpu.dot_dimension_numbers<[1], [0], [0], [1], [0, 0, 1, 1], [], []>} : vector<12x16xbf16>, vector<16x8xbf16>, vector<12x8xf32> -> vector<12x8xf32>
    %566 = arith.truncf %565 : vector<12x8xf32> to vector<12x8xbf16>
    %567 = vector.extract_strided_slice %346 {offsets = [24, 0], sizes = [8, 32], strides = [1, 1]} : vector<32x32xbf16> to vector<8x32xbf16>
    %cst_208 = arith.constant dense<0.000000e+00> : vector<12x32xf32>
    %568 = tpu.matmul %566, %567, %cst_208 {dimension_numbers = #tpu.dot_dimension_numbers<[1], [0], [0], [1], [0, 0, 1, 1], [], []>} : vector<12x8xbf16>, vector<8x32xbf16>, vector<12x32xf32> -> vector<12x32xf32>
    %569 = arith.addf %545, %568 : vector<12x32xf32>
    %570 = arith.truncf %300 : vector<16x32xf32> to vector<16x32xbf16>
    %cst_209 = arith.constant dense<0.000000e+00> : vector<16x64xf32>
    %571 = tpu.matmul %570, %350, %cst_209 {dimension_numbers = #tpu.dot_dimension_numbers<[1], [0], [0], [1], [0, 0, 1, 1], [], []>} : vector<16x32xbf16>, vector<32x64xbf16>, vector<16x64xf32> -> vector<16x64xf32>
    %572 = arith.truncf %472 : vector<16x32xf32> to vector<16x32xbf16>
    %cst_210 = arith.constant dense<0.000000e+00> : vector<16x64xf32>
    %573 = tpu.matmul %572, %352, %cst_210 {dimension_numbers = #tpu.dot_dimension_numbers<[1], [0], [0], [1], [0, 0, 1, 1], [], []>} : vector<16x32xbf16>, vector<32x64xbf16>, vector<16x64xf32> -> vector<16x64xf32>
    %574 = arith.addf %571, %573 : vector<16x64xf32>
    %575 = vector.broadcast %354 : vector<1x64xf32> to vector<16x64xf32>
    %576 = arith.addf %574, %575 : vector<16x64xf32>
    %cst_211 = arith.constant dense<0.000000e+00> : vector<64xf32>
    %577 = vector.multi_reduction <add>, %576, %cst_211 [0] : vector<16x64xf32> to vector<64xf32>
    %578 = vector.shape_cast %577 : vector<64xf32> to vector<1x64xf32>
    %cst_212 = arith.constant 1.600000e+01 : f32
    %579 = vector.broadcast %cst_212 : f32 to vector<1x64xf32>
    %580 = arith.divf %578, %579 : vector<1x64xf32>
    %581 = vector.broadcast %580 : vector<1x64xf32> to vector<16x64xf32>
    %582 = arith.subf %576, %581 : vector<16x64xf32>
    %583 = arith.mulf %582, %582 : vector<16x64xf32>
    %cst_213 = arith.constant dense<0.000000e+00> : vector<64xf32>
    %584 = vector.multi_reduction <add>, %583, %cst_213 [0] : vector<16x64xf32> to vector<64xf32>
    %585 = vector.shape_cast %584 : vector<64xf32> to vector<1x64xf32>
    %cst_214 = arith.constant 1.600000e+01 : f32
    %586 = vector.broadcast %cst_214 : f32 to vector<1x64xf32>
    %587 = arith.divf %585, %586 : vector<1x64xf32>
    %588 = vector.broadcast %580 : vector<1x64xf32> to vector<16x64xf32>
    %589 = arith.subf %576, %588 : vector<16x64xf32>
    %cst_215 = arith.constant 9.99999974E-6 : f32
    %590 = vector.broadcast %cst_215 : f32 to vector<1x64xf32>
    %591 = arith.addf %587, %590 : vector<1x64xf32>
    %592 = math.rsqrt %591 : vector<1x64xf32>
    %593 = vector.broadcast %592 : vector<1x64xf32> to vector<16x64xf32>
    %594 = arith.mulf %589, %593 : vector<16x64xf32>
    %cst_216 = arith.constant 0.000000e+00 : f32
    %595 = vector.broadcast %cst_216 : f32 to vector<16x64xf32>
    %596 = arith.maximumf %594, %595 : vector<16x64xf32>
    %597 = arith.truncf %596 : vector<16x64xf32> to vector<16x64xbf16>
    %cst_217 = arith.constant dense<0.000000e+00> : vector<16x32xf32>
    %598 = tpu.matmul %597, %356, %cst_217 {dimension_numbers = #tpu.dot_dimension_numbers<[1], [0], [0], [1], [0, 0, 1, 1], [], []>} : vector<16x64xbf16>, vector<64x32xbf16>, vector<16x32xf32> -> vector<16x32xf32>
    %599 = vector.broadcast %358 : vector<1x32xf32> to vector<16x32xf32>
    %600 = arith.addf %598, %599 : vector<16x32xf32>
    %601 = arith.addf %300, %600 : vector<16x32xf32>
    %602 = arith.truncf %332 : vector<12x32xf32> to vector<12x32xbf16>
    %cst_218 = arith.constant dense<0.000000e+00> : vector<12x64xf32>
    %603 = tpu.matmul %602, %350, %cst_218 {dimension_numbers = #tpu.dot_dimension_numbers<[1], [0], [0], [1], [0, 0, 1, 1], [], []>} : vector<12x32xbf16>, vector<32x64xbf16>, vector<12x64xf32> -> vector<12x64xf32>
    %604 = arith.truncf %569 : vector<12x32xf32> to vector<12x32xbf16>
    %cst_219 = arith.constant dense<0.000000e+00> : vector<12x64xf32>
    %605 = tpu.matmul %604, %352, %cst_219 {dimension_numbers = #tpu.dot_dimension_numbers<[1], [0], [0], [1], [0, 0, 1, 1], [], []>} : vector<12x32xbf16>, vector<32x64xbf16>, vector<12x64xf32> -> vector<12x64xf32>
    %606 = arith.addf %603, %605 : vector<12x64xf32>
    %607 = vector.broadcast %354 : vector<1x64xf32> to vector<12x64xf32>
    %608 = arith.addf %606, %607 : vector<12x64xf32>
    %cst_220 = arith.constant dense<0.000000e+00> : vector<64xf32>
    %609 = vector.multi_reduction <add>, %608, %cst_220 [0] : vector<12x64xf32> to vector<64xf32>
    %610 = vector.shape_cast %609 : vector<64xf32> to vector<1x64xf32>
    %cst_221 = arith.constant 1.200000e+01 : f32
    %611 = vector.broadcast %cst_221 : f32 to vector<1x64xf32>
    %612 = arith.divf %610, %611 : vector<1x64xf32>
    %613 = vector.broadcast %612 : vector<1x64xf32> to vector<12x64xf32>
    %614 = arith.subf %608, %613 : vector<12x64xf32>
    %615 = arith.mulf %614, %614 : vector<12x64xf32>
    %cst_222 = arith.constant dense<0.000000e+00> : vector<64xf32>
    %616 = vector.multi_reduction <add>, %615, %cst_222 [0] : vector<12x64xf32> to vector<64xf32>
    %617 = vector.shape_cast %616 : vector<64xf32> to vector<1x64xf32>
    %cst_223 = arith.constant 1.200000e+01 : f32
    %618 = vector.broadcast %cst_223 : f32 to vector<1x64xf32>
    %619 = arith.divf %617, %618 : vector<1x64xf32>
    %620 = vector.broadcast %612 : vector<1x64xf32> to vector<12x64xf32>
    %621 = arith.subf %608, %620 : vector<12x64xf32>
    %cst_224 = arith.constant 9.99999974E-6 : f32
    %622 = vector.broadcast %cst_224 : f32 to vector<1x64xf32>
    %623 = arith.addf %619, %622 : vector<1x64xf32>
    %624 = math.rsqrt %623 : vector<1x64xf32>
    %625 = vector.broadcast %624 : vector<1x64xf32> to vector<12x64xf32>
    %626 = arith.mulf %621, %625 : vector<12x64xf32>
    %cst_225 = arith.constant 0.000000e+00 : f32
    %627 = vector.broadcast %cst_225 : f32 to vector<12x64xf32>
    %628 = arith.maximumf %626, %627 : vector<12x64xf32>
    %629 = arith.truncf %628 : vector<12x64xf32> to vector<12x64xbf16>
    %cst_226 = arith.constant dense<0.000000e+00> : vector<12x32xf32>
    %630 = tpu.matmul %629, %356, %cst_226 {dimension_numbers = #tpu.dot_dimension_numbers<[1], [0], [0], [1], [0, 0, 1, 1], [], []>} : vector<12x64xbf16>, vector<64x32xbf16>, vector<12x32xf32> -> vector<12x32xf32>
    %631 = vector.broadcast %358 : vector<1x32xf32> to vector<12x32xf32>
    %632 = arith.addf %630, %631 : vector<12x32xf32>
    %633 = arith.addf %332, %632 : vector<12x32xf32>
    %c0_227 = arith.constant 0 : index
    %c0_228 = arith.constant 0 : index
    %c0_229 = arith.constant 0 : index
    %634 = vector.load %arg20[%c0_227, %c0_228, %c0_229] : memref<1x16x32xf32, #tpu.memory_space<vmem>>, vector<1x16x32xf32>
    %635 = vector.shape_cast %634 : vector<1x16x32xf32> to vector<16x32xf32>
    %636 = vector.shape_cast %601 : vector<16x32xf32> to vector<1x16x32xf32>
    tpu.vector_store %arg20[%c0_227, %c0_228, %c0_229], %636 {strides = array<i32>} : memref<1x16x32xf32, #tpu.memory_space<vmem>>, vector<1x16x32xf32>,
    %c0_230 = arith.constant 0 : index
    %c0_231 = arith.constant 0 : index
    %c0_232 = arith.constant 0 : index
    %637 = vector.load %arg21[%c0_230, %c0_231, %c0_232] : memref<1x12x32xf32, #tpu.memory_space<vmem>>, vector<1x12x32xf32>
    %638 = vector.shape_cast %637 : vector<1x12x32xf32> to vector<12x32xf32>
    %639 = vector.shape_cast %633 : vector<12x32xf32> to vector<1x12x32xf32>
    tpu.vector_store %arg21[%c0_230, %c0_231, %c0_232], %639 {strides = array<i32>} : memref<1x12x32xf32, #tpu.memory_space<vmem>>, vector<1x12x32xf32>,
    return
  }
  func.func @transform_0(%arg0: i32) -> (i32, i32, i32) {
    %c0_i32 = arith.constant 0 : i32
    %c0_i32_0 = arith.constant 0 : i32
    %c0_i32_1 = arith.constant 0 : i32
    return %arg0, %c0_i32, %c0_i32_0 : i32, i32, i32
  }
  func.func @transform_1(%arg0: i32) -> (i32, i32, i32) {
    %c0_i32 = arith.constant 0 : i32
    %c0_i32_0 = arith.constant 0 : i32
    %c0_i32_1 = arith.constant 0 : i32
    return %arg0, %c0_i32, %c0_i32_0 : i32, i32, i32
  }
  func.func @transform_2(%arg0: i32) -> (i32, i32, i32) {
    %c0_i32 = arith.constant 0 : i32
    %c0_i32_0 = arith.constant 0 : i32
    %c0_i32_1 = arith.constant 0 : i32
    return %arg0, %c0_i32, %c0_i32_0 : i32, i32, i32
  }
  func.func @transform_3(%arg0: i32) -> (i32, i32, i32) {
    %c0_i32 = arith.constant 0 : i32
    %c0_i32_0 = arith.constant 0 : i32
    %c0_i32_1 = arith.constant 0 : i32
    return %arg0, %c0_i32, %c0_i32_0 : i32, i32, i32
  }
  func.func @transform_4(%arg0: i32) -> (i32, i32, i32) {
    %c0_i32 = arith.constant 0 : i32
    %c0_i32_0 = arith.constant 0 : i32
    %c0_i32_1 = arith.constant 0 : i32
    return %arg0, %c0_i32, %c0_i32_0 : i32, i32, i32
  }
  func.func @transform_5(%arg0: i32) -> (i32, i32, i32) {
    %c0_i32 = arith.constant 0 : i32
    %c0_i32_0 = arith.constant 0 : i32
    %c0_i32_1 = arith.constant 0 : i32
    return %arg0, %c0_i32, %c0_i32_0 : i32, i32, i32
  }
  func.func @transform_6(%arg0: i32) -> (i32, i32, i32) {
    %c0_i32 = arith.constant 0 : i32
    %c0_i32_0 = arith.constant 0 : i32
    %c0_i32_1 = arith.constant 0 : i32
    %c0_i32_2 = arith.constant 0 : i32
    return %c0_i32, %c0_i32_0, %c0_i32_1 : i32, i32, i32
  }
  func.func @transform_7(%arg0: i32) -> (i32, i32, i32) {
    %c0_i32 = arith.constant 0 : i32
    %c0_i32_0 = arith.constant 0 : i32
    %c0_i32_1 = arith.constant 0 : i32
    %c0_i32_2 = arith.constant 0 : i32
    return %c0_i32, %c0_i32_0, %c0_i32_1 : i32, i32, i32
  }
  func.func @transform_8(%arg0: i32) -> (i32, i32, i32) {
    %c0_i32 = arith.constant 0 : i32
    %c0_i32_0 = arith.constant 0 : i32
    %c0_i32_1 = arith.constant 0 : i32
    %c0_i32_2 = arith.constant 0 : i32
    return %c0_i32, %c0_i32_0, %c0_i32_1 : i32, i32, i32
  }
  func.func @transform_9(%arg0: i32) -> (i32, i32, i32) {
    %c0_i32 = arith.constant 0 : i32
    %c0_i32_0 = arith.constant 0 : i32
    %c0_i32_1 = arith.constant 0 : i32
    %c0_i32_2 = arith.constant 0 : i32
    return %c0_i32, %c0_i32_0, %c0_i32_1 : i32, i32, i32
  }
  func.func @transform_10(%arg0: i32) -> (i32, i32, i32) {
    %c0_i32 = arith.constant 0 : i32
    %c0_i32_0 = arith.constant 0 : i32
    %c0_i32_1 = arith.constant 0 : i32
    %c0_i32_2 = arith.constant 0 : i32
    return %c0_i32, %c0_i32_0, %c0_i32_1 : i32, i32, i32
  }
  func.func @transform_11(%arg0: i32) -> (i32, i32, i32) {
    %c0_i32 = arith.constant 0 : i32
    %c0_i32_0 = arith.constant 0 : i32
    %c0_i32_1 = arith.constant 0 : i32
    %c0_i32_2 = arith.constant 0 : i32
    return %c0_i32, %c0_i32_0, %c0_i32_1 : i32, i32, i32
  }
  func.func @transform_12(%arg0: i32) -> (i32, i32, i32) {
    %c0_i32 = arith.constant 0 : i32
    %c0_i32_0 = arith.constant 0 : i32
    %c0_i32_1 = arith.constant 0 : i32
    %c0_i32_2 = arith.constant 0 : i32
    return %c0_i32, %c0_i32_0, %c0_i32_1 : i32, i32, i32
  }
  func.func @transform_13(%arg0: i32) -> (i32, i32, i32) {
    %c0_i32 = arith.constant 0 : i32
    %c0_i32_0 = arith.constant 0 : i32
    %c0_i32_1 = arith.constant 0 : i32
    %c0_i32_2 = arith.constant 0 : i32
    return %c0_i32, %c0_i32_0, %c0_i32_1 : i32, i32, i32
  }
  func.func @transform_14(%arg0: i32) -> (i32, i32, i32) {
    %c0_i32 = arith.constant 0 : i32
    %c0_i32_0 = arith.constant 0 : i32
    %c0_i32_1 = arith.constant 0 : i32
    %c0_i32_2 = arith.constant 0 : i32
    return %c0_i32, %c0_i32_0, %c0_i32_1 : i32, i32, i32
  }
  func.func @transform_15(%arg0: i32) -> (i32, i32, i32) {
    %c0_i32 = arith.constant 0 : i32
    %c0_i32_0 = arith.constant 0 : i32
    %c0_i32_1 = arith.constant 0 : i32
    %c0_i32_2 = arith.constant 0 : i32
    return %c0_i32, %c0_i32_0, %c0_i32_1 : i32, i32, i32
  }
  func.func @transform_16(%arg0: i32) -> (i32, i32, i32) {
    %c0_i32 = arith.constant 0 : i32
    %c0_i32_0 = arith.constant 0 : i32
    %c0_i32_1 = arith.constant 0 : i32
    %c0_i32_2 = arith.constant 0 : i32
    return %c0_i32, %c0_i32_0, %c0_i32_1 : i32, i32, i32
  }
  func.func @transform_17(%arg0: i32) -> (i32, i32, i32) {
    %c0_i32 = arith.constant 0 : i32
    %c0_i32_0 = arith.constant 0 : i32
    %c0_i32_1 = arith.constant 0 : i32
    %c0_i32_2 = arith.constant 0 : i32
    return %c0_i32, %c0_i32_0, %c0_i32_1 : i32, i32, i32
  }
  func.func @transform_18(%arg0: i32) -> (i32, i32, i32) {
    %c0_i32 = arith.constant 0 : i32
    %c0_i32_0 = arith.constant 0 : i32
    %c0_i32_1 = arith.constant 0 : i32
    %c0_i32_2 = arith.constant 0 : i32
    return %c0_i32, %c0_i32_0, %c0_i32_1 : i32, i32, i32
  }
  func.func @transform_19(%arg0: i32) -> (i32, i32, i32) {
    %c0_i32 = arith.constant 0 : i32
    %c0_i32_0 = arith.constant 0 : i32
    %c0_i32_1 = arith.constant 0 : i32
    return %arg0, %c0_i32, %c0_i32_0 : i32, i32, i32
  }
  func.func @transform_20(%arg0: i32) -> (i32, i32, i32) {
    %c0_i32 = arith.constant 0 : i32
    %c0_i32_0 = arith.constant 0 : i32
    %c0_i32_1 = arith.constant 0 : i32
    return %arg0, %c0_i32, %c0_i32_0 : i32, i32, i32
  }
}

</mosaic_0001>

<llo_original>
// kernel: attentional_gnn_pallas.1
$region0: #{attentional_gnn_pallas.1}
  #allocation0 [shape = 'u32[]', space=smem, size = 0x4, offset = 0x4, fixed_abs, tag = 'smem constant byte address 0x4 - core index']
  #allocation1 [shape = 'u32[144,128]{1,0:T(1,128)}', space=vmem, size = 0x12000, scoped, tag = 'internal scratch']
  %s0 = inlined_call_operand.vmem [shape: f32[2,16,32], index: 0, kind: input, shape index: {}]
  %s1 = inlined_call_operand.vmem [shape: f32[2,12,32], index: 1, kind: input, shape index: {}]
  %s2 = inlined_call_operand.vmem [shape: f32[2,16,16], index: 2, kind: input, shape index: {}]
  %s3 = inlined_call_operand.vmem [shape: f32[2,12,12], index: 3, kind: input, shape index: {}]
  %s4 = inlined_call_operand.vmem [shape: f32[2,16,12], index: 4, kind: input, shape index: {}]
  %s5 = inlined_call_operand.vmem [shape: f32[2,12,16], index: 5, kind: input, shape index: {}]
  %s6 = inlined_call_operand.vmem [shape: bf16[2,32,32], index: 6, kind: input, shape index: {}]
  %s7 = inlined_call_operand.vmem [shape: f32[2,1,32], index: 7, kind: input, shape index: {}]
  %s8 = inlined_call_operand.vmem [shape: bf16[2,32,32], index: 8, kind: input, shape index: {}]
  %s9 = inlined_call_operand.vmem [shape: f32[2,1,32], index: 9, kind: input, shape index: {}]
  %s10 = inlined_call_operand.vmem [shape: bf16[2,32,32], index: 10, kind: input, shape index: {}]
  %s11 = inlined_call_operand.vmem [shape: f32[2,1,32], index: 11, kind: input, shape index: {}]
  %s12 = inlined_call_operand.vmem [shape: bf16[2,32,32], index: 12, kind: input, shape index: {}]
  %s13 = inlined_call_operand.vmem [shape: f32[2,1,32], index: 13, kind: input, shape index: {}]
  %s14 = inlined_call_operand.vmem [shape: bf16[2,32,64], index: 14, kind: input, shape index: {}]
  %s15 = inlined_call_operand.vmem [shape: bf16[2,32,64], index: 15, kind: input, shape index: {}]
  %s16 = inlined_call_operand.hbm [shape: f32[2,1,64], index: 16, kind: input, shape index: {}]
  %s17 = inlined_call_operand.vmem [shape: bf16[2,64,32], index: 17, kind: input, shape index: {}]
  %s18 = inlined_call_operand.hbm [shape: f32[2,1,32], index: 18, kind: input, shape index: {}]
  %s19 = inlined_call_operand.hbm [shape: f32[2,16,32], index: 19, kind: output, shape index: {0}]
  %s20 = inlined_call_operand.vmem [shape: f32[2,12,32], index: 20, kind: output, shape index: {1}]
  %21 = xla_tuple %s19, %s20
  %s22 = sld [smem:[#allocation0]]
  $region125: #{attentional_gnn_pallas.1} parent=0
    _
  %s24 = ssub.s32 1, %s22
  %s25 = scalar_select 0, %s24, %s22
  $region1: #{attentional_gnn_pallas.1} parent=0
    #allocation2 [shape = 'u8[1024]{0}', space=vmem, size = 0x400, scoped, tag = 'input window, operand 16, single buffered']
    #allocation3 [shape = 's32[2]{0}', space=sflag, size = 0x8, scoped, tag = 'scoped memory for attentional_gnn_pallas.1']
    #allocation4 [shape = 's32[2]{0}', space=sflag, size = 0x8, scoped, tag = 'scoped memory for attentional_gnn_pallas.1']
    #allocation5 [shape = 'u8[1024]{0}', space=vmem, size = 0x400, scoped, tag = 'input window, operand 18, single buffered']
    #allocation6 [shape = 's32[1]{0}', space=sflag, size = 0x4, scoped, tag = 'scoped memory for attentional_gnn_pallas.1']
    #allocation7 [shape = 'u8[16384]{0}', space=vmem, size = 0x4000, scoped, tag = 'output window, operand 0']
    %26 = vsyncpa [#allocation3], 0
    %27 = vsyncpa [#allocation6], 0
    %28 = vsyncpa [#allocation4], 0
    %s29 = scalar_lea.sflag [#allocation4], 1
    %30 = vsyncpa %s29, 0
    loop: start=0, step=1, limit=4
    $region2: #{attentional_gnn_pallas.1} parent=1 // loop_pre_header
      _
    $region3: #{attentional_gnn_pallas.1} parent=1 // loop_header
      %s32 = sphi 0, %s36
      %p33 = scmp.ge.s32.totalorder %s32, 4
      %s42 = sphi 0, %s44
      %s45 = sphi 0, %s42
      %s46 = sphi 0, %s45
      %s62 = sphi 0, %s46
      %s68 = sphi 0, %s70
      %s71 = sphi 0, %s68
      %s72 = sphi 0, %s71
      %s88 = sphi 0, %s72
      %s94 = sphi 0, %s96
      %s97 = sphi 0, %s94
      %s98 = sphi 0, %s97
      %s114 = sphi 0, %s98
      %s120 = sphi 0, %s122
      %s123 = sphi 0, %s120
      %s124 = sphi 0, %s123
      %s140 = sphi 0, %s124
      %s146 = sphi 0, %s148
      %s149 = sphi 0, %s146
      %s150 = sphi 0, %s149
      %s166 = sphi 0, %s150
      %s172 = sphi 0, %s174
      %s175 = sphi 0, %s172
      %s176 = sphi 0, %s175
      %s192 = sphi 0, %s176
      %s196 = sphi 0, %s196
      %s198 = sphi 0, %s196
      %s199 = sphi 0, %s198
      %s213 = sphi 0, %s199
      %s217 = sphi 0, %s217
      %s219 = sphi 0, %s217
      %s220 = sphi 0, %s219
      %s234 = sphi 0, %s220
      %s238 = sphi 0, %s238
      %s240 = sphi 0, %s238
      %s241 = sphi 0, %s240
      %s255 = sphi 0, %s241
      %s259 = sphi 0, %s259
      %s261 = sphi 0, %s259
      %s262 = sphi 0, %s261
      %s276 = sphi 0, %s262
      %s280 = sphi 0, %s280
      %s282 = sphi 0, %s280
      %s283 = sphi 0, %s282
      %s297 = sphi 0, %s283
      %s301 = sphi 0, %s301
      %s303 = sphi 0, %s301
      %s304 = sphi 0, %s303
      %s318 = sphi 0, %s304
      %s322 = sphi 0, %s322
      %s324 = sphi 0, %s322
      %s325 = sphi 0, %s324
      %s339 = sphi 0, %s325
      %s343 = sphi 0, %s343
      %s345 = sphi 0, %s343
      %s346 = sphi 0, %s345
      %s360 = sphi 0, %s346
      %s364 = sphi 0, %s364
      %s366 = sphi 0, %s364
      %s367 = sphi 0, %s366
      %s381 = sphi 0, %s367
      %s385 = sphi 0, %s385
      %s387 = sphi 0, %s385
      %s388 = sphi 0, %s387
      %s402 = sphi 0, %s388
      %s406 = sphi 0, %s406
      %s408 = sphi 0, %s406
      %s409 = sphi 0, %s408
      %s423 = sphi 0, %s409
      %s427 = sphi 0, %s427
      %s429 = sphi 0, %s427
      %s430 = sphi 0, %s429
      %s444 = sphi 0, %s430
      %s448 = sphi 0, %s448
      %s450 = sphi 0, %s448
      %s451 = sphi 0, %s450
      %s465 = sphi 0, %s451
      %s471 = sphi 0, %s473
      %s474 = sphi 0, %s471
      %s475 = sphi 0, %s474
      %s491 = sphi 0, %s475
      %s497 = sphi 0, %s499
      %s500 = sphi 0, %s497
      %s501 = sphi 0, %s500
      %s517 = sphi 0, %s501
    $region4: #{attentional_gnn_pallas.1} parent=1 // loop_header_branch
      %35 = sbr.rel (%p33) target = $region8
    $region5: #{attentional_gnn_pallas.1} parent=1 // loop_body
      %s37 = ssub.s32 %s32, 1
      %s38 = ssub.s32 %s32, 2
      %s39 = sadd.s32 %s32, 1
      %s40 = ssub.s32 %s32, %s39
      %p41 = scmp.eq.s32.totalorder %s40, 0
      %s43 = sadd.s32 %s42, 1
      %s44 = scalar_select %p41, %s42, %s43
      %p47 = pneg %p41
      %p48 = scmp.eq.s32.totalorder %s32, 1
      %p49 = por %p47, %p48
      %p50 = scmp.ne.s32.totalorder %s42, %s45
      %p51 = scmp.eq.s32.totalorder %s32, 0
      %p52 = por %p50, %p51
      %p53 = scmp.ne.s32.totalorder %s42, %s45
      %p54 = scmp.eq.s32.totalorder %s37, 1
      %p55 = por %p53, %p54
      %p56 = scmp.ne.s32.totalorder %s45, %s46
      %p57 = scmp.eq.s32.totalorder %s37, 0
      %p58 = por %p56, %p57
      %p59 = scmp.ne.s32.totalorder %s45, %s46
      %p60 = scmp.eq.s32.totalorder %s38, 1
      %p61 = por %p59, %p60
      %p63 = scmp.ne.s32.totalorder %s46, %s62
      %p64 = scmp.eq.s32.totalorder %s38, 0
      %p65 = por %p63, %p64
      %s66 = ssub.s32 %s32, %s39
      %p67 = scmp.eq.s32.totalorder %s66, 0
      %s69 = sadd.s32 %s68, 1
      %s70 = scalar_select %p67, %s68, %s69
      %p73 = pneg %p67
      %p74 = scmp.eq.s32.totalorder %s32, 1
      %p75 = por %p73, %p74
      %p76 = scmp.ne.s32.totalorder %s68, %s71
      %p77 = scmp.eq.s32.totalorder %s32, 0
      %p78 = por %p76, %p77
      %p79 = scmp.ne.s32.totalorder %s68, %s71
      %p80 = scmp.eq.s32.totalorder %s37, 1
      %p81 = por %p79, %p80
      %p82 = scmp.ne.s32.totalorder %s71, %s72
      %p83 = scmp.eq.s32.totalorder %s37, 0
      %p84 = por %p82, %p83
      %p85 = scmp.ne.s32.totalorder %s71, %s72
      %p86 = scmp.eq.s32.totalorder %s38, 1
      %p87 = por %p85, %p86
      %p89 = scmp.ne.s32.totalorder %s72, %s88
      %p90 = scmp.eq.s32.totalorder %s38, 0
      %p91 = por %p89, %p90
      %s92 = ssub.s32 %s32, %s39
      %p93 = scmp.eq.s32.totalorder %s92, 0
      %s95 = sadd.s32 %s94, 1
      %s96 = scalar_select %p93, %s94, %s95
      %p99 = pneg %p93
      %p100 = scmp.eq.s32.totalorder %s32, 1
      %p101 = por %p99, %p100
      %p102 = scmp.ne.s32.totalorder %s94, %s97
      %p103 = scmp.eq.s32.totalorder %s32, 0
      %p104 = por %p102, %p103
      %p105 = scmp.ne.s32.totalorder %s94, %s97
      %p106 = scmp.eq.s32.totalorder %s37, 1
      %p107 = por %p105, %p106
      %p108 = scmp.ne.s32.totalorder %s97, %s98
      %p109 = scmp.eq.s32.totalorder %s37, 0
      %p110 = por %p108, %p109
      %p111 = scmp.ne.s32.totalorder %s97, %s98
      %p112 = scmp.eq.s32.totalorder %s38, 1
      %p113 = por %p111, %p112
      %p115 = scmp.ne.s32.totalorder %s98, %s114
      %p116 = scmp.eq.s32.totalorder %s38, 0
      %p117 = por %p115, %p116
      %s118 = ssub.s32 %s32, %s39
      %p119 = scmp.eq.s32.totalorder %s118, 0
      %s121 = sadd.s32 %s120, 1
      %s122 = scalar_select %p119, %s120, %s121
      %p125 = pneg %p119
      %p126 = scmp.eq.s32.totalorder %s32, 1
      %p127 = por %p125, %p126
      %p128 = scmp.ne.s32.totalorder %s120, %s123
      %p129 = scmp.eq.s32.totalorder %s32, 0
      %p130 = por %p128, %p129
      %p131 = scmp.ne.s32.totalorder %s120, %s123
      %p132 = scmp.eq.s32.totalorder %s37, 1
      %p133 = por %p131, %p132
      %p134 = scmp.ne.s32.totalorder %s123, %s124
      %p135 = scmp.eq.s32.totalorder %s37, 0
      %p136 = por %p134, %p135
      %p137 = scmp.ne.s32.totalorder %s123, %s124
      %p138 = scmp.eq.s32.totalorder %s38, 1
      %p139 = por %p137, %p138
      %p141 = scmp.ne.s32.totalorder %s124, %s140
      %p142 = scmp.eq.s32.totalorder %s38, 0
      %p143 = por %p141, %p142
      %s144 = ssub.s32 %s32, %s39
      %p145 = scmp.eq.s32.totalorder %s144, 0
      %s147 = sadd.s32 %s146, 1
      %s148 = scalar_select %p145, %s146, %s147
      %p151 = pneg %p145
      %p152 = scmp.eq.s32.totalorder %s32, 1
      %p153 = por %p151, %p152
      %p154 = scmp.ne.s32.totalorder %s146, %s149
      %p155 = scmp.eq.s32.totalorder %s32, 0
      %p156 = por %p154, %p155
      %p157 = scmp.ne.s32.totalorder %s146, %s149
      %p158 = scmp.eq.s32.totalorder %s37, 1
      %p159 = por %p157, %p158
      %p160 = scmp.ne.s32.totalorder %s149, %s150
      %p161 = scmp.eq.s32.totalorder %s37, 0
      %p162 = por %p160, %p161
      %p163 = scmp.ne.s32.totalorder %s149, %s150
      %p164 = scmp.eq.s32.totalorder %s38, 1
      %p165 = por %p163, %p164
      %p167 = scmp.ne.s32.totalorder %s150, %s166
      %p168 = scmp.eq.s32.totalorder %s38, 0
      %p169 = por %p167, %p168
      %s170 = ssub.s32 %s32, %s39
      %p171 = scmp.eq.s32.totalorder %s170, 0
      %s173 = sadd.s32 %s172, 1
      %s174 = scalar_select %p171, %s172, %s173
      %p177 = pneg %p171
      %p178 = scmp.eq.s32.totalorder %s32, 1
      %p179 = por %p177, %p178
      %p180 = scmp.ne.s32.totalorder %s172, %s175
      %p181 = scmp.eq.s32.totalorder %s32, 0
      %p182 = por %p180, %p181
      %p183 = scmp.ne.s32.totalorder %s172, %s175
      %p184 = scmp.eq.s32.totalorder %s37, 1
      %p185 = por %p183, %p184
      %p186 = scmp.ne.s32.totalorder %s175, %s176
      %p187 = scmp.eq.s32.totalorder %s37, 0
      %p188 = por %p186, %p187
      %p189 = scmp.ne.s32.totalorder %s175, %s176
      %p190 = scmp.eq.s32.totalorder %s38, 1
      %p191 = por %p189, %p190
      %p193 = scmp.ne.s32.totalorder %s176, %s192
      %p194 = scmp.eq.s32.totalorder %s38, 0
      %p195 = por %p193, %p194
      %s197 = sadd.s32 %s196, 1
      %p200 = scmp.eq.s32.totalorder %s32, 1
      %p201 = scmp.ne.s32.totalorder %s196, %s198
      %p202 = scmp.eq.s32.totalorder %s32, 0
      %p203 = por %p201, %p202
      %p204 = scmp.ne.s32.totalorder %s196, %s198
      %p205 = scmp.eq.s32.totalorder %s37, 1
      %p206 = por %p204, %p205
      %p207 = scmp.ne.s32.totalorder %s198, %s199
      %p208 = scmp.eq.s32.totalorder %s37, 0
      %p209 = por %p207, %p208
      %p210 = scmp.ne.s32.totalorder %s198, %s199
      %p211 = scmp.eq.s32.totalorder %s38, 1
      %p212 = por %p210, %p211
      %p214 = scmp.ne.s32.totalorder %s199, %s213
      %p215 = scmp.eq.s32.totalorder %s38, 0
      %p216 = por %p214, %p215
      %s218 = sadd.s32 %s217, 1
      %p221 = scmp.eq.s32.totalorder %s32, 1
      %p222 = scmp.ne.s32.totalorder %s217, %s219
      %p223 = scmp.eq.s32.totalorder %s32, 0
      %p224 = por %p222, %p223
      %p225 = scmp.ne.s32.totalorder %s217, %s219
      %p226 = scmp.eq.s32.totalorder %s37, 1
      %p227 = por %p225, %p226
      %p228 = scmp.ne.s32.totalorder %s219, %s220
      %p229 = scmp.eq.s32.totalorder %s37, 0
      %p230 = por %p228, %p229
      %p231 = scmp.ne.s32.totalorder %s219, %s220
      %p232 = scmp.eq.s32.totalorder %s38, 1
      %p233 = por %p231, %p232
      %p235 = scmp.ne.s32.totalorder %s220, %s234
      %p236 = scmp.eq.s32.totalorder %s38, 0
      %p237 = por %p235, %p236
      %s239 = sadd.s32 %s238, 1
      %p242 = scmp.eq.s32.totalorder %s32, 1
      %p243 = scmp.ne.s32.totalorder %s238, %s240
      %p244 = scmp.eq.s32.totalorder %s32, 0
      %p245 = por %p243, %p244
      %p246 = scmp.ne.s32.totalorder %s238, %s240
      %p247 = scmp.eq.s32.totalorder %s37, 1
      %p248 = por %p246, %p247
      %p249 = scmp.ne.s32.totalorder %s240, %s241
      %p250 = scmp.eq.s32.totalorder %s37, 0
      %p251 = por %p249, %p250
      %p252 = scmp.ne.s32.totalorder %s240, %s241
      %p253 = scmp.eq.s32.totalorder %s38, 1
      %p254 = por %p252, %p253
      %p256 = scmp.ne.s32.totalorder %s241, %s255
      %p257 = scmp.eq.s32.totalorder %s38, 0
      %p258 = por %p256, %p257
      %s260 = sadd.s32 %s259, 1
      %p263 = scmp.eq.s32.totalorder %s32, 1
      %p264 = scmp.ne.s32.totalorder %s259, %s261
      %p265 = scmp.eq.s32.totalorder %s32, 0
      %p266 = por %p264, %p265
      %p267 = scmp.ne.s32.totalorder %s259, %s261
      %p268 = scmp.eq.s32.totalorder %s37, 1
      %p269 = por %p267, %p268
      %p270 = scmp.ne.s32.totalorder %s261, %s262
      %p271 = scmp.eq.s32.totalorder %s37, 0
      %p272 = por %p270, %p271
      %p273 = scmp.ne.s32.totalorder %s261, %s262
      %p274 = scmp.eq.s32.totalorder %s38, 1
      %p275 = por %p273, %p274
      %p277 = scmp.ne.s32.totalorder %s262, %s276
      %p278 = scmp.eq.s32.totalorder %s38, 0
      %p279 = por %p277, %p278
      %s281 = sadd.s32 %s280, 1
      %p284 = scmp.eq.s32.totalorder %s32, 1
      %p285 = scmp.ne.s32.totalorder %s280, %s282
      %p286 = scmp.eq.s32.totalorder %s32, 0
      %p287 = por %p285, %p286
      %p288 = scmp.ne.s32.totalorder %s280, %s282
      %p289 = scmp.eq.s32.totalorder %s37, 1
      %p290 = por %p288, %p289
      %p291 = scmp.ne.s32.totalorder %s282, %s283
      %p292 = scmp.eq.s32.totalorder %s37, 0
      %p293 = por %p291, %p292
      %p294 = scmp.ne.s32.totalorder %s282, %s283
      %p295 = scmp.eq.s32.totalorder %s38, 1
      %p296 = por %p294, %p295
      %p298 = scmp.ne.s32.totalorder %s283, %s297
      %p299 = scmp.eq.s32.totalorder %s38, 0
      %p300 = por %p298, %p299
      %s302 = sadd.s32 %s301, 1
      %p305 = scmp.eq.s32.totalorder %s32, 1
      %p306 = scmp.ne.s32.totalorder %s301, %s303
      %p307 = scmp.eq.s32.totalorder %s32, 0
      %p308 = por %p306, %p307
      %p309 = scmp.ne.s32.totalorder %s301, %s303
      %p310 = scmp.eq.s32.totalorder %s37, 1
      %p311 = por %p309, %p310
      %p312 = scmp.ne.s32.totalorder %s303, %s304
      %p313 = scmp.eq.s32.totalorder %s37, 0
      %p314 = por %p312, %p313
      %p315 = scmp.ne.s32.totalorder %s303, %s304
      %p316 = scmp.eq.s32.totalorder %s38, 1
      %p317 = por %p315, %p316
      %p319 = scmp.ne.s32.totalorder %s304, %s318
      %p320 = scmp.eq.s32.totalorder %s38, 0
      %p321 = por %p319, %p320
      %s323 = sadd.s32 %s322, 1
      %p326 = scmp.eq.s32.totalorder %s32, 1
      %p327 = scmp.ne.s32.totalorder %s322, %s324
      %p328 = scmp.eq.s32.totalorder %s32, 0
      %p329 = por %p327, %p328
      %p330 = scmp.ne.s32.totalorder %s322, %s324
      %p331 = scmp.eq.s32.totalorder %s37, 1
      %p332 = por %p330, %p331
      %p333 = scmp.ne.s32.totalorder %s324, %s325
      %p334 = scmp.eq.s32.totalorder %s37, 0
      %p335 = por %p333, %p334
      %p336 = scmp.ne.s32.totalorder %s324, %s325
      %p337 = scmp.eq.s32.totalorder %s38, 1
      %p338 = por %p336, %p337
      %p340 = scmp.ne.s32.totalorder %s325, %s339
      %p341 = scmp.eq.s32.totalorder %s38, 0
      %p342 = por %p340, %p341
      %s344 = sadd.s32 %s343, 1
      %p347 = scmp.eq.s32.totalorder %s32, 1
      %p348 = scmp.ne.s32.totalorder %s343, %s345
      %p349 = scmp.eq.s32.totalorder %s32, 0
      %p350 = por %p348, %p349
      %p351 = scmp.ne.s32.totalorder %s343, %s345
      %p352 = scmp.eq.s32.totalorder %s37, 1
      %p353 = por %p351, %p352
      %p354 = scmp.ne.s32.totalorder %s345, %s346
      %p355 = scmp.eq.s32.totalorder %s37, 0
      %p356 = por %p354, %p355
      %p357 = scmp.ne.s32.totalorder %s345, %s346
      %p358 = scmp.eq.s32.totalorder %s38, 1
      %p359 = por %p357, %p358
      %p361 = scmp.ne.s32.totalorder %s346, %s360
      %p362 = scmp.eq.s32.totalorder %s38, 0
      %p363 = por %p361, %p362
      %s365 = sadd.s32 %s364, 1
      %p368 = scmp.eq.s32.totalorder %s32, 1
      %p369 = scmp.ne.s32.totalorder %s364, %s366
      %p370 = scmp.eq.s32.totalorder %s32, 0
      %p371 = por %p369, %p370
      %p372 = scmp.ne.s32.totalorder %s364, %s366
      %p373 = scmp.eq.s32.totalorder %s37, 1
      %p374 = por %p372, %p373
      %p375 = scmp.ne.s32.totalorder %s366, %s367
      %p376 = scmp.eq.s32.totalorder %s37, 0
      %p377 = por %p375, %p376
      %p378 = scmp.ne.s32.totalorder %s366, %s367
      %p379 = scmp.eq.s32.totalorder %s38, 1
      %p380 = por %p378, %p379
      %p382 = scmp.ne.s32.totalorder %s367, %s381
      %p383 = scmp.eq.s32.totalorder %s38, 0
      %p384 = por %p382, %p383
      %s386 = sadd.s32 %s385, 1
      %p389 = scmp.eq.s32.totalorder %s32, 1
      %p390 = scmp.ne.s32.totalorder %s385, %s387
      %p391 = scmp.eq.s32.totalorder %s32, 0
      %p392 = por %p390, %p391
      %p393 = scmp.ne.s32.totalorder %s385, %s387
      %p394 = scmp.eq.s32.totalorder %s37, 1
      %p395 = por %p393, %p394
      %p396 = scmp.ne.s32.totalorder %s387, %s388
      %p397 = scmp.eq.s32.totalorder %s37, 0
      %p398 = por %p396, %p397
      %p399 = scmp.ne.s32.totalorder %s387, %s388
      %p400 = scmp.eq.s32.totalorder %s38, 1
      %p401 = por %p399, %p400
      %p403 = scmp.ne.s32.totalorder %s388, %s402
      %p404 = scmp.eq.s32.totalorder %s38, 0
      %p405 = por %p403, %p404
      %s407 = sadd.s32 %s406, 1
      %p410 = scmp.eq.s32.totalorder %s32, 1
      %p411 = scmp.ne.s32.totalorder %s406, %s408
      %p412 = scmp.eq.s32.totalorder %s32, 0
      %p413 = por %p411, %p412
      %p414 = scmp.ne.s32.totalorder %s406, %s408
      %p415 = scmp.eq.s32.totalorder %s37, 1
      %p416 = por %p414, %p415
      %p417 = scmp.ne.s32.totalorder %s408, %s409
      %p418 = scmp.eq.s32.totalorder %s37, 0
      %p419 = por %p417, %p418
      %p420 = scmp.ne.s32.totalorder %s408, %s409
      %p421 = scmp.eq.s32.totalorder %s38, 1
      %p422 = por %p420, %p421
      %p424 = scmp.ne.s32.totalorder %s409, %s423
      %p425 = scmp.eq.s32.totalorder %s38, 0
      %p426 = por %p424, %p425
      %s428 = sadd.s32 %s427, 1
      %p431 = scmp.eq.s32.totalorder %s32, 1
      %p432 = scmp.ne.s32.totalorder %s427, %s429
      %p433 = scmp.eq.s32.totalorder %s32, 0
      %p434 = por %p432, %p433
      %p435 = scmp.ne.s32.totalorder %s427, %s429
      %p436 = scmp.eq.s32.totalorder %s37, 1
      %p437 = por %p435, %p436
      %p438 = scmp.ne.s32.totalorder %s429, %s430
      %p439 = scmp.eq.s32.totalorder %s37, 0
      %p440 = por %p438, %p439
      %p441 = scmp.ne.s32.totalorder %s429, %s430
      %p442 = scmp.eq.s32.totalorder %s38, 1
      %p443 = por %p441, %p442
      %p445 = scmp.ne.s32.totalorder %s430, %s444
      %p446 = scmp.eq.s32.totalorder %s38, 0
      %p447 = por %p445, %p446
      %s449 = sadd.s32 %s448, 1
      %p452 = scmp.eq.s32.totalorder %s32, 1
      %p453 = scmp.ne.s32.totalorder %s448, %s450
      %p454 = scmp.eq.s32.totalorder %s32, 0
      %p455 = por %p453, %p454
      %p456 = scmp.ne.s32.totalorder %s448, %s450
      %p457 = scmp.eq.s32.totalorder %s37, 1
      %p458 = por %p456, %p457
      %p459 = scmp.ne.s32.totalorder %s450, %s451
      %p460 = scmp.eq.s32.totalorder %s37, 0
      %p461 = por %p459, %p460
      %p462 = scmp.ne.s32.totalorder %s450, %s451
      %p463 = scmp.eq.s32.totalorder %s38, 1
      %p464 = por %p462, %p463
      %p466 = scmp.ne.s32.totalorder %s451, %s465
      %p467 = scmp.eq.s32.totalorder %s38, 0
      %p468 = por %p466, %p467
      %s469 = ssub.s32 %s32, %s39
      %p470 = scmp.eq.s32.totalorder %s469, 0
      %s472 = sadd.s32 %s471, 1
      %s473 = scalar_select %p470, %s471, %s472
      %p476 = pneg %p470
      %p477 = scmp.eq.s32.totalorder %s32, 1
      %p478 = por %p476, %p477
      %p479 = scmp.ne.s32.totalorder %s471, %s474
      %p480 = scmp.eq.s32.totalorder %s32, 0
      %p481 = por %p479, %p480
      %p482 = scmp.ne.s32.totalorder %s471, %s474
      %p483 = scmp.eq.s32.totalorder %s37, 1
      %p484 = por %p482, %p483
      %p485 = scmp.ne.s32.totalorder %s474, %s475
      %p486 = scmp.eq.s32.totalorder %s37, 0
      %p487 = por %p485, %p486
      %p488 = scmp.ne.s32.totalorder %s474, %s475
      %p489 = scmp.eq.s32.totalorder %s38, 1
      %p490 = por %p488, %p489
      %p492 = scmp.ne.s32.totalorder %s475, %s491
      %p493 = scmp.eq.s32.totalorder %s38, 0
      %p494 = por %p492, %p493
      %s495 = ssub.s32 %s32, %s39
      %p496 = scmp.eq.s32.totalorder %s495, 0
      %s498 = sadd.s32 %s497, 1
      %s499 = scalar_select %p496, %s497, %s498
      %p502 = pneg %p496
      %p503 = scmp.eq.s32.totalorder %s32, 1
      %p504 = por %p502, %p503
      %p505 = scmp.ne.s32.totalorder %s497, %s500
      %p506 = scmp.eq.s32.totalorder %s32, 0
      %p507 = por %p505, %p506
      %p508 = scmp.ne.s32.totalorder %s497, %s500
      %p509 = scmp.eq.s32.totalorder %s37, 1
      %p510 = por %p508, %p509
      %p511 = scmp.ne.s32.totalorder %s500, %s501
      %p512 = scmp.eq.s32.totalorder %s37, 0
      %p513 = por %p511, %p512
      %p514 = scmp.ne.s32.totalorder %s500, %s501
      %p515 = scmp.eq.s32.totalorder %s38, 1
      %p516 = por %p514, %p515
      %p518 = scmp.ne.s32.totalorder %s501, %s517
      %p519 = scmp.eq.s32.totalorder %s38, 0
      %p520 = por %p518, %p519
      %p521 = scmp.le.s32.totalorder 1, %s32
      %p522 = scmp.lt.s32.totalorder %s32, 3
      %p523 = pnand %p521, %p522
      %p524 = pneg %p523
      // Predicated region
      $region9: #{attentional_gnn_pallas.1} parent=5 // pred_check
        _
      $region10: #{attentional_gnn_pallas.1} parent=5 // pred_check_branch
        %526 = sbr.rel (%p523) target = $region12
      $region11: #{attentional_gnn_pallas.1} parent=5 // pred_region
        %s527 = ssub.s32 %s32, 1
        // Predicated region
        $region13: #{attentional_gnn_pallas.1} parent=11 // pred_check
          %p528 = pneg %p209
        $region14: #{attentional_gnn_pallas.1} parent=11 // pred_check_branch
          %530 = sbr.rel (%p528) target = $region16
        $region15: #{attentional_gnn_pallas.1} parent=11 // pred_region
          _
        $region16: #{attentional_gnn_pallas.1} parent=11 // pred_fallthru
          _
        // Predicated region
        $region17: #{attentional_gnn_pallas.1} parent=11 // pred_check
          %p531 = pneg %p230
        $region18: #{attentional_gnn_pallas.1} parent=11 // pred_check_branch
          %533 = sbr.rel (%p531) target = $region20
        $region19: #{attentional_gnn_pallas.1} parent=11 // pred_region
          _
        $region20: #{attentional_gnn_pallas.1} parent=11 // pred_fallthru
          _
        // Predicated region
        $region21: #{attentional_gnn_pallas.1} parent=11 // pred_check
          %p534 = pneg %p251
        $region22: #{attentional_gnn_pallas.1} parent=11 // pred_check_branch
          %536 = sbr.rel (%p534) target = $region24
        $region23: #{attentional_gnn_pallas.1} parent=11 // pred_region
          _
        $region24: #{attentional_gnn_pallas.1} parent=11 // pred_fallthru
          _
        // Predicated region
        $region25: #{attentional_gnn_pallas.1} parent=11 // pred_check
          %p537 = pneg %p272
        $region26: #{attentional_gnn_pallas.1} parent=11 // pred_check_branch
          %539 = sbr.rel (%p537) target = $region28
        $region27: #{attentional_gnn_pallas.1} parent=11 // pred_region
          _
        $region28: #{attentional_gnn_pallas.1} parent=11 // pred_fallthru
          _
        // Predicated region
        $region29: #{attentional_gnn_pallas.1} parent=11 // pred_check
          %p540 = pneg %p293
        $region30: #{attentional_gnn_pallas.1} parent=11 // pred_check_branch
          %542 = sbr.rel (%p540) target = $region32
        $region31: #{attentional_gnn_pallas.1} parent=11 // pred_region
          _
        $region32: #{attentional_gnn_pallas.1} parent=11 // pred_fallthru
          _
        // Predicated region
        $region33: #{attentional_gnn_pallas.1} parent=11 // pred_check
          %p543 = pneg %p314
        $region34: #{attentional_gnn_pallas.1} parent=11 // pred_check_branch
          %545 = sbr.rel (%p543) target = $region36
        $region35: #{attentional_gnn_pallas.1} parent=11 // pred_region
          _
        $region36: #{attentional_gnn_pallas.1} parent=11 // pred_fallthru
          _
        // Predicated region
        $region37: #{attentional_gnn_pallas.1} parent=11 // pred_check
          %p546 = pneg %p335
        $region38: #{attentional_gnn_pallas.1} parent=11 // pred_check_branch
          %548 = sbr.rel (%p546) target = $region40
        $region39: #{attentional_gnn_pallas.1} parent=11 // pred_region
          _
        $region40: #{attentional_gnn_pallas.1} parent=11 // pred_fallthru
          _
        // Predicated region
        $region41: #{attentional_gnn_pallas.1} parent=11 // pred_check
          %p549 = pneg %p356
        $region42: #{attentional_gnn_pallas.1} parent=11 // pred_check_branch
          %551 = sbr.rel (%p549) target = $region44
        $region43: #{attentional_gnn_pallas.1} parent=11 // pred_region
          _
        $region44: #{attentional_gnn_pallas.1} parent=11 // pred_fallthru
          _
        // Predicated region
        $region45: #{attentional_gnn_pallas.1} parent=11 // pred_check
          %p552 = pneg %p377
        $region46: #{attentional_gnn_pallas.1} parent=11 // pred_check_branch
          %554 = sbr.rel (%p552) target = $region48
        $region47: #{attentional_gnn_pallas.1} parent=11 // pred_region
          _
        $region48: #{attentional_gnn_pallas.1} parent=11 // pred_fallthru
          _
        // Predicated region
        $region49: #{attentional_gnn_pallas.1} parent=11 // pred_check
          %p555 = pneg %p398
        $region50: #{attentional_gnn_pallas.1} parent=11 // pred_check_branch
          %557 = sbr.rel (%p555) target = $region52
        $region51: #{attentional_gnn_pallas.1} parent=11 // pred_region
          _
        $region52: #{attentional_gnn_pallas.1} parent=11 // pred_fallthru
          _
        // Predicated region
        $region53: #{attentional_gnn_pallas.1} parent=11 // pred_check
          %p558 = pneg %p419
        $region54: #{attentional_gnn_pallas.1} parent=11 // pred_check_branch
          %560 = sbr.rel (%p558) target = $region56
        $region55: #{attentional_gnn_pallas.1} parent=11 // pred_region
          %s562 = ssub.s32 32, 32
          %563 = vsyncadd [#allocation3], %s562
          %s564 = sshll.u32 [#allocation2], 4
          %s565 = int_to_ptr.vmem [resolvable:$true] %s564
          %570 = dma.hbm_to_vmem [thread:$0]  %s16, 32, %s565, [#allocation3], 16, 16, 1
        $region56: #{attentional_gnn_pallas.1} parent=11 // pred_fallthru
          _
        // Predicated region
        $region57: #{attentional_gnn_pallas.1} parent=11 // pred_check
          %p571 = pneg %p440
        $region58: #{attentional_gnn_pallas.1} parent=11 // pred_check_branch
          %573 = sbr.rel (%p571) target = $region60
        $region59: #{attentional_gnn_pallas.1} parent=11 // pred_region
          _
        $region60: #{attentional_gnn_pallas.1} parent=11 // pred_fallthru
          _
        // Predicated region
        $region61: #{attentional_gnn_pallas.1} parent=11 // pred_check
          %p574 = pneg %p461
        $region62: #{attentional_gnn_pallas.1} parent=11 // pred_check_branch
          %576 = sbr.rel (%p574) target = $region64
        $region63: #{attentional_gnn_pallas.1} parent=11 // pred_region
          %s578 = ssub.s32 32, 32
          %579 = vsyncadd [#allocation6], %s578
          %s580 = sshll.u32 [#allocation5], 4
          %s581 = int_to_ptr.vmem [resolvable:$true] %s580
          %586 = dma.hbm_to_vmem [thread:$0]  %s18, 32, %s581, [#allocation6], 16, 16, 1
        $region64: #{attentional_gnn_pallas.1} parent=11 // pred_fallthru
          _
      $region12: #{attentional_gnn_pallas.1} parent=5 // pred_fallthru
        _
      %p587 = scmp.lt.s32.totalorder %s32, 2
      // Predicated region
      $region65: #{attentional_gnn_pallas.1} parent=5 // pred_check
        %p588 = pneg %p587
      $region66: #{attentional_gnn_pallas.1} parent=5 // pred_check_branch
        %590 = sbr.rel (%p588) target = $region68
      $region67: #{attentional_gnn_pallas.1} parent=5 // pred_region
        // Predicated region
        $region69: #{attentional_gnn_pallas.1} parent=67 // pred_check
          %p591 = pneg %p52
        $region70: #{attentional_gnn_pallas.1} parent=67 // pred_check_branch
          %593 = sbr.rel (%p591) target = $region72
        $region71: #{attentional_gnn_pallas.1} parent=67 // pred_region
          %p594 = scmp.lt.s32.totalorder %s32, 1
          %s595 = scalar_select %p594, %s32, 1
          %s596 = smul.addr %s595, 2
          %s597 = smul.addr %s596, 8
          %s598 = scalar_lea.vmem %s0, %s597
        $region72: #{attentional_gnn_pallas.1} parent=67 // pred_fallthru
          _
        // Predicated region
        $region73: #{attentional_gnn_pallas.1} parent=67 // pred_check
          %p599 = pneg %p78
        $region74: #{attentional_gnn_pallas.1} parent=67 // pred_check_branch
          %601 = sbr.rel (%p599) target = $region76
        $region75: #{attentional_gnn_pallas.1} parent=67 // pred_region
          %p602 = scmp.lt.s32.totalorder %s32, 1
          %s603 = scalar_select %p602, %s32, 1
          %s604 = smul.addr %s603, 2
          %s605 = smul.addr %s604, 8
          %s606 = scalar_lea.vmem %s1, %s605
        $region76: #{attentional_gnn_pallas.1} parent=67 // pred_fallthru
          _
        // Predicated region
        $region77: #{attentional_gnn_pallas.1} parent=67 // pred_check
          %p607 = pneg %p104
        $region78: #{attentional_gnn_pallas.1} parent=67 // pred_check_branch
          %609 = sbr.rel (%p607) target = $region80
        $region79: #{attentional_gnn_pallas.1} parent=67 // pred_region
          %p610 = scmp.lt.s32.totalorder %s32, 1
          %s611 = scalar_select %p610, %s32, 1
          %s612 = smul.addr %s611, 2
          %s613 = smul.addr %s612, 8
          %s614 = scalar_lea.vmem %s2, %s613
        $region80: #{attentional_gnn_pallas.1} parent=67 // pred_fallthru
          _
        // Predicated region
        $region81: #{attentional_gnn_pallas.1} parent=67 // pred_check
          %p615 = pneg %p130
        $region82: #{attentional_gnn_pallas.1} parent=67 // pred_check_branch
          %617 = sbr.rel (%p615) target = $region84
        $region83: #{attentional_gnn_pallas.1} parent=67 // pred_region
          %p618 = scmp.lt.s32.totalorder %s32, 1
          %s619 = scalar_select %p618, %s32, 1
          %s620 = smul.addr %s619, 2
          %s621 = smul.addr %s620, 8
          %s622 = scalar_lea.vmem %s3, %s621
        $region84: #{attentional_gnn_pallas.1} parent=67 // pred_fallthru
          _
        // Predicated region
        $region85: #{attentional_gnn_pallas.1} parent=67 // pred_check
          %p623 = pneg %p156
        $region86: #{attentional_gnn_pallas.1} parent=67 // pred_check_branch
          %625 = sbr.rel (%p623) target = $region88
        $region87: #{attentional_gnn_pallas.1} parent=67 // pred_region
          %p626 = scmp.lt.s32.totalorder %s32, 1
          %s627 = scalar_select %p626, %s32, 1
          %s628 = smul.addr %s627, 2
          %s629 = smul.addr %s628, 8
          %s630 = scalar_lea.vmem %s4, %s629
        $region88: #{attentional_gnn_pallas.1} parent=67 // pred_fallthru
          _
        // Predicated region
        $region89: #{attentional_gnn_pallas.1} parent=67 // pred_check
          %p631 = pneg %p182
        $region90: #{attentional_gnn_pallas.1} parent=67 // pred_check_branch
          %633 = sbr.rel (%p631) target = $region92
        $region91: #{attentional_gnn_pallas.1} parent=67 // pred_region
          %p634 = scmp.lt.s32.totalorder %s32, 1
          %s635 = scalar_select %p634, %s32, 1
          %s636 = smul.addr %s635, 2
          %s637 = smul.addr %s636, 8
          %s638 = scalar_lea.vmem %s5, %s637
        $region92: #{attentional_gnn_pallas.1} parent=67 // pred_fallthru
          _
      $region68: #{attentional_gnn_pallas.1} parent=5 // pred_fallthru
        _
      %p639 = scmp.le.s32.totalorder 1, %s32
      %p640 = scmp.lt.s32.totalorder %s32, 3
      %p641 = pnand %p639, %p640
      %p642 = pneg %p641
      // Predicated region
      $region93: #{attentional_gnn_pallas.1} parent=5 // pred_check
        _
      $region94: #{attentional_gnn_pallas.1} parent=5 // pred_check_branch
        %644 = sbr.rel (%p641) target = $region96
      $region95: #{attentional_gnn_pallas.1} parent=5 // pred_region
        %s645 = ssub.s32 %s32, 1
        // Predicated region
        $region97: #{attentional_gnn_pallas.1} parent=95 // pred_check
          %p646 = pneg %p419
        $region98: #{attentional_gnn_pallas.1} parent=95 // pred_check_branch
          %648 = sbr.rel (%p646) target = $region100
        $region99: #{attentional_gnn_pallas.1} parent=95 // pred_region
          %649 = dma.done [#allocation3], 32
        $region100: #{attentional_gnn_pallas.1} parent=95 // pred_fallthru
          _
        // Predicated region
        $region101: #{attentional_gnn_pallas.1} parent=95 // pred_check
          %p650 = pneg %p461
        $region102: #{attentional_gnn_pallas.1} parent=95 // pred_check_branch
          %652 = sbr.rel (%p650) target = $region104
        $region103: #{attentional_gnn_pallas.1} parent=95 // pred_region
          %653 = dma.done [#allocation6], 32
        $region104: #{attentional_gnn_pallas.1} parent=95 // pred_fallthru
          _
        %p654 = scmp.lt.s32.totalorder %s37, 1
        %s655 = scalar_select %p654, %s37, 1
        %s656 = smul.addr %s655, 2
        %s657 = smul.addr %s656, 8
        %s658 = scalar_lea.vmem %s0, %s657
        %p659 = pneg %p58
        %p660 = pneg %p55
        %p661 = scmp.lt.s32.totalorder %s37, 1
        %s662 = scalar_select %p661, %s37, 1
        %s663 = smul.addr %s662, 2
        %s664 = smul.addr %s663, 8
        %s665 = scalar_lea.vmem %s1, %s664
        %p666 = pneg %p84
        %p667 = pneg %p81
        %p668 = scmp.lt.s32.totalorder %s37, 1
        %s669 = scalar_select %p668, %s37, 1
        %s670 = smul.addr %s669, 2
        %s671 = smul.addr %s670, 8
        %s672 = scalar_lea.vmem %s2, %s671
        %p673 = pneg %p110
        %p674 = pneg %p107
        %p675 = scmp.lt.s32.totalorder %s37, 1
        %s676 = scalar_select %p675, %s37, 1
        %s677 = smul.addr %s676, 2
        %s678 = smul.addr %s677, 8
        %s679 = scalar_lea.vmem %s3, %s678
        %p680 = pneg %p136
        %p681 = pneg %p133
        %p682 = scmp.lt.s32.totalorder %s37, 1
        %s683 = scalar_select %p682, %s37, 1
        %s684 = smul.addr %s683, 2
        %s685 = smul.addr %s684, 8
        %s686 = scalar_lea.vmem %s4, %s685
        %p687 = pneg %p162
        %p688 = pneg %p159
        %p689 = scmp.lt.s32.totalorder %s37, 1
        %s690 = scalar_select %p689, %s37, 1
        %s691 = smul.addr %s690, 2
        %s692 = smul.addr %s691, 8
        %s693 = scalar_lea.vmem %s5, %s692
        %p694 = pneg %p188
        %p695 = pneg %p185
        %p696 = pneg %p209
        %p697 = pneg %p206
        %p698 = pneg %p230
        %p699 = pneg %p227
        %p700 = pneg %p251
        %p701 = pneg %p248
        %p702 = pneg %p272
        %p703 = pneg %p269
        %p704 = pneg %p293
        %p705 = pneg %p290
        %p706 = pneg %p314
        %p707 = pneg %p311
        %p708 = pneg %p335
        %p709 = pneg %p332
        %p710 = pneg %p356
        %p711 = pneg %p353
        %p712 = pneg %p377
        %p713 = pneg %p374
        %p714 = pneg %p398
        %p715 = pneg %p395
        %p716 = pneg %p419
        %p717 = pneg %p416
        %p718 = pneg %p440
        %p719 = pneg %p437
        %p720 = pneg %p461
        %p721 = pneg %p458
        %p722 = pneg %p487
        %p723 = pneg %p484
        %s724 = sand.u32 %s474, 1
        %s725 = scalar_lea.sflag [#allocation4], %s724
        %s726 = sand.u32 %s474, 1
        %s727 = smul.addr %s726, 16
        %s728 = scalar_lea.vmem [#allocation7], %s727
        %p729 = pneg %p513
        %p730 = pneg %p510
        %p731 = scmp.lt.s32.totalorder %s37, 1
        %s732 = scalar_select %p731, %s37, 1
        %s733 = smul.addr %s732, 2
        %s734 = smul.addr %s733, 8
        %s735 = scalar_lea.vmem %s20, %s734
        %p736 = scmp.lt.s32.totalorder %s37, 1
        %s737 = scalar_select %p736, %s37, 1
        %s738 = smul.addr %s737, 2
        %s739 = smul.addr %s738, 8
        %s740 = scalar_lea.vmem %s0, %s739
        %p741 = scmp.lt.s32.totalorder %s37, 1
        %s742 = scalar_select %p741, %s37, 1
        %s743 = smul.addr %s742, 2
        %s744 = smul.addr %s743, 8
        %s745 = scalar_lea.vmem %s1, %s744
        %p746 = scmp.lt.s32.totalorder %s37, 1
        %s747 = scalar_select %p746, %s37, 1
        %s748 = smul.addr %s747, 2
        %s749 = smul.addr %s748, 8
        %s750 = scalar_lea.vmem %s2, %s749
        %p751 = scmp.lt.s32.totalorder %s37, 1
        %s752 = scalar_select %p751, %s37, 1
        %s753 = smul.addr %s752, 2
        %s754 = smul.addr %s753, 8
        %s755 = scalar_lea.vmem %s3, %s754
        %p756 = scmp.lt.s32.totalorder %s37, 1
        %s757 = scalar_select %p756, %s37, 1
        %s758 = smul.addr %s757, 2
        %s759 = smul.addr %s758, 8
        %s760 = scalar_lea.vmem %s4, %s759
        %p761 = scmp.lt.s32.totalorder %s37, 1
        %s762 = scalar_select %p761, %s37, 1
        %s763 = smul.addr %s762, 2
        %s764 = smul.addr %s763, 8
        %s765 = scalar_lea.vmem %s5, %s764
        %p766 = scmp.lt.s32.totalorder %s37, 1
        %s767 = scalar_select %p766, %s37, 1
        %s768 = smul.addr %s767, 2
        %s769 = smul.addr %s768, 8
        %s770 = scalar_lea.vmem %s20, %s769
        %v772 = vld [vmem:[%s740] sm:$0xff]
        %v773 = vld [vmem:[%s740 + $0x8] sm:$0xff]
        %v774 = vld [vmem:[%s745] sm:$0xff]
        %v775 = vld [vmem:[%s745 + $0x8] sm:$0xf]
        %v776 = vld [vmem:[%s750] sm:$0xff]
        %v777 = vld [vmem:[%s750 + $0x8] sm:$0xff]
        %vm778 = vcmp.eq.f32.partialorder %v776, 0.0
        %vm779 = vcmp.eq.f32.partialorder %v777, 0.0
        %v780 = vsel %vm778, -1e+30, 0.0
        %v781 = vsel %vm779, -1e+30, 0.0
        %v782 = vld [vmem:[%s755] sm:$0xff]
        %v783 = vld [vmem:[%s755 + $0x8] sm:$0xf]
        %vm784 = vcmp.eq.f32.partialorder %v782, 0.0
        %vm785 = vcmp.eq.f32.partialorder %v783, 0.0
        %v786 = vsel %vm784, -1e+30, 0.0
        %v787 = vsel %vm785, -1e+30, 0.0
        %v788 = vld [vmem:[%s760] sm:$0xff]
        %v789 = vld [vmem:[%s760 + $0x8] sm:$0xff]
        %vm790 = vcmp.eq.f32.partialorder %v788, 0.0
        %vm791 = vcmp.eq.f32.partialorder %v789, 0.0
        %v792 = vsel %vm790, -1e+30, 0.0
        %v793 = vsel %vm791, -1e+30, 0.0
        %v794 = vld [vmem:[%s765] sm:$0xff]
        %v795 = vld [vmem:[%s765 + $0x8] sm:$0xf]
        %vm796 = vcmp.eq.f32.partialorder %v794, 0.0
        %vm797 = vcmp.eq.f32.partialorder %v795, 0.0
        %v798 = vsel %vm796, -1e+30, 0.0
        %v799 = vsel %vm797, -1e+30, 0.0
        %v800 = vld [vmem:[%s6] sm:$0xf]
        %v801 = vld [vmem:[%s6 + $0x4] sm:$0xf]
        %v802 = vld [vmem:[%s6 + $0x8] sm:$0xf]
        %v803 = vld [vmem:[%s6 + $0xc] sm:$0xf]
        %v804 = vld [vmem:[%s7] sm:$0x1]
        %v805 = vld [vmem:[%s8] sm:$0xf]
        %v806 = vld [vmem:[%s8 + $0x4] sm:$0xf]
        %v807 = vld [vmem:[%s8 + $0x8] sm:$0xf]
        %v808 = vld [vmem:[%s8 + $0xc] sm:$0xf]
        %v809 = vld [vmem:[%s9] sm:$0x1]
        %v810 = vld [vmem:[%s10] sm:$0xf]
        %v811 = vld [vmem:[%s10 + $0x4] sm:$0xf]
        %v812 = vld [vmem:[%s10 + $0x8] sm:$0xf]
        %v813 = vld [vmem:[%s10 + $0xc] sm:$0xf]
        %v814 = vld [vmem:[%s11] sm:$0x1]
        %v815 = vld [vmem:[%s12] sm:$0xf]
        %v816 = vld [vmem:[%s12 + $0x4] sm:$0xf]
        %v817 = vld [vmem:[%s12 + $0x8] sm:$0xf]
        %v818 = vld [vmem:[%s12 + $0xc] sm:$0xf]
        %v819 = vld [vmem:[%s13] sm:$0x1]
        %v820 = vld [vmem:[%s14] sm:$0xf]
        %v821 = vld [vmem:[%s14 + $0x4] sm:$0xf]
        %v822 = vld [vmem:[%s14 + $0x8] sm:$0xf]
        %v823 = vld [vmem:[%s14 + $0xc] sm:$0xf]
        %v824 = vld [vmem:[%s15] sm:$0xf]
        %v825 = vld [vmem:[%s15 + $0x4] sm:$0xf]
        %v826 = vld [vmem:[%s15 + $0x8] sm:$0xf]
        %v827 = vld [vmem:[%s15 + $0xc] sm:$0xf]
        %v828 = vld [vmem:[#allocation2] sm:$0x1]
        %v829 = vld [vmem:[%s17] sm:$0xf]
        %v830 = vld [vmem:[%s17 + $0x4] sm:$0xf]
        %v831 = vld [vmem:[%s17 + $0x8] sm:$0xf]
        %v832 = vld [vmem:[%s17 + $0xc] sm:$0xf]
        %v833 = vld [vmem:[%s17 + $0x10] sm:$0xf]
        %v834 = vld [vmem:[%s17 + $0x14] sm:$0xf]
        %v835 = vld [vmem:[%s17 + $0x18] sm:$0xf]
        %v836 = vld [vmem:[%s17 + $0x1c] sm:$0xf]
        %v837 = vld [vmem:[#allocation5] sm:$0x1]
        %v838 = vpack.c.bf16 %v773, %v772
        %v839 = vpack.c.bf16 %v775, %v774
        %v841 = vlaneseq
        %v842 = vshrl.u32 %v841, 7
        %v843 = vsub.s32 0, %v842
        %v844 = vrot.slane %v804, %v843
        %v850 = vunpack.c.l.b16 %v800
        %v851 = vunpack.c.l.b16 %v801
        %v852 = vunpack.c.l.b16 %v802
        %v853 = vunpack.c.l.b16 %v803
        %v854 = vpack.c.b16 %v851, %v850
        %v855 = vpack.c.b16 %v853, %v852
        %vm858 = vcmask 261120
        %v860 = vsel %vm858, %v838, 0
        %v863 = vsel %vm858, %v839, 0
        %865 = vmatprep.subr.bf16.mxu0 0
        %866 = vmatpush1.bf16.msra.mxu0 %v854
        %867 = vmatprep.subr.bf16.mxu0 0
        %868 = vmatpush1.bf16.msra.mxu0 %v855
        %869 = vmatprep.subr.bf16.mxu0 0
        %870 = vmatpush1.bf16.msra.mxu0 0
        %871 = vmatprep.subr.bf16.mxu0 0
        %872 = vmatpush1.bf16.msra.mxu0 0
        %873 = vmatprep.subr.bf16.mxu0 0
        %874 = vmatpush1.bf16.msra.mxu0 0
        %875 = vmatprep.subr.bf16.mxu0 0
        %876 = vmatpush1.bf16.msra.mxu0 0
        %877 = vmatprep.subr.bf16.mxu0 0
        %878 = vmatpush1.bf16.msra.mxu0 0
        %879 = vmatprep.subr.bf16.mxu0 0
        %880 = vmatpush1.bf16.msra.mxu0 0
        %881 = vmatprep.subr.bf16.mxu0 0
        %882 = vmatpush1.bf16.msra.mxu0 0
        %883 = vmatprep.subr.bf16.mxu0 0
        %884 = vmatpush1.bf16.msra.mxu0 0
        %885 = vmatprep.subr.bf16.mxu0 0
        %886 = vmatpush1.bf16.msra.mxu0 0
        %887 = vmatprep.subr.bf16.mxu0 0
        %888 = vmatpush1.bf16.msra.mxu0 0
        %889 = vmatprep.subr.bf16.mxu0 0
        %890 = vmatpush1.bf16.msra.mxu0 0
        %891 = vmatprep.subr.bf16.mxu0 0
        %892 = vmatpush1.bf16.msra.mxu0 0
        %893 = vmatprep.subr.bf16.mxu0 0
        %894 = vmatpush1.bf16.msra.mxu0 0
        %895 = vmatprep.subr.bf16.mxu0 0
        %896 = vmatpush1.bf16.msra.mxu0 0
        %897 = vmatprep.mubr.bf16.mxu0 0
        %898 = vmatmul.mubr.bf16.gmra.mrb[0].mxu0 %v860
        %v899 = vpop.f32.mrb[0].mxu0
        %v900 = vadd.f32 %v844, %v899
        %v901 = vpop.f32.mrb[0].mxu0
        %v902 = vpop.f32.mrb[0].mxu0
        %v903 = vadd.f32 %v844, %v902
        %v904 = vpop.f32.mrb[0].mxu0
        %905 = vmatprep.mubr.bf16.mxu0 0
        %906 = vmatmul.mubr.bf16.gmra.mrb[0].mxu0 %v863
        %v907 = vpop.f32.mrb[0].mxu0
        %v908 = vadd.f32 %v844, %v907
        %v909 = vpop.f32.mrb[0].mxu0
        %v910 = vpop.f32.mrb[0].mxu0
        %v911 = vadd.f32 %v844, %v910
        %v912 = vpop.f32.mrb[0].mxu0
        %913 = vdwg.mxu0
        %v915 = vlaneseq
        %v916 = vshrl.u32 %v915, 7
        %v917 = vsub.s32 0, %v916
        %v918 = vrot.slane %v809, %v917
        %v924 = vunpack.c.l.b16 %v805
        %v925 = vunpack.c.l.b16 %v806
        %v926 = vunpack.c.l.b16 %v807
        %v927 = vunpack.c.l.b16 %v808
        %v928 = vpack.c.b16 %v925, %v924
        %v929 = vpack.c.b16 %v927, %v926
        %932 = vmatprep.subr.bf16.mxu0 0
        %933 = vmatpush1.bf16.msra.mxu0 %v928
        %934 = vmatprep.subr.bf16.mxu0 0
        %935 = vmatpush1.bf16.msra.mxu0 %v929
        %936 = vmatprep.subr.bf16.mxu0 0
        %937 = vmatpush1.bf16.msra.mxu0 0
        %938 = vmatprep.subr.bf16.mxu0 0
        %939 = vmatpush1.bf16.msra.mxu0 0
        %940 = vmatprep.subr.bf16.mxu0 0
        %941 = vmatpush1.bf16.msra.mxu0 0
        %942 = vmatprep.subr.bf16.mxu0 0
        %943 = vmatpush1.bf16.msra.mxu0 0
        %944 = vmatprep.subr.bf16.mxu0 0
        %945 = vmatpush1.bf16.msra.mxu0 0
        %946 = vmatprep.subr.bf16.mxu0 0
        %947 = vmatpush1.bf16.msra.mxu0 0
        %948 = vmatprep.subr.bf16.mxu0 0
        %949 = vmatpush1.bf16.msra.mxu0 0
        %950 = vmatprep.subr.bf16.mxu0 0
        %951 = vmatpush1.bf16.msra.mxu0 0
        %952 = vmatprep.subr.bf16.mxu0 0
        %953 = vmatpush1.bf16.msra.mxu0 0
        %954 = vmatprep.subr.bf16.mxu0 0
        %955 = vmatpush1.bf16.msra.mxu0 0
        %956 = vmatprep.subr.bf16.mxu0 0
        %957 = vmatpush1.bf16.msra.mxu0 0
        %958 = vmatprep.subr.bf16.mxu0 0
        %959 = vmatpush1.bf16.msra.mxu0 0
        %960 = vmatprep.subr.bf16.mxu0 0
        %961 = vmatpush1.bf16.msra.mxu0 0
        %962 = vmatprep.subr.bf16.mxu0 0
        %963 = vmatpush1.bf16.msra.mxu0 0
        %964 = vmatprep.mubr.bf16.mxu0 0
        %965 = vmatmul.mubr.bf16.gmra.mrb[0].mxu0 %v860
        %v966 = vpop.f32.mrb[0].mxu0
        %v967 = vadd.f32 %v918, %v966
        %v968 = vpop.f32.mrb[0].mxu0
        %v969 = vpop.f32.mrb[0].mxu0
        %v970 = vadd.f32 %v918, %v969
        %v971 = vpop.f32.mrb[0].mxu0
        %972 = vmatprep.mubr.bf16.mxu0 0
        %973 = vmatmul.mubr.bf16.gmra.mrb[0].mxu0 %v863
        %v974 = vpop.f32.mrb[0].mxu0
        %v975 = vadd.f32 %v918, %v974
        %v976 = vpop.f32.mrb[0].mxu0
        %v977 = vpop.f32.mrb[0].mxu0
        %v978 = vadd.f32 %v918, %v977
        %v979 = vpop.f32.mrb[0].mxu0
        %980 = vdwg.mxu0
        %v982 = vlaneseq
        %v983 = vshrl.u32 %v982, 7
        %v984 = vsub.s32 0, %v983
        %v985 = vrot.slane %v814, %v984
        %v991 = vunpack.c.l.b16 %v810
        %v992 = vunpack.c.l.b16 %v811
        %v993 = vunpack.c.l.b16 %v812
        %v994 = vunpack.c.l.b16 %v813
        %v995 = vpack.c.b16 %v992, %v991
        %v996 = vpack.c.b16 %v994, %v993
        %999 = vmatprep.subr.bf16.mxu0 0
        %1000 = vmatpush1.bf16.msra.mxu0 %v995
        %1001 = vmatprep.subr.bf16.mxu0 0
        %1002 = vmatpush1.bf16.msra.mxu0 %v996
        %1003 = vmatprep.subr.bf16.mxu0 0
        %1004 = vmatpush1.bf16.msra.mxu0 0
        %1005 = vmatprep.subr.bf16.mxu0 0
        %1006 = vmatpush1.bf16.msra.mxu0 0
        %1007 = vmatprep.subr.bf16.mxu0 0
        %1008 = vmatpush1.bf16.msra.mxu0 0
        %1009 = vmatprep.subr.bf16.mxu0 0
        %1010 = vmatpush1.bf16.msra.mxu0 0
        %1011 = vmatprep.subr.bf16.mxu0 0
        %1012 = vmatpush1.bf16.msra.mxu0 0
        %1013 = vmatprep.subr.bf16.mxu0 0
        %1014 = vmatpush1.bf16.msra.mxu0 0
        %1015 = vmatprep.subr.bf16.mxu0 0
        %1016 = vmatpush1.bf16.msra.mxu0 0
        %1017 = vmatprep.subr.bf16.mxu0 0
        %1018 = vmatpush1.bf16.msra.mxu0 0
        %1019 = vmatprep.subr.bf16.mxu0 0
        %1020 = vmatpush1.bf16.msra.mxu0 0
        %1021 = vmatprep.subr.bf16.mxu0 0
        %1022 = vmatpush1.bf16.msra.mxu0 0
        %1023 = vmatprep.subr.bf16.mxu0 0
        %1024 = vmatpush1.bf16.msra.mxu0 0
        %1025 = vmatprep.subr.bf16.mxu0 0
        %1026 = vmatpush1.bf16.msra.mxu0 0
        %1027 = vmatprep.subr.bf16.mxu0 0
        %1028 = vmatpush1.bf16.msra.mxu0 0
        %1029 = vmatprep.subr.bf16.mxu0 0
        %1030 = vmatpush1.bf16.msra.mxu0 0
        %1031 = vmatprep.mubr.bf16.mxu0 0
        %1032 = vmatmul.mubr.bf16.gmra.mrb[0].mxu0 %v860
        %v1033 = vpop.f32.mrb[0].mxu0
        %v1034 = vadd.f32 %v985, %v1033
        %v1035 = vpop.f32.mrb[0].mxu0
        %v1036 = vpop.f32.mrb[0].mxu0
        %v1037 = vadd.f32 %v985, %v1036
        %v1038 = vpop.f32.mrb[0].mxu0
        %1039 = vmatprep.mubr.bf16.mxu0 0
        %1040 = vmatmul.mubr.bf16.gmra.mrb[0].mxu0 %v863
        %v1041 = vpop.f32.mrb[0].mxu0
        %v1042 = vadd.f32 %v985, %v1041
        %v1043 = vpop.f32.mrb[0].mxu0
        %v1044 = vpop.f32.mrb[0].mxu0
        %v1045 = vadd.f32 %v985, %v1044
        %v1046 = vpop.f32.mrb[0].mxu0
        %1047 = vdwg.mxu0
        %v1048 = vpack.c.bf16 %v903, %v900
        %v1049 = vpack.c.bf16 %v970, %v967
        %vm1050 = vcmask 64512
        %v1052 = vsel %vm1050, %v1048, 0
        %v1055 = vsel %vm1050, %v1049, 0
        %1057 = vmatprep.subr.bf16.mxu0 0
        %1058 = vmatpush1.bf16.xpose.msra.mxu0 %v1055
        %1059 = vmatprep.subr.bf16.mxu0 0
        %1060 = vmatpush1.bf16.xpose.msra.mxu0 0
        %1061 = vmatprep.subr.bf16.mxu0 0
        %1062 = vmatpush1.bf16.xpose.msra.mxu0 0
        %1063 = vmatprep.subr.bf16.mxu0 0
        %1064 = vmatpush1.bf16.xpose.msra.mxu0 0
        %1065 = vmatprep.subr.bf16.mxu0 0
        %1066 = vmatpush1.bf16.xpose.msra.mxu0 0
        %1067 = vmatprep.subr.bf16.mxu0 0
        %1068 = vmatpush1.bf16.xpose.msra.mxu0 0
        %1069 = vmatprep.subr.bf16.mxu0 0
        %1070 = vmatpush1.bf16.xpose.msra.mxu0 0
        %1071 = vmatprep.subr.bf16.mxu0 0
        %1072 = vmatpush1.bf16.xpose.msra.mxu0 0
        %1073 = vmatprep.subr.bf16.mxu0 0
        %1074 = vmatpush1.bf16.xpose.msra.mxu0 0
        %1075 = vmatprep.subr.bf16.mxu0 0
        %1076 = vmatpush1.bf16.xpose.msra.mxu0 0
        %1077 = vmatprep.subr.bf16.mxu0 0
        %1078 = vmatpush1.bf16.xpose.msra.mxu0 0
        %1079 = vmatprep.subr.bf16.mxu0 0
        %1080 = vmatpush1.bf16.xpose.msra.mxu0 0
        %1081 = vmatprep.subr.bf16.mxu0 0
        %1082 = vmatpush1.bf16.xpose.msra.mxu0 0
        %1083 = vmatprep.subr.bf16.mxu0 0
        %1084 = vmatpush1.bf16.xpose.msra.mxu0 0
        %1085 = vmatprep.subr.bf16.mxu0 0
        %1086 = vmatpush1.bf16.xpose.msra.mxu0 0
        %1087 = vmatprep.subr.bf16.mxu0 0
        %1088 = vmatpush1.bf16.xpose.msra.mxu0 0
        %1089 = vmatprep.mubr.bf16.mxu0 0
        %1090 = vmatmul.mubr.bf16.gmra.mrb[0].mxu0 %v1052
        %v1091 = vpop.f32.mrb[0].mxu0
        %v1092 = vadd.f32 %v780, %v1091
        %v1093 = vpop.f32.mrb[0].mxu0
        %v1094 = vpop.f32.mrb[0].mxu0
        %v1095 = vadd.f32 %v781, %v1094
        %v1096 = vpop.f32.mrb[0].mxu0
        %1097 = vdwg.mxu0
        %vm1098 = vcmask 130048
        %v1099 = vsel %vm1098, %v1092, -inf
        %1100 = vmax.xlane.f32.xlu0 %v1099
        %v1101 = vpop.xlane.xlu0 %1100
        %v1102 = vsel %vm1098, %v1095, -inf
        %1103 = vmax.xlane.f32.xlu0 %v1102
        %v1104 = vpop.xlane.xlu0 %1103
        %v1105 = vsub.f32 %v1092, %v1101
        %v1106 = vsub.f32 %v1095, %v1104
        %v1107 = vmul.f32 %v1105, 1.442695
        %v1108 = vpow.pop %v1107
        %v1109 = vmul.f32 %v1106, 1.442695
        %v1110 = vpow.pop %v1109
        %v1111 = vsel %vm1098, %v1108, 0.0
        %1112 = vadd.xlane.f32.xlu0 %v1111
        %v1113 = vpop.xlane.xlu0 %1112
        %v1114 = vsel %vm1098, %v1110, 0.0
        %1115 = vadd.xlane.f32.xlu0 %v1114
        %v1116 = vpop.xlane.xlu0 %1115
        %v1117 = vrcp.pop %v1113
        %v1118 = vrcp.pop %v1116
        %v1119 = vmul.f32 %v1108, %v1117
        %v1120 = vmul.f32 %v1110, %v1118
        %v1121 = vpack.c.bf16 %v1120, %v1119
        %v1122 = vpack.c.bf16 %v1037, %v1034
        %v1124 = vsel %vm1098, %v1121, 0
        %1126 = vmatprep.subr.bf16.mxu0 0
        %1127 = vmatpush1.bf16.msra.mxu0 %v1122
        %1128 = vmatprep.subr.bf16.mxu0 0
        %1129 = vmatpush1.bf16.msra.mxu0 0
        %1130 = vmatprep.subr.bf16.mxu0 0
        %1131 = vmatpush1.bf16.msra.mxu0 0
        %1132 = vmatprep.subr.bf16.mxu0 0
        %1133 = vmatpush1.bf16.msra.mxu0 0
        %1134 = vmatprep.subr.bf16.mxu0 0
        %1135 = vmatpush1.bf16.msra.mxu0 0
        %1136 = vmatprep.subr.bf16.mxu0 0
        %1137 = vmatpush1.bf16.msra.mxu0 0
        %1138 = vmatprep.subr.bf16.mxu0 0
        %1139 = vmatpush1.bf16.msra.mxu0 0
        %1140 = vmatprep.subr.bf16.mxu0 0
        %1141 = vmatpush1.bf16.msra.mxu0 0
        %1142 = vmatprep.subr.bf16.mxu0 0
        %1143 = vmatpush1.bf16.msra.mxu0 0
        %1144 = vmatprep.subr.bf16.mxu0 0
        %1145 = vmatpush1.bf16.msra.mxu0 0
        %1146 = vmatprep.subr.bf16.mxu0 0
        %1147 = vmatpush1.bf16.msra.mxu0 0
        %1148 = vmatprep.subr.bf16.mxu0 0
        %1149 = vmatpush1.bf16.msra.mxu0 0
        %1150 = vmatprep.subr.bf16.mxu0 0
        %1151 = vmatpush1.bf16.msra.mxu0 0
        %1152 = vmatprep.subr.bf16.mxu0 0
        %1153 = vmatpush1.bf16.msra.mxu0 0
        %1154 = vmatprep.subr.bf16.mxu0 0
        %1155 = vmatpush1.bf16.msra.mxu0 0
        %1156 = vmatprep.subr.bf16.mxu0 0
        %1157 = vmatpush1.bf16.msra.mxu0 0
        %1158 = vmatprep.mubr.bf16.mxu0 0
        %1159 = vmatmul.mubr.bf16.gmra.mrb[0].mxu0 %v1124
        %v1160 = vpop.f32.mrb[0].mxu0
        %v1161 = vadd.f32 0.0, %v1160
        %v1162 = vpop.f32.mrb[0].mxu0
        %v1163 = vpop.f32.mrb[0].mxu0
        %v1164 = vadd.f32 0.0, %v1163
        %v1165 = vpop.f32.mrb[0].mxu0
        %1166 = vdwg.mxu0
        %v1167 = vpack.c.bf16 %v1164, %v1161
        %v1169 = vsel %vm1050, %v1167, 0
        %vm1171 = vcmask 1043456
        %v1173 = vsel %vm1171, %v815, 0
        %1175 = vmatprep.subr.bf16.mxu0 0
        %1176 = vmatpush1.bf16.msra.mxu0 %v1173
        %1177 = vmatprep.subr.bf16.mxu0 0
        %1178 = vmatpush1.bf16.msra.mxu0 0
        %1179 = vmatprep.subr.bf16.mxu0 0
        %1180 = vmatpush1.bf16.msra.mxu0 0
        %1181 = vmatprep.subr.bf16.mxu0 0
        %1182 = vmatpush1.bf16.msra.mxu0 0
        %1183 = vmatprep.subr.bf16.mxu0 0
        %1184 = vmatpush1.bf16.msra.mxu0 0
        %1185 = vmatprep.subr.bf16.mxu0 0
        %1186 = vmatpush1.bf16.msra.mxu0 0
        %1187 = vmatprep.subr.bf16.mxu0 0
        %1188 = vmatpush1.bf16.msra.mxu0 0
        %1189 = vmatprep.subr.bf16.mxu0 0
        %1190 = vmatpush1.bf16.msra.mxu0 0
        %1191 = vmatprep.subr.bf16.mxu0 0
        %1192 = vmatpush1.bf16.msra.mxu0 0
        %1193 = vmatprep.subr.bf16.mxu0 0
        %1194 = vmatpush1.bf16.msra.mxu0 0
        %1195 = vmatprep.subr.bf16.mxu0 0
        %1196 = vmatpush1.bf16.msra.mxu0 0
        %1197 = vmatprep.subr.bf16.mxu0 0
        %1198 = vmatpush1.bf16.msra.mxu0 0
        %1199 = vmatprep.subr.bf16.mxu0 0
        %1200 = vmatpush1.bf16.msra.mxu0 0
        %1201 = vmatprep.subr.bf16.mxu0 0
        %1202 = vmatpush1.bf16.msra.mxu0 0
        %1203 = vmatprep.subr.bf16.mxu0 0
        %1204 = vmatpush1.bf16.msra.mxu0 0
        %1205 = vmatprep.subr.bf16.mxu0 0
        %1206 = vmatpush1.bf16.msra.mxu0 0
        %1207 = vmatprep.mubr.bf16.mxu0 0
        %1208 = vmatmul.mubr.bf16.gmra.mrb[0].mxu0 %v1169
        %v1209 = vpop.f32.mrb[0].mxu0
        %v1210 = vadd.f32 0.0, %v1209
        %v1211 = vpop.f32.mrb[0].mxu0
        %v1212 = vpop.f32.mrb[0].mxu0
        %v1213 = vadd.f32 0.0, %v1212
        %v1214 = vpop.f32.mrb[0].mxu0
        %1215 = vdwg.mxu0
        %v1217 = vlaneseq
        %v1218 = vshrl.u32 %v1217, 7
        %v1219 = vsub.s32 0, %v1218
        %v1220 = vrot.slane %v819, %v1219
        %v1222 = vadd.f32 %v1220, %v1210
        %v1223 = vadd.f32 %v1220, %v1213
        %1225 = vrot.lane.b32.xlu0 %v1048, 120
        %v1226 = vpop.permute.xlu0 %1225
        %1228 = vrot.lane.b32.xlu0 %v1049, 120
        %v1229 = vpop.permute.xlu0 %1228
        %v1231 = vsel %vm1050, %v1226, 0
        %v1234 = vsel %vm1050, %v1229, 0
        %1236 = vmatprep.subr.bf16.mxu0 0
        %1237 = vmatpush1.bf16.xpose.msra.mxu0 %v1234
        %1238 = vmatprep.subr.bf16.mxu0 0
        %1239 = vmatpush1.bf16.xpose.msra.mxu0 0
        %1240 = vmatprep.subr.bf16.mxu0 0
        %1241 = vmatpush1.bf16.xpose.msra.mxu0 0
        %1242 = vmatprep.subr.bf16.mxu0 0
        %1243 = vmatpush1.bf16.xpose.msra.mxu0 0
        %1244 = vmatprep.subr.bf16.mxu0 0
        %1245 = vmatpush1.bf16.xpose.msra.mxu0 0
        %1246 = vmatprep.subr.bf16.mxu0 0
        %1247 = vmatpush1.bf16.xpose.msra.mxu0 0
        %1248 = vmatprep.subr.bf16.mxu0 0
        %1249 = vmatpush1.bf16.xpose.msra.mxu0 0
        %1250 = vmatprep.subr.bf16.mxu0 0
        %1251 = vmatpush1.bf16.xpose.msra.mxu0 0
        %1252 = vmatprep.subr.bf16.mxu0 0
        %1253 = vmatpush1.bf16.xpose.msra.mxu0 0
        %1254 = vmatprep.subr.bf16.mxu0 0
        %1255 = vmatpush1.bf16.xpose.msra.mxu0 0
        %1256 = vmatprep.subr.bf16.mxu0 0
        %1257 = vmatpush1.bf16.xpose.msra.mxu0 0
        %1258 = vmatprep.subr.bf16.mxu0 0
        %1259 = vmatpush1.bf16.xpose.msra.mxu0 0
        %1260 = vmatprep.subr.bf16.mxu0 0
        %1261 = vmatpush1.bf16.xpose.msra.mxu0 0
        %1262 = vmatprep.subr.bf16.mxu0 0
        %1263 = vmatpush1.bf16.xpose.msra.mxu0 0
        %1264 = vmatprep.subr.bf16.mxu0 0
        %1265 = vmatpush1.bf16.xpose.msra.mxu0 0
        %1266 = vmatprep.subr.bf16.mxu0 0
        %1267 = vmatpush1.bf16.xpose.msra.mxu0 0
        %1268 = vmatprep.mubr.bf16.mxu0 0
        %1269 = vmatmul.mubr.bf16.gmra.mrb[0].mxu0 %v1231
        %v1270 = vpop.f32.mrb[0].mxu0
        %v1271 = vadd.f32 %v780, %v1270
        %v1272 = vpop.f32.mrb[0].mxu0
        %v1273 = vpop.f32.mrb[0].mxu0
        %v1274 = vadd.f32 %v781, %v1273
        %v1275 = vpop.f32.mrb[0].mxu0
        %1276 = vdwg.mxu0
        %v1277 = vsel %vm1098, %v1271, -inf
        %1278 = vmax.xlane.f32.xlu0 %v1277
        %v1279 = vpop.xlane.xlu0 %1278
        %v1280 = vsel %vm1098, %v1274, -inf
        %1281 = vmax.xlane.f32.xlu0 %v1280
        %v1282 = vpop.xlane.xlu0 %1281
        %v1283 = vsub.f32 %v1271, %v1279
        %v1284 = vsub.f32 %v1274, %v1282
        %v1285 = vmul.f32 %v1283, 1.442695
        %v1286 = vpow.pop %v1285
        %v1287 = vmul.f32 %v1284, 1.442695
        %v1288 = vpow.pop %v1287
        %v1289 = vsel %vm1098, %v1286, 0.0
        %1290 = vadd.xlane.f32.xlu0 %v1289
        %v1291 = vpop.xlane.xlu0 %1290
        %v1292 = vsel %vm1098, %v1288, 0.0
        %1293 = vadd.xlane.f32.xlu0 %v1292
        %v1294 = vpop.xlane.xlu0 %1293
        %v1295 = vrcp.pop %v1291
        %v1296 = vrcp.pop %v1294
        %v1297 = vmul.f32 %v1286, %v1295
        %v1298 = vmul.f32 %v1288, %v1296
        %v1299 = vpack.c.bf16 %v1298, %v1297
        %1301 = vrot.lane.b32.xlu0 %v1122, 120
        %v1302 = vpop.permute.xlu0 %1301
        %v1305 = vsel %vm1098, %v1299, 0
        %1307 = vmatprep.subr.bf16.mxu0 0
        %1308 = vmatpush1.bf16.msra.mxu0 %v1302
        %1309 = vmatprep.subr.bf16.mxu0 0
        %1310 = vmatpush1.bf16.msra.mxu0 0
        %1311 = vmatprep.subr.bf16.mxu0 0
        %1312 = vmatpush1.bf16.msra.mxu0 0
        %1313 = vmatprep.subr.bf16.mxu0 0
        %1314 = vmatpush1.bf16.msra.mxu0 0
        %1315 = vmatprep.subr.bf16.mxu0 0
        %1316 = vmatpush1.bf16.msra.mxu0 0
        %1317 = vmatprep.subr.bf16.mxu0 0
        %1318 = vmatpush1.bf16.msra.mxu0 0
        %1319 = vmatprep.subr.bf16.mxu0 0
        %1320 = vmatpush1.bf16.msra.mxu0 0
        %1321 = vmatprep.subr.bf16.mxu0 0
        %1322 = vmatpush1.bf16.msra.mxu0 0
        %1323 = vmatprep.subr.bf16.mxu0 0
        %1324 = vmatpush1.bf16.msra.mxu0 0
        %1325 = vmatprep.subr.bf16.mxu0 0
        %1326 = vmatpush1.bf16.msra.mxu0 0
        %1327 = vmatprep.subr.bf16.mxu0 0
        %1328 = vmatpush1.bf16.msra.mxu0 0
        %1329 = vmatprep.subr.bf16.mxu0 0
        %1330 = vmatpush1.bf16.msra.mxu0 0
        %1331 = vmatprep.subr.bf16.mxu0 0
        %1332 = vmatpush1.bf16.msra.mxu0 0
        %1333 = vmatprep.subr.bf16.mxu0 0
        %1334 = vmatpush1.bf16.msra.mxu0 0
        %1335 = vmatprep.subr.bf16.mxu0 0
        %1336 = vmatpush1.bf16.msra.mxu0 0
        %1337 = vmatprep.subr.bf16.mxu0 0
        %1338 = vmatpush1.bf16.msra.mxu0 0
        %1339 = vmatprep.mubr.bf16.mxu0 0
        %1340 = vmatmul.mubr.bf16.gmra.mrb[0].mxu0 %v1305
        %v1341 = vpop.f32.mrb[0].mxu0
        %v1342 = vadd.f32 0.0, %v1341
        %v1343 = vpop.f32.mrb[0].mxu0
        %v1344 = vpop.f32.mrb[0].mxu0
        %v1345 = vadd.f32 0.0, %v1344
        %v1346 = vpop.f32.mrb[0].mxu0
        %1347 = vdwg.mxu0
        %v1348 = vpack.c.bf16 %v1345, %v1342
        %v1350 = vsel %vm1050, %v1348, 0
        %v1353 = vsel %vm1171, %v816, 0
        %1355 = vmatprep.subr.bf16.mxu0 0
        %1356 = vmatpush1.bf16.msra.mxu0 %v1353
        %1357 = vmatprep.subr.bf16.mxu0 0
        %1358 = vmatpush1.bf16.msra.mxu0 0
        %1359 = vmatprep.subr.bf16.mxu0 0
        %1360 = vmatpush1.bf16.msra.mxu0 0
        %1361 = vmatprep.subr.bf16.mxu0 0
        %1362 = vmatpush1.bf16.msra.mxu0 0
        %1363 = vmatprep.subr.bf16.mxu0 0
        %1364 = vmatpush1.bf16.msra.mxu0 0
        %1365 = vmatprep.subr.bf16.mxu0 0
        %1366 = vmatpush1.bf16.msra.mxu0 0
        %1367 = vmatprep.subr.bf16.mxu0 0
        %1368 = vmatpush1.bf16.msra.mxu0 0
        %1369 = vmatprep.subr.bf16.mxu0 0
        %1370 = vmatpush1.bf16.msra.mxu0 0
        %1371 = vmatprep.subr.bf16.mxu0 0
        %1372 = vmatpush1.bf16.msra.mxu0 0
        %1373 = vmatprep.subr.bf16.mxu0 0
        %1374 = vmatpush1.bf16.msra.mxu0 0
        %1375 = vmatprep.subr.bf16.mxu0 0
        %1376 = vmatpush1.bf16.msra.mxu0 0
        %1377 = vmatprep.subr.bf16.mxu0 0
        %1378 = vmatpush1.bf16.msra.mxu0 0
        %1379 = vmatprep.subr.bf16.mxu0 0
        %1380 = vmatpush1.bf16.msra.mxu0 0
        %1381 = vmatprep.subr.bf16.mxu0 0
        %1382 = vmatpush1.bf16.msra.mxu0 0
        %1383 = vmatprep.subr.bf16.mxu0 0
        %1384 = vmatpush1.bf16.msra.mxu0 0
        %1385 = vmatprep.subr.bf16.mxu0 0
        %1386 = vmatpush1.bf16.msra.mxu0 0
        %1387 = vmatprep.mubr.bf16.mxu0 0
        %1388 = vmatmul.mubr.bf16.gmra.mrb[0].mxu0 %v1350
        %v1389 = vpop.f32.mrb[0].mxu0
        %v1390 = vadd.f32 0.0, %v1389
        %v1391 = vpop.f32.mrb[0].mxu0
        %v1392 = vpop.f32.mrb[0].mxu0
        %v1393 = vadd.f32 0.0, %v1392
        %v1394 = vpop.f32.mrb[0].mxu0
        %1395 = vdwg.mxu0
        %v1396 = vadd.f32 %v1222, %v1390
        %v1397 = vadd.f32 %v1223, %v1393
        %1398 = vrot.lane.b32.xlu0 %v1048, 112
        %v1399 = vpop.permute.xlu0 %1398
        %1400 = vrot.lane.b32.xlu0 %v1049, 112
        %v1401 = vpop.permute.xlu0 %1400
        %v1403 = vsel %vm1050, %v1399, 0
        %v1406 = vsel %vm1050, %v1401, 0
        %1408 = vmatprep.subr.bf16.mxu0 0
        %1409 = vmatpush1.bf16.xpose.msra.mxu0 %v1406
        %1410 = vmatprep.subr.bf16.mxu0 0
        %1411 = vmatpush1.bf16.xpose.msra.mxu0 0
        %1412 = vmatprep.subr.bf16.mxu0 0
        %1413 = vmatpush1.bf16.xpose.msra.mxu0 0
        %1414 = vmatprep.subr.bf16.mxu0 0
        %1415 = vmatpush1.bf16.xpose.msra.mxu0 0
        %1416 = vmatprep.subr.bf16.mxu0 0
        %1417 = vmatpush1.bf16.xpose.msra.mxu0 0
        %1418 = vmatprep.subr.bf16.mxu0 0
        %1419 = vmatpush1.bf16.xpose.msra.mxu0 0
        %1420 = vmatprep.subr.bf16.mxu0 0
        %1421 = vmatpush1.bf16.xpose.msra.mxu0 0
        %1422 = vmatprep.subr.bf16.mxu0 0
        %1423 = vmatpush1.bf16.xpose.msra.mxu0 0
        %1424 = vmatprep.subr.bf16.mxu0 0
        %1425 = vmatpush1.bf16.xpose.msra.mxu0 0
        %1426 = vmatprep.subr.bf16.mxu0 0
        %1427 = vmatpush1.bf16.xpose.msra.mxu0 0
        %1428 = vmatprep.subr.bf16.mxu0 0
        %1429 = vmatpush1.bf16.xpose.msra.mxu0 0
        %1430 = vmatprep.subr.bf16.mxu0 0
        %1431 = vmatpush1.bf16.xpose.msra.mxu0 0
        %1432 = vmatprep.subr.bf16.mxu0 0
        %1433 = vmatpush1.bf16.xpose.msra.mxu0 0
        %1434 = vmatprep.subr.bf16.mxu0 0
        %1435 = vmatpush1.bf16.xpose.msra.mxu0 0
        %1436 = vmatprep.subr.bf16.mxu0 0
        %1437 = vmatpush1.bf16.xpose.msra.mxu0 0
        %1438 = vmatprep.subr.bf16.mxu0 0
        %1439 = vmatpush1.bf16.xpose.msra.mxu0 0
        %1440 = vmatprep.mubr.bf16.mxu0 0
        %1441 = vmatmul.mubr.bf16.gmra.mrb[0].mxu0 %v1403
        %v1442 = vpop.f32.mrb[0].mxu0
        %v1443 = vadd.f32 %v780, %v1442
        %v1444 = vpop.f32.mrb[0].mxu0
        %v1445 = vpop.f32.mrb[0].mxu0
        %v1446 = vadd.f32 %v781, %v1445
        %v1447 = vpop.f32.mrb[0].mxu0
        %1448 = vdwg.mxu0
        %v1449 = vsel %vm1098, %v1443, -inf
        %1450 = vmax.xlane.f32.xlu0 %v1449
        %v1451 = vpop.xlane.xlu0 %1450
        %v1452 = vsel %vm1098, %v1446, -inf
        %1453 = vmax.xlane.f32.xlu0 %v1452
        %v1454 = vpop.xlane.xlu0 %1453
        %v1455 = vsub.f32 %v1443, %v1451
        %v1456 = vsub.f32 %v1446, %v1454
        %v1457 = vmul.f32 %v1455, 1.442695
        %v1458 = vpow.pop %v1457
        %v1459 = vmul.f32 %v1456, 1.442695
        %v1460 = vpow.pop %v1459
        %v1461 = vsel %vm1098, %v1458, 0.0
        %1462 = vadd.xlane.f32.xlu0 %v1461
        %v1463 = vpop.xlane.xlu0 %1462
        %v1464 = vsel %vm1098, %v1460, 0.0
        %1465 = vadd.xlane.f32.xlu0 %v1464
        %v1466 = vpop.xlane.xlu0 %1465
        %v1467 = vrcp.pop %v1463
        %v1468 = vrcp.pop %v1466
        %v1469 = vmul.f32 %v1458, %v1467
        %v1470 = vmul.f32 %v1460, %v1468
        %v1471 = vpack.c.bf16 %v1470, %v1469
        %1472 = vrot.lane.b32.xlu0 %v1122, 112
        %v1473 = vpop.permute.xlu0 %1472
        %v1476 = vsel %vm1098, %v1471, 0
        %1478 = vmatprep.subr.bf16.mxu0 0
        %1479 = vmatpush1.bf16.msra.mxu0 %v1473
        %1480 = vmatprep.subr.bf16.mxu0 0
        %1481 = vmatpush1.bf16.msra.mxu0 0
        %1482 = vmatprep.subr.bf16.mxu0 0
        %1483 = vmatpush1.bf16.msra.mxu0 0
        %1484 = vmatprep.subr.bf16.mxu0 0
        %1485 = vmatpush1.bf16.msra.mxu0 0
        %1486 = vmatprep.subr.bf16.mxu0 0
        %1487 = vmatpush1.bf16.msra.mxu0 0
        %1488 = vmatprep.subr.bf16.mxu0 0
        %1489 = vmatpush1.bf16.msra.mxu0 0
        %1490 = vmatprep.subr.bf16.mxu0 0
        %1491 = vmatpush1.bf16.msra.mxu0 0
        %1492 = vmatprep.subr.bf16.mxu0 0
        %1493 = vmatpush1.bf16.msra.mxu0 0
        %1494 = vmatprep.subr.bf16.mxu0 0
        %1495 = vmatpush1.bf16.msra.mxu0 0
        %1496 = vmatprep.subr.bf16.mxu0 0
        %1497 = vmatpush1.bf16.msra.mxu0 0
        %1498 = vmatprep.subr.bf16.mxu0 0
        %1499 = vmatpush1.bf16.msra.mxu0 0
        %1500 = vmatprep.subr.bf16.mxu0 0
        %1501 = vmatpush1.bf16.msra.mxu0 0
        %1502 = vmatprep.subr.bf16.mxu0 0
        %1503 = vmatpush1.bf16.msra.mxu0 0
        %1504 = vmatprep.subr.bf16.mxu0 0
        %1505 = vmatpush1.bf16.msra.mxu0 0
        %1506 = vmatprep.subr.bf16.mxu0 0
        %1507 = vmatpush1.bf16.msra.mxu0 0
        %1508 = vmatprep.subr.bf16.mxu0 0
        %1509 = vmatpush1.bf16.msra.mxu0 0
        %1510 = vmatprep.mubr.bf16.mxu0 0
        %1511 = vmatmul.mubr.bf16.gmra.mrb[0].mxu0 %v1476
        %v1512 = vpop.f32.mrb[0].mxu0
        %v1513 = vadd.f32 0.0, %v1512
        %v1514 = vpop.f32.mrb[0].mxu0
        %v1515 = vpop.f32.mrb[0].mxu0
        %v1516 = vadd.f32 0.0, %v1515
        %v1517 = vpop.f32.mrb[0].mxu0
        %1518 = vdwg.mxu0
        %v1519 = vpack.c.bf16 %v1516, %v1513
        %v1521 = vsel %vm1050, %v1519, 0
        %v1524 = vsel %vm1171, %v817, 0
        %1526 = vmatprep.subr.bf16.mxu0 0
        %1527 = vmatpush1.bf16.msra.mxu0 %v1524
        %1528 = vmatprep.subr.bf16.mxu0 0
        %1529 = vmatpush1.bf16.msra.mxu0 0
        %1530 = vmatprep.subr.bf16.mxu0 0
        %1531 = vmatpush1.bf16.msra.mxu0 0
        %1532 = vmatprep.subr.bf16.mxu0 0
        %1533 = vmatpush1.bf16.msra.mxu0 0
        %1534 = vmatprep.subr.bf16.mxu0 0
        %1535 = vmatpush1.bf16.msra.mxu0 0
        %1536 = vmatprep.subr.bf16.mxu0 0
        %1537 = vmatpush1.bf16.msra.mxu0 0
        %1538 = vmatprep.subr.bf16.mxu0 0
        %1539 = vmatpush1.bf16.msra.mxu0 0
        %1540 = vmatprep.subr.bf16.mxu0 0
        %1541 = vmatpush1.bf16.msra.mxu0 0
        %1542 = vmatprep.subr.bf16.mxu0 0
        %1543 = vmatpush1.bf16.msra.mxu0 0
        %1544 = vmatprep.subr.bf16.mxu0 0
        %1545 = vmatpush1.bf16.msra.mxu0 0
        %1546 = vmatprep.subr.bf16.mxu0 0
        %1547 = vmatpush1.bf16.msra.mxu0 0
        %1548 = vmatprep.subr.bf16.mxu0 0
        %1549 = vmatpush1.bf16.msra.mxu0 0
        %1550 = vmatprep.subr.bf16.mxu0 0
        %1551 = vmatpush1.bf16.msra.mxu0 0
        %1552 = vmatprep.subr.bf16.mxu0 0
        %1553 = vmatpush1.bf16.msra.mxu0 0
        %1554 = vmatprep.subr.bf16.mxu0 0
        %1555 = vmatpush1.bf16.msra.mxu0 0
        %1556 = vmatprep.subr.bf16.mxu0 0
        %1557 = vmatpush1.bf16.msra.mxu0 0
        %1558 = vmatprep.mubr.bf16.mxu0 0
        %1559 = vmatmul.mubr.bf16.gmra.mrb[0].mxu0 %v1521
        %v1560 = vpop.f32.mrb[0].mxu0
        %v1561 = vadd.f32 0.0, %v1560
        %v1562 = vpop.f32.mrb[0].mxu0
        %v1563 = vpop.f32.mrb[0].mxu0
        %v1564 = vadd.f32 0.0, %v1563
        %v1565 = vpop.f32.mrb[0].mxu0
        %1566 = vdwg.mxu0
        %v1567 = vadd.f32 %v1396, %v1561
        %v1568 = vadd.f32 %v1397, %v1564
        %1569 = vrot.lane.b32.xlu0 %v1048, 104
        %v1570 = vpop.permute.xlu0 %1569
        %1571 = vrot.lane.b32.xlu0 %v1049, 104
        %v1572 = vpop.permute.xlu0 %1571
        %v1574 = vsel %vm1050, %v1570, 0
        %v1577 = vsel %vm1050, %v1572, 0
        %1579 = vmatprep.subr.bf16.mxu0 0
        %1580 = vmatpush1.bf16.xpose.msra.mxu0 %v1577
        %1581 = vmatprep.subr.bf16.mxu0 0
        %1582 = vmatpush1.bf16.xpose.msra.mxu0 0
        %1583 = vmatprep.subr.bf16.mxu0 0
        %1584 = vmatpush1.bf16.xpose.msra.mxu0 0
        %1585 = vmatprep.subr.bf16.mxu0 0
        %1586 = vmatpush1.bf16.xpose.msra.mxu0 0
        %1587 = vmatprep.subr.bf16.mxu0 0
        %1588 = vmatpush1.bf16.xpose.msra.mxu0 0
        %1589 = vmatprep.subr.bf16.mxu0 0
        %1590 = vmatpush1.bf16.xpose.msra.mxu0 0
        %1591 = vmatprep.subr.bf16.mxu0 0
        %1592 = vmatpush1.bf16.xpose.msra.mxu0 0
        %1593 = vmatprep.subr.bf16.mxu0 0
        %1594 = vmatpush1.bf16.xpose.msra.mxu0 0
        %1595 = vmatprep.subr.bf16.mxu0 0
        %1596 = vmatpush1.bf16.xpose.msra.mxu0 0
        %1597 = vmatprep.subr.bf16.mxu0 0
        %1598 = vmatpush1.bf16.xpose.msra.mxu0 0
        %1599 = vmatprep.subr.bf16.mxu0 0
        %1600 = vmatpush1.bf16.xpose.msra.mxu0 0
        %1601 = vmatprep.subr.bf16.mxu0 0
        %1602 = vmatpush1.bf16.xpose.msra.mxu0 0
        %1603 = vmatprep.subr.bf16.mxu0 0
        %1604 = vmatpush1.bf16.xpose.msra.mxu0 0
        %1605 = vmatprep.subr.bf16.mxu0 0
        %1606 = vmatpush1.bf16.xpose.msra.mxu0 0
        %1607 = vmatprep.subr.bf16.mxu0 0
        %1608 = vmatpush1.bf16.xpose.msra.mxu0 0
        %1609 = vmatprep.subr.bf16.mxu0 0
        %1610 = vmatpush1.bf16.xpose.msra.mxu0 0
        %1611 = vmatprep.mubr.bf16.mxu0 0
        %1612 = vmatmul.mubr.bf16.gmra.mrb[0].mxu0 %v1574
        %v1613 = vpop.f32.mrb[0].mxu0
        %v1614 = vadd.f32 %v780, %v1613
        %v1615 = vpop.f32.mrb[0].mxu0
        %v1616 = vpop.f32.mrb[0].mxu0
        %v1617 = vadd.f32 %v781, %v1616
        %v1618 = vpop.f32.mrb[0].mxu0
        %1619 = vdwg.mxu0
        %v1620 = vsel %vm1098, %v1614, -inf
        %1621 = vmax.xlane.f32.xlu0 %v1620
        %v1622 = vpop.xlane.xlu0 %1621
        %v1623 = vsel %vm1098, %v1617, -inf
        %1624 = vmax.xlane.f32.xlu0 %v1623
        %v1625 = vpop.xlane.xlu0 %1624
        %v1626 = vsub.f32 %v1614, %v1622
        %v1627 = vsub.f32 %v1617, %v1625
        %v1628 = vmul.f32 %v1626, 1.442695
        %v1629 = vpow.pop %v1628
        %v1630 = vmul.f32 %v1627, 1.442695
        %v1631 = vpow.pop %v1630
        %v1632 = vsel %vm1098, %v1629, 0.0
        %1633 = vadd.xlane.f32.xlu0 %v1632
        %v1634 = vpop.xlane.xlu0 %1633
        %v1635 = vsel %vm1098, %v1631, 0.0
        %1636 = vadd.xlane.f32.xlu0 %v1635
        %v1637 = vpop.xlane.xlu0 %1636
        %v1638 = vrcp.pop %v1634
        %v1639 = vrcp.pop %v1637
        %v1640 = vmul.f32 %v1629, %v1638
        %v1641 = vmul.f32 %v1631, %v1639
        %v1642 = vpack.c.bf16 %v1641, %v1640
        %1643 = vrot.lane.b32.xlu0 %v1122, 104
        %v1644 = vpop.permute.xlu0 %1643
        %v1647 = vsel %vm1098, %v1642, 0
        %1649 = vmatprep.subr.bf16.mxu0 0
        %1650 = vmatpush1.bf16.msra.mxu0 %v1644
        %1651 = vmatprep.subr.bf16.mxu0 0
        %1652 = vmatpush1.bf16.msra.mxu0 0
        %1653 = vmatprep.subr.bf16.mxu0 0
        %1654 = vmatpush1.bf16.msra.mxu0 0
        %1655 = vmatprep.subr.bf16.mxu0 0
        %1656 = vmatpush1.bf16.msra.mxu0 0
        %1657 = vmatprep.subr.bf16.mxu0 0
        %1658 = vmatpush1.bf16.msra.mxu0 0
        %1659 = vmatprep.subr.bf16.mxu0 0
        %1660 = vmatpush1.bf16.msra.mxu0 0
        %1661 = vmatprep.subr.bf16.mxu0 0
        %1662 = vmatpush1.bf16.msra.mxu0 0
        %1663 = vmatprep.subr.bf16.mxu0 0
        %1664 = vmatpush1.bf16.msra.mxu0 0
        %1665 = vmatprep.subr.bf16.mxu0 0
        %1666 = vmatpush1.bf16.msra.mxu0 0
        %1667 = vmatprep.subr.bf16.mxu0 0
        %1668 = vmatpush1.bf16.msra.mxu0 0
        %1669 = vmatprep.subr.bf16.mxu0 0
        %1670 = vmatpush1.bf16.msra.mxu0 0
        %1671 = vmatprep.subr.bf16.mxu0 0
        %1672 = vmatpush1.bf16.msra.mxu0 0
        %1673 = vmatprep.subr.bf16.mxu0 0
        %1674 = vmatpush1.bf16.msra.mxu0 0
        %1675 = vmatprep.subr.bf16.mxu0 0
        %1676 = vmatpush1.bf16.msra.mxu0 0
        %1677 = vmatprep.subr.bf16.mxu0 0
        %1678 = vmatpush1.bf16.msra.mxu0 0
        %1679 = vmatprep.subr.bf16.mxu0 0
        %1680 = vmatpush1.bf16.msra.mxu0 0
        %1681 = vmatprep.mubr.bf16.mxu0 0
        %1682 = vmatmul.mubr.bf16.gmra.mrb[0].mxu0 %v1647
        %v1683 = vpop.f32.mrb[0].mxu0
        %v1684 = vadd.f32 0.0, %v1683
        %v1685 = vpop.f32.mrb[0].mxu0
        %v1686 = vpop.f32.mrb[0].mxu0
        %v1687 = vadd.f32 0.0, %v1686
        %v1688 = vpop.f32.mrb[0].mxu0
        %1689 = vdwg.mxu0
        %v1690 = vpack.c.bf16 %v1687, %v1684
        %v1692 = vsel %vm1050, %v1690, 0
        %v1695 = vsel %vm1171, %v818, 0
        %1697 = vmatprep.subr.bf16.mxu0 0
        %1698 = vmatpush1.bf16.msra.mxu0 %v1695
        %1699 = vmatprep.subr.bf16.mxu0 0
        %1700 = vmatpush1.bf16.msra.mxu0 0
        %1701 = vmatprep.subr.bf16.mxu0 0
        %1702 = vmatpush1.bf16.msra.mxu0 0
        %1703 = vmatprep.subr.bf16.mxu0 0
        %1704 = vmatpush1.bf16.msra.mxu0 0
        %1705 = vmatprep.subr.bf16.mxu0 0
        %1706 = vmatpush1.bf16.msra.mxu0 0
        %1707 = vmatprep.subr.bf16.mxu0 0
        %1708 = vmatpush1.bf16.msra.mxu0 0
        %1709 = vmatprep.subr.bf16.mxu0 0
        %1710 = vmatpush1.bf16.msra.mxu0 0
        %1711 = vmatprep.subr.bf16.mxu0 0
        %1712 = vmatpush1.bf16.msra.mxu0 0
        %1713 = vmatprep.subr.bf16.mxu0 0
        %1714 = vmatpush1.bf16.msra.mxu0 0
        %1715 = vmatprep.subr.bf16.mxu0 0
        %1716 = vmatpush1.bf16.msra.mxu0 0
        %1717 = vmatprep.subr.bf16.mxu0 0
        %1718 = vmatpush1.bf16.msra.mxu0 0
        %1719 = vmatprep.subr.bf16.mxu0 0
        %1720 = vmatpush1.bf16.msra.mxu0 0
        %1721 = vmatprep.subr.bf16.mxu0 0
        %1722 = vmatpush1.bf16.msra.mxu0 0
        %1723 = vmatprep.subr.bf16.mxu0 0
        %1724 = vmatpush1.bf16.msra.mxu0 0
        %1725 = vmatprep.subr.bf16.mxu0 0
        %1726 = vmatpush1.bf16.msra.mxu0 0
        %1727 = vmatprep.subr.bf16.mxu0 0
        %1728 = vmatpush1.bf16.msra.mxu0 0
        %1729 = vmatprep.mubr.bf16.mxu0 0
        %1730 = vmatmul.mubr.bf16.gmra.mrb[0].mxu0 %v1692
        %v1731 = vpop.f32.mrb[0].mxu0
        %v1732 = vadd.f32 0.0, %v1731
        %v1733 = vpop.f32.mrb[0].mxu0
        %v1734 = vpop.f32.mrb[0].mxu0
        %v1735 = vadd.f32 0.0, %v1734
        %v1736 = vpop.f32.mrb[0].mxu0
        %1737 = vdwg.mxu0
        %v1738 = vadd.f32 %v1567, %v1732
        %v1739 = vadd.f32 %v1568, %v1735
        %v1740 = vpack.c.bf16 %v911, %v908
        %v1741 = vpack.c.bf16 %v978, %v975
        %v1743 = vsel %vm1050, %v1740, 0
        %v1746 = vsel %vm1050, %v1741, 0
        %1748 = vmatprep.subr.bf16.mxu0 0
        %1749 = vmatpush1.bf16.xpose.msra.mxu0 %v1746
        %1750 = vmatprep.subr.bf16.mxu0 0
        %1751 = vmatpush1.bf16.xpose.msra.mxu0 0
        %1752 = vmatprep.subr.bf16.mxu0 0
        %1753 = vmatpush1.bf16.xpose.msra.mxu0 0
        %1754 = vmatprep.subr.bf16.mxu0 0
        %1755 = vmatpush1.bf16.xpose.msra.mxu0 0
        %1756 = vmatprep.subr.bf16.mxu0 0
        %1757 = vmatpush1.bf16.xpose.msra.mxu0 0
        %1758 = vmatprep.subr.bf16.mxu0 0
        %1759 = vmatpush1.bf16.xpose.msra.mxu0 0
        %1760 = vmatprep.subr.bf16.mxu0 0
        %1761 = vmatpush1.bf16.xpose.msra.mxu0 0
        %1762 = vmatprep.subr.bf16.mxu0 0
        %1763 = vmatpush1.bf16.xpose.msra.mxu0 0
        %1764 = vmatprep.subr.bf16.mxu0 0
        %1765 = vmatpush1.bf16.xpose.msra.mxu0 0
        %1766 = vmatprep.subr.bf16.mxu0 0
        %1767 = vmatpush1.bf16.xpose.msra.mxu0 0
        %1768 = vmatprep.subr.bf16.mxu0 0
        %1769 = vmatpush1.bf16.xpose.msra.mxu0 0
        %1770 = vmatprep.subr.bf16.mxu0 0
        %1771 = vmatpush1.bf16.xpose.msra.mxu0 0
        %1772 = vmatprep.subr.bf16.mxu0 0
        %1773 = vmatpush1.bf16.xpose.msra.mxu0 0
        %1774 = vmatprep.subr.bf16.mxu0 0
        %1775 = vmatpush1.bf16.xpose.msra.mxu0 0
        %1776 = vmatprep.subr.bf16.mxu0 0
        %1777 = vmatpush1.bf16.xpose.msra.mxu0 0
        %1778 = vmatprep.subr.bf16.mxu0 0
        %1779 = vmatpush1.bf16.xpose.msra.mxu0 0
        %1780 = vmatprep.mubr.bf16.mxu0 0
        %1781 = vmatmul.mubr.bf16.gmra.mrb[0].mxu0 %v1743
        %v1782 = vpop.f32.mrb[0].mxu0
        %v1783 = vadd.f32 %v786, %v1782
        %v1784 = vpop.f32.mrb[0].mxu0
        %v1785 = vpop.f32.mrb[0].mxu0
        %v1786 = vadd.f32 %v787, %v1785
        %v1787 = vpop.f32.mrb[0].mxu0
        %1788 = vdwg.mxu0
        %vm1789 = vcmask 97280
        %v1790 = vsel %vm1789, %v1783, -inf
        %1791 = vmax.xlane.f32.xlu0 %v1790
        %v1792 = vpop.xlane.xlu0 %1791
        %vm1793 = vcmask 93184
        %v1794 = vsel %vm1793, %v1786, -inf
        %1795 = vmax.xlane.f32.xlu0 %v1794
        %v1796 = vpop.xlane.xlu0 %1795
        %v1797 = vsub.f32 %v1783, %v1792
        %v1798 = vsub.f32 %v1786, %v1796
        %v1799 = vmul.f32 %v1797, 1.442695
        %v1800 = vpow.pop %v1799
        %v1801 = vmul.f32 %v1798, 1.442695
        %v1802 = vpow.pop %v1801
        %v1803 = vsel %vm1789, %v1800, 0.0
        %1804 = vadd.xlane.f32.xlu0 %v1803
        %v1805 = vpop.xlane.xlu0 %1804
        %v1806 = vsel %vm1793, %v1802, 0.0
        %1807 = vadd.xlane.f32.xlu0 %v1806
        %v1808 = vpop.xlane.xlu0 %1807
        %v1809 = vrcp.pop %v1805
        %v1810 = vrcp.pop %v1808
        %v1811 = vmul.f32 %v1800, %v1809
        %v1812 = vmul.f32 %v1802, %v1810
        %v1813 = vpack.c.bf16 %v1812, %v1811
        %v1814 = vpack.c.bf16 %v1045, %v1042
        %v1816 = vsel %vm1789, %v1813, 0
        %vm1818 = vcmask 1045504
        %v1820 = vsel %vm1818, %v1814, 0
        %1822 = vmatprep.subr.bf16.mxu0 0
        %1823 = vmatpush1.bf16.msra.mxu0 %v1820
        %1824 = vmatprep.subr.bf16.mxu0 0
        %1825 = vmatpush1.bf16.msra.mxu0 0
        %1826 = vmatprep.subr.bf16.mxu0 0
        %1827 = vmatpush1.bf16.msra.mxu0 0
        %1828 = vmatprep.subr.bf16.mxu0 0
        %1829 = vmatpush1.bf16.msra.mxu0 0
        %1830 = vmatprep.subr.bf16.mxu0 0
        %1831 = vmatpush1.bf16.msra.mxu0 0
        %1832 = vmatprep.subr.bf16.mxu0 0
        %1833 = vmatpush1.bf16.msra.mxu0 0
        %1834 = vmatprep.subr.bf16.mxu0 0
        %1835 = vmatpush1.bf16.msra.mxu0 0
        %1836 = vmatprep.subr.bf16.mxu0 0
        %1837 = vmatpush1.bf16.msra.mxu0 0
        %1838 = vmatprep.subr.bf16.mxu0 0
        %1839 = vmatpush1.bf16.msra.mxu0 0
        %1840 = vmatprep.subr.bf16.mxu0 0
        %1841 = vmatpush1.bf16.msra.mxu0 0
        %1842 = vmatprep.subr.bf16.mxu0 0
        %1843 = vmatpush1.bf16.msra.mxu0 0
        %1844 = vmatprep.subr.bf16.mxu0 0
        %1845 = vmatpush1.bf16.msra.mxu0 0
        %1846 = vmatprep.subr.bf16.mxu0 0
        %1847 = vmatpush1.bf16.msra.mxu0 0
        %1848 = vmatprep.subr.bf16.mxu0 0
        %1849 = vmatpush1.bf16.msra.mxu0 0
        %1850 = vmatprep.subr.bf16.mxu0 0
        %1851 = vmatpush1.bf16.msra.mxu0 0
        %1852 = vmatprep.subr.bf16.mxu0 0
        %1853 = vmatpush1.bf16.msra.mxu0 0
        %1854 = vmatprep.mubr.bf16.mxu0 0
        %1855 = vmatmul.mubr.bf16.gmra.mrb[0].mxu0 %v1816
        %v1856 = vpop.f32.mrb[0].mxu0
        %v1857 = vadd.f32 0.0, %v1856
        %v1858 = vpop.f32.mrb[0].mxu0
        %v1859 = vpop.f32.mrb[0].mxu0
        %v1860 = vadd.f32 0.0, %v1859
        %v1861 = vpop.f32.mrb[0].mxu0
        %1862 = vdwg.mxu0
        %v1863 = vpack.c.bf16 %v1860, %v1857
        %v1865 = vsel %vm1050, %v1863, 0
        %1867 = vmatprep.subr.bf16.mxu0 0
        %1868 = vmatpush1.bf16.msra.mxu0 %v1173
        %1869 = vmatprep.subr.bf16.mxu0 0
        %1870 = vmatpush1.bf16.msra.mxu0 0
        %1871 = vmatprep.subr.bf16.mxu0 0
        %1872 = vmatpush1.bf16.msra.mxu0 0
        %1873 = vmatprep.subr.bf16.mxu0 0
        %1874 = vmatpush1.bf16.msra.mxu0 0
        %1875 = vmatprep.subr.bf16.mxu0 0
        %1876 = vmatpush1.bf16.msra.mxu0 0
        %1877 = vmatprep.subr.bf16.mxu0 0
        %1878 = vmatpush1.bf16.msra.mxu0 0
        %1879 = vmatprep.subr.bf16.mxu0 0
        %1880 = vmatpush1.bf16.msra.mxu0 0
        %1881 = vmatprep.subr.bf16.mxu0 0
        %1882 = vmatpush1.bf16.msra.mxu0 0
        %1883 = vmatprep.subr.bf16.mxu0 0
        %1884 = vmatpush1.bf16.msra.mxu0 0
        %1885 = vmatprep.subr.bf16.mxu0 0
        %1886 = vmatpush1.bf16.msra.mxu0 0
        %1887 = vmatprep.subr.bf16.mxu0 0
        %1888 = vmatpush1.bf16.msra.mxu0 0
        %1889 = vmatprep.subr.bf16.mxu0 0
        %1890 = vmatpush1.bf16.msra.mxu0 0
        %1891 = vmatprep.subr.bf16.mxu0 0
        %1892 = vmatpush1.bf16.msra.mxu0 0
        %1893 = vmatprep.subr.bf16.mxu0 0
        %1894 = vmatpush1.bf16.msra.mxu0 0
        %1895 = vmatprep.subr.bf16.mxu0 0
        %1896 = vmatpush1.bf16.msra.mxu0 0
        %1897 = vmatprep.subr.bf16.mxu0 0
        %1898 = vmatpush1.bf16.msra.mxu0 0
        %1899 = vmatprep.mubr.bf16.mxu0 0
        %1900 = vmatmul.mubr.bf16.gmra.mrb[0].mxu0 %v1865
        %v1901 = vpop.f32.mrb[0].mxu0
        %v1902 = vadd.f32 0.0, %v1901
        %v1903 = vpop.f32.mrb[0].mxu0
        %v1904 = vpop.f32.mrb[0].mxu0
        %v1905 = vadd.f32 0.0, %v1904
        %v1906 = vpop.f32.mrb[0].mxu0
        %1907 = vdwg.mxu0
        %v1908 = vadd.f32 %v1220, %v1902
        %v1909 = vadd.f32 %v1220, %v1905
        %1911 = vrot.lane.b32.xlu0 %v1740, 120
        %v1912 = vpop.permute.xlu0 %1911
        %1914 = vrot.lane.b32.xlu0 %v1741, 120
        %v1915 = vpop.permute.xlu0 %1914
        %v1917 = vsel %vm1050, %v1912, 0
        %v1920 = vsel %vm1050, %v1915, 0
        %1922 = vmatprep.subr.bf16.mxu0 0
        %1923 = vmatpush1.bf16.xpose.msra.mxu0 %v1920
        %1924 = vmatprep.subr.bf16.mxu0 0
        %1925 = vmatpush1.bf16.xpose.msra.mxu0 0
        %1926 = vmatprep.subr.bf16.mxu0 0
        %1927 = vmatpush1.bf16.xpose.msra.mxu0 0
        %1928 = vmatprep.subr.bf16.mxu0 0
        %1929 = vmatpush1.bf16.xpose.msra.mxu0 0
        %1930 = vmatprep.subr.bf16.mxu0 0
        %1931 = vmatpush1.bf16.xpose.msra.mxu0 0
        %1932 = vmatprep.subr.bf16.mxu0 0
        %1933 = vmatpush1.bf16.xpose.msra.mxu0 0
        %1934 = vmatprep.subr.bf16.mxu0 0
        %1935 = vmatpush1.bf16.xpose.msra.mxu0 0
        %1936 = vmatprep.subr.bf16.mxu0 0
        %1937 = vmatpush1.bf16.xpose.msra.mxu0 0
        %1938 = vmatprep.subr.bf16.mxu0 0
        %1939 = vmatpush1.bf16.xpose.msra.mxu0 0
        %1940 = vmatprep.subr.bf16.mxu0 0
        %1941 = vmatpush1.bf16.xpose.msra.mxu0 0
        %1942 = vmatprep.subr.bf16.mxu0 0
        %1943 = vmatpush1.bf16.xpose.msra.mxu0 0
        %1944 = vmatprep.subr.bf16.mxu0 0
        %1945 = vmatpush1.bf16.xpose.msra.mxu0 0
        %1946 = vmatprep.subr.bf16.mxu0 0
        %1947 = vmatpush1.bf16.xpose.msra.mxu0 0
        %1948 = vmatprep.subr.bf16.mxu0 0
        %1949 = vmatpush1.bf16.xpose.msra.mxu0 0
        %1950 = vmatprep.subr.bf16.mxu0 0
        %1951 = vmatpush1.bf16.xpose.msra.mxu0 0
        %1952 = vmatprep.subr.bf16.mxu0 0
        %1953 = vmatpush1.bf16.xpose.msra.mxu0 0
        %1954 = vmatprep.mubr.bf16.mxu0 0
        %1955 = vmatmul.mubr.bf16.gmra.mrb[0].mxu0 %v1917
        %v1956 = vpop.f32.mrb[0].mxu0
        %v1957 = vadd.f32 %v786, %v1956
        %v1958 = vpop.f32.mrb[0].mxu0
        %v1959 = vpop.f32.mrb[0].mxu0
        %v1960 = vadd.f32 %v787, %v1959
        %v1961 = vpop.f32.mrb[0].mxu0
        %1962 = vdwg.mxu0
        %v1963 = vsel %vm1789, %v1957, -inf
        %1964 = vmax.xlane.f32.xlu0 %v1963
        %v1965 = vpop.xlane.xlu0 %1964
        %v1966 = vsel %vm1793, %v1960, -inf
        %1967 = vmax.xlane.f32.xlu0 %v1966
        %v1968 = vpop.xlane.xlu0 %1967
        %v1969 = vsub.f32 %v1957, %v1965
        %v1970 = vsub.f32 %v1960, %v1968
        %v1971 = vmul.f32 %v1969, 1.442695
        %v1972 = vpow.pop %v1971
        %v1973 = vmul.f32 %v1970, 1.442695
        %v1974 = vpow.pop %v1973
        %v1975 = vsel %vm1789, %v1972, 0.0
        %1976 = vadd.xlane.f32.xlu0 %v1975
        %v1977 = vpop.xlane.xlu0 %1976
        %v1978 = vsel %vm1793, %v1974, 0.0
        %1979 = vadd.xlane.f32.xlu0 %v1978
        %v1980 = vpop.xlane.xlu0 %1979
        %v1981 = vrcp.pop %v1977
        %v1982 = vrcp.pop %v1980
        %v1983 = vmul.f32 %v1972, %v1981
        %v1984 = vmul.f32 %v1974, %v1982
        %v1985 = vpack.c.bf16 %v1984, %v1983
        %1987 = vrot.lane.b32.xlu0 %v1814, 120
        %v1988 = vpop.permute.xlu0 %1987
        %v1990 = vsel %vm1789, %v1985, 0
        %v1993 = vsel %vm1818, %v1988, 0
        %1995 = vmatprep.subr.bf16.mxu0 0
        %1996 = vmatpush1.bf16.msra.mxu0 %v1993
        %1997 = vmatprep.subr.bf16.mxu0 0
        %1998 = vmatpush1.bf16.msra.mxu0 0
        %1999 = vmatprep.subr.bf16.mxu0 0
        %2000 = vmatpush1.bf16.msra.mxu0 0
        %2001 = vmatprep.subr.bf16.mxu0 0
        %2002 = vmatpush1.bf16.msra.mxu0 0
        %2003 = vmatprep.subr.bf16.mxu0 0
        %2004 = vmatpush1.bf16.msra.mxu0 0
        %2005 = vmatprep.subr.bf16.mxu0 0
        %2006 = vmatpush1.bf16.msra.mxu0 0
        %2007 = vmatprep.subr.bf16.mxu0 0
        %2008 = vmatpush1.bf16.msra.mxu0 0
        %2009 = vmatprep.subr.bf16.mxu0 0
        %2010 = vmatpush1.bf16.msra.mxu0 0
        %2011 = vmatprep.subr.bf16.mxu0 0
        %2012 = vmatpush1.bf16.msra.mxu0 0
        %2013 = vmatprep.subr.bf16.mxu0 0
        %2014 = vmatpush1.bf16.msra.mxu0 0
        %2015 = vmatprep.subr.bf16.mxu0 0
        %2016 = vmatpush1.bf16.msra.mxu0 0
        %2017 = vmatprep.subr.bf16.mxu0 0
        %2018 = vmatpush1.bf16.msra.mxu0 0
        %2019 = vmatprep.subr.bf16.mxu0 0
        %2020 = vmatpush1.bf16.msra.mxu0 0
        %2021 = vmatprep.subr.bf16.mxu0 0
        %2022 = vmatpush1.bf16.msra.mxu0 0
        %2023 = vmatprep.subr.bf16.mxu0 0
        %2024 = vmatpush1.bf16.msra.mxu0 0
        %2025 = vmatprep.subr.bf16.mxu0 0
        %2026 = vmatpush1.bf16.msra.mxu0 0
        %2027 = vmatprep.mubr.bf16.mxu0 0
        %2028 = vmatmul.mubr.bf16.gmra.mrb[0].mxu0 %v1990
        %v2029 = vpop.f32.mrb[0].mxu0
        %v2030 = vadd.f32 0.0, %v2029
        %v2031 = vpop.f32.mrb[0].mxu0
        %v2032 = vpop.f32.mrb[0].mxu0
        %v2033 = vadd.f32 0.0, %v2032
        %v2034 = vpop.f32.mrb[0].mxu0
        %2035 = vdwg.mxu0
        %v2036 = vpack.c.bf16 %v2033, %v2030
        %v2038 = vsel %vm1050, %v2036, 0
        %2040 = vmatprep.subr.bf16.mxu0 0
        %2041 = vmatpush1.bf16.msra.mxu0 %v1353
        %2042 = vmatprep.subr.bf16.mxu0 0
        %2043 = vmatpush1.bf16.msra.mxu0 0
        %2044 = vmatprep.subr.bf16.mxu0 0
        %2045 = vmatpush1.bf16.msra.mxu0 0
        %2046 = vmatprep.subr.bf16.mxu0 0
        %2047 = vmatpush1.bf16.msra.mxu0 0
        %2048 = vmatprep.subr.bf16.mxu0 0
        %2049 = vmatpush1.bf16.msra.mxu0 0
        %2050 = vmatprep.subr.bf16.mxu0 0
        %2051 = vmatpush1.bf16.msra.mxu0 0
        %2052 = vmatprep.subr.bf16.mxu0 0
        %2053 = vmatpush1.bf16.msra.mxu0 0
        %2054 = vmatprep.subr.bf16.mxu0 0
        %2055 = vmatpush1.bf16.msra.mxu0 0
        %2056 = vmatprep.subr.bf16.mxu0 0
        %2057 = vmatpush1.bf16.msra.mxu0 0
        %2058 = vmatprep.subr.bf16.mxu0 0
        %2059 = vmatpush1.bf16.msra.mxu0 0
        %2060 = vmatprep.subr.bf16.mxu0 0
        %2061 = vmatpush1.bf16.msra.mxu0 0
        %2062 = vmatprep.subr.bf16.mxu0 0
        %2063 = vmatpush1.bf16.msra.mxu0 0
        %2064 = vmatprep.subr.bf16.mxu0 0
        %2065 = vmatpush1.bf16.msra.mxu0 0
        %2066 = vmatprep.subr.bf16.mxu0 0
        %2067 = vmatpush1.bf16.msra.mxu0 0
        %2068 = vmatprep.subr.bf16.mxu0 0
        %2069 = vmatpush1.bf16.msra.mxu0 0
        %2070 = vmatprep.subr.bf16.mxu0 0
        %2071 = vmatpush1.bf16.msra.mxu0 0
        %2072 = vmatprep.mubr.bf16.mxu0 0
        %2073 = vmatmul.mubr.bf16.gmra.mrb[0].mxu0 %v2038
        %v2074 = vpop.f32.mrb[0].mxu0
        %v2075 = vadd.f32 0.0, %v2074
        %v2076 = vpop.f32.mrb[0].mxu0
        %v2077 = vpop.f32.mrb[0].mxu0
        %v2078 = vadd.f32 0.0, %v2077
        %v2079 = vpop.f32.mrb[0].mxu0
        %2080 = vdwg.mxu0
        %v2081 = vadd.f32 %v1908, %v2075
        %v2082 = vadd.f32 %v1909, %v2078
        %2083 = vrot.lane.b32.xlu0 %v1740, 112
        %v2084 = vpop.permute.xlu0 %2083
        %2085 = vrot.lane.b32.xlu0 %v1741, 112
        %v2086 = vpop.permute.xlu0 %2085
        %v2088 = vsel %vm1050, %v2084, 0
        %v2091 = vsel %vm1050, %v2086, 0
        %2093 = vmatprep.subr.bf16.mxu0 0
        %2094 = vmatpush1.bf16.xpose.msra.mxu0 %v2091
        %2095 = vmatprep.subr.bf16.mxu0 0
        %2096 = vmatpush1.bf16.xpose.msra.mxu0 0
        %2097 = vmatprep.subr.bf16.mxu0 0
        %2098 = vmatpush1.bf16.xpose.msra.mxu0 0
        %2099 = vmatprep.subr.bf16.mxu0 0
        %2100 = vmatpush1.bf16.xpose.msra.mxu0 0
        %2101 = vmatprep.subr.bf16.mxu0 0
        %2102 = vmatpush1.bf16.xpose.msra.mxu0 0
        %2103 = vmatprep.subr.bf16.mxu0 0
        %2104 = vmatpush1.bf16.xpose.msra.mxu0 0
        %2105 = vmatprep.subr.bf16.mxu0 0
        %2106 = vmatpush1.bf16.xpose.msra.mxu0 0
        %2107 = vmatprep.subr.bf16.mxu0 0
        %2108 = vmatpush1.bf16.xpose.msra.mxu0 0
        %2109 = vmatprep.subr.bf16.mxu0 0
        %2110 = vmatpush1.bf16.xpose.msra.mxu0 0
        %2111 = vmatprep.subr.bf16.mxu0 0
        %2112 = vmatpush1.bf16.xpose.msra.mxu0 0
        %2113 = vmatprep.subr.bf16.mxu0 0
        %2114 = vmatpush1.bf16.xpose.msra.mxu0 0
        %2115 = vmatprep.subr.bf16.mxu0 0
        %2116 = vmatpush1.bf16.xpose.msra.mxu0 0
        %2117 = vmatprep.subr.bf16.mxu0 0
        %2118 = vmatpush1.bf16.xpose.msra.mxu0 0
        %2119 = vmatprep.subr.bf16.mxu0 0
        %2120 = vmatpush1.bf16.xpose.msra.mxu0 0
        %2121 = vmatprep.subr.bf16.mxu0 0
        %2122 = vmatpush1.bf16.xpose.msra.mxu0 0
        %2123 = vmatprep.subr.bf16.mxu0 0
        %2124 = vmatpush1.bf16.xpose.msra.mxu0 0
        %2125 = vmatprep.mubr.bf16.mxu0 0
        %2126 = vmatmul.mubr.bf16.gmra.mrb[0].mxu0 %v2088
        %v2127 = vpop.f32.mrb[0].mxu0
        %v2128 = vadd.f32 %v786, %v2127
        %v2129 = vpop.f32.mrb[0].mxu0
        %v2130 = vpop.f32.mrb[0].mxu0
        %v2131 = vadd.f32 %v787, %v2130
        %v2132 = vpop.f32.mrb[0].mxu0
        %2133 = vdwg.mxu0
        %v2134 = vsel %vm1789, %v2128, -inf
        %2135 = vmax.xlane.f32.xlu0 %v2134
        %v2136 = vpop.xlane.xlu0 %2135
        %v2137 = vsel %vm1793, %v2131, -inf
        %2138 = vmax.xlane.f32.xlu0 %v2137
        %v2139 = vpop.xlane.xlu0 %2138
        %v2140 = vsub.f32 %v2128, %v2136
        %v2141 = vsub.f32 %v2131, %v2139
        %v2142 = vmul.f32 %v2140, 1.442695
        %v2143 = vpow.pop %v2142
        %v2144 = vmul.f32 %v2141, 1.442695
        %v2145 = vpow.pop %v2144
        %v2146 = vsel %vm1789, %v2143, 0.0
        %2147 = vadd.xlane.f32.xlu0 %v2146
        %v2148 = vpop.xlane.xlu0 %2147
        %v2149 = vsel %vm1793, %v2145, 0.0
        %2150 = vadd.xlane.f32.xlu0 %v2149
        %v2151 = vpop.xlane.xlu0 %2150
        %v2152 = vrcp.pop %v2148
        %v2153 = vrcp.pop %v2151
        %v2154 = vmul.f32 %v2143, %v2152
        %v2155 = vmul.f32 %v2145, %v2153
        %v2156 = vpack.c.bf16 %v2155, %v2154
        %2157 = vrot.lane.b32.xlu0 %v1814, 112
        %v2158 = vpop.permute.xlu0 %2157
        %v2160 = vsel %vm1789, %v2156, 0
        %v2163 = vsel %vm1818, %v2158, 0
        %2165 = vmatprep.subr.bf16.mxu0 0
        %2166 = vmatpush1.bf16.msra.mxu0 %v2163
        %2167 = vmatprep.subr.bf16.mxu0 0
        %2168 = vmatpush1.bf16.msra.mxu0 0
        %2169 = vmatprep.subr.bf16.mxu0 0
        %2170 = vmatpush1.bf16.msra.mxu0 0
        %2171 = vmatprep.subr.bf16.mxu0 0
        %2172 = vmatpush1.bf16.msra.mxu0 0
        %2173 = vmatprep.subr.bf16.mxu0 0
        %2174 = vmatpush1.bf16.msra.mxu0 0
        %2175 = vmatprep.subr.bf16.mxu0 0
        %2176 = vmatpush1.bf16.msra.mxu0 0
        %2177 = vmatprep.subr.bf16.mxu0 0
        %2178 = vmatpush1.bf16.msra.mxu0 0
        %2179 = vmatprep.subr.bf16.mxu0 0
        %2180 = vmatpush1.bf16.msra.mxu0 0
        %2181 = vmatprep.subr.bf16.mxu0 0
        %2182 = vmatpush1.bf16.msra.mxu0 0
        %2183 = vmatprep.subr.bf16.mxu0 0
        %2184 = vmatpush1.bf16.msra.mxu0 0
        %2185 = vmatprep.subr.bf16.mxu0 0
        %2186 = vmatpush1.bf16.msra.mxu0 0
        %2187 = vmatprep.subr.bf16.mxu0 0
        %2188 = vmatpush1.bf16.msra.mxu0 0
        %2189 = vmatprep.subr.bf16.mxu0 0
        %2190 = vmatpush1.bf16.msra.mxu0 0
        %2191 = vmatprep.subr.bf16.mxu0 0
        %2192 = vmatpush1.bf16.msra.mxu0 0
        %2193 = vmatprep.subr.bf16.mxu0 0
        %2194 = vmatpush1.bf16.msra.mxu0 0
        %2195 = vmatprep.subr.bf16.mxu0 0
        %2196 = vmatpush1.bf16.msra.mxu0 0
        %2197 = vmatprep.mubr.bf16.mxu0 0
        %2198 = vmatmul.mubr.bf16.gmra.mrb[0].mxu0 %v2160
        %v2199 = vpop.f32.mrb[0].mxu0
        %v2200 = vadd.f32 0.0, %v2199
        %v2201 = vpop.f32.mrb[0].mxu0
        %v2202 = vpop.f32.mrb[0].mxu0
        %v2203 = vadd.f32 0.0, %v2202
        %v2204 = vpop.f32.mrb[0].mxu0
        %2205 = vdwg.mxu0
        %v2206 = vpack.c.bf16 %v2203, %v2200
        %v2208 = vsel %vm1050, %v2206, 0
        %2210 = vmatprep.subr.bf16.mxu0 0
        %2211 = vmatpush1.bf16.msra.mxu0 %v1524
        %2212 = vmatprep.subr.bf16.mxu0 0
        %2213 = vmatpush1.bf16.msra.mxu0 0
        %2214 = vmatprep.subr.bf16.mxu0 0
        %2215 = vmatpush1.bf16.msra.mxu0 0
        %2216 = vmatprep.subr.bf16.mxu0 0
        %2217 = vmatpush1.bf16.msra.mxu0 0
        %2218 = vmatprep.subr.bf16.mxu0 0
        %2219 = vmatpush1.bf16.msra.mxu0 0
        %2220 = vmatprep.subr.bf16.mxu0 0
        %2221 = vmatpush1.bf16.msra.mxu0 0
        %2222 = vmatprep.subr.bf16.mxu0 0
        %2223 = vmatpush1.bf16.msra.mxu0 0
        %2224 = vmatprep.subr.bf16.mxu0 0
        %2225 = vmatpush1.bf16.msra.mxu0 0
        %2226 = vmatprep.subr.bf16.mxu0 0
        %2227 = vmatpush1.bf16.msra.mxu0 0
        %2228 = vmatprep.subr.bf16.mxu0 0
        %2229 = vmatpush1.bf16.msra.mxu0 0
        %2230 = vmatprep.subr.bf16.mxu0 0
        %2231 = vmatpush1.bf16.msra.mxu0 0
        %2232 = vmatprep.subr.bf16.mxu0 0
        %2233 = vmatpush1.bf16.msra.mxu0 0
        %2234 = vmatprep.subr.bf16.mxu0 0
        %2235 = vmatpush1.bf16.msra.mxu0 0
        %2236 = vmatprep.subr.bf16.mxu0 0
        %2237 = vmatpush1.bf16.msra.mxu0 0
        %2238 = vmatprep.subr.bf16.mxu0 0
        %2239 = vmatpush1.bf16.msra.mxu0 0
        %2240 = vmatprep.subr.bf16.mxu0 0
        %2241 = vmatpush1.bf16.msra.mxu0 0
        %2242 = vmatprep.mubr.bf16.mxu0 0
        %2243 = vmatmul.mubr.bf16.gmra.mrb[0].mxu0 %v2208
        %v2244 = vpop.f32.mrb[0].mxu0
        %v2245 = vadd.f32 0.0, %v2244
        %v2246 = vpop.f32.mrb[0].mxu0
        %v2247 = vpop.f32.mrb[0].mxu0
        %v2248 = vadd.f32 0.0, %v2247
        %v2249 = vpop.f32.mrb[0].mxu0
        %2250 = vdwg.mxu0
        %v2251 = vadd.f32 %v2081, %v2245
        %v2252 = vadd.f32 %v2082, %v2248
        %2253 = vrot.lane.b32.xlu0 %v1740, 104
        %v2254 = vpop.permute.xlu0 %2253
        %2255 = vrot.lane.b32.xlu0 %v1741, 104
        %v2256 = vpop.permute.xlu0 %2255
        %v2258 = vsel %vm1050, %v2254, 0
        %v2261 = vsel %vm1050, %v2256, 0
        %2263 = vmatprep.subr.bf16.mxu0 0
        %2264 = vmatpush1.bf16.xpose.msra.mxu0 %v2261
        %2265 = vmatprep.subr.bf16.mxu0 0
        %2266 = vmatpush1.bf16.xpose.msra.mxu0 0
        %2267 = vmatprep.subr.bf16.mxu0 0
        %2268 = vmatpush1.bf16.xpose.msra.mxu0 0
        %2269 = vmatprep.subr.bf16.mxu0 0
        %2270 = vmatpush1.bf16.xpose.msra.mxu0 0
        %2271 = vmatprep.subr.bf16.mxu0 0
        %2272 = vmatpush1.bf16.xpose.msra.mxu0 0
        %2273 = vmatprep.subr.bf16.mxu0 0
        %2274 = vmatpush1.bf16.xpose.msra.mxu0 0
        %2275 = vmatprep.subr.bf16.mxu0 0
        %2276 = vmatpush1.bf16.xpose.msra.mxu0 0
        %2277 = vmatprep.subr.bf16.mxu0 0
        %2278 = vmatpush1.bf16.xpose.msra.mxu0 0
        %2279 = vmatprep.subr.bf16.mxu0 0
        %2280 = vmatpush1.bf16.xpose.msra.mxu0 0
        %2281 = vmatprep.subr.bf16.mxu0 0
        %2282 = vmatpush1.bf16.xpose.msra.mxu0 0
        %2283 = vmatprep.subr.bf16.mxu0 0
        %2284 = vmatpush1.bf16.xpose.msra.mxu0 0
        %2285 = vmatprep.subr.bf16.mxu0 0
        %2286 = vmatpush1.bf16.xpose.msra.mxu0 0
        %2287 = vmatprep.subr.bf16.mxu0 0
        %2288 = vmatpush1.bf16.xpose.msra.mxu0 0
        %2289 = vmatprep.subr.bf16.mxu0 0
        %2290 = vmatpush1.bf16.xpose.msra.mxu0 0
        %2291 = vmatprep.subr.bf16.mxu0 0
        %2292 = vmatpush1.bf16.xpose.msra.mxu0 0
        %2293 = vmatprep.subr.bf16.mxu0 0
        %2294 = vmatpush1.bf16.xpose.msra.mxu0 0
        %2295 = vmatprep.mubr.bf16.mxu0 0
        %2296 = vmatmul.mubr.bf16.gmra.mrb[0].mxu0 %v2258
        %v2297 = vpop.f32.mrb[0].mxu0
        %v2298 = vadd.f32 %v786, %v2297
        %v2299 = vpop.f32.mrb[0].mxu0
        %v2300 = vpop.f32.mrb[0].mxu0
        %v2301 = vadd.f32 %v787, %v2300
        %v2302 = vpop.f32.mrb[0].mxu0
        %2303 = vdwg.mxu0
        %v2304 = vsel %vm1789, %v2298, -inf
        %2305 = vmax.xlane.f32.xlu0 %v2304
        %v2306 = vpop.xlane.xlu0 %2305
        %v2307 = vsel %vm1793, %v2301, -inf
        %2308 = vmax.xlane.f32.xlu0 %v2307
        %v2309 = vpop.xlane.xlu0 %2308
        %v2310 = vsub.f32 %v2298, %v2306
        %v2311 = vsub.f32 %v2301, %v2309
        %v2312 = vmul.f32 %v2310, 1.442695
        %v2313 = vpow.pop %v2312
        %v2314 = vmul.f32 %v2311, 1.442695
        %v2315 = vpow.pop %v2314
        %v2316 = vsel %vm1789, %v2313, 0.0
        %2317 = vadd.xlane.f32.xlu0 %v2316
        %v2318 = vpop.xlane.xlu0 %2317
        %v2319 = vsel %vm1793, %v2315, 0.0
        %2320 = vadd.xlane.f32.xlu0 %v2319
        %v2321 = vpop.xlane.xlu0 %2320
        %v2322 = vrcp.pop %v2318
        %v2323 = vrcp.pop %v2321
        %v2324 = vmul.f32 %v2313, %v2322
        %v2325 = vmul.f32 %v2315, %v2323
        %v2326 = vpack.c.bf16 %v2325, %v2324
        %2327 = vrot.lane.b32.xlu0 %v1814, 104
        %v2328 = vpop.permute.xlu0 %2327
        %v2330 = vsel %vm1789, %v2326, 0
        %v2333 = vsel %vm1818, %v2328, 0
        %2335 = vmatprep.subr.bf16.mxu0 0
        %2336 = vmatpush1.bf16.msra.mxu0 %v2333
        %2337 = vmatprep.subr.bf16.mxu0 0
        %2338 = vmatpush1.bf16.msra.mxu0 0
        %2339 = vmatprep.subr.bf16.mxu0 0
        %2340 = vmatpush1.bf16.msra.mxu0 0
        %2341 = vmatprep.subr.bf16.mxu0 0
        %2342 = vmatpush1.bf16.msra.mxu0 0
        %2343 = vmatprep.subr.bf16.mxu0 0
        %2344 = vmatpush1.bf16.msra.mxu0 0
        %2345 = vmatprep.subr.bf16.mxu0 0
        %2346 = vmatpush1.bf16.msra.mxu0 0
        %2347 = vmatprep.subr.bf16.mxu0 0
        %2348 = vmatpush1.bf16.msra.mxu0 0
        %2349 = vmatprep.subr.bf16.mxu0 0
        %2350 = vmatpush1.bf16.msra.mxu0 0
        %2351 = vmatprep.subr.bf16.mxu0 0
        %2352 = vmatpush1.bf16.msra.mxu0 0
        %2353 = vmatprep.subr.bf16.mxu0 0
        %2354 = vmatpush1.bf16.msra.mxu0 0
        %2355 = vmatprep.subr.bf16.mxu0 0
        %2356 = vmatpush1.bf16.msra.mxu0 0
        %2357 = vmatprep.subr.bf16.mxu0 0
        %2358 = vmatpush1.bf16.msra.mxu0 0
        %2359 = vmatprep.subr.bf16.mxu0 0
        %2360 = vmatpush1.bf16.msra.mxu0 0
        %2361 = vmatprep.subr.bf16.mxu0 0
        %2362 = vmatpush1.bf16.msra.mxu0 0
        %2363 = vmatprep.subr.bf16.mxu0 0
        %2364 = vmatpush1.bf16.msra.mxu0 0
        %2365 = vmatprep.subr.bf16.mxu0 0
        %2366 = vmatpush1.bf16.msra.mxu0 0
        %2367 = vmatprep.mubr.bf16.mxu0 0
        %2368 = vmatmul.mubr.bf16.gmra.mrb[0].mxu0 %v2330
        %v2369 = vpop.f32.mrb[0].mxu0
        %v2370 = vadd.f32 0.0, %v2369
        %v2371 = vpop.f32.mrb[0].mxu0
        %v2372 = vpop.f32.mrb[0].mxu0
        %v2373 = vadd.f32 0.0, %v2372
        %v2374 = vpop.f32.mrb[0].mxu0
        %2375 = vdwg.mxu0
        %v2376 = vpack.c.bf16 %v2373, %v2370
        %v2378 = vsel %vm1050, %v2376, 0
        %2380 = vmatprep.subr.bf16.mxu0 0
        %2381 = vmatpush1.bf16.msra.mxu0 %v1695
        %2382 = vmatprep.subr.bf16.mxu0 0
        %2383 = vmatpush1.bf16.msra.mxu0 0
        %2384 = vmatprep.subr.bf16.mxu0 0
        %2385 = vmatpush1.bf16.msra.mxu0 0
        %2386 = vmatprep.subr.bf16.mxu0 0
        %2387 = vmatpush1.bf16.msra.mxu0 0
        %2388 = vmatprep.subr.bf16.mxu0 0
        %2389 = vmatpush1.bf16.msra.mxu0 0
        %2390 = vmatprep.subr.bf16.mxu0 0
        %2391 = vmatpush1.bf16.msra.mxu0 0
        %2392 = vmatprep.subr.bf16.mxu0 0
        %2393 = vmatpush1.bf16.msra.mxu0 0
        %2394 = vmatprep.subr.bf16.mxu0 0
        %2395 = vmatpush1.bf16.msra.mxu0 0
        %2396 = vmatprep.subr.bf16.mxu0 0
        %2397 = vmatpush1.bf16.msra.mxu0 0
        %2398 = vmatprep.subr.bf16.mxu0 0
        %2399 = vmatpush1.bf16.msra.mxu0 0
        %2400 = vmatprep.subr.bf16.mxu0 0
        %2401 = vmatpush1.bf16.msra.mxu0 0
        %2402 = vmatprep.subr.bf16.mxu0 0
        %2403 = vmatpush1.bf16.msra.mxu0 0
        %2404 = vmatprep.subr.bf16.mxu0 0
        %2405 = vmatpush1.bf16.msra.mxu0 0
        %2406 = vmatprep.subr.bf16.mxu0 0
        %2407 = vmatpush1.bf16.msra.mxu0 0
        %2408 = vmatprep.subr.bf16.mxu0 0
        %2409 = vmatpush1.bf16.msra.mxu0 0
        %2410 = vmatprep.subr.bf16.mxu0 0
        %2411 = vmatpush1.bf16.msra.mxu0 0
        %2412 = vmatprep.mubr.bf16.mxu0 0
        %2413 = vmatmul.mubr.bf16.gmra.mrb[0].mxu0 %v2378
        %v2414 = vpop.f32.mrb[0].mxu0
        %v2415 = vadd.f32 0.0, %v2414
        %v2416 = vpop.f32.mrb[0].mxu0
        %v2417 = vpop.f32.mrb[0].mxu0
        %v2418 = vadd.f32 0.0, %v2417
        %v2419 = vpop.f32.mrb[0].mxu0
        %2420 = vdwg.mxu0
        %v2421 = vadd.f32 %v2251, %v2415
        %v2422 = vadd.f32 %v2252, %v2418
        %v2423 = vpack.c.bf16 %v1739, %v1738
        %v2428 = vunpack.c.l.b16 %v824
        %v2429 = vunpack.c.l.b16 %v825
        %v2430 = vunpack.c.l.b16 %v826
        %v2431 = vunpack.c.l.b16 %v827
        %v2432 = vpack.c.b16 %v2429, %v2428
        %v2433 = vpack.c.b16 %v2431, %v2430
        %v2437 = vsel %vm858, %v2423, 0
        %2439 = vmatprep.subr.bf16.mxu0 0
        %2440 = vmatpush1.bf16.msra.mxu0 %v2432
        %2441 = vmatprep.subr.bf16.mxu0 0
        %2442 = vmatpush1.bf16.msra.mxu0 %v2433
        %2443 = vmatprep.subr.bf16.mxu0 0
        %2444 = vmatpush1.bf16.msra.mxu0 0
        %2445 = vmatprep.subr.bf16.mxu0 0
        %2446 = vmatpush1.bf16.msra.mxu0 0
        %2447 = vmatprep.subr.bf16.mxu0 0
        %2448 = vmatpush1.bf16.msra.mxu0 0
        %2449 = vmatprep.subr.bf16.mxu0 0
        %2450 = vmatpush1.bf16.msra.mxu0 0
        %2451 = vmatprep.subr.bf16.mxu0 0
        %2452 = vmatpush1.bf16.msra.mxu0 0
        %2453 = vmatprep.subr.bf16.mxu0 0
        %2454 = vmatpush1.bf16.msra.mxu0 0
        %2455 = vmatprep.subr.bf16.mxu0 0
        %2456 = vmatpush1.bf16.msra.mxu0 0
        %2457 = vmatprep.subr.bf16.mxu0 0
        %2458 = vmatpush1.bf16.msra.mxu0 0
        %2459 = vmatprep.subr.bf16.mxu0 0
        %2460 = vmatpush1.bf16.msra.mxu0 0
        %2461 = vmatprep.subr.bf16.mxu0 0
        %2462 = vmatpush1.bf16.msra.mxu0 0
        %2463 = vmatprep.subr.bf16.mxu0 0
        %2464 = vmatpush1.bf16.msra.mxu0 0
        %2465 = vmatprep.subr.bf16.mxu0 0
        %2466 = vmatpush1.bf16.msra.mxu0 0
        %2467 = vmatprep.subr.bf16.mxu0 0
        %2468 = vmatpush1.bf16.msra.mxu0 0
        %2469 = vmatprep.subr.bf16.mxu0 0
        %2470 = vmatpush1.bf16.msra.mxu0 0
        %2471 = vmatprep.mubr.bf16.mxu0 0
        %2472 = vmatmul.mubr.bf16.gmra.mrb[0].mxu0 %v2437
        %v2473 = vpop.f32.mrb[0].mxu0
        %v2474 = vadd.f32 0.0, %v2473
        %v2475 = vpop.f32.mrb[0].mxu0
        %v2476 = vpop.f32.mrb[0].mxu0
        %v2477 = vadd.f32 0.0, %v2476
        %v2478 = vpop.f32.mrb[0].mxu0
        %2479 = vdwg.mxu0
        %v2484 = vunpack.c.l.b16 %v820
        %v2485 = vunpack.c.l.b16 %v821
        %v2486 = vunpack.c.l.b16 %v822
        %v2487 = vunpack.c.l.b16 %v823
        %v2488 = vpack.c.b16 %v2485, %v2484
        %v2489 = vpack.c.b16 %v2487, %v2486
        %2492 = vmatprep.subr.bf16.mxu0 0
        %2493 = vmatpush1.bf16.msra.mxu0 %v2488
        %2494 = vmatprep.subr.bf16.mxu0 0
        %2495 = vmatpush1.bf16.msra.mxu0 %v2489
        %2496 = vmatprep.subr.bf16.mxu0 0
        %2497 = vmatpush1.bf16.msra.mxu0 0
        %2498 = vmatprep.subr.bf16.mxu0 0
        %2499 = vmatpush1.bf16.msra.mxu0 0
        %2500 = vmatprep.subr.bf16.mxu0 0
        %2501 = vmatpush1.bf16.msra.mxu0 0
        %2502 = vmatprep.subr.bf16.mxu0 0
        %2503 = vmatpush1.bf16.msra.mxu0 0
        %2504 = vmatprep.subr.bf16.mxu0 0
        %2505 = vmatpush1.bf16.msra.mxu0 0
        %2506 = vmatprep.subr.bf16.mxu0 0
        %2507 = vmatpush1.bf16.msra.mxu0 0
        %2508 = vmatprep.subr.bf16.mxu0 0
        %2509 = vmatpush1.bf16.msra.mxu0 0
        %2510 = vmatprep.subr.bf16.mxu0 0
        %2511 = vmatpush1.bf16.msra.mxu0 0
        %2512 = vmatprep.subr.bf16.mxu0 0
        %2513 = vmatpush1.bf16.msra.mxu0 0
        %2514 = vmatprep.subr.bf16.mxu0 0
        %2515 = vmatpush1.bf16.msra.mxu0 0
        %2516 = vmatprep.subr.bf16.mxu0 0
        %2517 = vmatpush1.bf16.msra.mxu0 0
        %2518 = vmatprep.subr.bf16.mxu0 0
        %2519 = vmatpush1.bf16.msra.mxu0 0
        %2520 = vmatprep.subr.bf16.mxu0 0
        %2521 = vmatpush1.bf16.msra.mxu0 0
        %2522 = vmatprep.subr.bf16.mxu0 0
        %2523 = vmatpush1.bf16.msra.mxu0 0
        %2524 = vmatprep.mubr.bf16.mxu0 0
        %2525 = vmatmul.mubr.bf16.gmra.mrb[0].mxu0 %v860
        %v2526 = vpop.f32.mrb[0].mxu0
        %v2527 = vadd.f32 %v2474, %v2526
        %v2528 = vpop.f32.mrb[0].mxu0
        %v2529 = vpop.f32.mrb[0].mxu0
        %v2530 = vadd.f32 %v2477, %v2529
        %v2531 = vpop.f32.mrb[0].mxu0
        %2532 = vdwg.mxu0
        %v2534 = vlaneseq
        %v2535 = vshrl.u32 %v2534, 7
        %v2536 = vsub.s32 0, %v2535
        %v2537 = vrot.slane %v828, %v2536
        %v2539 = vadd.f32 %v2527, %v2537
        %v2540 = vadd.f32 %v2530, %v2537
        %vm2541 = vcmask 523264
        %v2542 = vsel %vm2541, %v2539, 0.0
        %v2543 = vsel %vm2541, %v2540, 0.0
        %v2544 = vadd.f32 %v2542, %v2543
        %v2545 = vrot.slane %v2544, 4
        %v2546 = vadd.f32 %v2544, %v2545
        %v2547 = vrot.slane %v2546, 2
        %v2548 = vadd.f32 %v2546, %v2547
        %v2549 = vrot.slane %v2548, 1
        %v2550 = vadd.f32 %v2548, %v2549
        %v2551 = vrcp.pop 16.0
        %v2552 = vmul.f32 %v2550, %v2551
        %v2553 = vsub.f32 %v2539, %v2552
        %v2554 = vsub.f32 %v2540, %v2552
        %v2555 = vmul.f32 %v2553, %v2553
        %v2556 = vmul.f32 %v2554, %v2554
        %v2557 = vsel %vm2541, %v2555, 0.0
        %v2558 = vsel %vm2541, %v2556, 0.0
        %v2559 = vadd.f32 %v2557, %v2558
        %v2560 = vrot.slane %v2559, 4
        %v2561 = vadd.f32 %v2559, %v2560
        %v2562 = vrot.slane %v2561, 2
        %v2563 = vadd.f32 %v2561, %v2562
        %v2564 = vrot.slane %v2563, 1
        %v2565 = vadd.f32 %v2563, %v2564
        %v2566 = vmul.f32 %v2565, %v2551
        %v2567 = vadd.f32 %v2566, 1e-05
        %v2568 = vrsqrt.pop %v2567
        %v2569 = vmul.f32 %v2553, %v2568
        %v2570 = vmul.f32 %v2554, %v2568
        %v2571 = vmax.f32 %v2569, 0.0
        %v2572 = vmax.f32 %v2570, 0.0
        %v2573 = vpack.c.bf16 %v2572, %v2571
        %v2575 = vlaneseq
        %v2576 = vshrl.u32 %v2575, 7
        %v2577 = vsub.s32 0, %v2576
        %v2578 = vrot.slane %v837, %v2577
        %v2588 = vunpack.c.l.b16 %v829
        %v2589 = vunpack.c.l.b16 %v830
        %v2590 = vunpack.c.l.b16 %v831
        %v2591 = vunpack.c.l.b16 %v832
        %v2592 = vunpack.c.l.b16 %v833
        %v2593 = vunpack.c.l.b16 %v834
        %v2594 = vunpack.c.l.b16 %v835
        %v2595 = vunpack.c.l.b16 %v836
        %v2596 = vpack.c.b16 %v2589, %v2588
        %v2597 = vpack.c.b16 %v2591, %v2590
        %v2598 = vpack.c.b16 %v2593, %v2592
        %v2599 = vpack.c.b16 %v2595, %v2594
        %v2605 = vsel %vm2541, %v2573, 0
        %2607 = vmatprep.subr.bf16.mxu0 0
        %2608 = vmatpush1.bf16.msra.mxu0 %v2596
        %2609 = vmatprep.subr.bf16.mxu0 0
        %2610 = vmatpush1.bf16.msra.mxu0 %v2597
        %2611 = vmatprep.subr.bf16.mxu0 0
        %2612 = vmatpush1.bf16.msra.mxu0 %v2598
        %2613 = vmatprep.subr.bf16.mxu0 0
        %2614 = vmatpush1.bf16.msra.mxu0 %v2599
        %2615 = vmatprep.subr.bf16.mxu0 0
        %2616 = vmatpush1.bf16.msra.mxu0 0
        %2617 = vmatprep.subr.bf16.mxu0 0
        %2618 = vmatpush1.bf16.msra.mxu0 0
        %2619 = vmatprep.subr.bf16.mxu0 0
        %2620 = vmatpush1.bf16.msra.mxu0 0
        %2621 = vmatprep.subr.bf16.mxu0 0
        %2622 = vmatpush1.bf16.msra.mxu0 0
        %2623 = vmatprep.subr.bf16.mxu0 0
        %2624 = vmatpush1.bf16.msra.mxu0 0
        %2625 = vmatprep.subr.bf16.mxu0 0
        %2626 = vmatpush1.bf16.msra.mxu0 0
        %2627 = vmatprep.subr.bf16.mxu0 0
        %2628 = vmatpush1.bf16.msra.mxu0 0
        %2629 = vmatprep.subr.bf16.mxu0 0
        %2630 = vmatpush1.bf16.msra.mxu0 0
        %2631 = vmatprep.subr.bf16.mxu0 0
        %2632 = vmatpush1.bf16.msra.mxu0 0
        %2633 = vmatprep.subr.bf16.mxu0 0
        %2634 = vmatpush1.bf16.msra.mxu0 0
        %2635 = vmatprep.subr.bf16.mxu0 0
        %2636 = vmatpush1.bf16.msra.mxu0 0
        %2637 = vmatprep.subr.bf16.mxu0 0
        %2638 = vmatpush1.bf16.msra.mxu0 0
        %2639 = vmatprep.mubr.bf16.mxu0 0
        %2640 = vmatmul.mubr.bf16.gmra.mrb[0].mxu0 %v2605
        %v2641 = vpop.f32.mrb[0].mxu0
        %v2642 = vadd.f32 %v2578, %v2641
        %v2643 = vpop.f32.mrb[0].mxu0
        %v2644 = vpop.f32.mrb[0].mxu0
        %v2645 = vadd.f32 %v2578, %v2644
        %v2646 = vpop.f32.mrb[0].mxu0
        %2647 = vdwg.mxu0
        %v2648 = vadd.f32 %v772, %v2642
        %v2649 = vadd.f32 %v773, %v2645
        %v2650 = vpack.c.bf16 %v2422, %v2421
        %v2652 = vsel %vm858, %v2650, 0
        %2654 = vmatprep.subr.bf16.mxu0 0
        %2655 = vmatpush1.bf16.msra.mxu0 %v2432
        %2656 = vmatprep.subr.bf16.mxu0 0
        %2657 = vmatpush1.bf16.msra.mxu0 %v2433
        %2658 = vmatprep.subr.bf16.mxu0 0
        %2659 = vmatpush1.bf16.msra.mxu0 0
        %2660 = vmatprep.subr.bf16.mxu0 0
        %2661 = vmatpush1.bf16.msra.mxu0 0
        %2662 = vmatprep.subr.bf16.mxu0 0
        %2663 = vmatpush1.bf16.msra.mxu0 0
        %2664 = vmatprep.subr.bf16.mxu0 0
        %2665 = vmatpush1.bf16.msra.mxu0 0
        %2666 = vmatprep.subr.bf16.mxu0 0
        %2667 = vmatpush1.bf16.msra.mxu0 0
        %2668 = vmatprep.subr.bf16.mxu0 0
        %2669 = vmatpush1.bf16.msra.mxu0 0
        %2670 = vmatprep.subr.bf16.mxu0 0
        %2671 = vmatpush1.bf16.msra.mxu0 0
        %2672 = vmatprep.subr.bf16.mxu0 0
        %2673 = vmatpush1.bf16.msra.mxu0 0
        %2674 = vmatprep.subr.bf16.mxu0 0
        %2675 = vmatpush1.bf16.msra.mxu0 0
        %2676 = vmatprep.subr.bf16.mxu0 0
        %2677 = vmatpush1.bf16.msra.mxu0 0
        %2678 = vmatprep.subr.bf16.mxu0 0
        %2679 = vmatpush1.bf16.msra.mxu0 0
        %2680 = vmatprep.subr.bf16.mxu0 0
        %2681 = vmatpush1.bf16.msra.mxu0 0
        %2682 = vmatprep.subr.bf16.mxu0 0
        %2683 = vmatpush1.bf16.msra.mxu0 0
        %2684 = vmatprep.subr.bf16.mxu0 0
        %2685 = vmatpush1.bf16.msra.mxu0 0
        %2686 = vmatprep.mubr.bf16.mxu0 0
        %2687 = vmatmul.mubr.bf16.gmra.mrb[0].mxu0 %v2652
        %v2688 = vpop.f32.mrb[0].mxu0
        %v2689 = vadd.f32 0.0, %v2688
        %v2690 = vpop.f32.mrb[0].mxu0
        %v2691 = vpop.f32.mrb[0].mxu0
        %v2692 = vadd.f32 0.0, %v2691
        %v2693 = vpop.f32.mrb[0].mxu0
        %2694 = vdwg.mxu0
        %2695 = vmatprep.subr.bf16.mxu0 0
        %2696 = vmatpush1.bf16.msra.mxu0 %v2488
        %2697 = vmatprep.subr.bf16.mxu0 0
        %2698 = vmatpush1.bf16.msra.mxu0 %v2489
        %2699 = vmatprep.subr.bf16.mxu0 0
        %2700 = vmatpush1.bf16.msra.mxu0 0
        %2701 = vmatprep.subr.bf16.mxu0 0
        %2702 = vmatpush1.bf16.msra.mxu0 0
        %2703 = vmatprep.subr.bf16.mxu0 0
        %2704 = vmatpush1.bf16.msra.mxu0 0
        %2705 = vmatprep.subr.bf16.mxu0 0
        %2706 = vmatpush1.bf16.msra.mxu0 0
        %2707 = vmatprep.subr.bf16.mxu0 0
        %2708 = vmatpush1.bf16.msra.mxu0 0
        %2709 = vmatprep.subr.bf16.mxu0 0
        %2710 = vmatpush1.bf16.msra.mxu0 0
        %2711 = vmatprep.subr.bf16.mxu0 0
        %2712 = vmatpush1.bf16.msra.mxu0 0
        %2713 = vmatprep.subr.bf16.mxu0 0
        %2714 = vmatpush1.bf16.msra.mxu0 0
        %2715 = vmatprep.subr.bf16.mxu0 0
        %2716 = vmatpush1.bf16.msra.mxu0 0
        %2717 = vmatprep.subr.bf16.mxu0 0
        %2718 = vmatpush1.bf16.msra.mxu0 0
        %2719 = vmatprep.subr.bf16.mxu0 0
        %2720 = vmatpush1.bf16.msra.mxu0 0
        %2721 = vmatprep.subr.bf16.mxu0 0
        %2722 = vmatpush1.bf16.msra.mxu0 0
        %2723 = vmatprep.subr.bf16.mxu0 0
        %2724 = vmatpush1.bf16.msra.mxu0 0
        %2725 = vmatprep.subr.bf16.mxu0 0
        %2726 = vmatpush1.bf16.msra.mxu0 0
        %2727 = vmatprep.mubr.bf16.mxu0 0
        %2728 = vmatmul.mubr.bf16.gmra.mrb[0].mxu0 %v863
        %v2729 = vpop.f32.mrb[0].mxu0
        %v2730 = vadd.f32 %v2689, %v2729
        %v2731 = vpop.f32.mrb[0].mxu0
        %v2732 = vpop.f32.mrb[0].mxu0
        %v2733 = vadd.f32 %v2692, %v2732
        %v2734 = vpop.f32.mrb[0].mxu0
        %2735 = vdwg.mxu0
        %v2736 = vadd.f32 %v2730, %v2537
        %v2737 = vadd.f32 %v2733, %v2537
        %v2738 = vsel %vm2541, %v2736, 0.0
        %vm2739 = vcmask 519168
        %v2740 = vsel %vm2739, %v2737, 0.0
        %v2741 = vadd.f32 %v2738, %v2740
        %v2742 = vrot.slane %v2741, 4
        %v2743 = vadd.f32 %v2741, %v2742
        %v2744 = vrot.slane %v2743, 2
        %v2745 = vadd.f32 %v2743, %v2744
        %v2746 = vrot.slane %v2745, 1
        %v2747 = vadd.f32 %v2745, %v2746
        %v2748 = vrcp.pop 12.0
        %v2749 = vmul.f32 %v2747, %v2748
        %v2750 = vsub.f32 %v2736, %v2749
        %v2751 = vsub.f32 %v2737, %v2749
        %v2752 = vmul.f32 %v2750, %v2750
        %v2753 = vmul.f32 %v2751, %v2751
        %v2754 = vsel %vm2541, %v2752, 0.0
        %v2755 = vsel %vm2739, %v2753, 0.0
        %v2756 = vadd.f32 %v2754, %v2755
        %v2757 = vrot.slane %v2756, 4
        %v2758 = vadd.f32 %v2756, %v2757
        %v2759 = vrot.slane %v2758, 2
        %v2760 = vadd.f32 %v2758, %v2759
        %v2761 = vrot.slane %v2760, 1
        %v2762 = vadd.f32 %v2760, %v2761
        %v2763 = vmul.f32 %v2762, %v2748
        %v2764 = vadd.f32 %v2763, 1e-05
        %v2765 = vrsqrt.pop %v2764
        %v2766 = vmul.f32 %v2750, %v2765
        %v2767 = vmul.f32 %v2751, %v2765
        %v2768 = vmax.f32 %v2766, 0.0
        %v2769 = vmax.f32 %v2767, 0.0
        %v2770 = vpack.c.bf16 %v2769, %v2768
        %v2772 = vsel %vm2541, %v2770, 0
        %2774 = vmatprep.subr.bf16.mxu0 0
        %2775 = vmatpush1.bf16.msra.mxu0 %v2596
        %2776 = vmatprep.subr.bf16.mxu0 0
        %2777 = vmatpush1.bf16.msra.mxu0 %v2597
        %2778 = vmatprep.subr.bf16.mxu0 0
        %2779 = vmatpush1.bf16.msra.mxu0 %v2598
        %2780 = vmatprep.subr.bf16.mxu0 0
        %2781 = vmatpush1.bf16.msra.mxu0 %v2599
        %2782 = vmatprep.subr.bf16.mxu0 0
        %2783 = vmatpush1.bf16.msra.mxu0 0
        %2784 = vmatprep.subr.bf16.mxu0 0
        %2785 = vmatpush1.bf16.msra.mxu0 0
        %2786 = vmatprep.subr.bf16.mxu0 0
        %2787 = vmatpush1.bf16.msra.mxu0 0
        %2788 = vmatprep.subr.bf16.mxu0 0
        %2789 = vmatpush1.bf16.msra.mxu0 0
        %2790 = vmatprep.subr.bf16.mxu0 0
        %2791 = vmatpush1.bf16.msra.mxu0 0
        %2792 = vmatprep.subr.bf16.mxu0 0
        %2793 = vmatpush1.bf16.msra.mxu0 0
        %2794 = vmatprep.subr.bf16.mxu0 0
        %2795 = vmatpush1.bf16.msra.mxu0 0
        %2796 = vmatprep.subr.bf16.mxu0 0
        %2797 = vmatpush1.bf16.msra.mxu0 0
        %2798 = vmatprep.subr.bf16.mxu0 0
        %2799 = vmatpush1.bf16.msra.mxu0 0
        %2800 = vmatprep.subr.bf16.mxu0 0
        %2801 = vmatpush1.bf16.msra.mxu0 0
        %2802 = vmatprep.subr.bf16.mxu0 0
        %2803 = vmatpush1.bf16.msra.mxu0 0
        %2804 = vmatprep.subr.bf16.mxu0 0
        %2805 = vmatpush1.bf16.msra.mxu0 0
        %2806 = vmatprep.mubr.bf16.mxu0 0
        %2807 = vmatmul.mubr.bf16.gmra.mrb[0].mxu0 %v2772
        %v2808 = vpop.f32.mrb[0].mxu0
        %v2809 = vadd.f32 %v2578, %v2808
        %v2810 = vpop.f32.mrb[0].mxu0
        %v2811 = vpop.f32.mrb[0].mxu0
        %v2812 = vadd.f32 %v2578, %v2811
        %v2813 = vpop.f32.mrb[0].mxu0
        %2814 = vdwg.mxu0
        %v2815 = vadd.f32 %v774, %v2809
        %v2816 = vadd.f32 %v775, %v2812
        %s2817 = scalar_lea.vmem %s6, 16
        %v2818 = vld [vmem:[%s2817] sm:$0xf]
        %v2819 = vld [vmem:[%s2817 + $0x4] sm:$0xf]
        %v2820 = vld [vmem:[%s2817 + $0x8] sm:$0xf]
        %v2821 = vld [vmem:[%s2817 + $0xc] sm:$0xf]
        %s2822 = scalar_lea.vmem %s7, 1
        %v2823 = vld [vmem:[%s2822] sm:$0x1]
        %s2824 = scalar_lea.vmem %s8, 16
        %v2825 = vld [vmem:[%s2824] sm:$0xf]
        %v2826 = vld [vmem:[%s2824 + $0x4] sm:$0xf]
        %v2827 = vld [vmem:[%s2824 + $0x8] sm:$0xf]
        %v2828 = vld [vmem:[%s2824 + $0xc] sm:$0xf]
        %s2829 = scalar_lea.vmem %s9, 1
        %v2830 = vld [vmem:[%s2829] sm:$0x1]
        %s2831 = scalar_lea.vmem %s10, 16
        %v2832 = vld [vmem:[%s2831] sm:$0xf]
        %v2833 = vld [vmem:[%s2831 + $0x4] sm:$0xf]
        %v2834 = vld [vmem:[%s2831 + $0x8] sm:$0xf]
        %v2835 = vld [vmem:[%s2831 + $0xc] sm:$0xf]
        %s2836 = scalar_lea.vmem %s11, 1
        %v2837 = vld [vmem:[%s2836] sm:$0x1]
        %s2838 = scalar_lea.vmem %s12, 16
        %v2839 = vld [vmem:[%s2838] sm:$0xf]
        %v2840 = vld [vmem:[%s2838 + $0x4] sm:$0xf]
        %v2841 = vld [vmem:[%s2838 + $0x8] sm:$0xf]
        %v2842 = vld [vmem:[%s2838 + $0xc] sm:$0xf]
        %s2843 = scalar_lea.vmem %s13, 1
        %v2844 = vld [vmem:[%s2843] sm:$0x1]
        %s2845 = scalar_lea.vmem %s14, 16
        %v2846 = vld [vmem:[%s2845] sm:$0xf]
        %v2847 = vld [vmem:[%s2845 + $0x4] sm:$0xf]
        %v2848 = vld [vmem:[%s2845 + $0x8] sm:$0xf]
        %v2849 = vld [vmem:[%s2845 + $0xc] sm:$0xf]
        %s2850 = scalar_lea.vmem %s15, 16
        %v2851 = vld [vmem:[%s2850] sm:$0xf]
        %v2852 = vld [vmem:[%s2850 + $0x4] sm:$0xf]
        %v2853 = vld [vmem:[%s2850 + $0x8] sm:$0xf]
        %v2854 = vld [vmem:[%s2850 + $0xc] sm:$0xf]
        %s2855 = scalar_lea.vmem [#allocation2], 1
        %v2856 = vld [vmem:[%s2855] sm:$0x1]
        %s2857 = scalar_lea.vmem %s17, 32
        %v2858 = vld [vmem:[%s2857] sm:$0xf]
        %v2859 = vld [vmem:[%s2857 + $0x4] sm:$0xf]
        %v2860 = vld [vmem:[%s2857 + $0x8] sm:$0xf]
        %v2861 = vld [vmem:[%s2857 + $0xc] sm:$0xf]
        %v2862 = vld [vmem:[%s2857 + $0x10] sm:$0xf]
        %v2863 = vld [vmem:[%s2857 + $0x14] sm:$0xf]
        %v2864 = vld [vmem:[%s2857 + $0x18] sm:$0xf]
        %v2865 = vld [vmem:[%s2857 + $0x1c] sm:$0xf]
        %s2866 = scalar_lea.vmem [#allocation5], 1
        %v2867 = vld [vmem:[%s2866] sm:$0x1]
        %v2868 = vpack.c.bf16 %v2649, %v2648
        %v2869 = vpack.c.bf16 %v2816, %v2815
        %v2871 = vlaneseq
        %v2872 = vshrl.u32 %v2871, 7
        %v2873 = vsub.s32 0, %v2872
        %v2874 = vrot.slane %v2823, %v2873
        %v2880 = vunpack.c.l.b16 %v2818
        %v2881 = vunpack.c.l.b16 %v2819
        %v2882 = vunpack.c.l.b16 %v2820
        %v2883 = vunpack.c.l.b16 %v2821
        %v2884 = vpack.c.b16 %v2881, %v2880
        %v2885 = vpack.c.b16 %v2883, %v2882
        %v2889 = vsel %vm858, %v2868, 0
        %v2892 = vsel %vm858, %v2869, 0
        %2894 = vmatprep.subr.bf16.mxu0 0
        %2895 = vmatpush1.bf16.msra.mxu0 %v2884
        %2896 = vmatprep.subr.bf16.mxu0 0
        %2897 = vmatpush1.bf16.msra.mxu0 %v2885
        %2898 = vmatprep.subr.bf16.mxu0 0
        %2899 = vmatpush1.bf16.msra.mxu0 0
        %2900 = vmatprep.subr.bf16.mxu0 0
        %2901 = vmatpush1.bf16.msra.mxu0 0
        %2902 = vmatprep.subr.bf16.mxu0 0
        %2903 = vmatpush1.bf16.msra.mxu0 0
        %2904 = vmatprep.subr.bf16.mxu0 0
        %2905 = vmatpush1.bf16.msra.mxu0 0
        %2906 = vmatprep.subr.bf16.mxu0 0
        %2907 = vmatpush1.bf16.msra.mxu0 0
        %2908 = vmatprep.subr.bf16.mxu0 0
        %2909 = vmatpush1.bf16.msra.mxu0 0
        %2910 = vmatprep.subr.bf16.mxu0 0
        %2911 = vmatpush1.bf16.msra.mxu0 0
        %2912 = vmatprep.subr.bf16.mxu0 0
        %2913 = vmatpush1.bf16.msra.mxu0 0
        %2914 = vmatprep.subr.bf16.mxu0 0
        %2915 = vmatpush1.bf16.msra.mxu0 0
        %2916 = vmatprep.subr.bf16.mxu0 0
        %2917 = vmatpush1.bf16.msra.mxu0 0
        %2918 = vmatprep.subr.bf16.mxu0 0
        %2919 = vmatpush1.bf16.msra.mxu0 0
        %2920 = vmatprep.subr.bf16.mxu0 0
        %2921 = vmatpush1.bf16.msra.mxu0 0
        %2922 = vmatprep.subr.bf16.mxu0 0
        %2923 = vmatpush1.bf16.msra.mxu0 0
        %2924 = vmatprep.subr.bf16.mxu0 0
        %2925 = vmatpush1.bf16.msra.mxu0 0
        %2926 = vmatprep.mubr.bf16.mxu0 0
        %2927 = vmatmul.mubr.bf16.gmra.mrb[0].mxu0 %v2889
        %v2928 = vpop.f32.mrb[0].mxu0
        %v2929 = vadd.f32 %v2874, %v2928
        %v2930 = vpop.f32.mrb[0].mxu0
        %v2931 = vpop.f32.mrb[0].mxu0
        %v2932 = vadd.f32 %v2874, %v2931
        %v2933 = vpop.f32.mrb[0].mxu0
        %2934 = vmatprep.mubr.bf16.mxu0 0
        %2935 = vmatmul.mubr.bf16.gmra.mrb[0].mxu0 %v2892
        %v2936 = vpop.f32.mrb[0].mxu0
        %v2937 = vadd.f32 %v2874, %v2936
        %v2938 = vpop.f32.mrb[0].mxu0
        %v2939 = vpop.f32.mrb[0].mxu0
        %v2940 = vadd.f32 %v2874, %v2939
        %v2941 = vpop.f32.mrb[0].mxu0
        %2942 = vdwg.mxu0
        %v2944 = vlaneseq
        %v2945 = vshrl.u32 %v2944, 7
        %v2946 = vsub.s32 0, %v2945
        %v2947 = vrot.slane %v2830, %v2946
        %v2953 = vunpack.c.l.b16 %v2825
        %v2954 = vunpack.c.l.b16 %v2826
        %v2955 = vunpack.c.l.b16 %v2827
        %v2956 = vunpack.c.l.b16 %v2828
        %v2957 = vpack.c.b16 %v2954, %v2953
        %v2958 = vpack.c.b16 %v2956, %v2955
        %2961 = vmatprep.subr.bf16.mxu0 0
        %2962 = vmatpush1.bf16.msra.mxu0 %v2957
        %2963 = vmatprep.subr.bf16.mxu0 0
        %2964 = vmatpush1.bf16.msra.mxu0 %v2958
        %2965 = vmatprep.subr.bf16.mxu0 0
        %2966 = vmatpush1.bf16.msra.mxu0 0
        %2967 = vmatprep.subr.bf16.mxu0 0
        %2968 = vmatpush1.bf16.msra.mxu0 0
        %2969 = vmatprep.subr.bf16.mxu0 0
        %2970 = vmatpush1.bf16.msra.mxu0 0
        %2971 = vmatprep.subr.bf16.mxu0 0
        %2972 = vmatpush1.bf16.msra.mxu0 0
        %2973 = vmatprep.subr.bf16.mxu0 0
        %2974 = vmatpush1.bf16.msra.mxu0 0
        %2975 = vmatprep.subr.bf16.mxu0 0
        %2976 = vmatpush1.bf16.msra.mxu0 0
        %2977 = vmatprep.subr.bf16.mxu0 0
        %2978 = vmatpush1.bf16.msra.mxu0 0
        %2979 = vmatprep.subr.bf16.mxu0 0
        %2980 = vmatpush1.bf16.msra.mxu0 0
        %2981 = vmatprep.subr.bf16.mxu0 0
        %2982 = vmatpush1.bf16.msra.mxu0 0
        %2983 = vmatprep.subr.bf16.mxu0 0
        %2984 = vmatpush1.bf16.msra.mxu0 0
        %2985 = vmatprep.subr.bf16.mxu0 0
        %2986 = vmatpush1.bf16.msra.mxu0 0
        %2987 = vmatprep.subr.bf16.mxu0 0
        %2988 = vmatpush1.bf16.msra.mxu0 0
        %2989 = vmatprep.subr.bf16.mxu0 0
        %2990 = vmatpush1.bf16.msra.mxu0 0
        %2991 = vmatprep.subr.bf16.mxu0 0
        %2992 = vmatpush1.bf16.msra.mxu0 0
        %2993 = vmatprep.mubr.bf16.mxu0 0
        %2994 = vmatmul.mubr.bf16.gmra.mrb[0].mxu0 %v2889
        %v2995 = vpop.f32.mrb[0].mxu0
        %v2996 = vadd.f32 %v2947, %v2995
        %v2997 = vpop.f32.mrb[0].mxu0
        %v2998 = vpop.f32.mrb[0].mxu0
        %v2999 = vadd.f32 %v2947, %v2998
        %v3000 = vpop.f32.mrb[0].mxu0
        %3001 = vmatprep.mubr.bf16.mxu0 0
        %3002 = vmatmul.mubr.bf16.gmra.mrb[0].mxu0 %v2892
        %v3003 = vpop.f32.mrb[0].mxu0
        %v3004 = vadd.f32 %v2947, %v3003
        %v3005 = vpop.f32.mrb[0].mxu0
        %v3006 = vpop.f32.mrb[0].mxu0
        %v3007 = vadd.f32 %v2947, %v3006
        %v3008 = vpop.f32.mrb[0].mxu0
        %3009 = vdwg.mxu0
        %v3011 = vlaneseq
        %v3012 = vshrl.u32 %v3011, 7
        %v3013 = vsub.s32 0, %v3012
        %v3014 = vrot.slane %v2837, %v3013
        %v3020 = vunpack.c.l.b16 %v2832
        %v3021 = vunpack.c.l.b16 %v2833
        %v3022 = vunpack.c.l.b16 %v2834
        %v3023 = vunpack.c.l.b16 %v2835
        %v3024 = vpack.c.b16 %v3021, %v3020
        %v3025 = vpack.c.b16 %v3023, %v3022
        %3028 = vmatprep.subr.bf16.mxu0 0
        %3029 = vmatpush1.bf16.msra.mxu0 %v3024
        %3030 = vmatprep.subr.bf16.mxu0 0
        %3031 = vmatpush1.bf16.msra.mxu0 %v3025
        %3032 = vmatprep.subr.bf16.mxu0 0
        %3033 = vmatpush1.bf16.msra.mxu0 0
        %3034 = vmatprep.subr.bf16.mxu0 0
        %3035 = vmatpush1.bf16.msra.mxu0 0
        %3036 = vmatprep.subr.bf16.mxu0 0
        %3037 = vmatpush1.bf16.msra.mxu0 0
        %3038 = vmatprep.subr.bf16.mxu0 0
        %3039 = vmatpush1.bf16.msra.mxu0 0
        %3040 = vmatprep.subr.bf16.mxu0 0
        %3041 = vmatpush1.bf16.msra.mxu0 0
        %3042 = vmatprep.subr.bf16.mxu0 0
        %3043 = vmatpush1.bf16.msra.mxu0 0
        %3044 = vmatprep.subr.bf16.mxu0 0
        %3045 = vmatpush1.bf16.msra.mxu0 0
        %3046 = vmatprep.subr.bf16.mxu0 0
        %3047 = vmatpush1.bf16.msra.mxu0 0
        %3048 = vmatprep.subr.bf16.mxu0 0
        %3049 = vmatpush1.bf16.msra.mxu0 0
        %3050 = vmatprep.subr.bf16.mxu0 0
        %3051 = vmatpush1.bf16.msra.mxu0 0
        %3052 = vmatprep.subr.bf16.mxu0 0
        %3053 = vmatpush1.bf16.msra.mxu0 0
        %3054 = vmatprep.subr.bf16.mxu0 0
        %3055 = vmatpush1.bf16.msra.mxu0 0
        %3056 = vmatprep.subr.bf16.mxu0 0
        %3057 = vmatpush1.bf16.msra.mxu0 0
        %3058 = vmatprep.subr.bf16.mxu0 0
        %3059 = vmatpush1.bf16.msra.mxu0 0
        %3060 = vmatprep.mubr.bf16.mxu0 0
        %3061 = vmatmul.mubr.bf16.gmra.mrb[0].mxu0 %v2889
        %v3062 = vpop.f32.mrb[0].mxu0
        %v3063 = vadd.f32 %v3014, %v3062
        %v3064 = vpop.f32.mrb[0].mxu0
        %v3065 = vpop.f32.mrb[0].mxu0
        %v3066 = vadd.f32 %v3014, %v3065
        %v3067 = vpop.f32.mrb[0].mxu0
        %3068 = vmatprep.mubr.bf16.mxu0 0
        %3069 = vmatmul.mubr.bf16.gmra.mrb[0].mxu0 %v2892
        %v3070 = vpop.f32.mrb[0].mxu0
        %v3071 = vadd.f32 %v3014, %v3070
        %v3072 = vpop.f32.mrb[0].mxu0
        %v3073 = vpop.f32.mrb[0].mxu0
        %v3074 = vadd.f32 %v3014, %v3073
        %v3075 = vpop.f32.mrb[0].mxu0
        %3076 = vdwg.mxu0
        %v3077 = vpack.c.bf16 %v2932, %v2929
        %v3078 = vpack.c.bf16 %v3007, %v3004
        %v3080 = vsel %vm1050, %v3077, 0
        %v3083 = vsel %vm1050, %v3078, 0
        %3085 = vmatprep.subr.bf16.mxu0 0
        %3086 = vmatpush1.bf16.xpose.msra.mxu0 %v3083
        %3087 = vmatprep.subr.bf16.mxu0 0
        %3088 = vmatpush1.bf16.xpose.msra.mxu0 0
        %3089 = vmatprep.subr.bf16.mxu0 0
        %3090 = vmatpush1.bf16.xpose.msra.mxu0 0
        %3091 = vmatprep.subr.bf16.mxu0 0
        %3092 = vmatpush1.bf16.xpose.msra.mxu0 0
        %3093 = vmatprep.subr.bf16.mxu0 0
        %3094 = vmatpush1.bf16.xpose.msra.mxu0 0
        %3095 = vmatprep.subr.bf16.mxu0 0
        %3096 = vmatpush1.bf16.xpose.msra.mxu0 0
        %3097 = vmatprep.subr.bf16.mxu0 0
        %3098 = vmatpush1.bf16.xpose.msra.mxu0 0
        %3099 = vmatprep.subr.bf16.mxu0 0
        %3100 = vmatpush1.bf16.xpose.msra.mxu0 0
        %3101 = vmatprep.subr.bf16.mxu0 0
        %3102 = vmatpush1.bf16.xpose.msra.mxu0 0
        %3103 = vmatprep.subr.bf16.mxu0 0
        %3104 = vmatpush1.bf16.xpose.msra.mxu0 0
        %3105 = vmatprep.subr.bf16.mxu0 0
        %3106 = vmatpush1.bf16.xpose.msra.mxu0 0
        %3107 = vmatprep.subr.bf16.mxu0 0
        %3108 = vmatpush1.bf16.xpose.msra.mxu0 0
        %3109 = vmatprep.subr.bf16.mxu0 0
        %3110 = vmatpush1.bf16.xpose.msra.mxu0 0
        %3111 = vmatprep.subr.bf16.mxu0 0
        %3112 = vmatpush1.bf16.xpose.msra.mxu0 0
        %3113 = vmatprep.subr.bf16.mxu0 0
        %3114 = vmatpush1.bf16.xpose.msra.mxu0 0
        %3115 = vmatprep.subr.bf16.mxu0 0
        %3116 = vmatpush1.bf16.xpose.msra.mxu0 0
        %3117 = vmatprep.mubr.bf16.mxu0 0
        %3118 = vmatmul.mubr.bf16.gmra.mrb[0].mxu0 %v3080
        %v3119 = vpop.f32.mrb[0].mxu0
        %v3120 = vadd.f32 %v792, %v3119
        %v3121 = vpop.f32.mrb[0].mxu0
        %v3122 = vpop.f32.mrb[0].mxu0
        %v3123 = vadd.f32 %v793, %v3122
        %v3124 = vpop.f32.mrb[0].mxu0
        %3125 = vdwg.mxu0
        %v3126 = vsel %vm1789, %v3120, -inf
        %3127 = vmax.xlane.f32.xlu0 %v3126
        %v3128 = vpop.xlane.xlu0 %3127
        %v3129 = vsel %vm1789, %v3123, -inf
        %3130 = vmax.xlane.f32.xlu0 %v3129
        %v3131 = vpop.xlane.xlu0 %3130
        %v3132 = vsub.f32 %v3120, %v3128
        %v3133 = vsub.f32 %v3123, %v3131
        %v3134 = vmul.f32 %v3132, 1.442695
        %v3135 = vpow.pop %v3134
        %v3136 = vmul.f32 %v3133, 1.442695
        %v3137 = vpow.pop %v3136
        %v3138 = vsel %vm1789, %v3135, 0.0
        %3139 = vadd.xlane.f32.xlu0 %v3138
        %v3140 = vpop.xlane.xlu0 %3139
        %v3141 = vsel %vm1789, %v3137, 0.0
        %3142 = vadd.xlane.f32.xlu0 %v3141
        %v3143 = vpop.xlane.xlu0 %3142
        %v3144 = vrcp.pop %v3140
        %v3145 = vrcp.pop %v3143
        %v3146 = vmul.f32 %v3135, %v3144
        %v3147 = vmul.f32 %v3137, %v3145
        %v3148 = vpack.c.bf16 %v3147, %v3146
        %v3149 = vpack.c.bf16 %v3074, %v3071
        %v3151 = vsel %vm1789, %v3148, 0
        %v3154 = vsel %vm1818, %v3149, 0
        %3156 = vmatprep.subr.bf16.mxu0 0
        %3157 = vmatpush1.bf16.msra.mxu0 %v3154
        %3158 = vmatprep.subr.bf16.mxu0 0
        %3159 = vmatpush1.bf16.msra.mxu0 0
        %3160 = vmatprep.subr.bf16.mxu0 0
        %3161 = vmatpush1.bf16.msra.mxu0 0
        %3162 = vmatprep.subr.bf16.mxu0 0
        %3163 = vmatpush1.bf16.msra.mxu0 0
        %3164 = vmatprep.subr.bf16.mxu0 0
        %3165 = vmatpush1.bf16.msra.mxu0 0
        %3166 = vmatprep.subr.bf16.mxu0 0
        %3167 = vmatpush1.bf16.msra.mxu0 0
        %3168 = vmatprep.subr.bf16.mxu0 0
        %3169 = vmatpush1.bf16.msra.mxu0 0
        %3170 = vmatprep.subr.bf16.mxu0 0
        %3171 = vmatpush1.bf16.msra.mxu0 0
        %3172 = vmatprep.subr.bf16.mxu0 0
        %3173 = vmatpush1.bf16.msra.mxu0 0
        %3174 = vmatprep.subr.bf16.mxu0 0
        %3175 = vmatpush1.bf16.msra.mxu0 0
        %3176 = vmatprep.subr.bf16.mxu0 0
        %3177 = vmatpush1.bf16.msra.mxu0 0
        %3178 = vmatprep.subr.bf16.mxu0 0
        %3179 = vmatpush1.bf16.msra.mxu0 0
        %3180 = vmatprep.subr.bf16.mxu0 0
        %3181 = vmatpush1.bf16.msra.mxu0 0
        %3182 = vmatprep.subr.bf16.mxu0 0
        %3183 = vmatpush1.bf16.msra.mxu0 0
        %3184 = vmatprep.subr.bf16.mxu0 0
        %3185 = vmatpush1.bf16.msra.mxu0 0
        %3186 = vmatprep.subr.bf16.mxu0 0
        %3187 = vmatpush1.bf16.msra.mxu0 0
        %3188 = vmatprep.mubr.bf16.mxu0 0
        %3189 = vmatmul.mubr.bf16.gmra.mrb[0].mxu0 %v3151
        %v3190 = vpop.f32.mrb[0].mxu0
        %v3191 = vadd.f32 0.0, %v3190
        %v3192 = vpop.f32.mrb[0].mxu0
        %v3193 = vpop.f32.mrb[0].mxu0
        %v3194 = vadd.f32 0.0, %v3193
        %v3195 = vpop.f32.mrb[0].mxu0
        %3196 = vdwg.mxu0
        %v3197 = vpack.c.bf16 %v3194, %v3191
        %v3199 = vsel %vm1050, %v3197, 0
        %v3202 = vsel %vm1171, %v2839, 0
        %3204 = vmatprep.subr.bf16.mxu0 0
        %3205 = vmatpush1.bf16.msra.mxu0 %v3202
        %3206 = vmatprep.subr.bf16.mxu0 0
        %3207 = vmatpush1.bf16.msra.mxu0 0
        %3208 = vmatprep.subr.bf16.mxu0 0
        %3209 = vmatpush1.bf16.msra.mxu0 0
        %3210 = vmatprep.subr.bf16.mxu0 0
        %3211 = vmatpush1.bf16.msra.mxu0 0
        %3212 = vmatprep.subr.bf16.mxu0 0
        %3213 = vmatpush1.bf16.msra.mxu0 0
        %3214 = vmatprep.subr.bf16.mxu0 0
        %3215 = vmatpush1.bf16.msra.mxu0 0
        %3216 = vmatprep.subr.bf16.mxu0 0
        %3217 = vmatpush1.bf16.msra.mxu0 0
        %3218 = vmatprep.subr.bf16.mxu0 0
        %3219 = vmatpush1.bf16.msra.mxu0 0
        %3220 = vmatprep.subr.bf16.mxu0 0
        %3221 = vmatpush1.bf16.msra.mxu0 0
        %3222 = vmatprep.subr.bf16.mxu0 0
        %3223 = vmatpush1.bf16.msra.mxu0 0
        %3224 = vmatprep.subr.bf16.mxu0 0
        %3225 = vmatpush1.bf16.msra.mxu0 0
        %3226 = vmatprep.subr.bf16.mxu0 0
        %3227 = vmatpush1.bf16.msra.mxu0 0
        %3228 = vmatprep.subr.bf16.mxu0 0
        %3229 = vmatpush1.bf16.msra.mxu0 0
        %3230 = vmatprep.subr.bf16.mxu0 0
        %3231 = vmatpush1.bf16.msra.mxu0 0
        %3232 = vmatprep.subr.bf16.mxu0 0
        %3233 = vmatpush1.bf16.msra.mxu0 0
        %3234 = vmatprep.subr.bf16.mxu0 0
        %3235 = vmatpush1.bf16.msra.mxu0 0
        %3236 = vmatprep.mubr.bf16.mxu0 0
        %3237 = vmatmul.mubr.bf16.gmra.mrb[0].mxu0 %v3199
        %v3238 = vpop.f32.mrb[0].mxu0
        %v3239 = vadd.f32 0.0, %v3238
        %v3240 = vpop.f32.mrb[0].mxu0
        %v3241 = vpop.f32.mrb[0].mxu0
        %v3242 = vadd.f32 0.0, %v3241
        %v3243 = vpop.f32.mrb[0].mxu0
        %3244 = vdwg.mxu0
        %v3246 = vlaneseq
        %v3247 = vshrl.u32 %v3246, 7
        %v3248 = vsub.s32 0, %v3247
        %v3249 = vrot.slane %v2844, %v3248
        %v3251 = vadd.f32 %v3249, %v3239
        %v3252 = vadd.f32 %v3249, %v3242
        %3254 = vrot.lane.b32.xlu0 %v3077, 120
        %v3255 = vpop.permute.xlu0 %3254
        %3257 = vrot.lane.b32.xlu0 %v3078, 120
        %v3258 = vpop.permute.xlu0 %3257
        %v3260 = vsel %vm1050, %v3255, 0
        %v3263 = vsel %vm1050, %v3258, 0
        %3265 = vmatprep.subr.bf16.mxu0 0
        %3266 = vmatpush1.bf16.xpose.msra.mxu0 %v3263
        %3267 = vmatprep.subr.bf16.mxu0 0
        %3268 = vmatpush1.bf16.xpose.msra.mxu0 0
        %3269 = vmatprep.subr.bf16.mxu0 0
        %3270 = vmatpush1.bf16.xpose.msra.mxu0 0
        %3271 = vmatprep.subr.bf16.mxu0 0
        %3272 = vmatpush1.bf16.xpose.msra.mxu0 0
        %3273 = vmatprep.subr.bf16.mxu0 0
        %3274 = vmatpush1.bf16.xpose.msra.mxu0 0
        %3275 = vmatprep.subr.bf16.mxu0 0
        %3276 = vmatpush1.bf16.xpose.msra.mxu0 0
        %3277 = vmatprep.subr.bf16.mxu0 0
        %3278 = vmatpush1.bf16.xpose.msra.mxu0 0
        %3279 = vmatprep.subr.bf16.mxu0 0
        %3280 = vmatpush1.bf16.xpose.msra.mxu0 0
        %3281 = vmatprep.subr.bf16.mxu0 0
        %3282 = vmatpush1.bf16.xpose.msra.mxu0 0
        %3283 = vmatprep.subr.bf16.mxu0 0
        %3284 = vmatpush1.bf16.xpose.msra.mxu0 0
        %3285 = vmatprep.subr.bf16.mxu0 0
        %3286 = vmatpush1.bf16.xpose.msra.mxu0 0
        %3287 = vmatprep.subr.bf16.mxu0 0
        %3288 = vmatpush1.bf16.xpose.msra.mxu0 0
        %3289 = vmatprep.subr.bf16.mxu0 0
        %3290 = vmatpush1.bf16.xpose.msra.mxu0 0
        %3291 = vmatprep.subr.bf16.mxu0 0
        %3292 = vmatpush1.bf16.xpose.msra.mxu0 0
        %3293 = vmatprep.subr.bf16.mxu0 0
        %3294 = vmatpush1.bf16.xpose.msra.mxu0 0
        %3295 = vmatprep.subr.bf16.mxu0 0
        %3296 = vmatpush1.bf16.xpose.msra.mxu0 0
        %3297 = vmatprep.mubr.bf16.mxu0 0
        %3298 = vmatmul.mubr.bf16.gmra.mrb[0].mxu0 %v3260
        %v3299 = vpop.f32.mrb[0].mxu0
        %v3300 = vadd.f32 %v792, %v3299
        %v3301 = vpop.f32.mrb[0].mxu0
        %v3302 = vpop.f32.mrb[0].mxu0
        %v3303 = vadd.f32 %v793, %v3302
        %v3304 = vpop.f32.mrb[0].mxu0
        %3305 = vdwg.mxu0
        %v3306 = vsel %vm1789, %v3300, -inf
        %3307 = vmax.xlane.f32.xlu0 %v3306
        %v3308 = vpop.xlane.xlu0 %3307
        %v3309 = vsel %vm1789, %v3303, -inf
        %3310 = vmax.xlane.f32.xlu0 %v3309
        %v3311 = vpop.xlane.xlu0 %3310
        %v3312 = vsub.f32 %v3300, %v3308
        %v3313 = vsub.f32 %v3303, %v3311
        %v3314 = vmul.f32 %v3312, 1.442695
        %v3315 = vpow.pop %v3314
        %v3316 = vmul.f32 %v3313, 1.442695
        %v3317 = vpow.pop %v3316
        %v3318 = vsel %vm1789, %v3315, 0.0
        %3319 = vadd.xlane.f32.xlu0 %v3318
        %v3320 = vpop.xlane.xlu0 %3319
        %v3321 = vsel %vm1789, %v3317, 0.0
        %3322 = vadd.xlane.f32.xlu0 %v3321
        %v3323 = vpop.xlane.xlu0 %3322
        %v3324 = vrcp.pop %v3320
        %v3325 = vrcp.pop %v3323
        %v3326 = vmul.f32 %v3315, %v3324
        %v3327 = vmul.f32 %v3317, %v3325
        %v3328 = vpack.c.bf16 %v3327, %v3326
        %3330 = vrot.lane.b32.xlu0 %v3149, 120
        %v3331 = vpop.permute.xlu0 %3330
        %v3333 = vsel %vm1789, %v3328, 0
        %v3336 = vsel %vm1818, %v3331, 0
        %3338 = vmatprep.subr.bf16.mxu0 0
        %3339 = vmatpush1.bf16.msra.mxu0 %v3336
        %3340 = vmatprep.subr.bf16.mxu0 0
        %3341 = vmatpush1.bf16.msra.mxu0 0
        %3342 = vmatprep.subr.bf16.mxu0 0
        %3343 = vmatpush1.bf16.msra.mxu0 0
        %3344 = vmatprep.subr.bf16.mxu0 0
        %3345 = vmatpush1.bf16.msra.mxu0 0
        %3346 = vmatprep.subr.bf16.mxu0 0
        %3347 = vmatpush1.bf16.msra.mxu0 0
        %3348 = vmatprep.subr.bf16.mxu0 0
        %3349 = vmatpush1.bf16.msra.mxu0 0
        %3350 = vmatprep.subr.bf16.mxu0 0
        %3351 = vmatpush1.bf16.msra.mxu0 0
        %3352 = vmatprep.subr.bf16.mxu0 0
        %3353 = vmatpush1.bf16.msra.mxu0 0
        %3354 = vmatprep.subr.bf16.mxu0 0
        %3355 = vmatpush1.bf16.msra.mxu0 0
        %3356 = vmatprep.subr.bf16.mxu0 0
        %3357 = vmatpush1.bf16.msra.mxu0 0
        %3358 = vmatprep.subr.bf16.mxu0 0
        %3359 = vmatpush1.bf16.msra.mxu0 0
        %3360 = vmatprep.subr.bf16.mxu0 0
        %3361 = vmatpush1.bf16.msra.mxu0 0
        %3362 = vmatprep.subr.bf16.mxu0 0
        %3363 = vmatpush1.bf16.msra.mxu0 0
        %3364 = vmatprep.subr.bf16.mxu0 0
        %3365 = vmatpush1.bf16.msra.mxu0 0
        %3366 = vmatprep.subr.bf16.mxu0 0
        %3367 = vmatpush1.bf16.msra.mxu0 0
        %3368 = vmatprep.subr.bf16.mxu0 0
        %3369 = vmatpush1.bf16.msra.mxu0 0
        %3370 = vmatprep.mubr.bf16.mxu0 0
        %3371 = vmatmul.mubr.bf16.gmra.mrb[0].mxu0 %v3333
        %v3372 = vpop.f32.mrb[0].mxu0
        %v3373 = vadd.f32 0.0, %v3372
        %v3374 = vpop.f32.mrb[0].mxu0
        %v3375 = vpop.f32.mrb[0].mxu0
        %v3376 = vadd.f32 0.0, %v3375
        %v3377 = vpop.f32.mrb[0].mxu0
        %3378 = vdwg.mxu0
        %v3379 = vpack.c.bf16 %v3376, %v3373
        %v3381 = vsel %vm1050, %v3379, 0
        %v3384 = vsel %vm1171, %v2840, 0
        %3386 = vmatprep.subr.bf16.mxu0 0
        %3387 = vmatpush1.bf16.msra.mxu0 %v3384
        %3388 = vmatprep.subr.bf16.mxu0 0
        %3389 = vmatpush1.bf16.msra.mxu0 0
        %3390 = vmatprep.subr.bf16.mxu0 0
        %3391 = vmatpush1.bf16.msra.mxu0 0
        %3392 = vmatprep.subr.bf16.mxu0 0
        %3393 = vmatpush1.bf16.msra.mxu0 0
        %3394 = vmatprep.subr.bf16.mxu0 0
        %3395 = vmatpush1.bf16.msra.mxu0 0
        %3396 = vmatprep.subr.bf16.mxu0 0
        %3397 = vmatpush1.bf16.msra.mxu0 0
        %3398 = vmatprep.subr.bf16.mxu0 0
        %3399 = vmatpush1.bf16.msra.mxu0 0
        %3400 = vmatprep.subr.bf16.mxu0 0
        %3401 = vmatpush1.bf16.msra.mxu0 0
        %3402 = vmatprep.subr.bf16.mxu0 0
        %3403 = vmatpush1.bf16.msra.mxu0 0
        %3404 = vmatprep.subr.bf16.mxu0 0
        %3405 = vmatpush1.bf16.msra.mxu0 0
        %3406 = vmatprep.subr.bf16.mxu0 0
        %3407 = vmatpush1.bf16.msra.mxu0 0
        %3408 = vmatprep.subr.bf16.mxu0 0
        %3409 = vmatpush1.bf16.msra.mxu0 0
        %3410 = vmatprep.subr.bf16.mxu0 0
        %3411 = vmatpush1.bf16.msra.mxu0 0
        %3412 = vmatprep.subr.bf16.mxu0 0
        %3413 = vmatpush1.bf16.msra.mxu0 0
        %3414 = vmatprep.subr.bf16.mxu0 0
        %3415 = vmatpush1.bf16.msra.mxu0 0
        %3416 = vmatprep.subr.bf16.mxu0 0
        %3417 = vmatpush1.bf16.msra.mxu0 0
        %3418 = vmatprep.mubr.bf16.mxu0 0
        %3419 = vmatmul.mubr.bf16.gmra.mrb[0].mxu0 %v3381
        %v3420 = vpop.f32.mrb[0].mxu0
        %v3421 = vadd.f32 0.0, %v3420
        %v3422 = vpop.f32.mrb[0].mxu0
        %v3423 = vpop.f32.mrb[0].mxu0
        %v3424 = vadd.f32 0.0, %v3423
        %v3425 = vpop.f32.mrb[0].mxu0
        %3426 = vdwg.mxu0
        %v3427 = vadd.f32 %v3251, %v3421
        %v3428 = vadd.f32 %v3252, %v3424
        %3429 = vrot.lane.b32.xlu0 %v3077, 112
        %v3430 = vpop.permute.xlu0 %3429
        %3431 = vrot.lane.b32.xlu0 %v3078, 112
        %v3432 = vpop.permute.xlu0 %3431
        %v3434 = vsel %vm1050, %v3430, 0
        %v3437 = vsel %vm1050, %v3432, 0
        %3439 = vmatprep.subr.bf16.mxu0 0
        %3440 = vmatpush1.bf16.xpose.msra.mxu0 %v3437
        %3441 = vmatprep.subr.bf16.mxu0 0
        %3442 = vmatpush1.bf16.xpose.msra.mxu0 0
        %3443 = vmatprep.subr.bf16.mxu0 0
        %3444 = vmatpush1.bf16.xpose.msra.mxu0 0
        %3445 = vmatprep.subr.bf16.mxu0 0
        %3446 = vmatpush1.bf16.xpose.msra.mxu0 0
        %3447 = vmatprep.subr.bf16.mxu0 0
        %3448 = vmatpush1.bf16.xpose.msra.mxu0 0
        %3449 = vmatprep.subr.bf16.mxu0 0
        %3450 = vmatpush1.bf16.xpose.msra.mxu0 0
        %3451 = vmatprep.subr.bf16.mxu0 0
        %3452 = vmatpush1.bf16.xpose.msra.mxu0 0
        %3453 = vmatprep.subr.bf16.mxu0 0
        %3454 = vmatpush1.bf16.xpose.msra.mxu0 0
        %3455 = vmatprep.subr.bf16.mxu0 0
        %3456 = vmatpush1.bf16.xpose.msra.mxu0 0
        %3457 = vmatprep.subr.bf16.mxu0 0
        %3458 = vmatpush1.bf16.xpose.msra.mxu0 0
        %3459 = vmatprep.subr.bf16.mxu0 0
        %3460 = vmatpush1.bf16.xpose.msra.mxu0 0
        %3461 = vmatprep.subr.bf16.mxu0 0
        %3462 = vmatpush1.bf16.xpose.msra.mxu0 0
        %3463 = vmatprep.subr.bf16.mxu0 0
        %3464 = vmatpush1.bf16.xpose.msra.mxu0 0
        %3465 = vmatprep.subr.bf16.mxu0 0
        %3466 = vmatpush1.bf16.xpose.msra.mxu0 0
        %3467 = vmatprep.subr.bf16.mxu0 0
        %3468 = vmatpush1.bf16.xpose.msra.mxu0 0
        %3469 = vmatprep.subr.bf16.mxu0 0
        %3470 = vmatpush1.bf16.xpose.msra.mxu0 0
        %3471 = vmatprep.mubr.bf16.mxu0 0
        %3472 = vmatmul.mubr.bf16.gmra.mrb[0].mxu0 %v3434
        %v3473 = vpop.f32.mrb[0].mxu0
        %v3474 = vadd.f32 %v792, %v3473
        %v3475 = vpop.f32.mrb[0].mxu0
        %v3476 = vpop.f32.mrb[0].mxu0
        %v3477 = vadd.f32 %v793, %v3476
        %v3478 = vpop.f32.mrb[0].mxu0
        %3479 = vdwg.mxu0
        %v3480 = vsel %vm1789, %v3474, -inf
        %3481 = vmax.xlane.f32.xlu0 %v3480
        %v3482 = vpop.xlane.xlu0 %3481
        %v3483 = vsel %vm1789, %v3477, -inf
        %3484 = vmax.xlane.f32.xlu0 %v3483
        %v3485 = vpop.xlane.xlu0 %3484
        %v3486 = vsub.f32 %v3474, %v3482
        %v3487 = vsub.f32 %v3477, %v3485
        %v3488 = vmul.f32 %v3486, 1.442695
        %v3489 = vpow.pop %v3488
        %v3490 = vmul.f32 %v3487, 1.442695
        %v3491 = vpow.pop %v3490
        %v3492 = vsel %vm1789, %v3489, 0.0
        %3493 = vadd.xlane.f32.xlu0 %v3492
        %v3494 = vpop.xlane.xlu0 %3493
        %v3495 = vsel %vm1789, %v3491, 0.0
        %3496 = vadd.xlane.f32.xlu0 %v3495
        %v3497 = vpop.xlane.xlu0 %3496
        %v3498 = vrcp.pop %v3494
        %v3499 = vrcp.pop %v3497
        %v3500 = vmul.f32 %v3489, %v3498
        %v3501 = vmul.f32 %v3491, %v3499
        %v3502 = vpack.c.bf16 %v3501, %v3500
        %3503 = vrot.lane.b32.xlu0 %v3149, 112
        %v3504 = vpop.permute.xlu0 %3503
        %v3506 = vsel %vm1789, %v3502, 0
        %v3509 = vsel %vm1818, %v3504, 0
        %3511 = vmatprep.subr.bf16.mxu0 0
        %3512 = vmatpush1.bf16.msra.mxu0 %v3509
        %3513 = vmatprep.subr.bf16.mxu0 0
        %3514 = vmatpush1.bf16.msra.mxu0 0
        %3515 = vmatprep.subr.bf16.mxu0 0
        %3516 = vmatpush1.bf16.msra.mxu0 0
        %3517 = vmatprep.subr.bf16.mxu0 0
        %3518 = vmatpush1.bf16.msra.mxu0 0
        %3519 = vmatprep.subr.bf16.mxu0 0
        %3520 = vmatpush1.bf16.msra.mxu0 0
        %3521 = vmatprep.subr.bf16.mxu0 0
        %3522 = vmatpush1.bf16.msra.mxu0 0
        %3523 = vmatprep.subr.bf16.mxu0 0
        %3524 = vmatpush1.bf16.msra.mxu0 0
        %3525 = vmatprep.subr.bf16.mxu0 0
        %3526 = vmatpush1.bf16.msra.mxu0 0
        %3527 = vmatprep.subr.bf16.mxu0 0
        %3528 = vmatpush1.bf16.msra.mxu0 0
        %3529 = vmatprep.subr.bf16.mxu0 0
        %3530 = vmatpush1.bf16.msra.mxu0 0
        %3531 = vmatprep.subr.bf16.mxu0 0
        %3532 = vmatpush1.bf16.msra.mxu0 0
        %3533 = vmatprep.subr.bf16.mxu0 0
        %3534 = vmatpush1.bf16.msra.mxu0 0
        %3535 = vmatprep.subr.bf16.mxu0 0
        %3536 = vmatpush1.bf16.msra.mxu0 0
        %3537 = vmatprep.subr.bf16.mxu0 0
        %3538 = vmatpush1.bf16.msra.mxu0 0
        %3539 = vmatprep.subr.bf16.mxu0 0
        %3540 = vmatpush1.bf16.msra.mxu0 0
        %3541 = vmatprep.subr.bf16.mxu0 0
        %3542 = vmatpush1.bf16.msra.mxu0 0
        %3543 = vmatprep.mubr.bf16.mxu0 0
        %3544 = vmatmul.mubr.bf16.gmra.mrb[0].mxu0 %v3506
        %v3545 = vpop.f32.mrb[0].mxu0
        %v3546 = vadd.f32 0.0, %v3545
        %v3547 = vpop.f32.mrb[0].mxu0
        %v3548 = vpop.f32.mrb[0].mxu0
        %v3549 = vadd.f32 0.0, %v3548
        %v3550 = vpop.f32.mrb[0].mxu0
        %3551 = vdwg.mxu0
        %v3552 = vpack.c.bf16 %v3549, %v3546
        %v3554 = vsel %vm1050, %v3552, 0
        %v3557 = vsel %vm1171, %v2841, 0
        %3559 = vmatprep.subr.bf16.mxu0 0
        %3560 = vmatpush1.bf16.msra.mxu0 %v3557
        %3561 = vmatprep.subr.bf16.mxu0 0
        %3562 = vmatpush1.bf16.msra.mxu0 0
        %3563 = vmatprep.subr.bf16.mxu0 0
        %3564 = vmatpush1.bf16.msra.mxu0 0
        %3565 = vmatprep.subr.bf16.mxu0 0
        %3566 = vmatpush1.bf16.msra.mxu0 0
        %3567 = vmatprep.subr.bf16.mxu0 0
        %3568 = vmatpush1.bf16.msra.mxu0 0
        %3569 = vmatprep.subr.bf16.mxu0 0
        %3570 = vmatpush1.bf16.msra.mxu0 0
        %3571 = vmatprep.subr.bf16.mxu0 0
        %3572 = vmatpush1.bf16.msra.mxu0 0
        %3573 = vmatprep.subr.bf16.mxu0 0
        %3574 = vmatpush1.bf16.msra.mxu0 0
        %3575 = vmatprep.subr.bf16.mxu0 0
        %3576 = vmatpush1.bf16.msra.mxu0 0
        %3577 = vmatprep.subr.bf16.mxu0 0
        %3578 = vmatpush1.bf16.msra.mxu0 0
        %3579 = vmatprep.subr.bf16.mxu0 0
        %3580 = vmatpush1.bf16.msra.mxu0 0
        %3581 = vmatprep.subr.bf16.mxu0 0
        %3582 = vmatpush1.bf16.msra.mxu0 0
        %3583 = vmatprep.subr.bf16.mxu0 0
        %3584 = vmatpush1.bf16.msra.mxu0 0
        %3585 = vmatprep.subr.bf16.mxu0 0
        %3586 = vmatpush1.bf16.msra.mxu0 0
        %3587 = vmatprep.subr.bf16.mxu0 0
        %3588 = vmatpush1.bf16.msra.mxu0 0
        %3589 = vmatprep.subr.bf16.mxu0 0
        %3590 = vmatpush1.bf16.msra.mxu0 0
        %3591 = vmatprep.mubr.bf16.mxu0 0
        %3592 = vmatmul.mubr.bf16.gmra.mrb[0].mxu0 %v3554
        %v3593 = vpop.f32.mrb[0].mxu0
        %v3594 = vadd.f32 0.0, %v3593
        %v3595 = vpop.f32.mrb[0].mxu0
        %v3596 = vpop.f32.mrb[0].mxu0
        %v3597 = vadd.f32 0.0, %v3596
        %v3598 = vpop.f32.mrb[0].mxu0
        %3599 = vdwg.mxu0
        %v3600 = vadd.f32 %v3427, %v3594
        %v3601 = vadd.f32 %v3428, %v3597
        %3602 = vrot.lane.b32.xlu0 %v3077, 104
        %v3603 = vpop.permute.xlu0 %3602
        %3604 = vrot.lane.b32.xlu0 %v3078, 104
        %v3605 = vpop.permute.xlu0 %3604
        %v3607 = vsel %vm1050, %v3603, 0
        %v3610 = vsel %vm1050, %v3605, 0
        %3612 = vmatprep.subr.bf16.mxu0 0
        %3613 = vmatpush1.bf16.xpose.msra.mxu0 %v3610
        %3614 = vmatprep.subr.bf16.mxu0 0
        %3615 = vmatpush1.bf16.xpose.msra.mxu0 0
        %3616 = vmatprep.subr.bf16.mxu0 0
        %3617 = vmatpush1.bf16.xpose.msra.mxu0 0
        %3618 = vmatprep.subr.bf16.mxu0 0
        %3619 = vmatpush1.bf16.xpose.msra.mxu0 0
        %3620 = vmatprep.subr.bf16.mxu0 0
        %3621 = vmatpush1.bf16.xpose.msra.mxu0 0
        %3622 = vmatprep.subr.bf16.mxu0 0
        %3623 = vmatpush1.bf16.xpose.msra.mxu0 0
        %3624 = vmatprep.subr.bf16.mxu0 0
        %3625 = vmatpush1.bf16.xpose.msra.mxu0 0
        %3626 = vmatprep.subr.bf16.mxu0 0
        %3627 = vmatpush1.bf16.xpose.msra.mxu0 0
        %3628 = vmatprep.subr.bf16.mxu0 0
        %3629 = vmatpush1.bf16.xpose.msra.mxu0 0
        %3630 = vmatprep.subr.bf16.mxu0 0
        %3631 = vmatpush1.bf16.xpose.msra.mxu0 0
        %3632 = vmatprep.subr.bf16.mxu0 0
        %3633 = vmatpush1.bf16.xpose.msra.mxu0 0
        %3634 = vmatprep.subr.bf16.mxu0 0
        %3635 = vmatpush1.bf16.xpose.msra.mxu0 0
        %3636 = vmatprep.subr.bf16.mxu0 0
        %3637 = vmatpush1.bf16.xpose.msra.mxu0 0
        %3638 = vmatprep.subr.bf16.mxu0 0
        %3639 = vmatpush1.bf16.xpose.msra.mxu0 0
        %3640 = vmatprep.subr.bf16.mxu0 0
        %3641 = vmatpush1.bf16.xpose.msra.mxu0 0
        %3642 = vmatprep.subr.bf16.mxu0 0
        %3643 = vmatpush1.bf16.xpose.msra.mxu0 0
        %3644 = vmatprep.mubr.bf16.mxu0 0
        %3645 = vmatmul.mubr.bf16.gmra.mrb[0].mxu0 %v3607
        %v3646 = vpop.f32.mrb[0].mxu0
        %v3647 = vadd.f32 %v792, %v3646
        %v3648 = vpop.f32.mrb[0].mxu0
        %v3649 = vpop.f32.mrb[0].mxu0
        %v3650 = vadd.f32 %v793, %v3649
        %v3651 = vpop.f32.mrb[0].mxu0
        %3652 = vdwg.mxu0
        %v3653 = vsel %vm1789, %v3647, -inf
        %3654 = vmax.xlane.f32.xlu0 %v3653
        %v3655 = vpop.xlane.xlu0 %3654
        %v3656 = vsel %vm1789, %v3650, -inf
        %3657 = vmax.xlane.f32.xlu0 %v3656
        %v3658 = vpop.xlane.xlu0 %3657
        %v3659 = vsub.f32 %v3647, %v3655
        %v3660 = vsub.f32 %v3650, %v3658
        %v3661 = vmul.f32 %v3659, 1.442695
        %v3662 = vpow.pop %v3661
        %v3663 = vmul.f32 %v3660, 1.442695
        %v3664 = vpow.pop %v3663
        %v3665 = vsel %vm1789, %v3662, 0.0
        %3666 = vadd.xlane.f32.xlu0 %v3665
        %v3667 = vpop.xlane.xlu0 %3666
        %v3668 = vsel %vm1789, %v3664, 0.0
        %3669 = vadd.xlane.f32.xlu0 %v3668
        %v3670 = vpop.xlane.xlu0 %3669
        %v3671 = vrcp.pop %v3667
        %v3672 = vrcp.pop %v3670
        %v3673 = vmul.f32 %v3662, %v3671
        %v3674 = vmul.f32 %v3664, %v3672
        %v3675 = vpack.c.bf16 %v3674, %v3673
        %3676 = vrot.lane.b32.xlu0 %v3149, 104
        %v3677 = vpop.permute.xlu0 %3676
        %v3679 = vsel %vm1789, %v3675, 0
        %v3682 = vsel %vm1818, %v3677, 0
        %3684 = vmatprep.subr.bf16.mxu0 0
        %3685 = vmatpush1.bf16.msra.mxu0 %v3682
        %3686 = vmatprep.subr.bf16.mxu0 0
        %3687 = vmatpush1.bf16.msra.mxu0 0
        %3688 = vmatprep.subr.bf16.mxu0 0
        %3689 = vmatpush1.bf16.msra.mxu0 0
        %3690 = vmatprep.subr.bf16.mxu0 0
        %3691 = vmatpush1.bf16.msra.mxu0 0
        %3692 = vmatprep.subr.bf16.mxu0 0
        %3693 = vmatpush1.bf16.msra.mxu0 0
        %3694 = vmatprep.subr.bf16.mxu0 0
        %3695 = vmatpush1.bf16.msra.mxu0 0
        %3696 = vmatprep.subr.bf16.mxu0 0
        %3697 = vmatpush1.bf16.msra.mxu0 0
        %3698 = vmatprep.subr.bf16.mxu0 0
        %3699 = vmatpush1.bf16.msra.mxu0 0
        %3700 = vmatprep.subr.bf16.mxu0 0
        %3701 = vmatpush1.bf16.msra.mxu0 0
        %3702 = vmatprep.subr.bf16.mxu0 0
        %3703 = vmatpush1.bf16.msra.mxu0 0
        %3704 = vmatprep.subr.bf16.mxu0 0
        %3705 = vmatpush1.bf16.msra.mxu0 0
        %3706 = vmatprep.subr.bf16.mxu0 0
        %3707 = vmatpush1.bf16.msra.mxu0 0
        %3708 = vmatprep.subr.bf16.mxu0 0
        %3709 = vmatpush1.bf16.msra.mxu0 0
        %3710 = vmatprep.subr.bf16.mxu0 0
        %3711 = vmatpush1.bf16.msra.mxu0 0
        %3712 = vmatprep.subr.bf16.mxu0 0
        %3713 = vmatpush1.bf16.msra.mxu0 0
        %3714 = vmatprep.subr.bf16.mxu0 0
        %3715 = vmatpush1.bf16.msra.mxu0 0
        %3716 = vmatprep.mubr.bf16.mxu0 0
        %3717 = vmatmul.mubr.bf16.gmra.mrb[0].mxu0 %v3679
        %v3718 = vpop.f32.mrb[0].mxu0
        %v3719 = vadd.f32 0.0, %v3718
        %v3720 = vpop.f32.mrb[0].mxu0
        %v3721 = vpop.f32.mrb[0].mxu0
        %v3722 = vadd.f32 0.0, %v3721
        %v3723 = vpop.f32.mrb[0].mxu0
        %3724 = vdwg.mxu0
        %v3725 = vpack.c.bf16 %v3722, %v3719
        %v3727 = vsel %vm1050, %v3725, 0
        %v3730 = vsel %vm1171, %v2842, 0
        %3732 = vmatprep.subr.bf16.mxu0 0
        %3733 = vmatpush1.bf16.msra.mxu0 %v3730
        %3734 = vmatprep.subr.bf16.mxu0 0
        %3735 = vmatpush1.bf16.msra.mxu0 0
        %3736 = vmatprep.subr.bf16.mxu0 0
        %3737 = vmatpush1.bf16.msra.mxu0 0
        %3738 = vmatprep.subr.bf16.mxu0 0
        %3739 = vmatpush1.bf16.msra.mxu0 0
        %3740 = vmatprep.subr.bf16.mxu0 0
        %3741 = vmatpush1.bf16.msra.mxu0 0
        %3742 = vmatprep.subr.bf16.mxu0 0
        %3743 = vmatpush1.bf16.msra.mxu0 0
        %3744 = vmatprep.subr.bf16.mxu0 0
        %3745 = vmatpush1.bf16.msra.mxu0 0
        %3746 = vmatprep.subr.bf16.mxu0 0
        %3747 = vmatpush1.bf16.msra.mxu0 0
        %3748 = vmatprep.subr.bf16.mxu0 0
        %3749 = vmatpush1.bf16.msra.mxu0 0
        %3750 = vmatprep.subr.bf16.mxu0 0
        %3751 = vmatpush1.bf16.msra.mxu0 0
        %3752 = vmatprep.subr.bf16.mxu0 0
        %3753 = vmatpush1.bf16.msra.mxu0 0
        %3754 = vmatprep.subr.bf16.mxu0 0
        %3755 = vmatpush1.bf16.msra.mxu0 0
        %3756 = vmatprep.subr.bf16.mxu0 0
        %3757 = vmatpush1.bf16.msra.mxu0 0
        %3758 = vmatprep.subr.bf16.mxu0 0
        %3759 = vmatpush1.bf16.msra.mxu0 0
        %3760 = vmatprep.subr.bf16.mxu0 0
        %3761 = vmatpush1.bf16.msra.mxu0 0
        %3762 = vmatprep.subr.bf16.mxu0 0
        %3763 = vmatpush1.bf16.msra.mxu0 0
        %3764 = vmatprep.mubr.bf16.mxu0 0
        %3765 = vmatmul.mubr.bf16.gmra.mrb[0].mxu0 %v3727
        %v3766 = vpop.f32.mrb[0].mxu0
        %v3767 = vadd.f32 0.0, %v3766
        %v3768 = vpop.f32.mrb[0].mxu0
        %v3769 = vpop.f32.mrb[0].mxu0
        %v3770 = vadd.f32 0.0, %v3769
        %v3771 = vpop.f32.mrb[0].mxu0
        %3772 = vdwg.mxu0
        %v3773 = vadd.f32 %v3600, %v3767
        %v3774 = vadd.f32 %v3601, %v3770
        %v3775 = vpack.c.bf16 %v2940, %v2937
        %v3776 = vpack.c.bf16 %v2999, %v2996
        %v3778 = vsel %vm1050, %v3775, 0
        %v3781 = vsel %vm1050, %v3776, 0
        %3783 = vmatprep.subr.bf16.mxu0 0
        %3784 = vmatpush1.bf16.xpose.msra.mxu0 %v3781
        %3785 = vmatprep.subr.bf16.mxu0 0
        %3786 = vmatpush1.bf16.xpose.msra.mxu0 0
        %3787 = vmatprep.subr.bf16.mxu0 0
        %3788 = vmatpush1.bf16.xpose.msra.mxu0 0
        %3789 = vmatprep.subr.bf16.mxu0 0
        %3790 = vmatpush1.bf16.xpose.msra.mxu0 0
        %3791 = vmatprep.subr.bf16.mxu0 0
        %3792 = vmatpush1.bf16.xpose.msra.mxu0 0
        %3793 = vmatprep.subr.bf16.mxu0 0
        %3794 = vmatpush1.bf16.xpose.msra.mxu0 0
        %3795 = vmatprep.subr.bf16.mxu0 0
        %3796 = vmatpush1.bf16.xpose.msra.mxu0 0
        %3797 = vmatprep.subr.bf16.mxu0 0
        %3798 = vmatpush1.bf16.xpose.msra.mxu0 0
        %3799 = vmatprep.subr.bf16.mxu0 0
        %3800 = vmatpush1.bf16.xpose.msra.mxu0 0
        %3801 = vmatprep.subr.bf16.mxu0 0
        %3802 = vmatpush1.bf16.xpose.msra.mxu0 0
        %3803 = vmatprep.subr.bf16.mxu0 0
        %3804 = vmatpush1.bf16.xpose.msra.mxu0 0
        %3805 = vmatprep.subr.bf16.mxu0 0
        %3806 = vmatpush1.bf16.xpose.msra.mxu0 0
        %3807 = vmatprep.subr.bf16.mxu0 0
        %3808 = vmatpush1.bf16.xpose.msra.mxu0 0
        %3809 = vmatprep.subr.bf16.mxu0 0
        %3810 = vmatpush1.bf16.xpose.msra.mxu0 0
        %3811 = vmatprep.subr.bf16.mxu0 0
        %3812 = vmatpush1.bf16.xpose.msra.mxu0 0
        %3813 = vmatprep.subr.bf16.mxu0 0
        %3814 = vmatpush1.bf16.xpose.msra.mxu0 0
        %3815 = vmatprep.mubr.bf16.mxu0 0
        %3816 = vmatmul.mubr.bf16.gmra.mrb[0].mxu0 %v3778
        %v3817 = vpop.f32.mrb[0].mxu0
        %v3818 = vadd.f32 %v798, %v3817
        %v3819 = vpop.f32.mrb[0].mxu0
        %v3820 = vpop.f32.mrb[0].mxu0
        %v3821 = vadd.f32 %v799, %v3820
        %v3822 = vpop.f32.mrb[0].mxu0
        %3823 = vdwg.mxu0
        %v3824 = vsel %vm1098, %v3818, -inf
        %3825 = vmax.xlane.f32.xlu0 %v3824
        %v3826 = vpop.xlane.xlu0 %3825
        %vm3827 = vcmask 125952
        %v3828 = vsel %vm3827, %v3821, -inf
        %3829 = vmax.xlane.f32.xlu0 %v3828
        %v3830 = vpop.xlane.xlu0 %3829
        %v3831 = vsub.f32 %v3818, %v3826
        %v3832 = vsub.f32 %v3821, %v3830
        %v3833 = vmul.f32 %v3831, 1.442695
        %v3834 = vpow.pop %v3833
        %v3835 = vmul.f32 %v3832, 1.442695
        %v3836 = vpow.pop %v3835
        %v3837 = vsel %vm1098, %v3834, 0.0
        %3838 = vadd.xlane.f32.xlu0 %v3837
        %v3839 = vpop.xlane.xlu0 %3838
        %v3840 = vsel %vm3827, %v3836, 0.0
        %3841 = vadd.xlane.f32.xlu0 %v3840
        %v3842 = vpop.xlane.xlu0 %3841
        %v3843 = vrcp.pop %v3839
        %v3844 = vrcp.pop %v3842
        %v3845 = vmul.f32 %v3834, %v3843
        %v3846 = vmul.f32 %v3836, %v3844
        %v3847 = vpack.c.bf16 %v3846, %v3845
        %v3848 = vpack.c.bf16 %v3066, %v3063
        %v3850 = vsel %vm1098, %v3847, 0
        %3852 = vmatprep.subr.bf16.mxu0 0
        %3853 = vmatpush1.bf16.msra.mxu0 %v3848
        %3854 = vmatprep.subr.bf16.mxu0 0
        %3855 = vmatpush1.bf16.msra.mxu0 0
        %3856 = vmatprep.subr.bf16.mxu0 0
        %3857 = vmatpush1.bf16.msra.mxu0 0
        %3858 = vmatprep.subr.bf16.mxu0 0
        %3859 = vmatpush1.bf16.msra.mxu0 0
        %3860 = vmatprep.subr.bf16.mxu0 0
        %3861 = vmatpush1.bf16.msra.mxu0 0
        %3862 = vmatprep.subr.bf16.mxu0 0
        %3863 = vmatpush1.bf16.msra.mxu0 0
        %3864 = vmatprep.subr.bf16.mxu0 0
        %3865 = vmatpush1.bf16.msra.mxu0 0
        %3866 = vmatprep.subr.bf16.mxu0 0
        %3867 = vmatpush1.bf16.msra.mxu0 0
        %3868 = vmatprep.subr.bf16.mxu0 0
        %3869 = vmatpush1.bf16.msra.mxu0 0
        %3870 = vmatprep.subr.bf16.mxu0 0
        %3871 = vmatpush1.bf16.msra.mxu0 0
        %3872 = vmatprep.subr.bf16.mxu0 0
        %3873 = vmatpush1.bf16.msra.mxu0 0
        %3874 = vmatprep.subr.bf16.mxu0 0
        %3875 = vmatpush1.bf16.msra.mxu0 0
        %3876 = vmatprep.subr.bf16.mxu0 0
        %3877 = vmatpush1.bf16.msra.mxu0 0
        %3878 = vmatprep.subr.bf16.mxu0 0
        %3879 = vmatpush1.bf16.msra.mxu0 0
        %3880 = vmatprep.subr.bf16.mxu0 0
        %3881 = vmatpush1.bf16.msra.mxu0 0
        %3882 = vmatprep.subr.bf16.mxu0 0
        %3883 = vmatpush1.bf16.msra.mxu0 0
        %3884 = vmatprep.mubr.bf16.mxu0 0
        %3885 = vmatmul.mubr.bf16.gmra.mrb[0].mxu0 %v3850
        %v3886 = vpop.f32.mrb[0].mxu0
        %v3887 = vadd.f32 0.0, %v3886
        %v3888 = vpop.f32.mrb[0].mxu0
        %v3889 = vpop.f32.mrb[0].mxu0
        %v3890 = vadd.f32 0.0, %v3889
        %v3891 = vpop.f32.mrb[0].mxu0
        %3892 = vdwg.mxu0
        %v3893 = vpack.c.bf16 %v3890, %v3887
        %v3895 = vsel %vm1050, %v3893, 0
        %3897 = vmatprep.subr.bf16.mxu0 0
        %3898 = vmatpush1.bf16.msra.mxu0 %v3202
        %3899 = vmatprep.subr.bf16.mxu0 0
        %3900 = vmatpush1.bf16.msra.mxu0 0
        %3901 = vmatprep.subr.bf16.mxu0 0
        %3902 = vmatpush1.bf16.msra.mxu0 0
        %3903 = vmatprep.subr.bf16.mxu0 0
        %3904 = vmatpush1.bf16.msra.mxu0 0
        %3905 = vmatprep.subr.bf16.mxu0 0
        %3906 = vmatpush1.bf16.msra.mxu0 0
        %3907 = vmatprep.subr.bf16.mxu0 0
        %3908 = vmatpush1.bf16.msra.mxu0 0
        %3909 = vmatprep.subr.bf16.mxu0 0
        %3910 = vmatpush1.bf16.msra.mxu0 0
        %3911 = vmatprep.subr.bf16.mxu0 0
        %3912 = vmatpush1.bf16.msra.mxu0 0
        %3913 = vmatprep.subr.bf16.mxu0 0
        %3914 = vmatpush1.bf16.msra.mxu0 0
        %3915 = vmatprep.subr.bf16.mxu0 0
        %3916 = vmatpush1.bf16.msra.mxu0 0
        %3917 = vmatprep.subr.bf16.mxu0 0
        %3918 = vmatpush1.bf16.msra.mxu0 0
        %3919 = vmatprep.subr.bf16.mxu0 0
        %3920 = vmatpush1.bf16.msra.mxu0 0
        %3921 = vmatprep.subr.bf16.mxu0 0
        %3922 = vmatpush1.bf16.msra.mxu0 0
        %3923 = vmatprep.subr.bf16.mxu0 0
        %3924 = vmatpush1.bf16.msra.mxu0 0
        %3925 = vmatprep.subr.bf16.mxu0 0
        %3926 = vmatpush1.bf16.msra.mxu0 0
        %3927 = vmatprep.subr.bf16.mxu0 0
        %3928 = vmatpush1.bf16.msra.mxu0 0
        %3929 = vmatprep.mubr.bf16.mxu0 0
        %3930 = vmatmul.mubr.bf16.gmra.mrb[0].mxu0 %v3895
        %v3931 = vpop.f32.mrb[0].mxu0
        %v3932 = vadd.f32 0.0, %v3931
        %v3933 = vpop.f32.mrb[0].mxu0
        %v3934 = vpop.f32.mrb[0].mxu0
        %v3935 = vadd.f32 0.0, %v3934
        %v3936 = vpop.f32.mrb[0].mxu0
        %3937 = vdwg.mxu0
        %v3938 = vadd.f32 %v3249, %v3932
        %v3939 = vadd.f32 %v3249, %v3935
        %3941 = vrot.lane.b32.xlu0 %v3775, 120
        %v3942 = vpop.permute.xlu0 %3941
        %3944 = vrot.lane.b32.xlu0 %v3776, 120
        %v3945 = vpop.permute.xlu0 %3944
        %v3947 = vsel %vm1050, %v3942, 0
        %v3950 = vsel %vm1050, %v3945, 0
        %3952 = vmatprep.subr.bf16.mxu0 0
        %3953 = vmatpush1.bf16.xpose.msra.mxu0 %v3950
        %3954 = vmatprep.subr.bf16.mxu0 0
        %3955 = vmatpush1.bf16.xpose.msra.mxu0 0
        %3956 = vmatprep.subr.bf16.mxu0 0
        %3957 = vmatpush1.bf16.xpose.msra.mxu0 0
        %3958 = vmatprep.subr.bf16.mxu0 0
        %3959 = vmatpush1.bf16.xpose.msra.mxu0 0
        %3960 = vmatprep.subr.bf16.mxu0 0
        %3961 = vmatpush1.bf16.xpose.msra.mxu0 0
        %3962 = vmatprep.subr.bf16.mxu0 0
        %3963 = vmatpush1.bf16.xpose.msra.mxu0 0
        %3964 = vmatprep.subr.bf16.mxu0 0
        %3965 = vmatpush1.bf16.xpose.msra.mxu0 0
        %3966 = vmatprep.subr.bf16.mxu0 0
        %3967 = vmatpush1.bf16.xpose.msra.mxu0 0
        %3968 = vmatprep.subr.bf16.mxu0 0
        %3969 = vmatpush1.bf16.xpose.msra.mxu0 0
        %3970 = vmatprep.subr.bf16.mxu0 0
        %3971 = vmatpush1.bf16.xpose.msra.mxu0 0
        %3972 = vmatprep.subr.bf16.mxu0 0
        %3973 = vmatpush1.bf16.xpose.msra.mxu0 0
        %3974 = vmatprep.subr.bf16.mxu0 0
        %3975 = vmatpush1.bf16.xpose.msra.mxu0 0
        %3976 = vmatprep.subr.bf16.mxu0 0
        %3977 = vmatpush1.bf16.xpose.msra.mxu0 0
        %3978 = vmatprep.subr.bf16.mxu0 0
        %3979 = vmatpush1.bf16.xpose.msra.mxu0 0
        %3980 = vmatprep.subr.bf16.mxu0 0
        %3981 = vmatpush1.bf16.xpose.msra.mxu0 0
        %3982 = vmatprep.subr.bf16.mxu0 0
        %3983 = vmatpush1.bf16.xpose.msra.mxu0 0
        %3984 = vmatprep.mubr.bf16.mxu0 0
        %3985 = vmatmul.mubr.bf16.gmra.mrb[0].mxu0 %v3947
        %v3986 = vpop.f32.mrb[0].mxu0
        %v3987 = vadd.f32 %v798, %v3986
        %v3988 = vpop.f32.mrb[0].mxu0
        %v3989 = vpop.f32.mrb[0].mxu0
        %v3990 = vadd.f32 %v799, %v3989
        %v3991 = vpop.f32.mrb[0].mxu0
        %3992 = vdwg.mxu0
        %v3993 = vsel %vm1098, %v3987, -inf
        %3994 = vmax.xlane.f32.xlu0 %v3993
        %v3995 = vpop.xlane.xlu0 %3994
        %v3996 = vsel %vm3827, %v3990, -inf
        %3997 = vmax.xlane.f32.xlu0 %v3996
        %v3998 = vpop.xlane.xlu0 %3997
        %v3999 = vsub.f32 %v3987, %v3995
        %v4000 = vsub.f32 %v3990, %v3998
        %v4001 = vmul.f32 %v3999, 1.442695
        %v4002 = vpow.pop %v4001
        %v4003 = vmul.f32 %v4000, 1.442695
        %v4004 = vpow.pop %v4003
        %v4005 = vsel %vm1098, %v4002, 0.0
        %4006 = vadd.xlane.f32.xlu0 %v4005
        %v4007 = vpop.xlane.xlu0 %4006
        %v4008 = vsel %vm3827, %v4004, 0.0
        %4009 = vadd.xlane.f32.xlu0 %v4008
        %v4010 = vpop.xlane.xlu0 %4009
        %v4011 = vrcp.pop %v4007
        %v4012 = vrcp.pop %v4010
        %v4013 = vmul.f32 %v4002, %v4011
        %v4014 = vmul.f32 %v4004, %v4012
        %v4015 = vpack.c.bf16 %v4014, %v4013
        %4017 = vrot.lane.b32.xlu0 %v3848, 120
        %v4018 = vpop.permute.xlu0 %4017
        %v4021 = vsel %vm1098, %v4015, 0
        %4023 = vmatprep.subr.bf16.mxu0 0
        %4024 = vmatpush1.bf16.msra.mxu0 %v4018
        %4025 = vmatprep.subr.bf16.mxu0 0
        %4026 = vmatpush1.bf16.msra.mxu0 0
        %4027 = vmatprep.subr.bf16.mxu0 0
        %4028 = vmatpush1.bf16.msra.mxu0 0
        %4029 = vmatprep.subr.bf16.mxu0 0
        %4030 = vmatpush1.bf16.msra.mxu0 0
        %4031 = vmatprep.subr.bf16.mxu0 0
        %4032 = vmatpush1.bf16.msra.mxu0 0
        %4033 = vmatprep.subr.bf16.mxu0 0
        %4034 = vmatpush1.bf16.msra.mxu0 0
        %4035 = vmatprep.subr.bf16.mxu0 0
        %4036 = vmatpush1.bf16.msra.mxu0 0
        %4037 = vmatprep.subr.bf16.mxu0 0
        %4038 = vmatpush1.bf16.msra.mxu0 0
        %4039 = vmatprep.subr.bf16.mxu0 0
        %4040 = vmatpush1.bf16.msra.mxu0 0
        %4041 = vmatprep.subr.bf16.mxu0 0
        %4042 = vmatpush1.bf16.msra.mxu0 0
        %4043 = vmatprep.subr.bf16.mxu0 0
        %4044 = vmatpush1.bf16.msra.mxu0 0
        %4045 = vmatprep.subr.bf16.mxu0 0
        %4046 = vmatpush1.bf16.msra.mxu0 0
        %4047 = vmatprep.subr.bf16.mxu0 0
        %4048 = vmatpush1.bf16.msra.mxu0 0
        %4049 = vmatprep.subr.bf16.mxu0 0
        %4050 = vmatpush1.bf16.msra.mxu0 0
        %4051 = vmatprep.subr.bf16.mxu0 0
        %4052 = vmatpush1.bf16.msra.mxu0 0
        %4053 = vmatprep.subr.bf16.mxu0 0
        %4054 = vmatpush1.bf16.msra.mxu0 0
        %4055 = vmatprep.mubr.bf16.mxu0 0
        %4056 = vmatmul.mubr.bf16.gmra.mrb[0].mxu0 %v4021
        %v4057 = vpop.f32.mrb[0].mxu0
        %v4058 = vadd.f32 0.0, %v4057
        %v4059 = vpop.f32.mrb[0].mxu0
        %v4060 = vpop.f32.mrb[0].mxu0
        %v4061 = vadd.f32 0.0, %v4060
        %v4062 = vpop.f32.mrb[0].mxu0
        %4063 = vdwg.mxu0
        %v4064 = vpack.c.bf16 %v4061, %v4058
        %v4066 = vsel %vm1050, %v4064, 0
        %4068 = vmatprep.subr.bf16.mxu0 0
        %4069 = vmatpush1.bf16.msra.mxu0 %v3384
        %4070 = vmatprep.subr.bf16.mxu0 0
        %4071 = vmatpush1.bf16.msra.mxu0 0
        %4072 = vmatprep.subr.bf16.mxu0 0
        %4073 = vmatpush1.bf16.msra.mxu0 0
        %4074 = vmatprep.subr.bf16.mxu0 0
        %4075 = vmatpush1.bf16.msra.mxu0 0
        %4076 = vmatprep.subr.bf16.mxu0 0
        %4077 = vmatpush1.bf16.msra.mxu0 0
        %4078 = vmatprep.subr.bf16.mxu0 0
        %4079 = vmatpush1.bf16.msra.mxu0 0
        %4080 = vmatprep.subr.bf16.mxu0 0
        %4081 = vmatpush1.bf16.msra.mxu0 0
        %4082 = vmatprep.subr.bf16.mxu0 0
        %4083 = vmatpush1.bf16.msra.mxu0 0
        %4084 = vmatprep.subr.bf16.mxu0 0
        %4085 = vmatpush1.bf16.msra.mxu0 0
        %4086 = vmatprep.subr.bf16.mxu0 0
        %4087 = vmatpush1.bf16.msra.mxu0 0
        %4088 = vmatprep.subr.bf16.mxu0 0
        %4089 = vmatpush1.bf16.msra.mxu0 0
        %4090 = vmatprep.subr.bf16.mxu0 0
        %4091 = vmatpush1.bf16.msra.mxu0 0
        %4092 = vmatprep.subr.bf16.mxu0 0
        %4093 = vmatpush1.bf16.msra.mxu0 0
        %4094 = vmatprep.subr.bf16.mxu0 0
        %4095 = vmatpush1.bf16.msra.mxu0 0
        %4096 = vmatprep.subr.bf16.mxu0 0
        %4097 = vmatpush1.bf16.msra.mxu0 0
        %4098 = vmatprep.subr.bf16.mxu0 0
        %4099 = vmatpush1.bf16.msra.mxu0 0
        %4100 = vmatprep.mubr.bf16.mxu0 0
        %4101 = vmatmul.mubr.bf16.gmra.mrb[0].mxu0 %v4066
        %v4102 = vpop.f32.mrb[0].mxu0
        %v4103 = vadd.f32 0.0, %v4102
        %v4104 = vpop.f32.mrb[0].mxu0
        %v4105 = vpop.f32.mrb[0].mxu0
        %v4106 = vadd.f32 0.0, %v4105
        %v4107 = vpop.f32.mrb[0].mxu0
        %4108 = vdwg.mxu0
        %v4109 = vadd.f32 %v3938, %v4103
        %v4110 = vadd.f32 %v3939, %v4106
        %4111 = vrot.lane.b32.xlu0 %v3775, 112
        %v4112 = vpop.permute.xlu0 %4111
        %4113 = vrot.lane.b32.xlu0 %v3776, 112
        %v4114 = vpop.permute.xlu0 %4113
        %v4116 = vsel %vm1050, %v4112, 0
        %v4119 = vsel %vm1050, %v4114, 0
        %4121 = vmatprep.subr.bf16.mxu0 0
        %4122 = vmatpush1.bf16.xpose.msra.mxu0 %v4119
        %4123 = vmatprep.subr.bf16.mxu0 0
        %4124 = vmatpush1.bf16.xpose.msra.mxu0 0
        %4125 = vmatprep.subr.bf16.mxu0 0
        %4126 = vmatpush1.bf16.xpose.msra.mxu0 0
        %4127 = vmatprep.subr.bf16.mxu0 0
        %4128 = vmatpush1.bf16.xpose.msra.mxu0 0
        %4129 = vmatprep.subr.bf16.mxu0 0
        %4130 = vmatpush1.bf16.xpose.msra.mxu0 0
        %4131 = vmatprep.subr.bf16.mxu0 0
        %4132 = vmatpush1.bf16.xpose.msra.mxu0 0
        %4133 = vmatprep.subr.bf16.mxu0 0
        %4134 = vmatpush1.bf16.xpose.msra.mxu0 0
        %4135 = vmatprep.subr.bf16.mxu0 0
        %4136 = vmatpush1.bf16.xpose.msra.mxu0 0
        %4137 = vmatprep.subr.bf16.mxu0 0
        %4138 = vmatpush1.bf16.xpose.msra.mxu0 0
        %4139 = vmatprep.subr.bf16.mxu0 0
        %4140 = vmatpush1.bf16.xpose.msra.mxu0 0
        %4141 = vmatprep.subr.bf16.mxu0 0
        %4142 = vmatpush1.bf16.xpose.msra.mxu0 0
        %4143 = vmatprep.subr.bf16.mxu0 0
        %4144 = vmatpush1.bf16.xpose.msra.mxu0 0
        %4145 = vmatprep.subr.bf16.mxu0 0
        %4146 = vmatpush1.bf16.xpose.msra.mxu0 0
        %4147 = vmatprep.subr.bf16.mxu0 0
        %4148 = vmatpush1.bf16.xpose.msra.mxu0 0
        %4149 = vmatprep.subr.bf16.mxu0 0
        %4150 = vmatpush1.bf16.xpose.msra.mxu0 0
        %4151 = vmatprep.subr.bf16.mxu0 0
        %4152 = vmatpush1.bf16.xpose.msra.mxu0 0
        %4153 = vmatprep.mubr.bf16.mxu0 0
        %4154 = vmatmul.mubr.bf16.gmra.mrb[0].mxu0 %v4116
        %v4155 = vpop.f32.mrb[0].mxu0
        %v4156 = vadd.f32 %v798, %v4155
        %v4157 = vpop.f32.mrb[0].mxu0
        %v4158 = vpop.f32.mrb[0].mxu0
        %v4159 = vadd.f32 %v799, %v4158
        %v4160 = vpop.f32.mrb[0].mxu0
        %4161 = vdwg.mxu0
        %v4162 = vsel %vm1098, %v4156, -inf
        %4163 = vmax.xlane.f32.xlu0 %v4162
        %v4164 = vpop.xlane.xlu0 %4163
        %v4165 = vsel %vm3827, %v4159, -inf
        %4166 = vmax.xlane.f32.xlu0 %v4165
        %v4167 = vpop.xlane.xlu0 %4166
        %v4168 = vsub.f32 %v4156, %v4164
        %v4169 = vsub.f32 %v4159, %v4167
        %v4170 = vmul.f32 %v4168, 1.442695
        %v4171 = vpow.pop %v4170
        %v4172 = vmul.f32 %v4169, 1.442695
        %v4173 = vpow.pop %v4172
        %v4174 = vsel %vm1098, %v4171, 0.0
        %4175 = vadd.xlane.f32.xlu0 %v4174
        %v4176 = vpop.xlane.xlu0 %4175
        %v4177 = vsel %vm3827, %v4173, 0.0
        %4178 = vadd.xlane.f32.xlu0 %v4177
        %v4179 = vpop.xlane.xlu0 %4178
        %v4180 = vrcp.pop %v4176
        %v4181 = vrcp.pop %v4179
        %v4182 = vmul.f32 %v4171, %v4180
        %v4183 = vmul.f32 %v4173, %v4181
        %v4184 = vpack.c.bf16 %v4183, %v4182
        %4185 = vrot.lane.b32.xlu0 %v3848, 112
        %v4186 = vpop.permute.xlu0 %4185
        %v4189 = vsel %vm1098, %v4184, 0
        %4191 = vmatprep.subr.bf16.mxu0 0
        %4192 = vmatpush1.bf16.msra.mxu0 %v4186
        %4193 = vmatprep.subr.bf16.mxu0 0
        %4194 = vmatpush1.bf16.msra.mxu0 0
        %4195 = vmatprep.subr.bf16.mxu0 0
        %4196 = vmatpush1.bf16.msra.mxu0 0
        %4197 = vmatprep.subr.bf16.mxu0 0
        %4198 = vmatpush1.bf16.msra.mxu0 0
        %4199 = vmatprep.subr.bf16.mxu0 0
        %4200 = vmatpush1.bf16.msra.mxu0 0
        %4201 = vmatprep.subr.bf16.mxu0 0
        %4202 = vmatpush1.bf16.msra.mxu0 0
        %4203 = vmatprep.subr.bf16.mxu0 0
        %4204 = vmatpush1.bf16.msra.mxu0 0
        %4205 = vmatprep.subr.bf16.mxu0 0
        %4206 = vmatpush1.bf16.msra.mxu0 0
        %4207 = vmatprep.subr.bf16.mxu0 0
        %4208 = vmatpush1.bf16.msra.mxu0 0
        %4209 = vmatprep.subr.bf16.mxu0 0
        %4210 = vmatpush1.bf16.msra.mxu0 0
        %4211 = vmatprep.subr.bf16.mxu0 0
        %4212 = vmatpush1.bf16.msra.mxu0 0
        %4213 = vmatprep.subr.bf16.mxu0 0
        %4214 = vmatpush1.bf16.msra.mxu0 0
        %4215 = vmatprep.subr.bf16.mxu0 0
        %4216 = vmatpush1.bf16.msra.mxu0 0
        %4217 = vmatprep.subr.bf16.mxu0 0
        %4218 = vmatpush1.bf16.msra.mxu0 0
        %4219 = vmatprep.subr.bf16.mxu0 0
        %4220 = vmatpush1.bf16.msra.mxu0 0
        %4221 = vmatprep.subr.bf16.mxu0 0
        %4222 = vmatpush1.bf16.msra.mxu0 0
        %4223 = vmatprep.mubr.bf16.mxu0 0
        %4224 = vmatmul.mubr.bf16.gmra.mrb[0].mxu0 %v4189
        %v4225 = vpop.f32.mrb[0].mxu0
        %v4226 = vadd.f32 0.0, %v4225
        %v4227 = vpop.f32.mrb[0].mxu0
        %v4228 = vpop.f32.mrb[0].mxu0
        %v4229 = vadd.f32 0.0, %v4228
        %v4230 = vpop.f32.mrb[0].mxu0
        %4231 = vdwg.mxu0
        %v4232 = vpack.c.bf16 %v4229, %v4226
        %v4234 = vsel %vm1050, %v4232, 0
        %4236 = vmatprep.subr.bf16.mxu0 0
        %4237 = vmatpush1.bf16.msra.mxu0 %v3557
        %4238 = vmatprep.subr.bf16.mxu0 0
        %4239 = vmatpush1.bf16.msra.mxu0 0
        %4240 = vmatprep.subr.bf16.mxu0 0
        %4241 = vmatpush1.bf16.msra.mxu0 0
        %4242 = vmatprep.subr.bf16.mxu0 0
        %4243 = vmatpush1.bf16.msra.mxu0 0
        %4244 = vmatprep.subr.bf16.mxu0 0
        %4245 = vmatpush1.bf16.msra.mxu0 0
        %4246 = vmatprep.subr.bf16.mxu0 0
        %4247 = vmatpush1.bf16.msra.mxu0 0
        %4248 = vmatprep.subr.bf16.mxu0 0
        %4249 = vmatpush1.bf16.msra.mxu0 0
        %4250 = vmatprep.subr.bf16.mxu0 0
        %4251 = vmatpush1.bf16.msra.mxu0 0
        %4252 = vmatprep.subr.bf16.mxu0 0
        %4253 = vmatpush1.bf16.msra.mxu0 0
        %4254 = vmatprep.subr.bf16.mxu0 0
        %4255 = vmatpush1.bf16.msra.mxu0 0
        %4256 = vmatprep.subr.bf16.mxu0 0
        %4257 = vmatpush1.bf16.msra.mxu0 0
        %4258 = vmatprep.subr.bf16.mxu0 0
        %4259 = vmatpush1.bf16.msra.mxu0 0
        %4260 = vmatprep.subr.bf16.mxu0 0
        %4261 = vmatpush1.bf16.msra.mxu0 0
        %4262 = vmatprep.subr.bf16.mxu0 0
        %4263 = vmatpush1.bf16.msra.mxu0 0
        %4264 = vmatprep.subr.bf16.mxu0 0
        %4265 = vmatpush1.bf16.msra.mxu0 0
        %4266 = vmatprep.subr.bf16.mxu0 0
        %4267 = vmatpush1.bf16.msra.mxu0 0
        %4268 = vmatprep.mubr.bf16.mxu0 0
        %4269 = vmatmul.mubr.bf16.gmra.mrb[0].mxu0 %v4234
        %v4270 = vpop.f32.mrb[0].mxu0
        %v4271 = vadd.f32 0.0, %v4270
        %v4272 = vpop.f32.mrb[0].mxu0
        %v4273 = vpop.f32.mrb[0].mxu0
        %v4274 = vadd.f32 0.0, %v4273
        %v4275 = vpop.f32.mrb[0].mxu0
        %4276 = vdwg.mxu0
        %v4277 = vadd.f32 %v4109, %v4271
        %v4278 = vadd.f32 %v4110, %v4274
        %4279 = vrot.lane.b32.xlu0 %v3775, 104
        %v4280 = vpop.permute.xlu0 %4279
        %4281 = vrot.lane.b32.xlu0 %v3776, 104
        %v4282 = vpop.permute.xlu0 %4281
        %v4284 = vsel %vm1050, %v4280, 0
        %v4287 = vsel %vm1050, %v4282, 0
        %4289 = vmatprep.subr.bf16.mxu0 0
        %4290 = vmatpush1.bf16.xpose.msra.mxu0 %v4287
        %4291 = vmatprep.subr.bf16.mxu0 0
        %4292 = vmatpush1.bf16.xpose.msra.mxu0 0
        %4293 = vmatprep.subr.bf16.mxu0 0
        %4294 = vmatpush1.bf16.xpose.msra.mxu0 0
        %4295 = vmatprep.subr.bf16.mxu0 0
        %4296 = vmatpush1.bf16.xpose.msra.mxu0 0
        %4297 = vmatprep.subr.bf16.mxu0 0
        %4298 = vmatpush1.bf16.xpose.msra.mxu0 0
        %4299 = vmatprep.subr.bf16.mxu0 0
        %4300 = vmatpush1.bf16.xpose.msra.mxu0 0
        %4301 = vmatprep.subr.bf16.mxu0 0
        %4302 = vmatpush1.bf16.xpose.msra.mxu0 0
        %4303 = vmatprep.subr.bf16.mxu0 0
        %4304 = vmatpush1.bf16.xpose.msra.mxu0 0
        %4305 = vmatprep.subr.bf16.mxu0 0
        %4306 = vmatpush1.bf16.xpose.msra.mxu0 0
        %4307 = vmatprep.subr.bf16.mxu0 0
        %4308 = vmatpush1.bf16.xpose.msra.mxu0 0
        %4309 = vmatprep.subr.bf16.mxu0 0
        %4310 = vmatpush1.bf16.xpose.msra.mxu0 0
        %4311 = vmatprep.subr.bf16.mxu0 0
        %4312 = vmatpush1.bf16.xpose.msra.mxu0 0
        %4313 = vmatprep.subr.bf16.mxu0 0
        %4314 = vmatpush1.bf16.xpose.msra.mxu0 0
        %4315 = vmatprep.subr.bf16.mxu0 0
        %4316 = vmatpush1.bf16.xpose.msra.mxu0 0
        %4317 = vmatprep.subr.bf16.mxu0 0
        %4318 = vmatpush1.bf16.xpose.msra.mxu0 0
        %4319 = vmatprep.subr.bf16.mxu0 0
        %4320 = vmatpush1.bf16.xpose.msra.mxu0 0
        %4321 = vmatprep.mubr.bf16.mxu0 0
        %4322 = vmatmul.mubr.bf16.gmra.mrb[0].mxu0 %v4284
        %v4323 = vpop.f32.mrb[0].mxu0
        %v4324 = vadd.f32 %v798, %v4323
        %v4325 = vpop.f32.mrb[0].mxu0
        %v4326 = vpop.f32.mrb[0].mxu0
        %v4327 = vadd.f32 %v799, %v4326
        %v4328 = vpop.f32.mrb[0].mxu0
        %4329 = vdwg.mxu0
        %v4330 = vsel %vm1098, %v4324, -inf
        %4331 = vmax.xlane.f32.xlu0 %v4330
        %v4332 = vpop.xlane.xlu0 %4331
        %v4333 = vsel %vm3827, %v4327, -inf
        %4334 = vmax.xlane.f32.xlu0 %v4333
        %v4335 = vpop.xlane.xlu0 %4334
        %v4336 = vsub.f32 %v4324, %v4332
        %v4337 = vsub.f32 %v4327, %v4335
        %v4338 = vmul.f32 %v4336, 1.442695
        %v4339 = vpow.pop %v4338
        %v4340 = vmul.f32 %v4337, 1.442695
        %v4341 = vpow.pop %v4340
        %v4342 = vsel %vm1098, %v4339, 0.0
        %4343 = vadd.xlane.f32.xlu0 %v4342
        %v4344 = vpop.xlane.xlu0 %4343
        %v4345 = vsel %vm3827, %v4341, 0.0
        %4346 = vadd.xlane.f32.xlu0 %v4345
        %v4347 = vpop.xlane.xlu0 %4346
        %v4348 = vrcp.pop %v4344
        %v4349 = vrcp.pop %v4347
        %v4350 = vmul.f32 %v4339, %v4348
        %v4351 = vmul.f32 %v4341, %v4349
        %v4352 = vpack.c.bf16 %v4351, %v4350
        %4353 = vrot.lane.b32.xlu0 %v3848, 104
        %v4354 = vpop.permute.xlu0 %4353
        %v4357 = vsel %vm1098, %v4352, 0
        %4359 = vmatprep.subr.bf16.mxu0 0
        %4360 = vmatpush1.bf16.msra.mxu0 %v4354
        %4361 = vmatprep.subr.bf16.mxu0 0
        %4362 = vmatpush1.bf16.msra.mxu0 0
        %4363 = vmatprep.subr.bf16.mxu0 0
        %4364 = vmatpush1.bf16.msra.mxu0 0
        %4365 = vmatprep.subr.bf16.mxu0 0
        %4366 = vmatpush1.bf16.msra.mxu0 0
        %4367 = vmatprep.subr.bf16.mxu0 0
        %4368 = vmatpush1.bf16.msra.mxu0 0
        %4369 = vmatprep.subr.bf16.mxu0 0
        %4370 = vmatpush1.bf16.msra.mxu0 0
        %4371 = vmatprep.subr.bf16.mxu0 0
        %4372 = vmatpush1.bf16.msra.mxu0 0
        %4373 = vmatprep.subr.bf16.mxu0 0
        %4374 = vmatpush1.bf16.msra.mxu0 0
        %4375 = vmatprep.subr.bf16.mxu0 0
        %4376 = vmatpush1.bf16.msra.mxu0 0
        %4377 = vmatprep.subr.bf16.mxu0 0
        %4378 = vmatpush1.bf16.msra.mxu0 0
        %4379 = vmatprep.subr.bf16.mxu0 0
        %4380 = vmatpush1.bf16.msra.mxu0 0
        %4381 = vmatprep.subr.bf16.mxu0 0
        %4382 = vmatpush1.bf16.msra.mxu0 0
        %4383 = vmatprep.subr.bf16.mxu0 0
        %4384 = vmatpush1.bf16.msra.mxu0 0
        %4385 = vmatprep.subr.bf16.mxu0 0
        %4386 = vmatpush1.bf16.msra.mxu0 0
        %4387 = vmatprep.subr.bf16.mxu0 0
        %4388 = vmatpush1.bf16.msra.mxu0 0
        %4389 = vmatprep.subr.bf16.mxu0 0
        %4390 = vmatpush1.bf16.msra.mxu0 0
        %4391 = vmatprep.mubr.bf16.mxu0 0
        %4392 = vmatmul.mubr.bf16.gmra.mrb[0].mxu0 %v4357
        %v4393 = vpop.f32.mrb[0].mxu0
        %v4394 = vadd.f32 0.0, %v4393
        %v4395 = vpop.f32.mrb[0].mxu0
        %v4396 = vpop.f32.mrb[0].mxu0
        %v4397 = vadd.f32 0.0, %v4396
        %v4398 = vpop.f32.mrb[0].mxu0
        %4399 = vdwg.mxu0
        %v4400 = vpack.c.bf16 %v4397, %v4394
        %v4402 = vsel %vm1050, %v4400, 0
        %4404 = vmatprep.subr.bf16.mxu0 0
        %4405 = vmatpush1.bf16.msra.mxu0 %v3730
        %4406 = vmatprep.subr.bf16.mxu0 0
        %4407 = vmatpush1.bf16.msra.mxu0 0
        %4408 = vmatprep.subr.bf16.mxu0 0
        %4409 = vmatpush1.bf16.msra.mxu0 0
        %4410 = vmatprep.subr.bf16.mxu0 0
        %4411 = vmatpush1.bf16.msra.mxu0 0
        %4412 = vmatprep.subr.bf16.mxu0 0
        %4413 = vmatpush1.bf16.msra.mxu0 0
        %4414 = vmatprep.subr.bf16.mxu0 0
        %4415 = vmatpush1.bf16.msra.mxu0 0
        %4416 = vmatprep.subr.bf16.mxu0 0
        %4417 = vmatpush1.bf16.msra.mxu0 0
        %4418 = vmatprep.subr.bf16.mxu0 0
        %4419 = vmatpush1.bf16.msra.mxu0 0
        %4420 = vmatprep.subr.bf16.mxu0 0
        %4421 = vmatpush1.bf16.msra.mxu0 0
        %4422 = vmatprep.subr.bf16.mxu0 0
        %4423 = vmatpush1.bf16.msra.mxu0 0
        %4424 = vmatprep.subr.bf16.mxu0 0
        %4425 = vmatpush1.bf16.msra.mxu0 0
        %4426 = vmatprep.subr.bf16.mxu0 0
        %4427 = vmatpush1.bf16.msra.mxu0 0
        %4428 = vmatprep.subr.bf16.mxu0 0
        %4429 = vmatpush1.bf16.msra.mxu0 0
        %4430 = vmatprep.subr.bf16.mxu0 0
        %4431 = vmatpush1.bf16.msra.mxu0 0
        %4432 = vmatprep.subr.bf16.mxu0 0
        %4433 = vmatpush1.bf16.msra.mxu0 0
        %4434 = vmatprep.subr.bf16.mxu0 0
        %4435 = vmatpush1.bf16.msra.mxu0 0
        %4436 = vmatprep.mubr.bf16.mxu0 0
        %4437 = vmatmul.mubr.bf16.gmra.mrb[0].mxu0 %v4402
        %v4438 = vpop.f32.mrb[0].mxu0
        %v4439 = vadd.f32 0.0, %v4438
        %v4440 = vpop.f32.mrb[0].mxu0
        %v4441 = vpop.f32.mrb[0].mxu0
        %v4442 = vadd.f32 0.0, %v4441
        %v4443 = vpop.f32.mrb[0].mxu0
        %4444 = vdwg.mxu0
        %v4445 = vadd.f32 %v4277, %v4439
        %v4446 = vadd.f32 %v4278, %v4442
        %v4447 = vpack.c.bf16 %v3774, %v3773
        %v4452 = vunpack.c.l.b16 %v2851
        %v4453 = vunpack.c.l.b16 %v2852
        %v4454 = vunpack.c.l.b16 %v2853
        %v4455 = vunpack.c.l.b16 %v2854
        %v4456 = vpack.c.b16 %v4453, %v4452
        %v4457 = vpack.c.b16 %v4455, %v4454
        %v4461 = vsel %vm858, %v4447, 0
        %4463 = vmatprep.subr.bf16.mxu0 0
        %4464 = vmatpush1.bf16.msra.mxu0 %v4456
        %4465 = vmatprep.subr.bf16.mxu0 0
        %4466 = vmatpush1.bf16.msra.mxu0 %v4457
        %4467 = vmatprep.subr.bf16.mxu0 0
        %4468 = vmatpush1.bf16.msra.mxu0 0
        %4469 = vmatprep.subr.bf16.mxu0 0
        %4470 = vmatpush1.bf16.msra.mxu0 0
        %4471 = vmatprep.subr.bf16.mxu0 0
        %4472 = vmatpush1.bf16.msra.mxu0 0
        %4473 = vmatprep.subr.bf16.mxu0 0
        %4474 = vmatpush1.bf16.msra.mxu0 0
        %4475 = vmatprep.subr.bf16.mxu0 0
        %4476 = vmatpush1.bf16.msra.mxu0 0
        %4477 = vmatprep.subr.bf16.mxu0 0
        %4478 = vmatpush1.bf16.msra.mxu0 0
        %4479 = vmatprep.subr.bf16.mxu0 0
        %4480 = vmatpush1.bf16.msra.mxu0 0
        %4481 = vmatprep.subr.bf16.mxu0 0
        %4482 = vmatpush1.bf16.msra.mxu0 0
        %4483 = vmatprep.subr.bf16.mxu0 0
        %4484 = vmatpush1.bf16.msra.mxu0 0
        %4485 = vmatprep.subr.bf16.mxu0 0
        %4486 = vmatpush1.bf16.msra.mxu0 0
        %4487 = vmatprep.subr.bf16.mxu0 0
        %4488 = vmatpush1.bf16.msra.mxu0 0
        %4489 = vmatprep.subr.bf16.mxu0 0
        %4490 = vmatpush1.bf16.msra.mxu0 0
        %4491 = vmatprep.subr.bf16.mxu0 0
        %4492 = vmatpush1.bf16.msra.mxu0 0
        %4493 = vmatprep.subr.bf16.mxu0 0
        %4494 = vmatpush1.bf16.msra.mxu0 0
        %4495 = vmatprep.mubr.bf16.mxu0 0
        %4496 = vmatmul.mubr.bf16.gmra.mrb[0].mxu0 %v4461
        %v4497 = vpop.f32.mrb[0].mxu0
        %v4498 = vadd.f32 0.0, %v4497
        %v4499 = vpop.f32.mrb[0].mxu0
        %v4500 = vpop.f32.mrb[0].mxu0
        %v4501 = vadd.f32 0.0, %v4500
        %v4502 = vpop.f32.mrb[0].mxu0
        %4503 = vdwg.mxu0
        %v4508 = vunpack.c.l.b16 %v2846
        %v4509 = vunpack.c.l.b16 %v2847
        %v4510 = vunpack.c.l.b16 %v2848
        %v4511 = vunpack.c.l.b16 %v2849
        %v4512 = vpack.c.b16 %v4509, %v4508
        %v4513 = vpack.c.b16 %v4511, %v4510
        %4516 = vmatprep.subr.bf16.mxu0 0
        %4517 = vmatpush1.bf16.msra.mxu0 %v4512
        %4518 = vmatprep.subr.bf16.mxu0 0
        %4519 = vmatpush1.bf16.msra.mxu0 %v4513
        %4520 = vmatprep.subr.bf16.mxu0 0
        %4521 = vmatpush1.bf16.msra.mxu0 0
        %4522 = vmatprep.subr.bf16.mxu0 0
        %4523 = vmatpush1.bf16.msra.mxu0 0
        %4524 = vmatprep.subr.bf16.mxu0 0
        %4525 = vmatpush1.bf16.msra.mxu0 0
        %4526 = vmatprep.subr.bf16.mxu0 0
        %4527 = vmatpush1.bf16.msra.mxu0 0
        %4528 = vmatprep.subr.bf16.mxu0 0
        %4529 = vmatpush1.bf16.msra.mxu0 0
        %4530 = vmatprep.subr.bf16.mxu0 0
        %4531 = vmatpush1.bf16.msra.mxu0 0
        %4532 = vmatprep.subr.bf16.mxu0 0
        %4533 = vmatpush1.bf16.msra.mxu0 0
        %4534 = vmatprep.subr.bf16.mxu0 0
        %4535 = vmatpush1.bf16.msra.mxu0 0
        %4536 = vmatprep.subr.bf16.mxu0 0
        %4537 = vmatpush1.bf16.msra.mxu0 0
        %4538 = vmatprep.subr.bf16.mxu0 0
        %4539 = vmatpush1.bf16.msra.mxu0 0
        %4540 = vmatprep.subr.bf16.mxu0 0
        %4541 = vmatpush1.bf16.msra.mxu0 0
        %4542 = vmatprep.subr.bf16.mxu0 0
        %4543 = vmatpush1.bf16.msra.mxu0 0
        %4544 = vmatprep.subr.bf16.mxu0 0
        %4545 = vmatpush1.bf16.msra.mxu0 0
        %4546 = vmatprep.subr.bf16.mxu0 0
        %4547 = vmatpush1.bf16.msra.mxu0 0
        %4548 = vmatprep.mubr.bf16.mxu0 0
        %4549 = vmatmul.mubr.bf16.gmra.mrb[0].mxu0 %v2889
        %v4550 = vpop.f32.mrb[0].mxu0
        %v4551 = vadd.f32 %v4498, %v4550
        %v4552 = vpop.f32.mrb[0].mxu0
        %v4553 = vpop.f32.mrb[0].mxu0
        %v4554 = vadd.f32 %v4501, %v4553
        %v4555 = vpop.f32.mrb[0].mxu0
        %4556 = vdwg.mxu0
        %v4558 = vlaneseq
        %v4559 = vshrl.u32 %v4558, 7
        %v4560 = vsub.s32 0, %v4559
        %v4561 = vrot.slane %v2856, %v4560
        %v4563 = vadd.f32 %v4551, %v4561
        %v4564 = vadd.f32 %v4554, %v4561
        %v4565 = vsel %vm2541, %v4563, 0.0
        %v4566 = vsel %vm2541, %v4564, 0.0
        %v4567 = vadd.f32 %v4565, %v4566
        %v4568 = vrot.slane %v4567, 4
        %v4569 = vadd.f32 %v4567, %v4568
        %v4570 = vrot.slane %v4569, 2
        %v4571 = vadd.f32 %v4569, %v4570
        %v4572 = vrot.slane %v4571, 1
        %v4573 = vadd.f32 %v4571, %v4572
        %v4574 = vmul.f32 %v4573, %v2551
        %v4575 = vsub.f32 %v4563, %v4574
        %v4576 = vsub.f32 %v4564, %v4574
        %v4577 = vmul.f32 %v4575, %v4575
        %v4578 = vmul.f32 %v4576, %v4576
        %v4579 = vsel %vm2541, %v4577, 0.0
        %v4580 = vsel %vm2541, %v4578, 0.0
        %v4581 = vadd.f32 %v4579, %v4580
        %v4582 = vrot.slane %v4581, 4
        %v4583 = vadd.f32 %v4581, %v4582
        %v4584 = vrot.slane %v4583, 2
        %v4585 = vadd.f32 %v4583, %v4584
        %v4586 = vrot.slane %v4585, 1
        %v4587 = vadd.f32 %v4585, %v4586
        %v4588 = vmul.f32 %v4587, %v2551
        %v4589 = vadd.f32 %v4588, 1e-05
        %v4590 = vrsqrt.pop %v4589
        %v4591 = vmul.f32 %v4575, %v4590
        %v4592 = vmul.f32 %v4576, %v4590
        %v4593 = vmax.f32 %v4591, 0.0
        %v4594 = vmax.f32 %v4592, 0.0
        %v4595 = vpack.c.bf16 %v4594, %v4593
        %v4597 = vlaneseq
        %v4598 = vshrl.u32 %v4597, 7
        %v4599 = vsub.s32 0, %v4598
        %v4600 = vrot.slane %v2867, %v4599
        %v4610 = vunpack.c.l.b16 %v2858
        %v4611 = vunpack.c.l.b16 %v2859
        %v4612 = vunpack.c.l.b16 %v2860
        %v4613 = vunpack.c.l.b16 %v2861
        %v4614 = vunpack.c.l.b16 %v2862
        %v4615 = vunpack.c.l.b16 %v2863
        %v4616 = vunpack.c.l.b16 %v2864
        %v4617 = vunpack.c.l.b16 %v2865
        %v4618 = vpack.c.b16 %v4611, %v4610
        %v4619 = vpack.c.b16 %v4613, %v4612
        %v4620 = vpack.c.b16 %v4615, %v4614
        %v4621 = vpack.c.b16 %v4617, %v4616
        %v4627 = vsel %vm2541, %v4595, 0
        %4629 = vmatprep.subr.bf16.mxu0 0
        %4630 = vmatpush1.bf16.msra.mxu0 %v4618
        %4631 = vmatprep.subr.bf16.mxu0 0
        %4632 = vmatpush1.bf16.msra.mxu0 %v4619
        %4633 = vmatprep.subr.bf16.mxu0 0
        %4634 = vmatpush1.bf16.msra.mxu0 %v4620
        %4635 = vmatprep.subr.bf16.mxu0 0
        %4636 = vmatpush1.bf16.msra.mxu0 %v4621
        %4637 = vmatprep.subr.bf16.mxu0 0
        %4638 = vmatpush1.bf16.msra.mxu0 0
        %4639 = vmatprep.subr.bf16.mxu0 0
        %4640 = vmatpush1.bf16.msra.mxu0 0
        %4641 = vmatprep.subr.bf16.mxu0 0
        %4642 = vmatpush1.bf16.msra.mxu0 0
        %4643 = vmatprep.subr.bf16.mxu0 0
        %4644 = vmatpush1.bf16.msra.mxu0 0
        %4645 = vmatprep.subr.bf16.mxu0 0
        %4646 = vmatpush1.bf16.msra.mxu0 0
        %4647 = vmatprep.subr.bf16.mxu0 0
        %4648 = vmatpush1.bf16.msra.mxu0 0
        %4649 = vmatprep.subr.bf16.mxu0 0
        %4650 = vmatpush1.bf16.msra.mxu0 0
        %4651 = vmatprep.subr.bf16.mxu0 0
        %4652 = vmatpush1.bf16.msra.mxu0 0
        %4653 = vmatprep.subr.bf16.mxu0 0
        %4654 = vmatpush1.bf16.msra.mxu0 0
        %4655 = vmatprep.subr.bf16.mxu0 0
        %4656 = vmatpush1.bf16.msra.mxu0 0
        %4657 = vmatprep.subr.bf16.mxu0 0
        %4658 = vmatpush1.bf16.msra.mxu0 0
        %4659 = vmatprep.subr.bf16.mxu0 0
        %4660 = vmatpush1.bf16.msra.mxu0 0
        %4661 = vmatprep.mubr.bf16.mxu0 0
        %4662 = vmatmul.mubr.bf16.gmra.mrb[0].mxu0 %v4627
        %v4663 = vpop.f32.mrb[0].mxu0
        %v4664 = vadd.f32 %v4600, %v4663
        %v4665 = vpop.f32.mrb[0].mxu0
        %v4666 = vpop.f32.mrb[0].mxu0
        %v4667 = vadd.f32 %v4600, %v4666
        %v4668 = vpop.f32.mrb[0].mxu0
        %4669 = vdwg.mxu0
        %v4670 = vadd.f32 %v2648, %v4664
        %v4671 = vadd.f32 %v2649, %v4667
        %v4672 = vpack.c.bf16 %v4446, %v4445
        %v4674 = vsel %vm858, %v4672, 0
        %4676 = vmatprep.subr.bf16.mxu0 0
        %4677 = vmatpush1.bf16.msra.mxu0 %v4456
        %4678 = vmatprep.subr.bf16.mxu0 0
        %4679 = vmatpush1.bf16.msra.mxu0 %v4457
        %4680 = vmatprep.subr.bf16.mxu0 0
        %4681 = vmatpush1.bf16.msra.mxu0 0
        %4682 = vmatprep.subr.bf16.mxu0 0
        %4683 = vmatpush1.bf16.msra.mxu0 0
        %4684 = vmatprep.subr.bf16.mxu0 0
        %4685 = vmatpush1.bf16.msra.mxu0 0
        %4686 = vmatprep.subr.bf16.mxu0 0
        %4687 = vmatpush1.bf16.msra.mxu0 0
        %4688 = vmatprep.subr.bf16.mxu0 0
        %4689 = vmatpush1.bf16.msra.mxu0 0
        %4690 = vmatprep.subr.bf16.mxu0 0
        %4691 = vmatpush1.bf16.msra.mxu0 0
        %4692 = vmatprep.subr.bf16.mxu0 0
        %4693 = vmatpush1.bf16.msra.mxu0 0
        %4694 = vmatprep.subr.bf16.mxu0 0
        %4695 = vmatpush1.bf16.msra.mxu0 0
        %4696 = vmatprep.subr.bf16.mxu0 0
        %4697 = vmatpush1.bf16.msra.mxu0 0
        %4698 = vmatprep.subr.bf16.mxu0 0
        %4699 = vmatpush1.bf16.msra.mxu0 0
        %4700 = vmatprep.subr.bf16.mxu0 0
        %4701 = vmatpush1.bf16.msra.mxu0 0
        %4702 = vmatprep.subr.bf16.mxu0 0
        %4703 = vmatpush1.bf16.msra.mxu0 0
        %4704 = vmatprep.subr.bf16.mxu0 0
        %4705 = vmatpush1.bf16.msra.mxu0 0
        %4706 = vmatprep.subr.bf16.mxu0 0
        %4707 = vmatpush1.bf16.msra.mxu0 0
        %4708 = vmatprep.mubr.bf16.mxu0 0
        %4709 = vmatmul.mubr.bf16.gmra.mrb[0].mxu0 %v4674
        %v4710 = vpop.f32.mrb[0].mxu0
        %v4711 = vadd.f32 0.0, %v4710
        %v4712 = vpop.f32.mrb[0].mxu0
        %v4713 = vpop.f32.mrb[0].mxu0
        %v4714 = vadd.f32 0.0, %v4713
        %v4715 = vpop.f32.mrb[0].mxu0
        %4716 = vdwg.mxu0
        %4717 = vmatprep.subr.bf16.mxu0 0
        %4718 = vmatpush1.bf16.msra.mxu0 %v4512
        %4719 = vmatprep.subr.bf16.mxu0 0
        %4720 = vmatpush1.bf16.msra.mxu0 %v4513
        %4721 = vmatprep.subr.bf16.mxu0 0
        %4722 = vmatpush1.bf16.msra.mxu0 0
        %4723 = vmatprep.subr.bf16.mxu0 0
        %4724 = vmatpush1.bf16.msra.mxu0 0
        %4725 = vmatprep.subr.bf16.mxu0 0
        %4726 = vmatpush1.bf16.msra.mxu0 0
        %4727 = vmatprep.subr.bf16.mxu0 0
        %4728 = vmatpush1.bf16.msra.mxu0 0
        %4729 = vmatprep.subr.bf16.mxu0 0
        %4730 = vmatpush1.bf16.msra.mxu0 0
        %4731 = vmatprep.subr.bf16.mxu0 0
        %4732 = vmatpush1.bf16.msra.mxu0 0
        %4733 = vmatprep.subr.bf16.mxu0 0
        %4734 = vmatpush1.bf16.msra.mxu0 0
        %4735 = vmatprep.subr.bf16.mxu0 0
        %4736 = vmatpush1.bf16.msra.mxu0 0
        %4737 = vmatprep.subr.bf16.mxu0 0
        %4738 = vmatpush1.bf16.msra.mxu0 0
        %4739 = vmatprep.subr.bf16.mxu0 0
        %4740 = vmatpush1.bf16.msra.mxu0 0
        %4741 = vmatprep.subr.bf16.mxu0 0
        %4742 = vmatpush1.bf16.msra.mxu0 0
        %4743 = vmatprep.subr.bf16.mxu0 0
        %4744 = vmatpush1.bf16.msra.mxu0 0
        %4745 = vmatprep.subr.bf16.mxu0 0
        %4746 = vmatpush1.bf16.msra.mxu0 0
        %4747 = vmatprep.subr.bf16.mxu0 0
        %4748 = vmatpush1.bf16.msra.mxu0 0
        %4749 = vmatprep.mubr.bf16.mxu0 0
        %4750 = vmatmul.mubr.bf16.gmra.mrb[0].mxu0 %v2892
        %v4751 = vpop.f32.mrb[0].mxu0
        %v4752 = vadd.f32 %v4711, %v4751
        %v4753 = vpop.f32.mrb[0].mxu0
        %v4754 = vpop.f32.mrb[0].mxu0
        %v4755 = vadd.f32 %v4714, %v4754
        %v4756 = vpop.f32.mrb[0].mxu0
        %4757 = vdwg.mxu0
        %v4758 = vadd.f32 %v4752, %v4561
        %v4759 = vadd.f32 %v4755, %v4561
        %v4760 = vsel %vm2541, %v4758, 0.0
        %v4761 = vsel %vm2739, %v4759, 0.0
        %v4762 = vadd.f32 %v4760, %v4761
        %v4763 = vrot.slane %v4762, 4
        %v4764 = vadd.f32 %v4762, %v4763
        %v4765 = vrot.slane %v4764, 2
        %v4766 = vadd.f32 %v4764, %v4765
        %v4767 = vrot.slane %v4766, 1
        %v4768 = vadd.f32 %v4766, %v4767
        %v4769 = vmul.f32 %v4768, %v2748
        %v4770 = vsub.f32 %v4758, %v4769
        %v4771 = vsub.f32 %v4759, %v4769
        %v4772 = vmul.f32 %v4770, %v4770
        %v4773 = vmul.f32 %v4771, %v4771
        %v4774 = vsel %vm2541, %v4772, 0.0
        %v4775 = vsel %vm2739, %v4773, 0.0
        %v4776 = vadd.f32 %v4774, %v4775
        %v4777 = vrot.slane %v4776, 4
        %v4778 = vadd.f32 %v4776, %v4777
        %v4779 = vrot.slane %v4778, 2
        %v4780 = vadd.f32 %v4778, %v4779
        %v4781 = vrot.slane %v4780, 1
        %v4782 = vadd.f32 %v4780, %v4781
        %v4783 = vmul.f32 %v4782, %v2748
        %v4784 = vadd.f32 %v4783, 1e-05
        %v4785 = vrsqrt.pop %v4784
        %v4786 = vmul.f32 %v4770, %v4785
        %v4787 = vmul.f32 %v4771, %v4785
        %v4788 = vmax.f32 %v4786, 0.0
        %v4789 = vmax.f32 %v4787, 0.0
        %v4790 = vpack.c.bf16 %v4789, %v4788
        %v4792 = vsel %vm2541, %v4790, 0
        %4794 = vmatprep.subr.bf16.mxu0 0
        %4795 = vmatpush1.bf16.msra.mxu0 %v4618
        %4796 = vmatprep.subr.bf16.mxu0 0
        %4797 = vmatpush1.bf16.msra.mxu0 %v4619
        %4798 = vmatprep.subr.bf16.mxu0 0
        %4799 = vmatpush1.bf16.msra.mxu0 %v4620
        %4800 = vmatprep.subr.bf16.mxu0 0
        %4801 = vmatpush1.bf16.msra.mxu0 %v4621
        %4802 = vmatprep.subr.bf16.mxu0 0
        %4803 = vmatpush1.bf16.msra.mxu0 0
        %4804 = vmatprep.subr.bf16.mxu0 0
        %4805 = vmatpush1.bf16.msra.mxu0 0
        %4806 = vmatprep.subr.bf16.mxu0 0
        %4807 = vmatpush1.bf16.msra.mxu0 0
        %4808 = vmatprep.subr.bf16.mxu0 0
        %4809 = vmatpush1.bf16.msra.mxu0 0
        %4810 = vmatprep.subr.bf16.mxu0 0
        %4811 = vmatpush1.bf16.msra.mxu0 0
        %4812 = vmatprep.subr.bf16.mxu0 0
        %4813 = vmatpush1.bf16.msra.mxu0 0
        %4814 = vmatprep.subr.bf16.mxu0 0
        %4815 = vmatpush1.bf16.msra.mxu0 0
        %4816 = vmatprep.subr.bf16.mxu0 0
        %4817 = vmatpush1.bf16.msra.mxu0 0
        %4818 = vmatprep.subr.bf16.mxu0 0
        %4819 = vmatpush1.bf16.msra.mxu0 0
        %4820 = vmatprep.subr.bf16.mxu0 0
        %4821 = vmatpush1.bf16.msra.mxu0 0
        %4822 = vmatprep.subr.bf16.mxu0 0
        %4823 = vmatpush1.bf16.msra.mxu0 0
        %4824 = vmatprep.subr.bf16.mxu0 0
        %4825 = vmatpush1.bf16.msra.mxu0 0
        %4826 = vmatprep.mubr.bf16.mxu0 0
        %4827 = vmatmul.mubr.bf16.gmra.mrb[0].mxu0 %v4792
        %v4828 = vpop.f32.mrb[0].mxu0
        %v4829 = vadd.f32 %v4600, %v4828
        %v4830 = vpop.f32.mrb[0].mxu0
        %v4831 = vpop.f32.mrb[0].mxu0
        %v4832 = vadd.f32 %v4600, %v4831
        %v4833 = vpop.f32.mrb[0].mxu0
        %4834 = vdwg.mxu0
        %v4835 = vadd.f32 %v2815, %v4829
        %v4836 = vadd.f32 %v2816, %v4832
        %4837 = vst.msk [vmem:[%s728] sm:$0xff] %vm858, %v4670
        %4838 = vst.msk [vmem:[%s728 + $0x8] sm:$0xff] %vm858, %v4671
        %4839 = vst.msk [vmem:[%s770] sm:$0xff] %vm858, %v4835
        %vm4840 = vcmask 257024
        %4841 = vst.msk [vmem:[%s770 + $0x8] sm:$0xf] %vm4840, %v4836
        %s4842 = sand.u32 %s474, 1
        %s4843 = scalar_lea.sflag [#allocation4], %s4842
        %s4844 = sand.u32 %s474, 1
        %s4845 = smul.addr %s4844, 16
        %s4846 = scalar_lea.vmem [#allocation7], %s4845
        %p4847 = scmp.lt.s32.totalorder %s37, 1
        %s4848 = scalar_select %p4847, %s37, 1
        %s4849 = smul.addr %s4848, 2
        %s4850 = smul.addr %s4849, 8
        %s4851 = scalar_lea.vmem %s20, %s4850
        // Predicated region
        $region105: #{attentional_gnn_pallas.1} parent=95 // pred_check
          %p4852 = pneg %p484
        $region106: #{attentional_gnn_pallas.1} parent=95 // pred_check_branch
          %4854 = sbr.rel (%p4852) target = $region108
        $region107: #{attentional_gnn_pallas.1} parent=95 // pred_region
          %s4856 = ssub.s32 256, 256
          %4857 = vsyncadd %s4843, %s4856
          %s4858 = smul.addr %s37, 2
          %s4859 = smul.addr %s4858, 128
          %s4860 = scalar_lea.hbm %s19, %s4859
          %s4861 = sshll.u32 %s4846, 4
          %s4862 = int_to_ptr.vmem [resolvable:$true] %s4861
          %4867 = dma.vmem_to_hbm [thread:$0]  %s4862, 256, %s4860, %s4843, 128, 128, 8
        $region108: #{attentional_gnn_pallas.1} parent=95 // pred_fallthru
          _
        // Predicated region
        $region109: #{attentional_gnn_pallas.1} parent=95 // pred_check
          %p4868 = pneg %p510
        $region110: #{attentional_gnn_pallas.1} parent=95 // pred_check_branch
          %4870 = sbr.rel (%p4868) target = $region112
        $region111: #{attentional_gnn_pallas.1} parent=95 // pred_region
          _
        $region112: #{attentional_gnn_pallas.1} parent=95 // pred_fallthru
          _
      $region96: #{attentional_gnn_pallas.1} parent=5 // pred_fallthru
        _
      %p4871 = scmp.le.s32.totalorder 2, %s32
      // Predicated region
      $region113: #{attentional_gnn_pallas.1} parent=5 // pred_check
        %p4872 = pneg %p4871
      $region114: #{attentional_gnn_pallas.1} parent=5 // pred_check_branch
        %4874 = sbr.rel (%p4872) target = $region116
      $region115: #{attentional_gnn_pallas.1} parent=5 // pred_region
        %s4875 = ssub.s32 %s32, 2
        // Predicated region
        $region117: #{attentional_gnn_pallas.1} parent=115 // pred_check
          %p4876 = pneg %p490
        $region118: #{attentional_gnn_pallas.1} parent=115 // pred_check_branch
          %4878 = sbr.rel (%p4876) target = $region120
        $region119: #{attentional_gnn_pallas.1} parent=115 // pred_region
          %s4879 = sand.u32 %s475, 1
          %s4880 = scalar_lea.sflag [#allocation4], %s4879
          %s4881 = sand.u32 %s475, 1
          %s4882 = smul.addr %s4881, 16
          %s4883 = scalar_lea.vmem [#allocation7], %s4882
          %4884 = dma.done %s4880, 256
        $region120: #{attentional_gnn_pallas.1} parent=115 // pred_fallthru
          _
        // Predicated region
        $region121: #{attentional_gnn_pallas.1} parent=115 // pred_check
          %p4885 = pneg %p516
        $region122: #{attentional_gnn_pallas.1} parent=115 // pred_check_branch
          %4887 = sbr.rel (%p4885) target = $region124
        $region123: #{attentional_gnn_pallas.1} parent=115 // pred_region
          %p4888 = scmp.lt.s32.totalorder %s38, 1
          %s4889 = scalar_select %p4888, %s38, 1
          %s4890 = smul.addr %s4889, 2
          %s4891 = smul.addr %s4890, 8
          %s4892 = scalar_lea.vmem %s20, %s4891
        $region124: #{attentional_gnn_pallas.1} parent=115 // pred_fallthru
          _
      $region116: #{attentional_gnn_pallas.1} parent=5 // pred_fallthru
        _
    $region6: #{attentional_gnn_pallas.1} parent=1 // loop_footer
      %s36 = sadd.s32 1, %s32
    $region7: #{attentional_gnn_pallas.1} parent=1 // loop_footer_branch
      %31 = sbr.rel target = $region3
    $region8: #{attentional_gnn_pallas.1} parent=1 // loop_exit
      _
    %4893 = vsyncpa [#allocation3], 1
    %s4894 = scalar_lea.sflag [#allocation3], 1
    %4895 = vsyncpa %s4894, 1
    %4896 = vsyncpa [#allocation6], 1
    %4897 = vsyncpa [#allocation4], 1
    %s4898 = scalar_lea.sflag [#allocation4], 1
    %4899 = vsyncpa %s4898, 1

</llo_original>
